<compile_context>
chip_gen: v5e
topology: v5e:2x2
jax: 0.10.0
libtpu: 0.0.40
codegen_flags: <defaults>
</compile_context>

<pallas_src>
import jax
import jax.numpy as jnp
from jax.experimental import pallas as pl
from jax.experimental.pallas import tpu as pltpu

_VMEM_LIMIT = 32 * 1024 * 1024  # explicit scoped-VMEM budget, safe on v5e/v6e/v7x


def _pick_tile(total, target, quantum=8):
    """Largest multiple of `quantum` <= target that divides `total` (else total)."""
    best = None
    cand = quantum
    while cand <= min(total, target):
        if total % cand == 0:
            best = cand
        cand += quantum
    return best if best is not None else total


# ------------------------------ Pallas kernels -------------------------------

def fused_1x1_stems(x2d, w, b, *, tile_m):
    """relu(x2d @ [w_b3_1 | w_b4_1] + b): one Cout=128 matmul, two 64-wide outs.

    x2d: (M, Cin) bf16, w: (Cin, 128) bf16 (BN scale folded), b: (1, 128) f32.
    Returns (t3, t4a), each (M, 64) bf16.
    """
    M, cin = x2d.shape
    cout = w.shape[1]
    half = cout // 2

    def kernel(x_ref, w_ref, b_ref, o3_ref, o4_ref):
        acc = jnp.dot(x_ref[...], w_ref[...], preferred_element_type=jnp.float32)
        y = jnp.maximum(acc + b_ref[...], 0.0).astype(o3_ref.dtype)
        o3_ref[...] = y[:, :half]
        o4_ref[...] = y[:, half:]

    return pl.pallas_call(
        kernel,
        out_shape=(jax.ShapeDtypeStruct((M, half), jnp.bfloat16),
                   jax.ShapeDtypeStruct((M, half), jnp.bfloat16)),
        grid=(M // tile_m,),
        in_specs=[pl.BlockSpec((tile_m, cin), lambda i: (i, 0)),
                  pl.BlockSpec((cin, cout), lambda i: (0, 0)),
                  pl.BlockSpec((1, cout), lambda i: (0, 0))],
        out_specs=(pl.BlockSpec((tile_m, half), lambda i: (i, 0)),
                   pl.BlockSpec((tile_m, half), lambda i: (i, 0))),
        compiler_params=pltpu.CompilerParams(
            dimension_semantics=("parallel",),
            vmem_limit_bytes=_VMEM_LIMIT),
    )(x2d, w, b)


def _im2col_taps(xpad_ref, row0, tile_h, w_img):
    """(H+2, W+2, C) padded ref -> (tile_h*W, 9*C) im2col block built in VMEM.

    Tap order is (dy, dx) row-major, matching the (9, Cin, Cout) weight layout.
    """
    taps = [xpad_ref[pl.ds(row0 + dy, tile_h), pl.ds(dx, w_img), :]
            for dy in range(3) for dx in range(3)]
    patch = jnp.concatenate(taps, axis=-1)          # (tile_h, W, 9*C)
    return patch.reshape(tile_h * w_img, patch.shape[-1])


def conv3x3_bn_relu(xpad, w, b, *, tile_h):
    """3x3 conv (pad=1, stride=1) + folded-BN bias + ReLU as one K=9*Cin matmul.

    xpad: (N, H+2, W+2, Cin) bf16 (zero padded), w: (9*Cin, Cout) bf16,
    b: (1, Cout) f32.  Returns (N, H*W, Cout) bf16.
    """
    N, hp, wpd, cin = xpad.shape
    H, W = hp - 2, wpd - 2
    cout = w.shape[1]
    nh = H // tile_h

    def kernel(x_ref, w_ref, b_ref, o_ref):
        row0 = pl.program_id(1) * tile_h
        patch = _im2col_taps(x_ref, row0, tile_h, W)           # (tile_h*W, 9*Cin)
        acc = jnp.dot(patch, w_ref[...], preferred_element_type=jnp.float32)
        o_ref[...] = jnp.maximum(acc + b_ref[...], 0.0).astype(o_ref.dtype)

    return pl.pallas_call(
        kernel,
        out_shape=jax.ShapeDtypeStruct((N, H * W, cout), jnp.bfloat16),
        grid=(N, nh),
        in_specs=[pl.BlockSpec((None, hp, wpd, cin), lambda n, h: (n, 0, 0, 0)),
                  pl.BlockSpec((9 * cin, cout), lambda n, h: (0, 0)),
                  pl.BlockSpec((1, cout), lambda n, h: (0, 0))],
        out_specs=pl.BlockSpec((None, tile_h * W, cout), lambda n, h: (n, h, 0)),
        compiler_params=pltpu.CompilerParams(
            dimension_semantics=("parallel", "parallel"),
            vmem_limit_bytes=_VMEM_LIMIT),
    )(xpad, w, b)


def final_branches(xpad, t3pad, t4pad,
                   w_pool, b_pool, w_b2, b_b2, w_b3, b_b3, w_b4, b_b4, *, tile_h):
    """Last stage of all four branches, writing the lane-dense 384-wide concat.

    xpad : (N, H+2, W+2, Cin) bf16   padded input (branches 1 & 2)
    t3pad: (N, H+2, W+2, 64)  bf16   padded b3_1 output
    t4pad: (N, H+2, W+2, 96)  bf16   padded b4_2 output
    Returns (N, H*W, 384) f32, channel order [y1 | y2 | y3 | y4].
    """
    N, hp, wpd, cin = xpad.shape
    H, W = hp - 2, wpd - 2
    c3, c4 = t3pad.shape[-1], t4pad.shape[-1]
    nh = H // tile_h

    def kernel(x_ref, t3_ref, t4_ref, wpool_ref, bpool_ref, w2_ref, b2_ref,
               w3_ref, b3_ref, w4_ref, b4_ref, o_ref):
        row0 = pl.program_id(1) * tile_h

        # branch 1: AvgPool2d(3, s=1, p=1, count_include_pad=True) -> 1x1 conv.
        # Separable 3x3 sum (4 VPU adds instead of 8); the /9 is folded into wpool.
        rs = (x_ref[pl.ds(row0, tile_h + 2), pl.ds(0, W), :]
              + x_ref[pl.ds(row0, tile_h + 2), pl.ds(1, W), :]
              + x_ref[pl.ds(row0, tile_h + 2), pl.ds(2, W), :])
        pooled = (rs[0:tile_h] + rs[1:tile_h + 1] + rs[2:tile_h + 2])
        pooled = pooled.reshape(tile_h * W, cin)
        y1 = jnp.maximum(
            jnp.dot(pooled, wpool_ref[...], preferred_element_type=jnp.float32)
            + bpool_ref[...], 0.0)

        # branch 2: 1x1 on the un-padded interior of the same resident block.
        xi = x_ref[pl.ds(row0 + 1, tile_h), pl.ds(1, W), :].reshape(tile_h * W, cin)
        y2 = jnp.maximum(
            jnp.dot(xi, w2_ref[...], preferred_element_type=jnp.float32)
            + b2_ref[...], 0.0)

        # branch 3: 3x3 over t3 as a single K = 9*64 MXU matmul.
        p3 = _im2col_taps(t3_ref, row0, tile_h, W)
        y3 = jnp.maximum(
            jnp.dot(p3, w3_ref[...], preferred_element_type=jnp.float32)
            + b3_ref[...], 0.0)

        # branch 4: 3x3 over t4b as a single K = 9*96 MXU matmul.
        p4 = _im2col_taps(t4_ref, row0, tile_h, W)
        y4 = jnp.maximum(
            jnp.dot(p4, w4_ref[...], preferred_element_type=jnp.float32)
            + b4_ref[...], 0.0)

        # Single lane-dense store: 384 = 3 * 128 output lanes.
        o_ref[...] = jnp.concatenate([y1, y2, y3, y4], axis=-1).astype(o_ref.dtype)

    act_spec = lambda c: pl.BlockSpec((None, hp, wpd, c), lambda n, h: (n, 0, 0, 0))
    full = lambda a: pl.BlockSpec(a.shape, lambda n, h: (0, 0))
    return pl.pallas_call(
        kernel,
        out_shape=jax.ShapeDtypeStruct((N, H * W, 4 * 96), jnp.float32),
        grid=(N, nh),
        in_specs=[act_spec(cin), act_spec(c3), act_spec(c4),
                  full(w_pool), full(b_pool), full(w_b2), full(b_b2),
                  full(w_b3), full(b_b3), full(w_b4), full(b_b4)],
        out_specs=pl.BlockSpec((None, tile_h * W, 4 * 96), lambda n, h: (n, h, 0)),
        compiler_params=pltpu.CompilerParams(
            dimension_semantics=("parallel", "parallel"),
            vmem_limit_bytes=_VMEM_LIMIT),
    )(xpad, t3pad, t4pad, w_pool, b_pool, w_b2, b_b2, w_b3, b_b3, w_b4, b_b4)


# --------------------------- parameter initialization ------------------------

def init_conv_bn(key, cin, cout, ksize, extra_scale=1.0):
    """Conv2d(+bias) + BatchNorm2d(eval) with BN scale (and `extra_scale`)
    folded into the weight; bias folded into a single (1, Cout) f32 vector.

    Weight layout: (Cin, Cout) for 1x1; (9*Cin, Cout) for 3x3 with tap order
    (dy, dx) row-major, matching the in-kernel im2col."""
    k_w, k_b, k_g, k_be, k_m, k_v = jax.random.split(key, 6)
    if ksize == 1:
        w = jax.random.normal(k_w, (cin, cout), jnp.float32) * 0.1
    else:
        w = jax.random.normal(k_w, (9, cin, cout), jnp.float32) * 0.05
    conv_b = jax.random.normal(k_b, (cout,), jnp.float32) * 0.1
    gamma = 1.0 + 0.1 * jax.random.normal(k_g, (cout,), jnp.float32)
    beta = 0.1 * jax.random.normal(k_be, (cout,), jnp.float32)
    r_mean = 0.1 * jax.random.normal(k_m, (cout,), jnp.float32)
    r_var = 1.0 + 0.1 * jnp.abs(jax.random.normal(k_v, (cout,), jnp.float32))
    s = gamma / jnp.sqrt(r_var + 1e-5)
    w = w * (s * extra_scale)
    bias = ((conv_b - r_mean) * s + beta).reshape(1, cout)
    if ksize == 3:
        w = w.reshape(9 * cin, cout)
    return w.astype(jnp.bfloat16), bias.astype(jnp.float32)


def init_inception_a(key, in_channels):
    ks = jax.random.split(key, 7)
    # AvgPool's 1/9 (count_include_pad=True) is folded into the b1_2 weight.
    w_b1_2, b_b1_2 = init_conv_bn(ks[0], in_channels, 96, 1, extra_scale=1.0 / 9.0)
    w_b2, b_b2 = init_conv_bn(ks[1], in_channels, 96, 1)
    w_b3_1, b_b3_1 = init_conv_bn(ks[2], in_channels, 64, 1)
    w_b3_2, b_b3_2 = init_conv_bn(ks[3], 64, 96, 3)
    w_b4_1, b_b4_1 = init_conv_bn(ks[4], in_channels, 64, 1)
    w_b4_2, b_b4_2 = init_conv_bn(ks[5], 64, 96, 3)
    w_b4_3, b_b4_3 = init_conv_bn(ks[6], 96, 96, 3)
    return {
        # fused 1x1 stems [b3_1 | b4_1]: Cout = 128, lane aligned.
        "w_stem": jnp.concatenate([w_b3_1, w_b4_1], axis=1),
        "b_stem": jnp.concatenate([b_b3_1, b_b4_1], axis=1),
        "w_b1_2": w_b1_2, "b_b1_2": b_b1_2,
        "w_b2": w_b2, "b_b2": b_b2,
        "w_b3_2": w_b3_2, "b_b3_2": b_b3_2,
        "w_b4_2": w_b4_2, "b_b4_2": b_b4_2,
        "w_b4_3": w_b4_3, "b_b4_3": b_b4_3,
    }


# ----------------------------------- forward ---------------------------------

def inception_a_forward(x_nchw, params):
    N, cin, H, W = x_nchw.shape
    x = jnp.transpose(x_nchw, (0, 2, 3, 1)).astype(jnp.bfloat16)      # NHWC bf16
    M = N * H * W
    # 512-2048 at production shapes; modest target so small inputs still tile.
    tile_m = _pick_tile(M, 256)
    tile_h = _pick_tile(H, 8, quantum=1)

    x2d = x.reshape(M, cin)
    xpad = jnp.pad(x, ((0, 0), (1, 1), (1, 1), (0, 0)))

    # fused 1x1 stems: t3 = b3_1(x), t4a = b4_1(x)
    t3, t4a = fused_1x1_stems(x2d, params["w_stem"], params["b_stem"], tile_m=tile_m)

    # branch-4 middle 3x3 (64 -> 96)
    t4a_pad = jnp.pad(t4a.reshape(N, H, W, -1), ((0, 0), (1, 1), (1, 1), (0, 0)))
    t4b = conv3x3_bn_relu(t4a_pad, params["w_b4_2"], params["b_b4_2"], tile_h=tile_h)

    # final fused stage -> (N, H*W, 384)
    t3_pad = jnp.pad(t3.reshape(N, H, W, -1), ((0, 0), (1, 1), (1, 1), (0, 0)))
    t4b_pad = jnp.pad(t4b.reshape(N, H, W, -1), ((0, 0), (1, 1), (1, 1), (0, 0)))
    out = final_branches(xpad, t3_pad, t4b_pad,
                         params["w_b1_2"], params["b_b1_2"],
                         params["w_b2"], params["b_b2"],
                         params["w_b3_2"], params["b_b3_2"],
                         params["w_b4_3"], params["b_b4_3"], tile_h=tile_h)
    out = out.reshape(N, H, W, 4 * 96)
    return jnp.transpose(out, (0, 3, 1, 2))                            # NCHW


# ------------------------------ pure-JAX reference ---------------------------

def _reference_forward(x_nchw, params):
    """Pure-JAX reference mirroring the kernel math (bf16 operands, f32 accum)."""
    N, cin, H, W = x_nchw.shape
    f32 = jnp.float32
    x = jnp.transpose(x_nchw, (0, 2, 3, 1)).astype(jnp.bfloat16).astype(f32)
    M = N * H * W

    def im2col(v):                                   # (N,H,W,C) -> (M, 9C)
        vp = jnp.pad(v, ((0, 0), (1, 1), (1, 1), (0, 0)))
        taps = [vp[:, dy:dy + H, dx:dx + W, :].reshape(M, v.shape[-1])
                for dy in range(3) for dx in range(3)]
        return jnp.concatenate(taps, axis=-1)

    def relu_mm(a, w, b):
        return jnp.maximum(a @ w.astype(f32) + b, 0.0)

    x2d = x.reshape(M, cin)
    stems = relu_mm(x2d, params["w_stem"], params["b_stem"])
    stems = stems.astype(jnp.bfloat16).astype(f32)
    t3, t4a = stems[:, :64], stems[:, 64:]
    t4b = relu_mm(im2col(t4a.reshape(N, H, W, 64)), params["w_b4_2"], params["b_b4_2"])
    t4b = t4b.astype(jnp.bfloat16).astype(f32)
    y4 = relu_mm(im2col(t4b.reshape(N, H, W, 96)), params["w_b4_3"], params["b_b4_3"])
    y3 = relu_mm(im2col(t3.reshape(N, H, W, 64)), params["w_b3_2"], params["b_b3_2"])
    pooled = im2col(x).reshape(M, 9, cin).sum(axis=1)   # /9 lives in w_b1_2
    y1 = relu_mm(pooled, params["w_b1_2"], params["b_b1_2"])
    y2 = relu_mm(x2d, params["w_b2"], params["b_b2"])
    y = jnp.concatenate([y1, y2, y3, y4], axis=-1).reshape(N, H, W, 4 * 96)
    return jnp.transpose(y, (0, 3, 1, 2))


# -------------------------------------- main ---------------------------------

if __name__ == "__main__":
    key = jax.random.PRNGKey(0)
    k_x, k_p = jax.random.split(key)

    N, C, H, W = 2, 4, 16, 16
    x = jax.random.normal(k_x, (N, C, H, W), jnp.float32)
    params = init_inception_a(k_p, C)

    fwd = jax.jit(inception_a_forward)
    out = fwd(x, params)
    jax.block_until_ready(out)
    assert out.shape == (N, 4 * 96, H, W), out.shape

    ref = _reference_forward(x, params)
    max_err = float(jnp.max(jnp.abs(out.astype(jnp.float32) - ref)))
    assert max_err < 5e-2, f"kernel/reference mismatch: max abs err {max_err}"

    print("KERNEL_OK")
</pallas_src>

<mosaic_0001>
module attributes {stable_mosaic.version = 11 : i64} {
  func.func @kernel(%arg0: i32, %arg1: memref<256x4xbf16, #tpu.memory_space<vmem>>, %arg2: memref<4x128xbf16, #tpu.memory_space<vmem>>, %arg3: memref<1x128xf32, #tpu.memory_space<vmem>>, %arg4: memref<256x64xbf16, #tpu.memory_space<vmem>>, %arg5: memref<256x64xbf16, #tpu.memory_space<vmem>>) attributes {dimension_semantics = [#tpu.dimension_semantics<parallel>], iteration_bounds = array<i64: 2>, scalar_prefetch = 0 : i64, scratch_operands = 0 : i64, tpu.core_type = #tpu.core_type<tc>, window_params = [{transform_indices = @transform_0, window_bounds = array<i64: 256, 4>}, {pipeline_mode = #tpu.pipeline_mode<synchronous>, transform_indices = @transform_1, window_bounds = array<i64: 4, 128>}, {pipeline_mode = #tpu.pipeline_mode<synchronous>, transform_indices = @transform_2, window_bounds = array<i64: 1, 128>}, {transform_indices = @transform_3, window_bounds = array<i64: 256, 64>}, {transform_indices = @transform_4, window_bounds = array<i64: 256, 64>}]} {
    %c0 = arith.constant 0 : index
    %c0_0 = arith.constant 0 : index
    %0 = vector.load %arg1[%c0, %c0_0] : memref<256x4xbf16, #tpu.memory_space<vmem>>, vector<256x4xbf16>
    %c0_1 = arith.constant 0 : index
    %c0_2 = arith.constant 0 : index
    %1 = vector.load %arg2[%c0_1, %c0_2] : memref<4x128xbf16, #tpu.memory_space<vmem>>, vector<4x128xbf16>
    %cst = arith.constant dense<0.000000e+00> : vector<256x128xf32>
    %2 = tpu.matmul %0, %1, %cst {dimension_numbers = #tpu.dot_dimension_numbers<[1], [0], [0], [1], [0, 0, 1, 1], [], []>} : vector<256x4xbf16>, vector<4x128xbf16>, vector<256x128xf32> -> vector<256x128xf32>
    %c0_3 = arith.constant 0 : index
    %c0_4 = arith.constant 0 : index
    %3 = vector.load %arg3[%c0_3, %c0_4] : memref<1x128xf32, #tpu.memory_space<vmem>>, vector<1x128xf32>
    %4 = vector.broadcast %3 : vector<1x128xf32> to vector<256x128xf32>
    %5 = arith.addf %2, %4 : vector<256x128xf32>
    %cst_5 = arith.constant 0.000000e+00 : f32
    %6 = vector.broadcast %cst_5 : f32 to vector<256x128xf32>
    %7 = arith.maximumf %5, %6 : vector<256x128xf32>
    %8 = arith.truncf %7 : vector<256x128xf32> to vector<256x128xbf16>
    %9 = vector.extract_strided_slice %8 {offsets = [0, 0], sizes = [256, 64], strides = [1, 1]} : vector<256x128xbf16> to vector<256x64xbf16>
    %c0_6 = arith.constant 0 : index
    %c0_7 = arith.constant 0 : index
    %10 = vector.load %arg4[%c0_6, %c0_7] : memref<256x64xbf16, #tpu.memory_space<vmem>>, vector<256x64xbf16>
    tpu.vector_store %arg4[%c0_6, %c0_7], %9 {strides = array<i32>} : memref<256x64xbf16, #tpu.memory_space<vmem>>, vector<256x64xbf16>,
    %11 = vector.extract_strided_slice %8 {offsets = [0, 64], sizes = [256, 64], strides = [1, 1]} : vector<256x128xbf16> to vector<256x64xbf16>
    %c0_8 = arith.constant 0 : index
    %c0_9 = arith.constant 0 : index
    %12 = vector.load %arg5[%c0_8, %c0_9] : memref<256x64xbf16, #tpu.memory_space<vmem>>, vector<256x64xbf16>
    tpu.vector_store %arg5[%c0_8, %c0_9], %11 {strides = array<i32>} : memref<256x64xbf16, #tpu.memory_space<vmem>>, vector<256x64xbf16>,
    return
  }
  func.func @transform_0(%arg0: i32) -> (i32, i32) {
    %c0_i32 = arith.constant 0 : i32
    %c0_i32_0 = arith.constant 0 : i32
    return %arg0, %c0_i32 : i32, i32
  }
  func.func @transform_1(%arg0: i32) -> (i32, i32) {
    %c0_i32 = arith.constant 0 : i32
    %c0_i32_0 = arith.constant 0 : i32
    %c0_i32_1 = arith.constant 0 : i32
    return %c0_i32, %c0_i32_0 : i32, i32
  }
  func.func @transform_2(%arg0: i32) -> (i32, i32) {
    %c0_i32 = arith.constant 0 : i32
    %c0_i32_0 = arith.constant 0 : i32
    %c0_i32_1 = arith.constant 0 : i32
    return %c0_i32, %c0_i32_0 : i32, i32
  }
  func.func @transform_3(%arg0: i32) -> (i32, i32) {
    %c0_i32 = arith.constant 0 : i32
    %c0_i32_0 = arith.constant 0 : i32
    return %arg0, %c0_i32 : i32, i32
  }
  func.func @transform_4(%arg0: i32) -> (i32, i32) {
    %c0_i32 = arith.constant 0 : i32
    %c0_i32_0 = arith.constant 0 : i32
    return %arg0, %c0_i32 : i32, i32
  }
}

module attributes {stable_mosaic.version = 11 : i64} {
  func.func @kernel(%arg0: i32, %arg1: i32, %arg2: memref<1x18x18x64xbf16, #tpu.memory_space<vmem>>, %arg3: memref<576x96xbf16, #tpu.memory_space<vmem>>, %arg4: memref<1x96xf32, #tpu.memory_space<vmem>>, %arg5: memref<1x128x96xbf16, #tpu.memory_space<vmem>>) attributes {dimension_semantics = [#tpu.dimension_semantics<parallel>, #tpu.dimension_semantics<parallel>], iteration_bounds = array<i64: 2, 2>, scalar_prefetch = 0 : i64, scratch_operands = 0 : i64, tpu.core_type = #tpu.core_type<tc>, window_params = [{transform_indices = @transform_0, window_bounds = array<i64: 1, 18, 18, 64>}, {pipeline_mode = #tpu.pipeline_mode<synchronous>, transform_indices = @transform_1, window_bounds = array<i64: 576, 96>}, {pipeline_mode = #tpu.pipeline_mode<synchronous>, transform_indices = @transform_2, window_bounds = array<i64: 1, 96>}, {transform_indices = @transform_3, window_bounds = array<i64: 1, 128, 96>}]} {
    %c8_i32 = arith.constant 8 : i32
    %0 = arith.muli %arg1, %c8_i32 : i32
    %c0_i32 = arith.constant 0 : i32
    %1 = arith.addi %0, %c0_i32 : i32
    %c0 = arith.constant 0 : index
    %2 = arith.index_cast %1 : i32 to index
    %c0_0 = arith.constant 0 : index
    %c0_1 = arith.constant 0 : index
    %3 = vector.load %arg2[%c0, %2, %c0_0, %c0_1] : memref<1x18x18x64xbf16, #tpu.memory_space<vmem>>, vector<1x8x16x64xbf16>
    %4 = vector.shape_cast %3 : vector<1x8x16x64xbf16> to vector<8x16x64xbf16>
    %c0_i32_2 = arith.constant 0 : i32
    %5 = arith.addi %0, %c0_i32_2 : i32
    %c0_3 = arith.constant 0 : index
    %6 = arith.index_cast %5 : i32 to index
    %c1 = arith.constant 1 : index
    %c0_4 = arith.constant 0 : index
    %7 = vector.load %arg2[%c0_3, %6, %c1, %c0_4] : memref<1x18x18x64xbf16, #tpu.memory_space<vmem>>, vector<1x8x16x64xbf16>
    %8 = vector.shape_cast %7 : vector<1x8x16x64xbf16> to vector<8x16x64xbf16>
    %c0_i32_5 = arith.constant 0 : i32
    %9 = arith.addi %0, %c0_i32_5 : i32
    %c0_6 = arith.constant 0 : index
    %10 = arith.index_cast %9 : i32 to index
    %c2 = arith.constant 2 : index
    %c0_7 = arith.constant 0 : index
    %11 = vector.load %arg2[%c0_6, %10, %c2, %c0_7] : memref<1x18x18x64xbf16, #tpu.memory_space<vmem>>, vector<1x8x16x64xbf16>
    %12 = vector.shape_cast %11 : vector<1x8x16x64xbf16> to vector<8x16x64xbf16>
    %c1_i32 = arith.constant 1 : i32
    %13 = arith.addi %0, %c1_i32 : i32
    %c0_8 = arith.constant 0 : index
    %14 = arith.index_cast %13 : i32 to index
    %c0_9 = arith.constant 0 : index
    %c0_10 = arith.constant 0 : index
    %15 = vector.load %arg2[%c0_8, %14, %c0_9, %c0_10] : memref<1x18x18x64xbf16, #tpu.memory_space<vmem>>, vector<1x8x16x64xbf16>
    %16 = vector.shape_cast %15 : vector<1x8x16x64xbf16> to vector<8x16x64xbf16>
    %c1_i32_11 = arith.constant 1 : i32
    %17 = arith.addi %0, %c1_i32_11 : i32
    %c0_12 = arith.constant 0 : index
    %18 = arith.index_cast %17 : i32 to index
    %c1_13 = arith.constant 1 : index
    %c0_14 = arith.constant 0 : index
    %19 = vector.load %arg2[%c0_12, %18, %c1_13, %c0_14] : memref<1x18x18x64xbf16, #tpu.memory_space<vmem>>, vector<1x8x16x64xbf16>
    %20 = vector.shape_cast %19 : vector<1x8x16x64xbf16> to vector<8x16x64xbf16>
    %c1_i32_15 = arith.constant 1 : i32
    %21 = arith.addi %0, %c1_i32_15 : i32
    %c0_16 = arith.constant 0 : index
    %22 = arith.index_cast %21 : i32 to index
    %c2_17 = arith.constant 2 : index
    %c0_18 = arith.constant 0 : index
    %23 = vector.load %arg2[%c0_16, %22, %c2_17, %c0_18] : memref<1x18x18x64xbf16, #tpu.memory_space<vmem>>, vector<1x8x16x64xbf16>
    %24 = vector.shape_cast %23 : vector<1x8x16x64xbf16> to vector<8x16x64xbf16>
    %c2_i32 = arith.constant 2 : i32
    %25 = arith.addi %0, %c2_i32 : i32
    %c0_19 = arith.constant 0 : index
    %26 = arith.index_cast %25 : i32 to index
    %c0_20 = arith.constant 0 : index
    %c0_21 = arith.constant 0 : index
    %27 = vector.load %arg2[%c0_19, %26, %c0_20, %c0_21] : memref<1x18x18x64xbf16, #tpu.memory_space<vmem>>, vector<1x8x16x64xbf16>
    %28 = vector.shape_cast %27 : vector<1x8x16x64xbf16> to vector<8x16x64xbf16>
    %c2_i32_22 = arith.constant 2 : i32
    %29 = arith.addi %0, %c2_i32_22 : i32
    %c0_23 = arith.constant 0 : index
    %30 = arith.index_cast %29 : i32 to index
    %c1_24 = arith.constant 1 : index
    %c0_25 = arith.constant 0 : index
    %31 = vector.load %arg2[%c0_23, %30, %c1_24, %c0_25] : memref<1x18x18x64xbf16, #tpu.memory_space<vmem>>, vector<1x8x16x64xbf16>
    %32 = vector.shape_cast %31 : vector<1x8x16x64xbf16> to vector<8x16x64xbf16>
    %c2_i32_26 = arith.constant 2 : i32
    %33 = arith.addi %0, %c2_i32_26 : i32
    %c0_27 = arith.constant 0 : index
    %34 = arith.index_cast %33 : i32 to index
    %c2_28 = arith.constant 2 : index
    %c0_29 = arith.constant 0 : index
    %35 = vector.load %arg2[%c0_27, %34, %c2_28, %c0_29] : memref<1x18x18x64xbf16, #tpu.memory_space<vmem>>, vector<1x8x16x64xbf16>
    %36 = vector.shape_cast %35 : vector<1x8x16x64xbf16> to vector<8x16x64xbf16>
    %37 = tpu.concatenate %4, %8, %12, %16, %20, %24, %28, %32, %36 in 2 : vector<8x16x64xbf16>, vector<8x16x64xbf16>, vector<8x16x64xbf16>, vector<8x16x64xbf16>, vector<8x16x64xbf16>, vector<8x16x64xbf16>, vector<8x16x64xbf16>, vector<8x16x64xbf16>, vector<8x16x64xbf16> -> vector<8x16x576xbf16>
    %38 = vector.shape_cast %37 : vector<8x16x576xbf16> to vector<128x576xbf16>
    %c0_30 = arith.constant 0 : index
    %c0_31 = arith.constant 0 : index
    %39 = vector.load %arg3[%c0_30, %c0_31] : memref<576x96xbf16, #tpu.memory_space<vmem>>, vector<576x96xbf16>
    %cst = arith.constant dense<0.000000e+00> : vector<128x96xf32>
    %40 = tpu.matmul %38, %39, %cst {dimension_numbers = #tpu.dot_dimension_numbers<[1], [0], [0], [1], [0, 0, 1, 1], [], []>} : vector<128x576xbf16>, vector<576x96xbf16>, vector<128x96xf32> -> vector<128x96xf32>
    %c0_32 = arith.constant 0 : index
    %c0_33 = arith.constant 0 : index
    %41 = vector.load %arg4[%c0_32, %c0_33] : memref<1x96xf32, #tpu.memory_space<vmem>>, vector<1x96xf32>
    %42 = vector.broadcast %41 : vector<1x96xf32> to vector<128x96xf32>
    %43 = arith.addf %40, %42 : vector<128x96xf32>
    %cst_34 = arith.constant 0.000000e+00 : f32
    %44 = vector.broadcast %cst_34 : f32 to vector<128x96xf32>
    %45 = arith.maximumf %43, %44 : vector<128x96xf32>
    %46 = arith.truncf %45 : vector<128x96xf32> to vector<128x96xbf16>
    %c0_35 = arith.constant 0 : index
    %c0_36 = arith.constant 0 : index
    %c0_37 = arith.constant 0 : index
    %47 = vector.load %arg5[%c0_35, %c0_36, %c0_37] : memref<1x128x96xbf16, #tpu.memory_space<vmem>>, vector<1x128x96xbf16>
    %48 = vector.shape_cast %47 : vector<1x128x96xbf16> to vector<128x96xbf16>
    %49 = vector.shape_cast %46 : vector<128x96xbf16> to vector<1x128x96xbf16>
    tpu.vector_store %arg5[%c0_35, %c0_36, %c0_37], %49 {strides = array<i32>} : memref<1x128x96xbf16, #tpu.memory_space<vmem>>, vector<1x128x96xbf16>,
    return
  }
  func.func @transform_0(%arg0: i32, %arg1: i32) -> (i32, i32, i32, i32) {
    %c0_i32 = arith.constant 0 : i32
    %c0_i32_0 = arith.constant 0 : i32
    %c0_i32_1 = arith.constant 0 : i32
    %c0_i32_2 = arith.constant 0 : i32
    return %arg0, %c0_i32, %c0_i32_0, %c0_i32_1 : i32, i32, i32, i32
  }
  func.func @transform_1(%arg0: i32, %arg1: i32) -> (i32, i32) {
    %c0_i32 = arith.constant 0 : i32
    %c0_i32_0 = arith.constant 0 : i32
    %c0_i32_1 = arith.constant 0 : i32
    return %c0_i32, %c0_i32_0 : i32, i32
  }
  func.func @transform_2(%arg0: i32, %arg1: i32) -> (i32, i32) {
    %c0_i32 = arith.constant 0 : i32
    %c0_i32_0 = arith.constant 0 : i32
    %c0_i32_1 = arith.constant 0 : i32
    return %c0_i32, %c0_i32_0 : i32, i32
  }
  func.func @transform_3(%arg0: i32, %arg1: i32) -> (i32, i32, i32) {
    %c0_i32 = arith.constant 0 : i32
    %c0_i32_0 = arith.constant 0 : i32
    return %arg0, %arg1, %c0_i32 : i32, i32, i32
  }
}

module attributes {stable_mosaic.version = 11 : i64} {
  func.func @kernel(%arg0: i32, %arg1: i32, %arg2: memref<1x18x18x4xbf16, #tpu.memory_space<vmem>>, %arg3: memref<1x18x18x64xbf16, #tpu.memory_space<vmem>>, %arg4: memref<1x18x18x96xbf16, #tpu.memory_space<vmem>>, %arg5: memref<4x96xbf16, #tpu.memory_space<vmem>>, %arg6: memref<1x96xf32, #tpu.memory_space<vmem>>, %arg7: memref<4x96xbf16, #tpu.memory_space<vmem>>, %arg8: memref<1x96xf32, #tpu.memory_space<vmem>>, %arg9: memref<576x96xbf16, #tpu.memory_space<vmem>>, %arg10: memref<1x96xf32, #tpu.memory_space<vmem>>, %arg11: memref<864x96xbf16, #tpu.memory_space<vmem>>, %arg12: memref<1x96xf32, #tpu.memory_space<vmem>>, %arg13: memref<1x128x384xf32, #tpu.memory_space<vmem>>) attributes {dimension_semantics = [#tpu.dimension_semantics<parallel>, #tpu.dimension_semantics<parallel>], iteration_bounds = array<i64: 2, 2>, scalar_prefetch = 0 : i64, scratch_operands = 0 : i64, tpu.core_type = #tpu.core_type<tc>, window_params = [{transform_indices = @transform_0, window_bounds = array<i64: 1, 18, 18, 4>}, {transform_indices = @transform_1, window_bounds = array<i64: 1, 18, 18, 64>}, {transform_indices = @transform_2, window_bounds = array<i64: 1, 18, 18, 96>}, {pipeline_mode = #tpu.pipeline_mode<synchronous>, transform_indices = @transform_3, window_bounds = array<i64: 4, 96>}, {pipeline_mode = #tpu.pipeline_mode<synchronous>, transform_indices = @transform_4, window_bounds = array<i64: 1, 96>}, {pipeline_mode = #tpu.pipeline_mode<synchronous>, transform_indices = @transform_5, window_bounds = array<i64: 4, 96>}, {pipeline_mode = #tpu.pipeline_mode<synchronous>, transform_indices = @transform_6, window_bounds = array<i64: 1, 96>}, {pipeline_mode = #tpu.pipeline_mode<synchronous>, transform_indices = @transform_7, window_bounds = array<i64: 576, 96>}, {pipeline_mode = #tpu.pipeline_mode<synchronous>, transform_indices = @transform_8, window_bounds = array<i64: 1, 96>}, {pipeline_mode = #tpu.pipeline_mode<synchronous>, transform_indices = @transform_9, window_bounds = array<i64: 864, 96>}, {pipeline_mode = #tpu.pipeline_mode<synchronous>, transform_indices = @transform_10, window_bounds = array<i64: 1, 96>}, {transform_indices = @transform_11, window_bounds = array<i64: 1, 128, 384>}]} {
    %c8_i32 = arith.constant 8 : i32
    %0 = arith.muli %arg1, %c8_i32 : i32
    %c0 = arith.constant 0 : index
    %1 = arith.index_cast %0 : i32 to index
    %c0_0 = arith.constant 0 : index
    %c0_1 = arith.constant 0 : index
    %2 = vector.load %arg2[%c0, %1, %c0_0, %c0_1] : memref<1x18x18x4xbf16, #tpu.memory_space<vmem>>, vector<1x10x16x4xbf16>
    %3 = vector.shape_cast %2 : vector<1x10x16x4xbf16> to vector<10x16x4xbf16>
    %c0_2 = arith.constant 0 : index
    %4 = arith.index_cast %0 : i32 to index
    %c1 = arith.constant 1 : index
    %c0_3 = arith.constant 0 : index
    %5 = vector.load %arg2[%c0_2, %4, %c1, %c0_3] : memref<1x18x18x4xbf16, #tpu.memory_space<vmem>>, vector<1x10x16x4xbf16>
    %6 = vector.shape_cast %5 : vector<1x10x16x4xbf16> to vector<10x16x4xbf16>
    %7 = arith.addf %3, %6 : vector<10x16x4xbf16>
    %c0_4 = arith.constant 0 : index
    %8 = arith.index_cast %0 : i32 to index
    %c2 = arith.constant 2 : index
    %c0_5 = arith.constant 0 : index
    %9 = vector.load %arg2[%c0_4, %8, %c2, %c0_5] : memref<1x18x18x4xbf16, #tpu.memory_space<vmem>>, vector<1x10x16x4xbf16>
    %10 = vector.shape_cast %9 : vector<1x10x16x4xbf16> to vector<10x16x4xbf16>
    %11 = arith.addf %7, %10 : vector<10x16x4xbf16>
    %12 = vector.extract_strided_slice %11 {offsets = [0, 0, 0], sizes = [8, 16, 4], strides = [1, 1, 1]} : vector<10x16x4xbf16> to vector<8x16x4xbf16>
    %13 = vector.extract_strided_slice %11 {offsets = [1, 0, 0], sizes = [8, 16, 4], strides = [1, 1, 1]} : vector<10x16x4xbf16> to vector<8x16x4xbf16>
    %14 = arith.addf %12, %13 : vector<8x16x4xbf16>
    %15 = vector.extract_strided_slice %11 {offsets = [2, 0, 0], sizes = [8, 16, 4], strides = [1, 1, 1]} : vector<10x16x4xbf16> to vector<8x16x4xbf16>
    %16 = arith.addf %14, %15 : vector<8x16x4xbf16>
    %17 = vector.shape_cast %16 : vector<8x16x4xbf16> to vector<128x4xbf16>
    %c0_6 = arith.constant 0 : index
    %c0_7 = arith.constant 0 : index
    %18 = vector.load %arg5[%c0_6, %c0_7] : memref<4x96xbf16, #tpu.memory_space<vmem>>, vector<4x96xbf16>
    %cst = arith.constant dense<0.000000e+00> : vector<128x96xf32>
    %19 = tpu.matmul %17, %18, %cst {dimension_numbers = #tpu.dot_dimension_numbers<[1], [0], [0], [1], [0, 0, 1, 1], [], []>} : vector<128x4xbf16>, vector<4x96xbf16>, vector<128x96xf32> -> vector<128x96xf32>
    %c0_8 = arith.constant 0 : index
    %c0_9 = arith.constant 0 : index
    %20 = vector.load %arg6[%c0_8, %c0_9] : memref<1x96xf32, #tpu.memory_space<vmem>>, vector<1x96xf32>
    %21 = vector.broadcast %20 : vector<1x96xf32> to vector<128x96xf32>
    %22 = arith.addf %19, %21 : vector<128x96xf32>
    %cst_10 = arith.constant 0.000000e+00 : f32
    %23 = vector.broadcast %cst_10 : f32 to vector<128x96xf32>
    %24 = arith.maximumf %22, %23 : vector<128x96xf32>
    %c1_i32 = arith.constant 1 : i32
    %25 = arith.addi %0, %c1_i32 : i32
    %c0_11 = arith.constant 0 : index
    %26 = arith.index_cast %25 : i32 to index
    %c1_12 = arith.constant 1 : index
    %c0_13 = arith.constant 0 : index
    %27 = vector.load %arg2[%c0_11, %26, %c1_12, %c0_13] : memref<1x18x18x4xbf16, #tpu.memory_space<vmem>>, vector<1x8x16x4xbf16>
    %28 = vector.shape_cast %27 : vector<1x8x16x4xbf16> to vector<8x16x4xbf16>
    %29 = vector.shape_cast %28 : vector<8x16x4xbf16> to vector<128x4xbf16>
    %c0_14 = arith.constant 0 : index
    %c0_15 = arith.constant 0 : index
    %30 = vector.load %arg7[%c0_14, %c0_15] : memref<4x96xbf16, #tpu.memory_space<vmem>>, vector<4x96xbf16>
    %cst_16 = arith.constant dense<0.000000e+00> : vector<128x96xf32>
    %31 = tpu.matmul %29, %30, %cst_16 {dimension_numbers = #tpu.dot_dimension_numbers<[1], [0], [0], [1], [0, 0, 1, 1], [], []>} : vector<128x4xbf16>, vector<4x96xbf16>, vector<128x96xf32> -> vector<128x96xf32>
    %c0_17 = arith.constant 0 : index
    %c0_18 = arith.constant 0 : index
    %32 = vector.load %arg8[%c0_17, %c0_18] : memref<1x96xf32, #tpu.memory_space<vmem>>, vector<1x96xf32>
    %33 = vector.broadcast %32 : vector<1x96xf32> to vector<128x96xf32>
    %34 = arith.addf %31, %33 : vector<128x96xf32>
    %cst_19 = arith.constant 0.000000e+00 : f32
    %35 = vector.broadcast %cst_19 : f32 to vector<128x96xf32>
    %36 = arith.maximumf %34, %35 : vector<128x96xf32>
    %c0_i32 = arith.constant 0 : i32
    %37 = arith.addi %0, %c0_i32 : i32
    %c0_20 = arith.constant 0 : index
    %38 = arith.index_cast %37 : i32 to index
    %c0_21 = arith.constant 0 : index
    %c0_22 = arith.constant 0 : index
    %39 = vector.load %arg3[%c0_20, %38, %c0_21, %c0_22] : memref<1x18x18x64xbf16, #tpu.memory_space<vmem>>, vector<1x8x16x64xbf16>
    %40 = vector.shape_cast %39 : vector<1x8x16x64xbf16> to vector<8x16x64xbf16>
    %c0_i32_23 = arith.constant 0 : i32
    %41 = arith.addi %0, %c0_i32_23 : i32
    %c0_24 = arith.constant 0 : index
    %42 = arith.index_cast %41 : i32 to index
    %c1_25 = arith.constant 1 : index
    %c0_26 = arith.constant 0 : index
    %43 = vector.load %arg3[%c0_24, %42, %c1_25, %c0_26] : memref<1x18x18x64xbf16, #tpu.memory_space<vmem>>, vector<1x8x16x64xbf16>
    %44 = vector.shape_cast %43 : vector<1x8x16x64xbf16> to vector<8x16x64xbf16>
    %c0_i32_27 = arith.constant 0 : i32
    %45 = arith.addi %0, %c0_i32_27 : i32
    %c0_28 = arith.constant 0 : index
    %46 = arith.index_cast %45 : i32 to index
    %c2_29 = arith.constant 2 : index
    %c0_30 = arith.constant 0 : index
    %47 = vector.load %arg3[%c0_28, %46, %c2_29, %c0_30] : memref<1x18x18x64xbf16, #tpu.memory_space<vmem>>, vector<1x8x16x64xbf16>
    %48 = vector.shape_cast %47 : vector<1x8x16x64xbf16> to vector<8x16x64xbf16>
    %c1_i32_31 = arith.constant 1 : i32
    %49 = arith.addi %0, %c1_i32_31 : i32
    %c0_32 = arith.constant 0 : index
    %50 = arith.index_cast %49 : i32 to index
    %c0_33 = arith.constant 0 : index
    %c0_34 = arith.constant 0 : index
    %51 = vector.load %arg3[%c0_32, %50, %c0_33, %c0_34] : memref<1x18x18x64xbf16, #tpu.memory_space<vmem>>, vector<1x8x16x64xbf16>
    %52 = vector.shape_cast %51 : vector<1x8x16x64xbf16> to vector<8x16x64xbf16>
    %c1_i32_35 = arith.constant 1 : i32
    %53 = arith.addi %0, %c1_i32_35 : i32
    %c0_36 = arith.constant 0 : index
    %54 = arith.index_cast %53 : i32 to index
    %c1_37 = arith.constant 1 : index
    %c0_38 = arith.constant 0 : index
    %55 = vector.load %arg3[%c0_36, %54, %c1_37, %c0_38] : memref<1x18x18x64xbf16, #tpu.memory_space<vmem>>, vector<1x8x16x64xbf16>
    %56 = vector.shape_cast %55 : vector<1x8x16x64xbf16> to vector<8x16x64xbf16>
    %c1_i32_39 = arith.constant 1 : i32
    %57 = arith.addi %0, %c1_i32_39 : i32
    %c0_40 = arith.constant 0 : index
    %58 = arith.index_cast %57 : i32 to index
    %c2_41 = arith.constant 2 : index
    %c0_42 = arith.constant 0 : index
    %59 = vector.load %arg3[%c0_40, %58, %c2_41, %c0_42] : memref<1x18x18x64xbf16, #tpu.memory_space<vmem>>, vector<1x8x16x64xbf16>
    %60 = vector.shape_cast %59 : vector<1x8x16x64xbf16> to vector<8x16x64xbf16>
    %c2_i32 = arith.constant 2 : i32
    %61 = arith.addi %0, %c2_i32 : i32
    %c0_43 = arith.constant 0 : index
    %62 = arith.index_cast %61 : i32 to index
    %c0_44 = arith.constant 0 : index
    %c0_45 = arith.constant 0 : index
    %63 = vector.load %arg3[%c0_43, %62, %c0_44, %c0_45] : memref<1x18x18x64xbf16, #tpu.memory_space<vmem>>, vector<1x8x16x64xbf16>
    %64 = vector.shape_cast %63 : vector<1x8x16x64xbf16> to vector<8x16x64xbf16>
    %c2_i32_46 = arith.constant 2 : i32
    %65 = arith.addi %0, %c2_i32_46 : i32
    %c0_47 = arith.constant 0 : index
    %66 = arith.index_cast %65 : i32 to index
    %c1_48 = arith.constant 1 : index
    %c0_49 = arith.constant 0 : index
    %67 = vector.load %arg3[%c0_47, %66, %c1_48, %c0_49] : memref<1x18x18x64xbf16, #tpu.memory_space<vmem>>, vector<1x8x16x64xbf16>
    %68 = vector.shape_cast %67 : vector<1x8x16x64xbf16> to vector<8x16x64xbf16>
    %c2_i32_50 = arith.constant 2 : i32
    %69 = arith.addi %0, %c2_i32_50 : i32
    %c0_51 = arith.constant 0 : index
    %70 = arith.index_cast %69 : i32 to index
    %c2_52 = arith.constant 2 : index
    %c0_53 = arith.constant 0 : index
    %71 = vector.load %arg3[%c0_51, %70, %c2_52, %c0_53] : memref<1x18x18x64xbf16, #tpu.memory_space<vmem>>, vector<1x8x16x64xbf16>
    %72 = vector.shape_cast %71 : vector<1x8x16x64xbf16> to vector<8x16x64xbf16>
    %73 = tpu.concatenate %40, %44, %48, %52, %56, %60, %64, %68, %72 in 2 : vector<8x16x64xbf16>, vector<8x16x64xbf16>, vector<8x16x64xbf16>, vector<8x16x64xbf16>, vector<8x16x64xbf16>, vector<8x16x64xbf16>, vector<8x16x64xbf16>, vector<8x16x64xbf16>, vector<8x16x64xbf16> -> vector<8x16x576xbf16>
    %74 = vector.shape_cast %73 : vector<8x16x576xbf16> to vector<128x576xbf16>
    %c0_54 = arith.constant 0 : index
    %c0_55 = arith.constant 0 : index
    %75 = vector.load %arg9[%c0_54, %c0_55] : memref<576x96xbf16, #tpu.memory_space<vmem>>, vector<576x96xbf16>
    %cst_56 = arith.constant dense<0.000000e+00> : vector<128x96xf32>
    %76 = tpu.matmul %74, %75, %cst_56 {dimension_numbers = #tpu.dot_dimension_numbers<[1], [0], [0], [1], [0, 0, 1, 1], [], []>} : vector<128x576xbf16>, vector<576x96xbf16>, vector<128x96xf32> -> vector<128x96xf32>
    %c0_57 = arith.constant 0 : index
    %c0_58 = arith.constant 0 : index
    %77 = vector.load %arg10[%c0_57, %c0_58] : memref<1x96xf32, #tpu.memory_space<vmem>>, vector<1x96xf32>
    %78 = vector.broadcast %77 : vector<1x96xf32> to vector<128x96xf32>
    %79 = arith.addf %76, %78 : vector<128x96xf32>
    %cst_59 = arith.constant 0.000000e+00 : f32
    %80 = vector.broadcast %cst_59 : f32 to vector<128x96xf32>
    %81 = arith.maximumf %79, %80 : vector<128x96xf32>
    %c0_i32_60 = arith.constant 0 : i32
    %82 = arith.addi %0, %c0_i32_60 : i32
    %c0_61 = arith.constant 0 : index
    %83 = arith.index_cast %82 : i32 to index
    %c0_62 = arith.constant 0 : index
    %c0_63 = arith.constant 0 : index
    %84 = vector.load %arg4[%c0_61, %83, %c0_62, %c0_63] : memref<1x18x18x96xbf16, #tpu.memory_space<vmem>>, vector<1x8x16x96xbf16>
    %85 = vector.shape_cast %84 : vector<1x8x16x96xbf16> to vector<8x16x96xbf16>
    %c0_i32_64 = arith.constant 0 : i32
    %86 = arith.addi %0, %c0_i32_64 : i32
    %c0_65 = arith.constant 0 : index
    %87 = arith.index_cast %86 : i32 to index
    %c1_66 = arith.constant 1 : index
    %c0_67 = arith.constant 0 : index
    %88 = vector.load %arg4[%c0_65, %87, %c1_66, %c0_67] : memref<1x18x18x96xbf16, #tpu.memory_space<vmem>>, vector<1x8x16x96xbf16>
    %89 = vector.shape_cast %88 : vector<1x8x16x96xbf16> to vector<8x16x96xbf16>
    %c0_i32_68 = arith.constant 0 : i32
    %90 = arith.addi %0, %c0_i32_68 : i32
    %c0_69 = arith.constant 0 : index
    %91 = arith.index_cast %90 : i32 to index
    %c2_70 = arith.constant 2 : index
    %c0_71 = arith.constant 0 : index
    %92 = vector.load %arg4[%c0_69, %91, %c2_70, %c0_71] : memref<1x18x18x96xbf16, #tpu.memory_space<vmem>>, vector<1x8x16x96xbf16>
    %93 = vector.shape_cast %92 : vector<1x8x16x96xbf16> to vector<8x16x96xbf16>
    %c1_i32_72 = arith.constant 1 : i32
    %94 = arith.addi %0, %c1_i32_72 : i32
    %c0_73 = arith.constant 0 : index
    %95 = arith.index_cast %94 : i32 to index
    %c0_74 = arith.constant 0 : index
    %c0_75 = arith.constant 0 : index
    %96 = vector.load %arg4[%c0_73, %95, %c0_74, %c0_75] : memref<1x18x18x96xbf16, #tpu.memory_space<vmem>>, vector<1x8x16x96xbf16>
    %97 = vector.shape_cast %96 : vector<1x8x16x96xbf16> to vector<8x16x96xbf16>
    %c1_i32_76 = arith.constant 1 : i32
    %98 = arith.addi %0, %c1_i32_76 : i32
    %c0_77 = arith.constant 0 : index
    %99 = arith.index_cast %98 : i32 to index
    %c1_78 = arith.constant 1 : index
    %c0_79 = arith.constant 0 : index
    %100 = vector.load %arg4[%c0_77, %99, %c1_78, %c0_79] : memref<1x18x18x96xbf16, #tpu.memory_space<vmem>>, vector<1x8x16x96xbf16>
    %101 = vector.shape_cast %100 : vector<1x8x16x96xbf16> to vector<8x16x96xbf16>
    %c1_i32_80 = arith.constant 1 : i32
    %102 = arith.addi %0, %c1_i32_80 : i32
    %c0_81 = arith.constant 0 : index
    %103 = arith.index_cast %102 : i32 to index
    %c2_82 = arith.constant 2 : index
    %c0_83 = arith.constant 0 : index
    %104 = vector.load %arg4[%c0_81, %103, %c2_82, %c0_83] : memref<1x18x18x96xbf16, #tpu.memory_space<vmem>>, vector<1x8x16x96xbf16>
    %105 = vector.shape_cast %104 : vector<1x8x16x96xbf16> to vector<8x16x96xbf16>
    %c2_i32_84 = arith.constant 2 : i32
    %106 = arith.addi %0, %c2_i32_84 : i32
    %c0_85 = arith.constant 0 : index
    %107 = arith.index_cast %106 : i32 to index
    %c0_86 = arith.constant 0 : index
    %c0_87 = arith.constant 0 : index
    %108 = vector.load %arg4[%c0_85, %107, %c0_86, %c0_87] : memref<1x18x18x96xbf16, #tpu.memory_space<vmem>>, vector<1x8x16x96xbf16>
    %109 = vector.shape_cast %108 : vector<1x8x16x96xbf16> to vector<8x16x96xbf16>
    %c2_i32_88 = arith.constant 2 : i32
    %110 = arith.addi %0, %c2_i32_88 : i32
    %c0_89 = arith.constant 0 : index
    %111 = arith.index_cast %110 : i32 to index
    %c1_90 = arith.constant 1 : index
    %c0_91 = arith.constant 0 : index
    %112 = vector.load %arg4[%c0_89, %111, %c1_90, %c0_91] : memref<1x18x18x96xbf16, #tpu.memory_space<vmem>>, vector<1x8x16x96xbf16>
    %113 = vector.shape_cast %112 : vector<1x8x16x96xbf16> to vector<8x16x96xbf16>
    %c2_i32_92 = arith.constant 2 : i32
    %114 = arith.addi %0, %c2_i32_92 : i32
    %c0_93 = arith.constant 0 : index
    %115 = arith.index_cast %114 : i32 to index
    %c2_94 = arith.constant 2 : index
    %c0_95 = arith.constant 0 : index
    %116 = vector.load %arg4[%c0_93, %115, %c2_94, %c0_95] : memref<1x18x18x96xbf16, #tpu.memory_space<vmem>>, vector<1x8x16x96xbf16>
    %117 = vector.shape_cast %116 : vector<1x8x16x96xbf16> to vector<8x16x96xbf16>
    %118 = tpu.concatenate %85, %89, %93, %97, %101, %105, %109, %113, %117 in 2 : vector<8x16x96xbf16>, vector<8x16x96xbf16>, vector<8x16x96xbf16>, vector<8x16x96xbf16>, vector<8x16x96xbf16>, vector<8x16x96xbf16>, vector<8x16x96xbf16>, vector<8x16x96xbf16>, vector<8x16x96xbf16> -> vector<8x16x864xbf16>
    %119 = vector.shape_cast %118 : vector<8x16x864xbf16> to vector<128x864xbf16>
    %c0_96 = arith.constant 0 : index
    %c0_97 = arith.constant 0 : index
    %120 = vector.load %arg11[%c0_96, %c0_97] : memref<864x96xbf16, #tpu.memory_space<vmem>>, vector<864x96xbf16>
    %cst_98 = arith.constant dense<0.000000e+00> : vector<128x96xf32>
    %121 = tpu.matmul %119, %120, %cst_98 {dimension_numbers = #tpu.dot_dimension_numbers<[1], [0], [0], [1], [0, 0, 1, 1], [], []>} : vector<128x864xbf16>, vector<864x96xbf16>, vector<128x96xf32> -> vector<128x96xf32>
    %c0_99 = arith.constant 0 : index
    %c0_100 = arith.constant 0 : index
    %122 = vector.load %arg12[%c0_99, %c0_100] : memref<1x96xf32, #tpu.memory_space<vmem>>, vector<1x96xf32>
    %123 = vector.broadcast %122 : vector<1x96xf32> to vector<128x96xf32>
    %124 = arith.addf %121, %123 : vector<128x96xf32>
    %cst_101 = arith.constant 0.000000e+00 : f32
    %125 = vector.broadcast %cst_101 : f32 to vector<128x96xf32>
    %126 = arith.maximumf %124, %125 : vector<128x96xf32>
    %127 = tpu.concatenate %24, %36, %81, %126 in 1 : vector<128x96xf32>, vector<128x96xf32>, vector<128x96xf32>, vector<128x96xf32> -> vector<128x384xf32>
    %c0_102 = arith.constant 0 : index
    %c0_103 = arith.constant 0 : index
    %c0_104 = arith.constant 0 : index
    %128 = vector.load %arg13[%c0_102, %c0_103, %c0_104] : memref<1x128x384xf32, #tpu.memory_space<vmem>>, vector<1x128x384xf32>
    %129 = vector.shape_cast %128 : vector<1x128x384xf32> to vector<128x384xf32>
    %130 = vector.shape_cast %127 : vector<128x384xf32> to vector<1x128x384xf32>
    tpu.vector_store %arg13[%c0_102, %c0_103, %c0_104], %130 {strides = array<i32>} : memref<1x128x384xf32, #tpu.memory_space<vmem>>, vector<1x128x384xf32>,
    return
  }
  func.func @transform_0(%arg0: i32, %arg1: i32) -> (i32, i32, i32, i32) {
    %c0_i32 = arith.constant 0 : i32
    %c0_i32_0 = arith.constant 0 : i32
    %c0_i32_1 = arith.constant 0 : i32
    %c0_i32_2 = arith.constant 0 : i32
    return %arg0, %c0_i32, %c0_i32_0, %c0_i32_1 : i32, i32, i32, i32
  }
  func.func @transform_1(%arg0: i32, %arg1: i32) -> (i32, i32, i32, i32) {
    %c0_i32 = arith.constant 0 : i32
    %c0_i32_0 = arith.constant 0 : i32
    %c0_i32_1 = arith.constant 0 : i32
    %c0_i32_2 = arith.constant 0 : i32
    return %arg0, %c0_i32, %c0_i32_0, %c0_i32_1 : i32, i32, i32, i32
  }
  func.func @transform_2(%arg0: i32, %arg1: i32) -> (i32, i32, i32, i32) {
    %c0_i32 = arith.constant 0 : i32
    %c0_i32_0 = arith.constant 0 : i32
    %c0_i32_1 = arith.constant 0 : i32
    %c0_i32_2 = arith.constant 0 : i32
    return %arg0, %c0_i32, %c0_i32_0, %c0_i32_1 : i32, i32, i32, i32
  }
  func.func @transform_3(%arg0: i32, %arg1: i32) -> (i32, i32) {
    %c0_i32 = arith.constant 0 : i32
    %c0_i32_0 = arith.constant 0 : i32
    %c0_i32_1 = arith.constant 0 : i32
    return %c0_i32, %c0_i32_0 : i32, i32
  }
  func.func @transform_4(%arg0: i32, %arg1: i32) -> (i32, i32) {
    %c0_i32 = arith.constant 0 : i32
    %c0_i32_0 = arith.constant 0 : i32
    %c0_i32_1 = arith.constant 0 : i32
    return %c0_i32, %c0_i32_0 : i32, i32
  }
  func.func @transform_5(%arg0: i32, %arg1: i32) -> (i32, i32) {
    %c0_i32 = arith.constant 0 : i32
    %c0_i32_0 = arith.constant 0 : i32
    %c0_i32_1 = arith.constant 0 : i32
    return %c0_i32, %c0_i32_0 : i32, i32
  }
  func.func @transform_6(%arg0: i32, %arg1: i32) -> (i32, i32) {
    %c0_i32 = arith.constant 0 : i32
    %c0_i32_0 = arith.constant 0 : i32
    %c0_i32_1 = arith.constant 0 : i32
    return %c0_i32, %c0_i32_0 : i32, i32
  }
  func.func @transform_7(%arg0: i32, %arg1: i32) -> (i32, i32) {
    %c0_i32 = arith.constant 0 : i32
    %c0_i32_0 = arith.constant 0 : i32
    %c0_i32_1 = arith.constant 0 : i32
    return %c0_i32, %c0_i32_0 : i32, i32
  }
  func.func @transform_8(%arg0: i32, %arg1: i32) -> (i32, i32) {
    %c0_i32 = arith.constant 0 : i32
    %c0_i32_0 = arith.constant 0 : i32
    %c0_i32_1 = arith.constant 0 : i32
    return %c0_i32, %c0_i32_0 : i32, i32
  }
  func.func @transform_9(%arg0: i32, %arg1: i32) -> (i32, i32) {
    %c0_i32 = arith.constant 0 : i32
    %c0_i32_0 = arith.constant 0 : i32
    %c0_i32_1 = arith.constant 0 : i32
    return %c0_i32, %c0_i32_0 : i32, i32
  }
  func.func @transform_10(%arg0: i32, %arg1: i32) -> (i32, i32) {
    %c0_i32 = arith.constant 0 : i32
    %c0_i32_0 = arith.constant 0 : i32
    %c0_i32_1 = arith.constant 0 : i32
    return %c0_i32, %c0_i32_0 : i32, i32
  }
  func.func @transform_11(%arg0: i32, %arg1: i32) -> (i32, i32, i32) {
    %c0_i32 = arith.constant 0 : i32
    %c0_i32_0 = arith.constant 0 : i32
    return %arg0, %arg1, %c0_i32 : i32, i32, i32
  }
}

</mosaic_0001>

<llo_original>
// kernel: inception_a_forward.3
$region0: #{inception_a_forward.3}
  #allocation0 [shape = 'u32[]', space=smem, size = 0x4, offset = 0x4, fixed_abs, tag = 'smem constant byte address 0x4 - core index']
  #allocation1 [shape = 'u32[72,128]{1,0:T(1,128)}', space=vmem, size = 0x9000, scoped, tag = 'internal scratch']
  %s0 = inlined_call_operand.vmem [shape: bf16[512,4], index: 0, kind: input, shape index: {}]
  %s1 = inlined_call_operand.vmem [shape: bf16[4,128], index: 1, kind: input, shape index: {}]
  %s2 = inlined_call_operand.vmem [shape: f32[1,128], index: 2, kind: input, shape index: {}]
  %s3 = inlined_call_operand.vmem [shape: bf16[512,64], index: 3, kind: output, shape index: {0}]
  %s4 = inlined_call_operand.vmem [shape: bf16[512,64], index: 4, kind: output, shape index: {1}]
  %5 = xla_tuple %s3, %s4
  %s6 = sld [smem:[#allocation0]]
  $region53: #{inception_a_forward.3} parent=0
    _
  %s8 = ssub.s32 1, %s6
  %s9 = scalar_select 0, %s8, %s6
  loop: start=0, step=1, limit=4
  $region2: #{inception_a_forward.3} parent=0 // loop_pre_header
    _
  $region3: #{inception_a_forward.3} parent=0 // loop_header
    %s11 = sphi 0, %s15
    %p12 = scmp.ge.s32.totalorder %s11, 4
    %s21 = sphi 0, %s23
    %s24 = sphi 0, %s21
    %s25 = sphi 0, %s24
    %s41 = sphi 0, %s25
    %s45 = sphi 0, %s45
    %s47 = sphi 0, %s45
    %s48 = sphi 0, %s47
    %s62 = sphi 0, %s48
    %s66 = sphi 0, %s66
    %s68 = sphi 0, %s66
    %s69 = sphi 0, %s68
    %s83 = sphi 0, %s69
    %s89 = sphi 0, %s91
    %s92 = sphi 0, %s89
    %s93 = sphi 0, %s92
    %s109 = sphi 0, %s93
    %s115 = sphi 0, %s117
    %s118 = sphi 0, %s115
    %s119 = sphi 0, %s118
    %s135 = sphi 0, %s119
  $region4: #{inception_a_forward.3} parent=0 // loop_header_branch
    %14 = sbr.rel (%p12) target = $region8
  $region5: #{inception_a_forward.3} parent=0 // loop_body
    %s16 = ssub.s32 %s11, 1
    %s17 = ssub.s32 %s11, 2
    %s18 = sadd.s32 %s11, 1
    %s19 = ssub.s32 %s11, %s18
    %p20 = scmp.eq.s32.totalorder %s19, 0
    %s22 = sadd.s32 %s21, 1
    %s23 = scalar_select %p20, %s21, %s22
    %p26 = pneg %p20
    %p27 = scmp.eq.s32.totalorder %s11, 1
    %p28 = por %p26, %p27
    %p29 = scmp.ne.s32.totalorder %s21, %s24
    %p30 = scmp.eq.s32.totalorder %s11, 0
    %p31 = por %p29, %p30
    %p32 = scmp.ne.s32.totalorder %s21, %s24
    %p33 = scmp.eq.s32.totalorder %s16, 1
    %p34 = por %p32, %p33
    %p35 = scmp.ne.s32.totalorder %s24, %s25
    %p36 = scmp.eq.s32.totalorder %s16, 0
    %p37 = por %p35, %p36
    %p38 = scmp.ne.s32.totalorder %s24, %s25
    %p39 = scmp.eq.s32.totalorder %s17, 1
    %p40 = por %p38, %p39
    %p42 = scmp.ne.s32.totalorder %s25, %s41
    %p43 = scmp.eq.s32.totalorder %s17, 0
    %p44 = por %p42, %p43
    %s46 = sadd.s32 %s45, 1
    %p49 = scmp.eq.s32.totalorder %s11, 1
    %p50 = scmp.ne.s32.totalorder %s45, %s47
    %p51 = scmp.eq.s32.totalorder %s11, 0
    %p52 = por %p50, %p51
    %p53 = scmp.ne.s32.totalorder %s45, %s47
    %p54 = scmp.eq.s32.totalorder %s16, 1
    %p55 = por %p53, %p54
    %p56 = scmp.ne.s32.totalorder %s47, %s48
    %p57 = scmp.eq.s32.totalorder %s16, 0
    %p58 = por %p56, %p57
    %p59 = scmp.ne.s32.totalorder %s47, %s48
    %p60 = scmp.eq.s32.totalorder %s17, 1
    %p61 = por %p59, %p60
    %p63 = scmp.ne.s32.totalorder %s48, %s62
    %p64 = scmp.eq.s32.totalorder %s17, 0
    %p65 = por %p63, %p64
    %s67 = sadd.s32 %s66, 1
    %p70 = scmp.eq.s32.totalorder %s11, 1
    %p71 = scmp.ne.s32.totalorder %s66, %s68
    %p72 = scmp.eq.s32.totalorder %s11, 0
    %p73 = por %p71, %p72
    %p74 = scmp.ne.s32.totalorder %s66, %s68
    %p75 = scmp.eq.s32.totalorder %s16, 1
    %p76 = por %p74, %p75
    %p77 = scmp.ne.s32.totalorder %s68, %s69
    %p78 = scmp.eq.s32.totalorder %s16, 0
    %p79 = por %p77, %p78
    %p80 = scmp.ne.s32.totalorder %s68, %s69
    %p81 = scmp.eq.s32.totalorder %s17, 1
    %p82 = por %p80, %p81
    %p84 = scmp.ne.s32.totalorder %s69, %s83
    %p85 = scmp.eq.s32.totalorder %s17, 0
    %p86 = por %p84, %p85
    %s87 = ssub.s32 %s11, %s18
    %p88 = scmp.eq.s32.totalorder %s87, 0
    %s90 = sadd.s32 %s89, 1
    %s91 = scalar_select %p88, %s89, %s90
    %p94 = pneg %p88
    %p95 = scmp.eq.s32.totalorder %s11, 1
    %p96 = por %p94, %p95
    %p97 = scmp.ne.s32.totalorder %s89, %s92
    %p98 = scmp.eq.s32.totalorder %s11, 0
    %p99 = por %p97, %p98
    %p100 = scmp.ne.s32.totalorder %s89, %s92
    %p101 = scmp.eq.s32.totalorder %s16, 1
    %p102 = por %p100, %p101
    %p103 = scmp.ne.s32.totalorder %s92, %s93
    %p104 = scmp.eq.s32.totalorder %s16, 0
    %p105 = por %p103, %p104
    %p106 = scmp.ne.s32.totalorder %s92, %s93
    %p107 = scmp.eq.s32.totalorder %s17, 1
    %p108 = por %p106, %p107
    %p110 = scmp.ne.s32.totalorder %s93, %s109
    %p111 = scmp.eq.s32.totalorder %s17, 0
    %p112 = por %p110, %p111
    %s113 = ssub.s32 %s11, %s18
    %p114 = scmp.eq.s32.totalorder %s113, 0
    %s116 = sadd.s32 %s115, 1
    %s117 = scalar_select %p114, %s115, %s116
    %p120 = pneg %p114
    %p121 = scmp.eq.s32.totalorder %s11, 1
    %p122 = por %p120, %p121
    %p123 = scmp.ne.s32.totalorder %s115, %s118
    %p124 = scmp.eq.s32.totalorder %s11, 0
    %p125 = por %p123, %p124
    %p126 = scmp.ne.s32.totalorder %s115, %s118
    %p127 = scmp.eq.s32.totalorder %s16, 1
    %p128 = por %p126, %p127
    %p129 = scmp.ne.s32.totalorder %s118, %s119
    %p130 = scmp.eq.s32.totalorder %s16, 0
    %p131 = por %p129, %p130
    %p132 = scmp.ne.s32.totalorder %s118, %s119
    %p133 = scmp.eq.s32.totalorder %s17, 1
    %p134 = por %p132, %p133
    %p136 = scmp.ne.s32.totalorder %s119, %s135
    %p137 = scmp.eq.s32.totalorder %s17, 0
    %p138 = por %p136, %p137
    %p139 = scmp.le.s32.totalorder 1, %s11
    %p140 = scmp.lt.s32.totalorder %s11, 3
    %p141 = pnand %p139, %p140
    %p142 = pneg %p141
    // Predicated region
    $region9: #{inception_a_forward.3} parent=5 // pred_check
      _
    $region10: #{inception_a_forward.3} parent=5 // pred_check_branch
      %144 = sbr.rel (%p141) target = $region12
    $region11: #{inception_a_forward.3} parent=5 // pred_region
      %s145 = ssub.s32 %s11, 1
      // Predicated region
      $region13: #{inception_a_forward.3} parent=11 // pred_check
        %p146 = pneg %p58
      $region14: #{inception_a_forward.3} parent=11 // pred_check_branch
        %148 = sbr.rel (%p146) target = $region16
      $region15: #{inception_a_forward.3} parent=11 // pred_region
        _
      $region16: #{inception_a_forward.3} parent=11 // pred_fallthru
        _
      // Predicated region
      $region17: #{inception_a_forward.3} parent=11 // pred_check
        %p149 = pneg %p79
      $region18: #{inception_a_forward.3} parent=11 // pred_check_branch
        %151 = sbr.rel (%p149) target = $region20
      $region19: #{inception_a_forward.3} parent=11 // pred_region
        _
      $region20: #{inception_a_forward.3} parent=11 // pred_fallthru
        _
    $region12: #{inception_a_forward.3} parent=5 // pred_fallthru
      _
    %p152 = scmp.lt.s32.totalorder %s11, 2
    // Predicated region
    $region21: #{inception_a_forward.3} parent=5 // pred_check
      %p153 = pneg %p152
    $region22: #{inception_a_forward.3} parent=5 // pred_check_branch
      %155 = sbr.rel (%p153) target = $region24
    $region23: #{inception_a_forward.3} parent=5 // pred_region
      // Predicated region
      $region25: #{inception_a_forward.3} parent=23 // pred_check
        %p156 = pneg %p31
      $region26: #{inception_a_forward.3} parent=23 // pred_check_branch
        %158 = sbr.rel (%p156) target = $region28
      $region27: #{inception_a_forward.3} parent=23 // pred_region
        %s159 = smul.u32 32, %s11
        %p160 = scmp.lt.s32.totalorder %s159, 63
        %s161 = scalar_select %p160, %s159, 63
        %s162 = smul.addr %s161, 4
        %s163 = scalar_lea.vmem %s0, %s162
        %s164 = smul.u32 32, %s11
      $region28: #{inception_a_forward.3} parent=23 // pred_fallthru
        _
    $region24: #{inception_a_forward.3} parent=5 // pred_fallthru
      _
    %p165 = scmp.le.s32.totalorder 1, %s11
    %p166 = scmp.lt.s32.totalorder %s11, 3
    %p167 = pnand %p165, %p166
    %p168 = pneg %p167
    // Predicated region
    $region29: #{inception_a_forward.3} parent=5 // pred_check
      _
    $region30: #{inception_a_forward.3} parent=5 // pred_check_branch
      %170 = sbr.rel (%p167) target = $region32
    $region31: #{inception_a_forward.3} parent=5 // pred_region
      %s171 = ssub.s32 %s11, 1
      %s172 = smul.u32 32, %s16
      %p173 = scmp.lt.s32.totalorder %s172, 63
      %s174 = scalar_select %p173, %s172, 63
      %s175 = smul.addr %s174, 4
      %s176 = scalar_lea.vmem %s0, %s175
      %p177 = pneg %p37
      %p178 = pneg %p34
      %p179 = pneg %p58
      %p180 = pneg %p55
      %p181 = pneg %p79
      %p182 = pneg %p76
      %p183 = pneg %p105
      %p184 = pneg %p102
      %s185 = smul.u32 32, %s16
      %p186 = scmp.lt.s32.totalorder %s185, 63
      %s187 = scalar_select %p186, %s185, 63
      %s188 = smul.addr %s187, 4
      %s189 = scalar_lea.vmem %s3, %s188
      %p190 = pneg %p131
      %p191 = pneg %p128
      %s192 = smul.u32 32, %s16
      %p193 = scmp.lt.s32.totalorder %s192, 63
      %s194 = scalar_select %p193, %s192, 63
      %s195 = smul.addr %s194, 4
      %s196 = scalar_lea.vmem %s4, %s195
      %s197 = smul.u32 32, %s16
      %p198 = scmp.lt.s32.totalorder %s197, 63
      %s199 = scalar_select %p198, %s197, 63
      %s200 = smul.addr %s199, 4
      %s201 = scalar_lea.vmem %s0, %s200
      %s202 = smul.u32 32, %s16
      %s203 = smul.u32 32, %s16
      %p204 = scmp.lt.s32.totalorder %s203, 63
      %s205 = scalar_select %p204, %s203, 63
      %s206 = smul.addr %s205, 4
      %s207 = scalar_lea.vmem %s3, %s206
      %s208 = smul.u32 32, %s16
      %s209 = smul.u32 32, %s16
      %p210 = scmp.lt.s32.totalorder %s209, 63
      %s211 = scalar_select %p210, %s209, 63
      %s212 = smul.addr %s211, 4
      %s213 = scalar_lea.vmem %s4, %s212
      %s214 = smul.u32 32, %s16
      %v216 = vld [vmem:[%s201] sm:$0xf]
      %v217 = vld [vmem:[%s201 + $0x4] sm:$0xf]
      %v218 = vld [vmem:[%s201 + $0x8] sm:$0xf]
      %v219 = vld [vmem:[%s201 + $0xc] sm:$0xf]
      %v220 = vld [vmem:[%s201 + $0x10] sm:$0xf]
      %v221 = vld [vmem:[%s201 + $0x14] sm:$0xf]
      %v222 = vld [vmem:[%s201 + $0x18] sm:$0xf]
      %v223 = vld [vmem:[%s201 + $0x1c] sm:$0xf]
      %v224 = vld [vmem:[%s201 + $0x20] sm:$0xf]
      %v225 = vld [vmem:[%s201 + $0x24] sm:$0xf]
      %v226 = vld [vmem:[%s201 + $0x28] sm:$0xf]
      %v227 = vld [vmem:[%s201 + $0x2c] sm:$0xf]
      %v228 = vld [vmem:[%s201 + $0x30] sm:$0xf]
      %v229 = vld [vmem:[%s201 + $0x34] sm:$0xf]
      %v230 = vld [vmem:[%s201 + $0x38] sm:$0xf]
      %v231 = vld [vmem:[%s201 + $0x3c] sm:$0xf]
      %v232 = vld [vmem:[%s201 + $0x40] sm:$0xf]
      %v233 = vld [vmem:[%s201 + $0x44] sm:$0xf]
      %v234 = vld [vmem:[%s201 + $0x48] sm:$0xf]
      %v235 = vld [vmem:[%s201 + $0x4c] sm:$0xf]
      %v236 = vld [vmem:[%s201 + $0x50] sm:$0xf]
      %v237 = vld [vmem:[%s201 + $0x54] sm:$0xf]
      %v238 = vld [vmem:[%s201 + $0x58] sm:$0xf]
      %v239 = vld [vmem:[%s201 + $0x5c] sm:$0xf]
      %v240 = vld [vmem:[%s201 + $0x60] sm:$0xf]
      %v241 = vld [vmem:[%s201 + $0x64] sm:$0xf]
      %v242 = vld [vmem:[%s201 + $0x68] sm:$0xf]
      %v243 = vld [vmem:[%s201 + $0x6c] sm:$0xf]
      %v244 = vld [vmem:[%s201 + $0x70] sm:$0xf]
      %v245 = vld [vmem:[%s201 + $0x74] sm:$0xf]
      %v246 = vld [vmem:[%s201 + $0x78] sm:$0xf]
      %v247 = vld [vmem:[%s201 + $0x7c] sm:$0xf]
      %v248 = vld [vmem:[%s1] sm:$0x3]
      %v249 = vld [vmem:[%s2] sm:$0x1]
      %v251 = vperm.slane %v249, 0
      %v285 = vunpack.c.l.b16 %v216
      %v286 = vunpack.c.l.b16 %v217
      %v287 = vunpack.c.l.b16 %v218
      %v288 = vunpack.c.l.b16 %v219
      %v289 = vunpack.c.l.b16 %v220
      %v290 = vunpack.c.l.b16 %v221
      %v291 = vunpack.c.l.b16 %v222
      %v292 = vunpack.c.l.b16 %v223
      %v293 = vunpack.c.l.b16 %v224
      %v294 = vunpack.c.l.b16 %v225
      %v295 = vunpack.c.l.b16 %v226
      %v296 = vunpack.c.l.b16 %v227
      %v297 = vunpack.c.l.b16 %v228
      %v298 = vunpack.c.l.b16 %v229
      %v299 = vunpack.c.l.b16 %v230
      %v300 = vunpack.c.l.b16 %v231
      %v301 = vunpack.c.l.b16 %v232
      %v302 = vunpack.c.l.b16 %v233
      %v303 = vunpack.c.l.b16 %v234
      %v304 = vunpack.c.l.b16 %v235
      %v305 = vunpack.c.l.b16 %v236
      %v306 = vunpack.c.l.b16 %v237
      %v307 = vunpack.c.l.b16 %v238
      %v308 = vunpack.c.l.b16 %v239
      %v309 = vunpack.c.l.b16 %v240
      %v310 = vunpack.c.l.b16 %v241
      %v311 = vunpack.c.l.b16 %v242
      %v312 = vunpack.c.l.b16 %v243
      %v313 = vunpack.c.l.b16 %v244
      %v314 = vunpack.c.l.b16 %v245
      %v315 = vunpack.c.l.b16 %v246
      %v316 = vunpack.c.l.b16 %v247
      %v317 = vpack.c.b16 %v286, %v285
      %v318 = vpack.c.b16 %v288, %v287
      %v319 = vpack.c.b16 %v290, %v289
      %v320 = vpack.c.b16 %v292, %v291
      %v321 = vpack.c.b16 %v294, %v293
      %v322 = vpack.c.b16 %v296, %v295
      %v323 = vpack.c.b16 %v298, %v297
      %v324 = vpack.c.b16 %v300, %v299
      %v325 = vpack.c.b16 %v302, %v301
      %v326 = vpack.c.b16 %v304, %v303
      %v327 = vpack.c.b16 %v306, %v305
      %v328 = vpack.c.b16 %v308, %v307
      %v329 = vpack.c.b16 %v310, %v309
      %v330 = vpack.c.b16 %v312, %v311
      %v331 = vpack.c.b16 %v314, %v313
      %v332 = vpack.c.b16 %v316, %v315
      %vm333 = vcmask 31744
      %v335 = vsel %vm333, %v317, 0
      %v338 = vsel %vm333, %v318, 0
      %v341 = vsel %vm333, %v319, 0
      %v344 = vsel %vm333, %v320, 0
      %v347 = vsel %vm333, %v321, 0
      %v350 = vsel %vm333, %v322, 0
      %v353 = vsel %vm333, %v323, 0
      %v356 = vsel %vm333, %v324, 0
      %v359 = vsel %vm333, %v325, 0
      %v362 = vsel %vm333, %v326, 0
      %v365 = vsel %vm333, %v327, 0
      %v368 = vsel %vm333, %v328, 0
      %v371 = vsel %vm333, %v329, 0
      %v374 = vsel %vm333, %v330, 0
      %v377 = vsel %vm333, %v331, 0
      %v380 = vsel %vm333, %v332, 0
      %vm382 = vcmask 1041408
      %v384 = vsel %vm382, %v248, 0
      %386 = vmatpush.bf16.msra.mxu0 0
      %387 = vmatpush.bf16.msra.mxu0 0
      %388 = vmatpush.bf16.msra.mxu0 0
      %389 = vmatpush.bf16.msra.mxu0 0
      %390 = vmatpush.bf16.msra.mxu0 0
      %391 = vmatpush.bf16.msra.mxu0 0
      %392 = vmatpush.bf16.msra.mxu0 0
      %393 = vmatpush.bf16.msra.mxu0 %v384
      %394 = vmatmul.bf16.gmra.mxu0 %v335
      %v395 = vpop.f32.mrf.mxu0
      %v396 = vadd.f32 %v251, %v395
      %v397 = vpop.f32.mrf.mxu0
      %v398 = vadd.f32 %v251, %v397
      %399 = vmatmul.bf16.gmra.mxu0 %v338
      %v400 = vpop.f32.mrf.mxu0
      %v401 = vadd.f32 %v251, %v400
      %v402 = vpop.f32.mrf.mxu0
      %v403 = vadd.f32 %v251, %v402
      %404 = vmatmul.bf16.gmra.mxu0 %v341
      %v405 = vpop.f32.mrf.mxu0
      %v406 = vadd.f32 %v251, %v405
      %v407 = vpop.f32.mrf.mxu0
      %v408 = vadd.f32 %v251, %v407
      %409 = vmatmul.bf16.gmra.mxu0 %v344
      %v410 = vpop.f32.mrf.mxu0
      %v411 = vadd.f32 %v251, %v410
      %v412 = vpop.f32.mrf.mxu0
      %v413 = vadd.f32 %v251, %v412
      %414 = vmatmul.bf16.gmra.mxu0 %v347
      %v415 = vpop.f32.mrf.mxu0
      %v416 = vadd.f32 %v251, %v415
      %v417 = vpop.f32.mrf.mxu0
      %v418 = vadd.f32 %v251, %v417
      %419 = vmatmul.bf16.gmra.mxu0 %v350
      %v420 = vpop.f32.mrf.mxu0
      %v421 = vadd.f32 %v251, %v420
      %v422 = vpop.f32.mrf.mxu0
      %v423 = vadd.f32 %v251, %v422
      %424 = vmatmul.bf16.gmra.mxu0 %v353
      %v425 = vpop.f32.mrf.mxu0
      %v426 = vadd.f32 %v251, %v425
      %v427 = vpop.f32.mrf.mxu0
      %v428 = vadd.f32 %v251, %v427
      %429 = vmatmul.bf16.gmra.mxu0 %v356
      %v430 = vpop.f32.mrf.mxu0
      %v431 = vadd.f32 %v251, %v430
      %v432 = vpop.f32.mrf.mxu0
      %v433 = vadd.f32 %v251, %v432
      %434 = vmatmul.bf16.gmra.mxu0 %v359
      %v435 = vpop.f32.mrf.mxu0
      %v436 = vadd.f32 %v251, %v435
      %v437 = vpop.f32.mrf.mxu0
      %v438 = vadd.f32 %v251, %v437
      %439 = vmatmul.bf16.gmra.mxu0 %v362
      %v440 = vpop.f32.mrf.mxu0
      %v441 = vadd.f32 %v251, %v440
      %v442 = vpop.f32.mrf.mxu0
      %v443 = vadd.f32 %v251, %v442
      %444 = vmatmul.bf16.gmra.mxu0 %v365
      %v445 = vpop.f32.mrf.mxu0
      %v446 = vadd.f32 %v251, %v445
      %v447 = vpop.f32.mrf.mxu0
      %v448 = vadd.f32 %v251, %v447
      %449 = vmatmul.bf16.gmra.mxu0 %v368
      %v450 = vpop.f32.mrf.mxu0
      %v451 = vadd.f32 %v251, %v450
      %v452 = vpop.f32.mrf.mxu0
      %v453 = vadd.f32 %v251, %v452
      %454 = vmatmul.bf16.gmra.mxu0 %v371
      %v455 = vpop.f32.mrf.mxu0
      %v456 = vadd.f32 %v251, %v455
      %v457 = vpop.f32.mrf.mxu0
      %v458 = vadd.f32 %v251, %v457
      %459 = vmatmul.bf16.gmra.mxu0 %v374
      %v460 = vpop.f32.mrf.mxu0
      %v461 = vadd.f32 %v251, %v460
      %v462 = vpop.f32.mrf.mxu0
      %v463 = vadd.f32 %v251, %v462
      %464 = vmatmul.bf16.gmra.mxu0 %v377
      %v465 = vpop.f32.mrf.mxu0
      %v466 = vadd.f32 %v251, %v465
      %v467 = vpop.f32.mrf.mxu0
      %v468 = vadd.f32 %v251, %v467
      %469 = vmatmul.bf16.gmra.mxu0 %v380
      %v470 = vpop.f32.mrf.mxu0
      %v471 = vadd.f32 %v251, %v470
      %v472 = vpop.f32.mrf.mxu0
      %v473 = vadd.f32 %v251, %v472
      %474 = vdwg.mxu0
      %v475 = vmax.f32 %v396, 0.0
      %v476 = vmax.f32 %v398, 0.0
      %v477 = vmax.f32 %v401, 0.0
      %v478 = vmax.f32 %v403, 0.0
      %v479 = vmax.f32 %v406, 0.0
      %v480 = vmax.f32 %v408, 0.0
      %v481 = vmax.f32 %v411, 0.0
      %v482 = vmax.f32 %v413, 0.0
      %v483 = vmax.f32 %v416, 0.0
      %v484 = vmax.f32 %v418, 0.0
      %v485 = vmax.f32 %v421, 0.0
      %v486 = vmax.f32 %v423, 0.0
      %v487 = vmax.f32 %v426, 0.0
      %v488 = vmax.f32 %v428, 0.0
      %v489 = vmax.f32 %v431, 0.0
      %v490 = vmax.f32 %v433, 0.0
      %v491 = vmax.f32 %v436, 0.0
      %v492 = vmax.f32 %v438, 0.0
      %v493 = vmax.f32 %v441, 0.0
      %v494 = vmax.f32 %v443, 0.0
      %v495 = vmax.f32 %v446, 0.0
      %v496 = vmax.f32 %v448, 0.0
      %v497 = vmax.f32 %v451, 0.0
      %v498 = vmax.f32 %v453, 0.0
      %v499 = vmax.f32 %v456, 0.0
      %v500 = vmax.f32 %v458, 0.0
      %v501 = vmax.f32 %v461, 0.0
      %v502 = vmax.f32 %v463, 0.0
      %v503 = vmax.f32 %v466, 0.0
      %v504 = vmax.f32 %v468, 0.0
      %v505 = vmax.f32 %v471, 0.0
      %v506 = vmax.f32 %v473, 0.0
      %v507 = vpack.c.bf16 %v475, %v475
      %v508 = vpack.c.bf16 %v476, %v476
      %v509 = vpack.c.bf16 %v477, %v477
      %v510 = vpack.c.bf16 %v478, %v478
      %v511 = vpack.c.bf16 %v479, %v479
      %v512 = vpack.c.bf16 %v480, %v480
      %v513 = vpack.c.bf16 %v481, %v481
      %v514 = vpack.c.bf16 %v482, %v482
      %v515 = vpack.c.bf16 %v483, %v483
      %v516 = vpack.c.bf16 %v484, %v484
      %v517 = vpack.c.bf16 %v485, %v485
      %v518 = vpack.c.bf16 %v486, %v486
      %v519 = vpack.c.bf16 %v487, %v487
      %v520 = vpack.c.bf16 %v488, %v488
      %v521 = vpack.c.bf16 %v489, %v489
      %v522 = vpack.c.bf16 %v490, %v490
      %v523 = vpack.c.bf16 %v491, %v491
      %v524 = vpack.c.bf16 %v492, %v492
      %v525 = vpack.c.bf16 %v493, %v493
      %v526 = vpack.c.bf16 %v494, %v494
      %v527 = vpack.c.bf16 %v495, %v495
      %v528 = vpack.c.bf16 %v496, %v496
      %v529 = vpack.c.bf16 %v497, %v497
      %v530 = vpack.c.bf16 %v498, %v498
      %v531 = vpack.c.bf16 %v499, %v499
      %v532 = vpack.c.bf16 %v500, %v500
      %v533 = vpack.c.bf16 %v501, %v501
      %v534 = vpack.c.bf16 %v502, %v502
      %v535 = vpack.c.bf16 %v503, %v503
      %v536 = vpack.c.bf16 %v504, %v504
      %v537 = vpack.c.bf16 %v505, %v505
      %v538 = vpack.c.bf16 %v506, %v506
      %vm539 = vcmask 519168
      %540 = vst.msk [vmem:[%s207] sm:$0xf] %vm539, %v507
      %541 = vst.msk [vmem:[%s207 + $0x4] sm:$0xf] %vm539, %v508
      %542 = vst.msk [vmem:[%s207 + $0x8] sm:$0xf] %vm539, %v509
      %543 = vst.msk [vmem:[%s207 + $0xc] sm:$0xf] %vm539, %v510
      %544 = vst.msk [vmem:[%s207 + $0x10] sm:$0xf] %vm539, %v511
      %545 = vst.msk [vmem:[%s207 + $0x14] sm:$0xf] %vm539, %v512
      %546 = vst.msk [vmem:[%s207 + $0x18] sm:$0xf] %vm539, %v513
      %547 = vst.msk [vmem:[%s207 + $0x1c] sm:$0xf] %vm539, %v514
      %548 = vst.msk [vmem:[%s207 + $0x20] sm:$0xf] %vm539, %v515
      %549 = vst.msk [vmem:[%s207 + $0x24] sm:$0xf] %vm539, %v516
      %550 = vst.msk [vmem:[%s207 + $0x28] sm:$0xf] %vm539, %v517
      %551 = vst.msk [vmem:[%s207 + $0x2c] sm:$0xf] %vm539, %v518
      %552 = vst.msk [vmem:[%s207 + $0x30] sm:$0xf] %vm539, %v519
      %553 = vst.msk [vmem:[%s207 + $0x34] sm:$0xf] %vm539, %v520
      %554 = vst.msk [vmem:[%s207 + $0x38] sm:$0xf] %vm539, %v521
      %555 = vst.msk [vmem:[%s207 + $0x3c] sm:$0xf] %vm539, %v522
      %556 = vst.msk [vmem:[%s207 + $0x40] sm:$0xf] %vm539, %v523
      %557 = vst.msk [vmem:[%s207 + $0x44] sm:$0xf] %vm539, %v524
      %558 = vst.msk [vmem:[%s207 + $0x48] sm:$0xf] %vm539, %v525
      %559 = vst.msk [vmem:[%s207 + $0x4c] sm:$0xf] %vm539, %v526
      %560 = vst.msk [vmem:[%s207 + $0x50] sm:$0xf] %vm539, %v527
      %561 = vst.msk [vmem:[%s207 + $0x54] sm:$0xf] %vm539, %v528
      %562 = vst.msk [vmem:[%s207 + $0x58] sm:$0xf] %vm539, %v529
      %563 = vst.msk [vmem:[%s207 + $0x5c] sm:$0xf] %vm539, %v530
      %564 = vst.msk [vmem:[%s207 + $0x60] sm:$0xf] %vm539, %v531
      %565 = vst.msk [vmem:[%s207 + $0x64] sm:$0xf] %vm539, %v532
      %566 = vst.msk [vmem:[%s207 + $0x68] sm:$0xf] %vm539, %v533
      %567 = vst.msk [vmem:[%s207 + $0x6c] sm:$0xf] %vm539, %v534
      %568 = vst.msk [vmem:[%s207 + $0x70] sm:$0xf] %vm539, %v535
      %569 = vst.msk [vmem:[%s207 + $0x74] sm:$0xf] %vm539, %v536
      %570 = vst.msk [vmem:[%s207 + $0x78] sm:$0xf] %vm539, %v537
      %571 = vst.msk [vmem:[%s207 + $0x7c] sm:$0xf] %vm539, %v538
      %604 = vrot.lane.b32.xlu0 %v507, 64
      %v605 = vpop.permute.xlu0 %604
      %606 = vrot.lane.b32.xlu0 %v508, 64
      %v607 = vpop.permute.xlu0 %606
      %608 = vrot.lane.b32.xlu0 %v509, 64
      %v609 = vpop.permute.xlu0 %608
      %610 = vrot.lane.b32.xlu0 %v510, 64
      %v611 = vpop.permute.xlu0 %610
      %612 = vrot.lane.b32.xlu0 %v511, 64
      %v613 = vpop.permute.xlu0 %612
      %614 = vrot.lane.b32.xlu0 %v512, 64
      %v615 = vpop.permute.xlu0 %614
      %616 = vrot.lane.b32.xlu0 %v513, 64
      %v617 = vpop.permute.xlu0 %616
      %618 = vrot.lane.b32.xlu0 %v514, 64
      %v619 = vpop.permute.xlu0 %618
      %620 = vrot.lane.b32.xlu0 %v515, 64
      %v621 = vpop.permute.xlu0 %620
      %622 = vrot.lane.b32.xlu0 %v516, 64
      %v623 = vpop.permute.xlu0 %622
      %624 = vrot.lane.b32.xlu0 %v517, 64
      %v625 = vpop.permute.xlu0 %624
      %626 = vrot.lane.b32.xlu0 %v518, 64
      %v627 = vpop.permute.xlu0 %626
      %628 = vrot.lane.b32.xlu0 %v519, 64
      %v629 = vpop.permute.xlu0 %628
      %630 = vrot.lane.b32.xlu0 %v520, 64
      %v631 = vpop.permute.xlu0 %630
      %632 = vrot.lane.b32.xlu0 %v521, 64
      %v633 = vpop.permute.xlu0 %632
      %634 = vrot.lane.b32.xlu0 %v522, 64
      %v635 = vpop.permute.xlu0 %634
      %636 = vrot.lane.b32.xlu0 %v523, 64
      %v637 = vpop.permute.xlu0 %636
      %638 = vrot.lane.b32.xlu0 %v524, 64
      %v639 = vpop.permute.xlu0 %638
      %640 = vrot.lane.b32.xlu0 %v525, 64
      %v641 = vpop.permute.xlu0 %640
      %642 = vrot.lane.b32.xlu0 %v526, 64
      %v643 = vpop.permute.xlu0 %642
      %644 = vrot.lane.b32.xlu0 %v527, 64
      %v645 = vpop.permute.xlu0 %644
      %646 = vrot.lane.b32.xlu0 %v528, 64
      %v647 = vpop.permute.xlu0 %646
      %648 = vrot.lane.b32.xlu0 %v529, 64
      %v649 = vpop.permute.xlu0 %648
      %650 = vrot.lane.b32.xlu0 %v530, 64
      %v651 = vpop.permute.xlu0 %650
      %652 = vrot.lane.b32.xlu0 %v531, 64
      %v653 = vpop.permute.xlu0 %652
      %654 = vrot.lane.b32.xlu0 %v532, 64
      %v655 = vpop.permute.xlu0 %654
      %656 = vrot.lane.b32.xlu0 %v533, 64
      %v657 = vpop.permute.xlu0 %656
      %658 = vrot.lane.b32.xlu0 %v534, 64
      %v659 = vpop.permute.xlu0 %658
      %660 = vrot.lane.b32.xlu0 %v535, 64
      %v661 = vpop.permute.xlu0 %660
      %662 = vrot.lane.b32.xlu0 %v536, 64
      %v663 = vpop.permute.xlu0 %662
      %664 = vrot.lane.b32.xlu0 %v537, 64
      %v665 = vpop.permute.xlu0 %664
      %666 = vrot.lane.b32.xlu0 %v538, 64
      %v667 = vpop.permute.xlu0 %666
      %700 = vst.msk [vmem:[%s213] sm:$0xf] %vm539, %v605
      %701 = vst.msk [vmem:[%s213 + $0x4] sm:$0xf] %vm539, %v607
      %702 = vst.msk [vmem:[%s213 + $0x8] sm:$0xf] %vm539, %v609
      %703 = vst.msk [vmem:[%s213 + $0xc] sm:$0xf] %vm539, %v611
      %704 = vst.msk [vmem:[%s213 + $0x10] sm:$0xf] %vm539, %v613
      %705 = vst.msk [vmem:[%s213 + $0x14] sm:$0xf] %vm539, %v615
      %706 = vst.msk [vmem:[%s213 + $0x18] sm:$0xf] %vm539, %v617
      %707 = vst.msk [vmem:[%s213 + $0x1c] sm:$0xf] %vm539, %v619
      %708 = vst.msk [vmem:[%s213 + $0x20] sm:$0xf] %vm539, %v621
      %709 = vst.msk [vmem:[%s213 + $0x24] sm:$0xf] %vm539, %v623
      %710 = vst.msk [vmem:[%s213 + $0x28] sm:$0xf] %vm539, %v625
      %711 = vst.msk [vmem:[%s213 + $0x2c] sm:$0xf] %vm539, %v627
      %712 = vst.msk [vmem:[%s213 + $0x30] sm:$0xf] %vm539, %v629
      %713 = vst.msk [vmem:[%s213 + $0x34] sm:$0xf] %vm539, %v631
      %714 = vst.msk [vmem:[%s213 + $0x38] sm:$0xf] %vm539, %v633
      %715 = vst.msk [vmem:[%s213 + $0x3c] sm:$0xf] %vm539, %v635
      %716 = vst.msk [vmem:[%s213 + $0x40] sm:$0xf] %vm539, %v637
      %717 = vst.msk [vmem:[%s213 + $0x44] sm:$0xf] %vm539, %v639
      %718 = vst.msk [vmem:[%s213 + $0x48] sm:$0xf] %vm539, %v641
      %719 = vst.msk [vmem:[%s213 + $0x4c] sm:$0xf] %vm539, %v643
      %720 = vst.msk [vmem:[%s213 + $0x50] sm:$0xf] %vm539, %v645
      %721 = vst.msk [vmem:[%s213 + $0x54] sm:$0xf] %vm539, %v647
      %722 = vst.msk [vmem:[%s213 + $0x58] sm:$0xf] %vm539, %v649
      %723 = vst.msk [vmem:[%s213 + $0x5c] sm:$0xf] %vm539, %v651
      %724 = vst.msk [vmem:[%s213 + $0x60] sm:$0xf] %vm539, %v653
      %725 = vst.msk [vmem:[%s213 + $0x64] sm:$0xf] %vm539, %v655
      %726 = vst.msk [vmem:[%s213 + $0x68] sm:$0xf] %vm539, %v657
      %727 = vst.msk [vmem:[%s213 + $0x6c] sm:$0xf] %vm539, %v659
      %728 = vst.msk [vmem:[%s213 + $0x70] sm:$0xf] %vm539, %v661
      %729 = vst.msk [vmem:[%s213 + $0x74] sm:$0xf] %vm539, %v663
      %730 = vst.msk [vmem:[%s213 + $0x78] sm:$0xf] %vm539, %v665
      %731 = vst.msk [vmem:[%s213 + $0x7c] sm:$0xf] %vm539, %v667
      %s732 = smul.u32 32, %s16
      %p733 = scmp.lt.s32.totalorder %s732, 63
      %s734 = scalar_select %p733, %s732, 63
      %s735 = smul.addr %s734, 4
      %s736 = scalar_lea.vmem %s3, %s735
      %s737 = smul.u32 32, %s16
      %p738 = scmp.lt.s32.totalorder %s737, 63
      %s739 = scalar_select %p738, %s737, 63
      %s740 = smul.addr %s739, 4
      %s741 = scalar_lea.vmem %s4, %s740
      // Predicated region
      $region33: #{inception_a_forward.3} parent=31 // pred_check
        %p742 = pneg %p102
      $region34: #{inception_a_forward.3} parent=31 // pred_check_branch
        %744 = sbr.rel (%p742) target = $region36
      $region35: #{inception_a_forward.3} parent=31 // pred_region
        %s745 = smul.u32 32, %s16
      $region36: #{inception_a_forward.3} parent=31 // pred_fallthru
        _
      // Predicated region
      $region37: #{inception_a_forward.3} parent=31 // pred_check
        %p746 = pneg %p128
      $region38: #{inception_a_forward.3} parent=31 // pred_check_branch
        %748 = sbr.rel (%p746) target = $region40
      $region39: #{inception_a_forward.3} parent=31 // pred_region
        %s749 = smul.u32 32, %s16
      $region40: #{inception_a_forward.3} parent=31 // pred_fallthru
        _
    $region32: #{inception_a_forward.3} parent=5 // pred_fallthru
      _
    %p750 = scmp.le.s32.totalorder 2, %s11
    // Predicated region
    $region41: #{inception_a_forward.3} parent=5 // pred_check
      %p751 = pneg %p750
    $region42: #{inception_a_forward.3} parent=5 // pred_check_branch
      %753 = sbr.rel (%p751) target = $region44
    $region43: #{inception_a_forward.3} parent=5 // pred_region
      %s754 = ssub.s32 %s11, 2
      // Predicated region
      $region45: #{inception_a_forward.3} parent=43 // pred_check
        %p755 = pneg %p108
      $region46: #{inception_a_forward.3} parent=43 // pred_check_branch
        %757 = sbr.rel (%p755) target = $region48
      $region47: #{inception_a_forward.3} parent=43 // pred_region
        %s758 = smul.u32 32, %s17
        %p759 = scmp.lt.s32.totalorder %s758, 63
        %s760 = scalar_select %p759, %s758, 63
        %s761 = smul.addr %s760, 4
        %s762 = scalar_lea.vmem %s3, %s761
      $region48: #{inception_a_forward.3} parent=43 // pred_fallthru
        _
      // Predicated region
      $region49: #{inception_a_forward.3} parent=43 // pred_check
        %p763 = pneg %p134
      $region50: #{inception_a_forward.3} parent=43 // pred_check_branch
        %765 = sbr.rel (%p763) target = $region52
      $region51: #{inception_a_forward.3} parent=43 // pred_region
        %s766 = smul.u32 32, %s17
        %p767 = scmp.lt.s32.totalorder %s766, 63
        %s768 = scalar_select %p767, %s766, 63
        %s769 = smul.addr %s768, 4
        %s770 = scalar_lea.vmem %s4, %s769
      $region52: #{inception_a_forward.3} parent=43 // pred_fallthru
        _
    $region44: #{inception_a_forward.3} parent=5 // pred_fallthru
      _
  $region6: #{inception_a_forward.3} parent=0 // loop_footer
    %s15 = sadd.s32 1, %s11
  $region7: #{inception_a_forward.3} parent=0 // loop_footer_branch
    %10 = sbr.rel target = $region3
  $region8: #{inception_a_forward.3} parent=0 // loop_exit
    _

// kernel: inception_a_forward.4
$region0: #{inception_a_forward.4}
  #allocation0 [shape = 'u32[]', space=smem, size = 0x4, offset = 0x4, fixed_abs, tag = 'smem constant byte address 0x4 - core index']
  #allocation1 [shape = 'u32[72,128]{1,0:T(1,128)}', space=vmem, size = 0x9000, scoped, tag = 'internal scratch']
  %s0 = inlined_call_operand.vmem [shape: bf16[2,18,18,64], index: 0, kind: input, shape index: {}]
  %s1 = inlined_call_operand.vmem [shape: bf16[576,96], index: 1, kind: input, shape index: {}]
  %s2 = inlined_call_operand.vmem [shape: f32[1,96], index: 2, kind: input, shape index: {}]
  %s3 = inlined_call_operand.vmem [shape: bf16[2,256,96], index: 3, kind: output, shape index: {}]
  %s4 = sld [smem:[#allocation0]]
  $region45: #{inception_a_forward.4} parent=0
    _
  %s6 = ssub.s32 1, %s4
  %s7 = scalar_select 0, %s6, %s4
  loop: start=0, step=1, limit=6
  $region2: #{inception_a_forward.4} parent=0 // loop_pre_header
    _
  $region3: #{inception_a_forward.4} parent=0 // loop_header
    %s9 = sphi 0, %s13
    %p10 = scmp.ge.s32.totalorder %s9, 6
    %s16 = sphi 0, %s28
    %s17 = sphi 0, %s24
    %s18 = sphi 0, %s16
    %s19 = sphi 0, %s17
    %s20 = sphi 0, %s18
    %s21 = sphi 0, %s19
    %s31 = sphi 0, %s33
    %s34 = sphi 0, %s31
    %s35 = sphi 0, %s34
    %s51 = sphi 0, %s35
    %s55 = sphi 0, %s55
    %s57 = sphi 0, %s55
    %s58 = sphi 0, %s57
    %s72 = sphi 0, %s58
    %s76 = sphi 0, %s76
    %s78 = sphi 0, %s76
    %s79 = sphi 0, %s78
    %s93 = sphi 0, %s79
    %s101 = sphi 0, %s103
    %s104 = sphi 0, %s101
    %s105 = sphi 0, %s104
    %s121 = sphi 0, %s105
  $region4: #{inception_a_forward.4} parent=0 // loop_header_branch
    %12 = sbr.rel (%p10) target = $region8
  $region5: #{inception_a_forward.4} parent=0 // loop_body
    %s14 = ssub.s32 %s9, 1
    %s15 = ssub.s32 %s9, 2
    %s22 = sadd.s32 1, %s17
    %p23 = scmp.ge.s32.totalorder %s22, 2
    %s24 = scalar_select %p23, 0, %s22
    %s25 = sadd.s32 1, %s16
    %s26 = scalar_select %p23, %s25, %s16
    %p27 = scmp.ge.s32.totalorder %s26, 2
    %s28 = scalar_select %p27, 0, %s26
    %s29 = ssub.s32 %s16, %s28
    %p30 = scmp.eq.s32.totalorder %s29, 0
    %s32 = sadd.s32 %s31, 1
    %s33 = scalar_select %p30, %s31, %s32
    %p36 = pneg %p30
    %p37 = scmp.eq.s32.totalorder %s9, 3
    %p38 = por %p36, %p37
    %p39 = scmp.ne.s32.totalorder %s31, %s34
    %p40 = scmp.eq.s32.totalorder %s9, 0
    %p41 = por %p39, %p40
    %p42 = scmp.ne.s32.totalorder %s31, %s34
    %p43 = scmp.eq.s32.totalorder %s14, 3
    %p44 = por %p42, %p43
    %p45 = scmp.ne.s32.totalorder %s34, %s35
    %p46 = scmp.eq.s32.totalorder %s14, 0
    %p47 = por %p45, %p46
    %p48 = scmp.ne.s32.totalorder %s34, %s35
    %p49 = scmp.eq.s32.totalorder %s15, 3
    %p50 = por %p48, %p49
    %p52 = scmp.ne.s32.totalorder %s35, %s51
    %p53 = scmp.eq.s32.totalorder %s15, 0
    %p54 = por %p52, %p53
    %s56 = sadd.s32 %s55, 1
    %p59 = scmp.eq.s32.totalorder %s9, 3
    %p60 = scmp.ne.s32.totalorder %s55, %s57
    %p61 = scmp.eq.s32.totalorder %s9, 0
    %p62 = por %p60, %p61
    %p63 = scmp.ne.s32.totalorder %s55, %s57
    %p64 = scmp.eq.s32.totalorder %s14, 3
    %p65 = por %p63, %p64
    %p66 = scmp.ne.s32.totalorder %s57, %s58
    %p67 = scmp.eq.s32.totalorder %s14, 0
    %p68 = por %p66, %p67
    %p69 = scmp.ne.s32.totalorder %s57, %s58
    %p70 = scmp.eq.s32.totalorder %s15, 3
    %p71 = por %p69, %p70
    %p73 = scmp.ne.s32.totalorder %s58, %s72
    %p74 = scmp.eq.s32.totalorder %s15, 0
    %p75 = por %p73, %p74
    %s77 = sadd.s32 %s76, 1
    %p80 = scmp.eq.s32.totalorder %s9, 3
    %p81 = scmp.ne.s32.totalorder %s76, %s78
    %p82 = scmp.eq.s32.totalorder %s9, 0
    %p83 = por %p81, %p82
    %p84 = scmp.ne.s32.totalorder %s76, %s78
    %p85 = scmp.eq.s32.totalorder %s14, 3
    %p86 = por %p84, %p85
    %p87 = scmp.ne.s32.totalorder %s78, %s79
    %p88 = scmp.eq.s32.totalorder %s14, 0
    %p89 = por %p87, %p88
    %p90 = scmp.ne.s32.totalorder %s78, %s79
    %p91 = scmp.eq.s32.totalorder %s15, 3
    %p92 = por %p90, %p91
    %p94 = scmp.ne.s32.totalorder %s79, %s93
    %p95 = scmp.eq.s32.totalorder %s15, 0
    %p96 = por %p94, %p95
    %s97 = ssub.s32 %s16, %s28
    %s98 = ssub.s32 %s17, %s24
    %s99 = sor.u32 %s97, %s98
    %p100 = scmp.eq.s32.totalorder %s99, 0
    %s102 = sadd.s32 %s101, 1
    %s103 = scalar_select %p100, %s101, %s102
    %p106 = pneg %p100
    %p107 = scmp.eq.s32.totalorder %s9, 3
    %p108 = por %p106, %p107
    %p109 = scmp.ne.s32.totalorder %s101, %s104
    %p110 = scmp.eq.s32.totalorder %s9, 0
    %p111 = por %p109, %p110
    %p112 = scmp.ne.s32.totalorder %s101, %s104
    %p113 = scmp.eq.s32.totalorder %s14, 3
    %p114 = por %p112, %p113
    %p115 = scmp.ne.s32.totalorder %s104, %s105
    %p116 = scmp.eq.s32.totalorder %s14, 0
    %p117 = por %p115, %p116
    %p118 = scmp.ne.s32.totalorder %s104, %s105
    %p119 = scmp.eq.s32.totalorder %s15, 3
    %p120 = por %p118, %p119
    %p122 = scmp.ne.s32.totalorder %s105, %s121
    %p123 = scmp.eq.s32.totalorder %s15, 0
    %p124 = por %p122, %p123
    %p125 = scmp.le.s32.totalorder 1, %s9
    %p126 = scmp.lt.s32.totalorder %s9, 5
    %p127 = pnand %p125, %p126
    %p128 = pneg %p127
    // Predicated region
    $region9: #{inception_a_forward.4} parent=5 // pred_check
      _
    $region10: #{inception_a_forward.4} parent=5 // pred_check_branch
      %130 = sbr.rel (%p127) target = $region12
    $region11: #{inception_a_forward.4} parent=5 // pred_region
      %s131 = ssub.s32 %s9, 1
      // Predicated region
      $region13: #{inception_a_forward.4} parent=11 // pred_check
        %p132 = pneg %p68
      $region14: #{inception_a_forward.4} parent=11 // pred_check_branch
        %134 = sbr.rel (%p132) target = $region16
      $region15: #{inception_a_forward.4} parent=11 // pred_region
        _
      $region16: #{inception_a_forward.4} parent=11 // pred_fallthru
        _
      // Predicated region
      $region17: #{inception_a_forward.4} parent=11 // pred_check
        %p135 = pneg %p89
      $region18: #{inception_a_forward.4} parent=11 // pred_check_branch
        %137 = sbr.rel (%p135) target = $region20
      $region19: #{inception_a_forward.4} parent=11 // pred_region
        _
      $region20: #{inception_a_forward.4} parent=11 // pred_fallthru
        _
    $region12: #{inception_a_forward.4} parent=5 // pred_fallthru
      _
    %p138 = scmp.lt.s32.totalorder %s9, 4
    // Predicated region
    $region21: #{inception_a_forward.4} parent=5 // pred_check
      %p139 = pneg %p138
    $region22: #{inception_a_forward.4} parent=5 // pred_check_branch
      %141 = sbr.rel (%p139) target = $region24
    $region23: #{inception_a_forward.4} parent=5 // pred_region
      // Predicated region
      $region25: #{inception_a_forward.4} parent=23 // pred_check
        %p142 = pneg %p41
      $region26: #{inception_a_forward.4} parent=23 // pred_check_branch
        %144 = sbr.rel (%p142) target = $region28
      $region27: #{inception_a_forward.4} parent=23 // pred_region
        %p145 = scmp.lt.s32.totalorder %s16, 1
        %s146 = scalar_select %p145, %s16, 1
        %s147 = smul.addr %s146, 54
        %s148 = smul.addr %s147, 4
        %s149 = scalar_lea.vmem %s0, %s148
      $region28: #{inception_a_forward.4} parent=23 // pred_fallthru
        _
    $region24: #{inception_a_forward.4} parent=5 // pred_fallthru
      _
    %p150 = scmp.le.s32.totalorder 1, %s9
    %p151 = scmp.lt.s32.totalorder %s9, 5
    %p152 = pnand %p150, %p151
    %p153 = pneg %p152
    // Predicated region
    $region29: #{inception_a_forward.4} parent=5 // pred_check
      _
    $region30: #{inception_a_forward.4} parent=5 // pred_check_branch
      %155 = sbr.rel (%p152) target = $region32
    $region31: #{inception_a_forward.4} parent=5 // pred_region
      %s156 = ssub.s32 %s9, 1
      %p157 = scmp.lt.s32.totalorder %s18, 1
      %s158 = scalar_select %p157, %s18, 1
      %s159 = smul.addr %s158, 54
      %s160 = smul.addr %s159, 4
      %s161 = scalar_lea.vmem %s0, %s160
      %p162 = pneg %p47
      %p163 = pneg %p44
      %p164 = pneg %p68
      %p165 = pneg %p65
      %p166 = pneg %p89
      %p167 = pneg %p86
      %p168 = pneg %p117
      %p169 = pneg %p114
      %s170 = smul.u32 16, %s19
      %p171 = scmp.lt.s32.totalorder %s18, 1
      %s172 = scalar_select %p171, %s18, 1
      %p173 = scmp.lt.s32.totalorder %s170, 31
      %s174 = scalar_select %p173, %s170, 31
      %s175 = smul.addr %s172, 32
      %s176 = sadd.s32 %s174, %s175
      %s177 = smul.addr %s176, 4
      %s178 = scalar_lea.vmem %s3, %s177
      %p179 = scmp.lt.s32.totalorder %s18, 1
      %s180 = scalar_select %p179, %s18, 1
      %s181 = smul.addr %s180, 54
      %s182 = smul.addr %s181, 4
      %s183 = scalar_lea.vmem %s0, %s182
      %s184 = smul.u32 16, %s19
      %p185 = scmp.lt.s32.totalorder %s18, 1
      %s186 = scalar_select %p185, %s18, 1
      %p187 = scmp.lt.s32.totalorder %s184, 31
      %s188 = scalar_select %p187, %s184, 31
      %s189 = smul.addr %s186, 32
      %s190 = sadd.s32 %s188, %s189
      %s191 = smul.addr %s190, 4
      %s192 = scalar_lea.vmem %s3, %s191
      %s193 = smul.u32 16, %s19
      %s195 = smul.u32 %s19, 8
      %s196 = smul.u32 %s195, 3
      %s197 = smul.addr %s196, 4
      %s198 = scalar_lea.vmem %s183, %s197
      %v199 = vld [vmem:[%s198] sm:$0xf]
      %v200 = vld [vmem:[%s198 + $0x4] sm:$0xf]
      %v201 = vld [vmem:[%s198 + $0xc] sm:$0xf]
      %v202 = vld [vmem:[%s198 + $0x10] sm:$0xf]
      %v203 = vld [vmem:[%s198 + $0x18] sm:$0xf]
      %v204 = vld [vmem:[%s198 + $0x1c] sm:$0xf]
      %v205 = vld [vmem:[%s198 + $0x24] sm:$0xf]
      %v206 = vld [vmem:[%s198 + $0x28] sm:$0xf]
      %v207 = vld [vmem:[%s198 + $0x30] sm:$0xf]
      %v208 = vld [vmem:[%s198 + $0x34] sm:$0xf]
      %v209 = vld [vmem:[%s198 + $0x3c] sm:$0xf]
      %v210 = vld [vmem:[%s198 + $0x40] sm:$0xf]
      %v211 = vld [vmem:[%s198 + $0x48] sm:$0xf]
      %v212 = vld [vmem:[%s198 + $0x4c] sm:$0xf]
      %v213 = vld [vmem:[%s198 + $0x54] sm:$0xf]
      %v214 = vld [vmem:[%s198 + $0x58] sm:$0xf]
      %v215 = vld [vmem:[%s198 + $0x8] sm:$0x1]
      %v216 = vld [vmem:[%s198 + $0x14] sm:$0x1]
      %v217 = vld [vmem:[%s198 + $0x20] sm:$0x1]
      %v218 = vld [vmem:[%s198 + $0x2c] sm:$0x1]
      %v219 = vld [vmem:[%s198 + $0x38] sm:$0x1]
      %v220 = vld [vmem:[%s198 + $0x44] sm:$0x1]
      %v221 = vld [vmem:[%s198 + $0x50] sm:$0x1]
      %v222 = vld [vmem:[%s198 + $0x5c] sm:$0x1]
      %v223 = vld [vmem:[%s198] sm:$0xe]
      %v224 = vld [vmem:[%s198 + $0xc] sm:$0xe]
      %v225 = vld [vmem:[%s198 + $0x18] sm:$0xe]
      %v226 = vld [vmem:[%s198 + $0x24] sm:$0xe]
      %v227 = vld [vmem:[%s198 + $0x30] sm:$0xe]
      %v228 = vld [vmem:[%s198 + $0x3c] sm:$0xe]
      %v229 = vld [vmem:[%s198 + $0x48] sm:$0xe]
      %v230 = vld [vmem:[%s198 + $0x54] sm:$0xe]
      %s231 = sadd.s32 %s195, 1
      %s232 = smul.u32 %s231, 3
      %s233 = smul.addr %s232, 4
      %s234 = scalar_lea.vmem %s183, %s233
      %v235 = vld [vmem:[%s234] sm:$0xf]
      %v236 = vld [vmem:[%s234 + $0x4] sm:$0xf]
      %v237 = vld [vmem:[%s234 + $0xc] sm:$0xf]
      %v238 = vld [vmem:[%s234 + $0x10] sm:$0xf]
      %v239 = vld [vmem:[%s234 + $0x18] sm:$0xf]
      %v240 = vld [vmem:[%s234 + $0x1c] sm:$0xf]
      %v241 = vld [vmem:[%s234 + $0x24] sm:$0xf]
      %v242 = vld [vmem:[%s234 + $0x28] sm:$0xf]
      %v243 = vld [vmem:[%s234 + $0x30] sm:$0xf]
      %v244 = vld [vmem:[%s234 + $0x34] sm:$0xf]
      %v245 = vld [vmem:[%s234 + $0x3c] sm:$0xf]
      %v246 = vld [vmem:[%s234 + $0x40] sm:$0xf]
      %v247 = vld [vmem:[%s234 + $0x48] sm:$0xf]
      %v248 = vld [vmem:[%s234 + $0x4c] sm:$0xf]
      %v249 = vld [vmem:[%s234 + $0x54] sm:$0xf]
      %v250 = vld [vmem:[%s234 + $0x58] sm:$0xf]
      %v251 = vld [vmem:[%s234 + $0x8] sm:$0x1]
      %v252 = vld [vmem:[%s234 + $0x14] sm:$0x1]
      %v253 = vld [vmem:[%s234 + $0x20] sm:$0x1]
      %v254 = vld [vmem:[%s234 + $0x2c] sm:$0x1]
      %v255 = vld [vmem:[%s234 + $0x38] sm:$0x1]
      %v256 = vld [vmem:[%s234 + $0x44] sm:$0x1]
      %v257 = vld [vmem:[%s234 + $0x50] sm:$0x1]
      %v258 = vld [vmem:[%s234 + $0x5c] sm:$0x1]
      %v259 = vld [vmem:[%s234] sm:$0xe]
      %v260 = vld [vmem:[%s234 + $0xc] sm:$0xe]
      %v261 = vld [vmem:[%s234 + $0x18] sm:$0xe]
      %v262 = vld [vmem:[%s234 + $0x24] sm:$0xe]
      %v263 = vld [vmem:[%s234 + $0x30] sm:$0xe]
      %v264 = vld [vmem:[%s234 + $0x3c] sm:$0xe]
      %v265 = vld [vmem:[%s234 + $0x48] sm:$0xe]
      %v266 = vld [vmem:[%s234 + $0x54] sm:$0xe]
      %s267 = sadd.s32 %s195, 2
      %s268 = smul.u32 %s267, 3
      %s269 = smul.addr %s268, 4
      %s270 = scalar_lea.vmem %s183, %s269
      %v271 = vld [vmem:[%s270] sm:$0xf]
      %v272 = vld [vmem:[%s270 + $0x4] sm:$0xf]
      %v273 = vld [vmem:[%s270 + $0xc] sm:$0xf]
      %v274 = vld [vmem:[%s270 + $0x10] sm:$0xf]
      %v275 = vld [vmem:[%s270 + $0x18] sm:$0xf]
      %v276 = vld [vmem:[%s270 + $0x1c] sm:$0xf]
      %v277 = vld [vmem:[%s270 + $0x24] sm:$0xf]
      %v278 = vld [vmem:[%s270 + $0x28] sm:$0xf]
      %v279 = vld [vmem:[%s270 + $0x30] sm:$0xf]
      %v280 = vld [vmem:[%s270 + $0x34] sm:$0xf]
      %v281 = vld [vmem:[%s270 + $0x3c] sm:$0xf]
      %v282 = vld [vmem:[%s270 + $0x40] sm:$0xf]
      %v283 = vld [vmem:[%s270 + $0x48] sm:$0xf]
      %v284 = vld [vmem:[%s270 + $0x4c] sm:$0xf]
      %v285 = vld [vmem:[%s270 + $0x54] sm:$0xf]
      %v286 = vld [vmem:[%s270 + $0x58] sm:$0xf]
      %v287 = vld [vmem:[%s270 + $0x8] sm:$0x1]
      %v288 = vld [vmem:[%s270 + $0x14] sm:$0x1]
      %v289 = vld [vmem:[%s270 + $0x20] sm:$0x1]
      %v290 = vld [vmem:[%s270 + $0x2c] sm:$0x1]
      %v291 = vld [vmem:[%s270 + $0x38] sm:$0x1]
      %v292 = vld [vmem:[%s270 + $0x44] sm:$0x1]
      %v293 = vld [vmem:[%s270 + $0x50] sm:$0x1]
      %v294 = vld [vmem:[%s270 + $0x5c] sm:$0x1]
      %v295 = vld [vmem:[%s270] sm:$0xe]
      %v296 = vld [vmem:[%s270 + $0xc] sm:$0xe]
      %v297 = vld [vmem:[%s270 + $0x18] sm:$0xe]
      %v298 = vld [vmem:[%s270 + $0x24] sm:$0xe]
      %v299 = vld [vmem:[%s270 + $0x30] sm:$0xe]
      %v300 = vld [vmem:[%s270 + $0x3c] sm:$0xe]
      %v301 = vld [vmem:[%s270 + $0x48] sm:$0xe]
      %v302 = vld [vmem:[%s270 + $0x54] sm:$0xe]
      %v319 = vunpack.c.l.b16 %v199
      %v320 = vunpack.c.l.b16 %v200
      %v321 = vunpack.c.l.b16 %v201
      %v322 = vunpack.c.l.b16 %v202
      %v323 = vunpack.c.l.b16 %v203
      %v324 = vunpack.c.l.b16 %v204
      %v325 = vunpack.c.l.b16 %v205
      %v326 = vunpack.c.l.b16 %v206
      %v327 = vunpack.c.l.b16 %v207
      %v328 = vunpack.c.l.b16 %v208
      %v329 = vunpack.c.l.b16 %v209
      %v330 = vunpack.c.l.b16 %v210
      %v331 = vunpack.c.l.b16 %v211
      %v332 = vunpack.c.l.b16 %v212
      %v333 = vunpack.c.l.b16 %v213
      %v334 = vunpack.c.l.b16 %v214
      %v335 = vpack.c.b16 %v320, %v319
      %v336 = vpack.c.b16 %v322, %v321
      %v337 = vpack.c.b16 %v324, %v323
      %v338 = vpack.c.b16 %v326, %v325
      %v339 = vpack.c.b16 %v328, %v327
      %v340 = vpack.c.b16 %v330, %v329
      %v341 = vpack.c.b16 %v332, %v331
      %v342 = vpack.c.b16 %v334, %v333
      %v351 = vunpack.c.l.b16 %v215
      %v352 = vunpack.c.l.b16 %v216
      %v353 = vunpack.c.l.b16 %v217
      %v354 = vunpack.c.l.b16 %v218
      %v355 = vunpack.c.l.b16 %v219
      %v356 = vunpack.c.l.b16 %v220
      %v357 = vunpack.c.l.b16 %v221
      %v358 = vunpack.c.l.b16 %v222
      %v359 = vpack.c.b16 %v351, %v351
      %v360 = vpack.c.b16 %v352, %v352
      %v361 = vpack.c.b16 %v353, %v353
      %v362 = vpack.c.b16 %v354, %v354
      %v363 = vpack.c.b16 %v355, %v355
      %v364 = vpack.c.b16 %v356, %v356
      %v365 = vpack.c.b16 %v357, %v357
      %v366 = vpack.c.b16 %v358, %v358
      %vm367 = vsmask.f32 7424
      %v369 = vshrl.u32 %v335, 16
      %v371 = vshll.u32 %v335, 16
      %v373 = vrot.slane %v371, 1
      %v374 = vor.u32 %v369, %v373
      %v376 = vshll.u32 %v359, 16
      %v378 = vrot.slane %v376, 1
      %v379 = vsel %vm367, %v374, %v378
      %v381 = vshrl.u32 %v336, 16
      %v383 = vshll.u32 %v336, 16
      %v385 = vrot.slane %v383, 1
      %v386 = vor.u32 %v381, %v385
      %v388 = vshll.u32 %v360, 16
      %v390 = vrot.slane %v388, 1
      %v391 = vsel %vm367, %v386, %v390
      %v393 = vshrl.u32 %v337, 16
      %v395 = vshll.u32 %v337, 16
      %v397 = vrot.slane %v395, 1
      %v398 = vor.u32 %v393, %v397
      %v400 = vshll.u32 %v361, 16
      %v402 = vrot.slane %v400, 1
      %v403 = vsel %vm367, %v398, %v402
      %v405 = vshrl.u32 %v338, 16
      %v407 = vshll.u32 %v338, 16
      %v409 = vrot.slane %v407, 1
      %v410 = vor.u32 %v405, %v409
      %v412 = vshll.u32 %v362, 16
      %v414 = vrot.slane %v412, 1
      %v415 = vsel %vm367, %v410, %v414
      %v417 = vshrl.u32 %v339, 16
      %v419 = vshll.u32 %v339, 16
      %v421 = vrot.slane %v419, 1
      %v422 = vor.u32 %v417, %v421
      %v424 = vshll.u32 %v363, 16
      %v426 = vrot.slane %v424, 1
      %v427 = vsel %vm367, %v422, %v426
      %v429 = vshrl.u32 %v340, 16
      %v431 = vshll.u32 %v340, 16
      %v433 = vrot.slane %v431, 1
      %v434 = vor.u32 %v429, %v433
      %v436 = vshll.u32 %v364, 16
      %v438 = vrot.slane %v436, 1
      %v439 = vsel %vm367, %v434, %v438
      %v441 = vshrl.u32 %v341, 16
      %v443 = vshll.u32 %v341, 16
      %v445 = vrot.slane %v443, 1
      %v446 = vor.u32 %v441, %v445
      %v448 = vshll.u32 %v365, 16
      %v450 = vrot.slane %v448, 1
      %v451 = vsel %vm367, %v446, %v450
      %v453 = vshrl.u32 %v342, 16
      %v455 = vshll.u32 %v342, 16
      %v457 = vrot.slane %v455, 1
      %v458 = vor.u32 %v453, %v457
      %v460 = vshll.u32 %v366, 16
      %v462 = vrot.slane %v460, 1
      %v463 = vsel %vm367, %v458, %v462
      %464 = vrot.lane.b32.xlu0 %v379, 64
      %v465 = vpop.permute.xlu0 %464
      %466 = vrot.lane.b32.xlu0 %v391, 64
      %v467 = vpop.permute.xlu0 %466
      %468 = vrot.lane.b32.xlu0 %v403, 64
      %v469 = vpop.permute.xlu0 %468
      %470 = vrot.lane.b32.xlu0 %v415, 64
      %v471 = vpop.permute.xlu0 %470
      %472 = vrot.lane.b32.xlu0 %v427, 64
      %v473 = vpop.permute.xlu0 %472
      %474 = vrot.lane.b32.xlu0 %v439, 64
      %v475 = vpop.permute.xlu0 %474
      %476 = vrot.lane.b32.xlu0 %v451, 64
      %v477 = vpop.permute.xlu0 %476
      %478 = vrot.lane.b32.xlu0 %v463, 64
      %v479 = vpop.permute.xlu0 %478
      %v488 = vunpack.c.l.b16 %v223
      %v489 = vunpack.c.l.b16 %v224
      %v490 = vunpack.c.l.b16 %v225
      %v491 = vunpack.c.l.b16 %v226
      %v492 = vunpack.c.l.b16 %v227
      %v493 = vunpack.c.l.b16 %v228
      %v494 = vunpack.c.l.b16 %v229
      %v495 = vunpack.c.l.b16 %v230
      %v496 = vpack.c.b16 %v320, %v488
      %v497 = vpack.c.b16 %v322, %v489
      %v498 = vpack.c.b16 %v324, %v490
      %v499 = vpack.c.b16 %v326, %v491
      %v500 = vpack.c.b16 %v328, %v492
      %v501 = vpack.c.b16 %v330, %v493
      %v502 = vpack.c.b16 %v332, %v494
      %v503 = vpack.c.b16 %v334, %v495
      %vm504 = vcmask 1046528
      %v505 = vrot.slane %v496, 1
      %v506 = vrot.slane %v359, 1
      %v507 = vsel %vm504, %v505, %v506
      %v508 = vrot.slane %v497, 1
      %v509 = vrot.slane %v360, 1
      %v510 = vsel %vm504, %v508, %v509
      %v511 = vrot.slane %v498, 1
      %v512 = vrot.slane %v361, 1
      %v513 = vsel %vm504, %v511, %v512
      %v514 = vrot.slane %v499, 1
      %v515 = vrot.slane %v362, 1
      %v516 = vsel %vm504, %v514, %v515
      %v517 = vrot.slane %v500, 1
      %v518 = vrot.slane %v363, 1
      %v519 = vsel %vm504, %v517, %v518
      %v520 = vrot.slane %v501, 1
      %v521 = vrot.slane %v364, 1
      %v522 = vsel %vm504, %v520, %v521
      %v523 = vrot.slane %v502, 1
      %v524 = vrot.slane %v365, 1
      %v525 = vsel %vm504, %v523, %v524
      %v526 = vrot.slane %v503, 1
      %v527 = vrot.slane %v366, 1
      %v528 = vsel %vm504, %v526, %v527
      %v545 = vunpack.c.l.b16 %v235
      %v546 = vunpack.c.l.b16 %v236
      %v547 = vunpack.c.l.b16 %v237
      %v548 = vunpack.c.l.b16 %v238
      %v549 = vunpack.c.l.b16 %v239
      %v550 = vunpack.c.l.b16 %v240
      %v551 = vunpack.c.l.b16 %v241
      %v552 = vunpack.c.l.b16 %v242
      %v553 = vunpack.c.l.b16 %v243
      %v554 = vunpack.c.l.b16 %v244
      %v555 = vunpack.c.l.b16 %v245
      %v556 = vunpack.c.l.b16 %v246
      %v557 = vunpack.c.l.b16 %v247
      %v558 = vunpack.c.l.b16 %v248
      %v559 = vunpack.c.l.b16 %v249
      %v560 = vunpack.c.l.b16 %v250
      %v561 = vpack.c.b16 %v546, %v545
      %v562 = vpack.c.b16 %v548, %v547
      %v563 = vpack.c.b16 %v550, %v549
      %v564 = vpack.c.b16 %v552, %v551
      %v565 = vpack.c.b16 %v554, %v553
      %v566 = vpack.c.b16 %v556, %v555
      %v567 = vpack.c.b16 %v558, %v557
      %v568 = vpack.c.b16 %v560, %v559
      %569 = vrot.lane.b32.xlu0 %v561, 64
      %v570 = vpop.permute.xlu0 %569
      %571 = vrot.lane.b32.xlu0 %v562, 64
      %v572 = vpop.permute.xlu0 %571
      %573 = vrot.lane.b32.xlu0 %v563, 64
      %v574 = vpop.permute.xlu0 %573
      %575 = vrot.lane.b32.xlu0 %v564, 64
      %v576 = vpop.permute.xlu0 %575
      %577 = vrot.lane.b32.xlu0 %v565, 64
      %v578 = vpop.permute.xlu0 %577
      %579 = vrot.lane.b32.xlu0 %v566, 64
      %v580 = vpop.permute.xlu0 %579
      %581 = vrot.lane.b32.xlu0 %v567, 64
      %v582 = vpop.permute.xlu0 %581
      %583 = vrot.lane.b32.xlu0 %v568, 64
      %v584 = vpop.permute.xlu0 %583
      %v593 = vunpack.c.l.b16 %v251
      %v594 = vunpack.c.l.b16 %v252
      %v595 = vunpack.c.l.b16 %v253
      %v596 = vunpack.c.l.b16 %v254
      %v597 = vunpack.c.l.b16 %v255
      %v598 = vunpack.c.l.b16 %v256
      %v599 = vunpack.c.l.b16 %v257
      %v600 = vunpack.c.l.b16 %v258
      %v601 = vpack.c.b16 %v593, %v593
      %v602 = vpack.c.b16 %v594, %v594
      %v603 = vpack.c.b16 %v595, %v595
      %v604 = vpack.c.b16 %v596, %v596
      %v605 = vpack.c.b16 %v597, %v597
      %v606 = vpack.c.b16 %v598, %v598
      %v607 = vpack.c.b16 %v599, %v599
      %v608 = vpack.c.b16 %v600, %v600
      %v610 = vshrl.u32 %v561, 16
      %v612 = vshll.u32 %v561, 16
      %v614 = vrot.slane %v612, 1
      %v615 = vor.u32 %v610, %v614
      %v617 = vshll.u32 %v601, 16
      %v619 = vrot.slane %v617, 1
      %v620 = vsel %vm367, %v615, %v619
      %v622 = vshrl.u32 %v562, 16
      %v624 = vshll.u32 %v562, 16
      %v626 = vrot.slane %v624, 1
      %v627 = vor.u32 %v622, %v626
      %v629 = vshll.u32 %v602, 16
      %v631 = vrot.slane %v629, 1
      %v632 = vsel %vm367, %v627, %v631
      %v634 = vshrl.u32 %v563, 16
      %v636 = vshll.u32 %v563, 16
      %v638 = vrot.slane %v636, 1
      %v639 = vor.u32 %v634, %v638
      %v641 = vshll.u32 %v603, 16
      %v643 = vrot.slane %v641, 1
      %v644 = vsel %vm367, %v639, %v643
      %v646 = vshrl.u32 %v564, 16
      %v648 = vshll.u32 %v564, 16
      %v650 = vrot.slane %v648, 1
      %v651 = vor.u32 %v646, %v650
      %v653 = vshll.u32 %v604, 16
      %v655 = vrot.slane %v653, 1
      %v656 = vsel %vm367, %v651, %v655
      %v658 = vshrl.u32 %v565, 16
      %v660 = vshll.u32 %v565, 16
      %v662 = vrot.slane %v660, 1
      %v663 = vor.u32 %v658, %v662
      %v665 = vshll.u32 %v605, 16
      %v667 = vrot.slane %v665, 1
      %v668 = vsel %vm367, %v663, %v667
      %v670 = vshrl.u32 %v566, 16
      %v672 = vshll.u32 %v566, 16
      %v674 = vrot.slane %v672, 1
      %v675 = vor.u32 %v670, %v674
      %v677 = vshll.u32 %v606, 16
      %v679 = vrot.slane %v677, 1
      %v680 = vsel %vm367, %v675, %v679
      %v682 = vshrl.u32 %v567, 16
      %v684 = vshll.u32 %v567, 16
      %v686 = vrot.slane %v684, 1
      %v687 = vor.u32 %v682, %v686
      %v689 = vshll.u32 %v607, 16
      %v691 = vrot.slane %v689, 1
      %v692 = vsel %vm367, %v687, %v691
      %v694 = vshrl.u32 %v568, 16
      %v696 = vshll.u32 %v568, 16
      %v698 = vrot.slane %v696, 1
      %v699 = vor.u32 %v694, %v698
      %v701 = vshll.u32 %v608, 16
      %v703 = vrot.slane %v701, 1
      %v704 = vsel %vm367, %v699, %v703
      %v713 = vunpack.c.l.b16 %v259
      %v714 = vunpack.c.l.b16 %v260
      %v715 = vunpack.c.l.b16 %v261
      %v716 = vunpack.c.l.b16 %v262
      %v717 = vunpack.c.l.b16 %v263
      %v718 = vunpack.c.l.b16 %v264
      %v719 = vunpack.c.l.b16 %v265
      %v720 = vunpack.c.l.b16 %v266
      %v721 = vpack.c.b16 %v546, %v713
      %v722 = vpack.c.b16 %v548, %v714
      %v723 = vpack.c.b16 %v550, %v715
      %v724 = vpack.c.b16 %v552, %v716
      %v725 = vpack.c.b16 %v554, %v717
      %v726 = vpack.c.b16 %v556, %v718
      %v727 = vpack.c.b16 %v558, %v719
      %v728 = vpack.c.b16 %v560, %v720
      %v729 = vrot.slane %v721, 1
      %v730 = vrot.slane %v601, 1
      %v731 = vsel %vm504, %v729, %v730
      %v732 = vrot.slane %v722, 1
      %v733 = vrot.slane %v602, 1
      %v734 = vsel %vm504, %v732, %v733
      %v735 = vrot.slane %v723, 1
      %v736 = vrot.slane %v603, 1
      %v737 = vsel %vm504, %v735, %v736
      %v738 = vrot.slane %v724, 1
      %v739 = vrot.slane %v604, 1
      %v740 = vsel %vm504, %v738, %v739
      %v741 = vrot.slane %v725, 1
      %v742 = vrot.slane %v605, 1
      %v743 = vsel %vm504, %v741, %v742
      %v744 = vrot.slane %v726, 1
      %v745 = vrot.slane %v606, 1
      %v746 = vsel %vm504, %v744, %v745
      %v747 = vrot.slane %v727, 1
      %v748 = vrot.slane %v607, 1
      %v749 = vsel %vm504, %v747, %v748
      %v750 = vrot.slane %v728, 1
      %v751 = vrot.slane %v608, 1
      %v752 = vsel %vm504, %v750, %v751
      %753 = vrot.lane.b32.xlu0 %v731, 64
      %v754 = vpop.permute.xlu0 %753
      %755 = vrot.lane.b32.xlu0 %v734, 64
      %v756 = vpop.permute.xlu0 %755
      %757 = vrot.lane.b32.xlu0 %v737, 64
      %v758 = vpop.permute.xlu0 %757
      %759 = vrot.lane.b32.xlu0 %v740, 64
      %v760 = vpop.permute.xlu0 %759
      %761 = vrot.lane.b32.xlu0 %v743, 64
      %v762 = vpop.permute.xlu0 %761
      %763 = vrot.lane.b32.xlu0 %v746, 64
      %v764 = vpop.permute.xlu0 %763
      %765 = vrot.lane.b32.xlu0 %v749, 64
      %v766 = vpop.permute.xlu0 %765
      %767 = vrot.lane.b32.xlu0 %v752, 64
      %v768 = vpop.permute.xlu0 %767
      %v785 = vunpack.c.l.b16 %v271
      %v786 = vunpack.c.l.b16 %v272
      %v787 = vunpack.c.l.b16 %v273
      %v788 = vunpack.c.l.b16 %v274
      %v789 = vunpack.c.l.b16 %v275
      %v790 = vunpack.c.l.b16 %v276
      %v791 = vunpack.c.l.b16 %v277
      %v792 = vunpack.c.l.b16 %v278
      %v793 = vunpack.c.l.b16 %v279
      %v794 = vunpack.c.l.b16 %v280
      %v795 = vunpack.c.l.b16 %v281
      %v796 = vunpack.c.l.b16 %v282
      %v797 = vunpack.c.l.b16 %v283
      %v798 = vunpack.c.l.b16 %v284
      %v799 = vunpack.c.l.b16 %v285
      %v800 = vunpack.c.l.b16 %v286
      %v801 = vpack.c.b16 %v786, %v785
      %v802 = vpack.c.b16 %v788, %v787
      %v803 = vpack.c.b16 %v790, %v789
      %v804 = vpack.c.b16 %v792, %v791
      %v805 = vpack.c.b16 %v794, %v793
      %v806 = vpack.c.b16 %v796, %v795
      %v807 = vpack.c.b16 %v798, %v797
      %v808 = vpack.c.b16 %v800, %v799
      %v817 = vunpack.c.l.b16 %v287
      %v818 = vunpack.c.l.b16 %v288
      %v819 = vunpack.c.l.b16 %v289
      %v820 = vunpack.c.l.b16 %v290
      %v821 = vunpack.c.l.b16 %v291
      %v822 = vunpack.c.l.b16 %v292
      %v823 = vunpack.c.l.b16 %v293
      %v824 = vunpack.c.l.b16 %v294
      %v825 = vpack.c.b16 %v817, %v817
      %v826 = vpack.c.b16 %v818, %v818
      %v827 = vpack.c.b16 %v819, %v819
      %v828 = vpack.c.b16 %v820, %v820
      %v829 = vpack.c.b16 %v821, %v821
      %v830 = vpack.c.b16 %v822, %v822
      %v831 = vpack.c.b16 %v823, %v823
      %v832 = vpack.c.b16 %v824, %v824
      %v834 = vshrl.u32 %v801, 16
      %v836 = vshll.u32 %v801, 16
      %v838 = vrot.slane %v836, 1
      %v839 = vor.u32 %v834, %v838
      %v841 = vshll.u32 %v825, 16
      %v843 = vrot.slane %v841, 1
      %v844 = vsel %vm367, %v839, %v843
      %v846 = vshrl.u32 %v802, 16
      %v848 = vshll.u32 %v802, 16
      %v850 = vrot.slane %v848, 1
      %v851 = vor.u32 %v846, %v850
      %v853 = vshll.u32 %v826, 16
      %v855 = vrot.slane %v853, 1
      %v856 = vsel %vm367, %v851, %v855
      %v858 = vshrl.u32 %v803, 16
      %v860 = vshll.u32 %v803, 16
      %v862 = vrot.slane %v860, 1
      %v863 = vor.u32 %v858, %v862
      %v865 = vshll.u32 %v827, 16
      %v867 = vrot.slane %v865, 1
      %v868 = vsel %vm367, %v863, %v867
      %v870 = vshrl.u32 %v804, 16
      %v872 = vshll.u32 %v804, 16
      %v874 = vrot.slane %v872, 1
      %v875 = vor.u32 %v870, %v874
      %v877 = vshll.u32 %v828, 16
      %v879 = vrot.slane %v877, 1
      %v880 = vsel %vm367, %v875, %v879
      %v882 = vshrl.u32 %v805, 16
      %v884 = vshll.u32 %v805, 16
      %v886 = vrot.slane %v884, 1
      %v887 = vor.u32 %v882, %v886
      %v889 = vshll.u32 %v829, 16
      %v891 = vrot.slane %v889, 1
      %v892 = vsel %vm367, %v887, %v891
      %v894 = vshrl.u32 %v806, 16
      %v896 = vshll.u32 %v806, 16
      %v898 = vrot.slane %v896, 1
      %v899 = vor.u32 %v894, %v898
      %v901 = vshll.u32 %v830, 16
      %v903 = vrot.slane %v901, 1
      %v904 = vsel %vm367, %v899, %v903
      %v906 = vshrl.u32 %v807, 16
      %v908 = vshll.u32 %v807, 16
      %v910 = vrot.slane %v908, 1
      %v911 = vor.u32 %v906, %v910
      %v913 = vshll.u32 %v831, 16
      %v915 = vrot.slane %v913, 1
      %v916 = vsel %vm367, %v911, %v915
      %v918 = vshrl.u32 %v808, 16
      %v920 = vshll.u32 %v808, 16
      %v922 = vrot.slane %v920, 1
      %v923 = vor.u32 %v918, %v922
      %v925 = vshll.u32 %v832, 16
      %v927 = vrot.slane %v925, 1
      %v928 = vsel %vm367, %v923, %v927
      %929 = vrot.lane.b32.xlu0 %v844, 64
      %v930 = vpop.permute.xlu0 %929
      %931 = vrot.lane.b32.xlu0 %v856, 64
      %v932 = vpop.permute.xlu0 %931
      %933 = vrot.lane.b32.xlu0 %v868, 64
      %v934 = vpop.permute.xlu0 %933
      %935 = vrot.lane.b32.xlu0 %v880, 64
      %v936 = vpop.permute.xlu0 %935
      %937 = vrot.lane.b32.xlu0 %v892, 64
      %v938 = vpop.permute.xlu0 %937
      %939 = vrot.lane.b32.xlu0 %v904, 64
      %v940 = vpop.permute.xlu0 %939
      %941 = vrot.lane.b32.xlu0 %v916, 64
      %v942 = vpop.permute.xlu0 %941
      %943 = vrot.lane.b32.xlu0 %v928, 64
      %v944 = vpop.permute.xlu0 %943
      %v953 = vunpack.c.l.b16 %v295
      %v954 = vunpack.c.l.b16 %v296
      %v955 = vunpack.c.l.b16 %v297
      %v956 = vunpack.c.l.b16 %v298
      %v957 = vunpack.c.l.b16 %v299
      %v958 = vunpack.c.l.b16 %v300
      %v959 = vunpack.c.l.b16 %v301
      %v960 = vunpack.c.l.b16 %v302
      %v961 = vpack.c.b16 %v786, %v953
      %v962 = vpack.c.b16 %v788, %v954
      %v963 = vpack.c.b16 %v790, %v955
      %v964 = vpack.c.b16 %v792, %v956
      %v965 = vpack.c.b16 %v794, %v957
      %v966 = vpack.c.b16 %v796, %v958
      %v967 = vpack.c.b16 %v798, %v959
      %v968 = vpack.c.b16 %v800, %v960
      %v969 = vrot.slane %v961, 1
      %v970 = vrot.slane %v825, 1
      %v971 = vsel %vm504, %v969, %v970
      %v972 = vrot.slane %v962, 1
      %v973 = vrot.slane %v826, 1
      %v974 = vsel %vm504, %v972, %v973
      %v975 = vrot.slane %v963, 1
      %v976 = vrot.slane %v827, 1
      %v977 = vsel %vm504, %v975, %v976
      %v978 = vrot.slane %v964, 1
      %v979 = vrot.slane %v828, 1
      %v980 = vsel %vm504, %v978, %v979
      %v981 = vrot.slane %v965, 1
      %v982 = vrot.slane %v829, 1
      %v983 = vsel %vm504, %v981, %v982
      %v984 = vrot.slane %v966, 1
      %v985 = vrot.slane %v830, 1
      %v986 = vsel %vm504, %v984, %v985
      %v987 = vrot.slane %v967, 1
      %v988 = vrot.slane %v831, 1
      %v989 = vsel %vm504, %v987, %v988
      %v990 = vrot.slane %v968, 1
      %v991 = vrot.slane %v832, 1
      %v992 = vsel %vm504, %v990, %v991
      %vm993 = vcmask 523264
      %v995 = vsel %vm993, %v335, %v465
      %v998 = vsel %vm993, %v336, %v467
      %v1001 = vsel %vm993, %v337, %v469
      %v1004 = vsel %vm993, %v338, %v471
      %v1007 = vsel %vm993, %v339, %v473
      %v1010 = vsel %vm993, %v340, %v475
      %v1013 = vsel %vm993, %v341, %v477
      %v1016 = vsel %vm993, %v342, %v479
      %v1020 = vsel %vm993, %v507, %v570
      %v1024 = vsel %vm993, %v510, %v572
      %v1028 = vsel %vm993, %v513, %v574
      %v1032 = vsel %vm993, %v516, %v576
      %v1036 = vsel %vm993, %v519, %v578
      %v1040 = vsel %vm993, %v522, %v580
      %v1044 = vsel %vm993, %v525, %v582
      %v1048 = vsel %vm993, %v528, %v584
      %v1052 = vsel %vm993, %v620, %v754
      %v1056 = vsel %vm993, %v632, %v756
      %v1060 = vsel %vm993, %v644, %v758
      %v1064 = vsel %vm993, %v656, %v760
      %v1068 = vsel %vm993, %v668, %v762
      %v1072 = vsel %vm993, %v680, %v764
      %v1076 = vsel %vm993, %v692, %v766
      %v1080 = vsel %vm993, %v704, %v768
      %v1083 = vsel %vm993, %v801, %v930
      %v1086 = vsel %vm993, %v802, %v932
      %v1089 = vsel %vm993, %v803, %v934
      %v1092 = vsel %vm993, %v804, %v936
      %v1095 = vsel %vm993, %v805, %v938
      %v1098 = vsel %vm993, %v806, %v940
      %v1101 = vsel %vm993, %v807, %v942
      %v1104 = vsel %vm993, %v808, %v944
      %v1106 = vld [vmem:[%s1] sm:$0xf]
      %v1107 = vld [vmem:[%s1 + $0x4] sm:$0xf]
      %v1108 = vld [vmem:[%s1 + $0x8] sm:$0xf]
      %v1109 = vld [vmem:[%s1 + $0xc] sm:$0xf]
      %v1110 = vld [vmem:[%s1 + $0x10] sm:$0xf]
      %v1111 = vld [vmem:[%s1 + $0x14] sm:$0xf]
      %v1112 = vld [vmem:[%s1 + $0x18] sm:$0xf]
      %v1113 = vld [vmem:[%s1 + $0x1c] sm:$0xf]
      %v1114 = vld [vmem:[%s1 + $0x20] sm:$0xf]
      %v1115 = vld [vmem:[%s1 + $0x24] sm:$0xf]
      %v1116 = vld [vmem:[%s1 + $0x28] sm:$0xf]
      %v1117 = vld [vmem:[%s1 + $0x2c] sm:$0xf]
      %v1118 = vld [vmem:[%s1 + $0x30] sm:$0xf]
      %v1119 = vld [vmem:[%s1 + $0x34] sm:$0xf]
      %v1120 = vld [vmem:[%s1 + $0x38] sm:$0xf]
      %v1121 = vld [vmem:[%s1 + $0x3c] sm:$0xf]
      %v1122 = vld [vmem:[%s1 + $0x40] sm:$0xf]
      %v1123 = vld [vmem:[%s1 + $0x44] sm:$0xf]
      %v1124 = vld [vmem:[%s1 + $0x48] sm:$0xf]
      %v1125 = vld [vmem:[%s1 + $0x4c] sm:$0xf]
      %v1126 = vld [vmem:[%s1 + $0x50] sm:$0xf]
      %v1127 = vld [vmem:[%s1 + $0x54] sm:$0xf]
      %v1128 = vld [vmem:[%s1 + $0x58] sm:$0xf]
      %v1129 = vld [vmem:[%s1 + $0x5c] sm:$0xf]
      %v1130 = vld [vmem:[%s1 + $0x60] sm:$0xf]
      %v1131 = vld [vmem:[%s1 + $0x64] sm:$0xf]
      %v1132 = vld [vmem:[%s1 + $0x68] sm:$0xf]
      %v1133 = vld [vmem:[%s1 + $0x6c] sm:$0xf]
      %v1134 = vld [vmem:[%s1 + $0x70] sm:$0xf]
      %v1135 = vld [vmem:[%s1 + $0x74] sm:$0xf]
      %v1136 = vld [vmem:[%s1 + $0x78] sm:$0xf]
      %v1137 = vld [vmem:[%s1 + $0x7c] sm:$0xf]
      %v1138 = vld [vmem:[%s1 + $0x80] sm:$0xf]
      %v1139 = vld [vmem:[%s1 + $0x84] sm:$0xf]
      %v1140 = vld [vmem:[%s1 + $0x88] sm:$0xf]
      %v1141 = vld [vmem:[%s1 + $0x8c] sm:$0xf]
      %v1142 = vld [vmem:[%s1 + $0x90] sm:$0xf]
      %v1143 = vld [vmem:[%s1 + $0x94] sm:$0xf]
      %v1144 = vld [vmem:[%s1 + $0x98] sm:$0xf]
      %v1145 = vld [vmem:[%s1 + $0x9c] sm:$0xf]
      %v1146 = vld [vmem:[%s1 + $0xa0] sm:$0xf]
      %v1147 = vld [vmem:[%s1 + $0xa4] sm:$0xf]
      %v1148 = vld [vmem:[%s1 + $0xa8] sm:$0xf]
      %v1149 = vld [vmem:[%s1 + $0xac] sm:$0xf]
      %v1150 = vld [vmem:[%s1 + $0xb0] sm:$0xf]
      %v1151 = vld [vmem:[%s1 + $0xb4] sm:$0xf]
      %v1152 = vld [vmem:[%s1 + $0xb8] sm:$0xf]
      %v1153 = vld [vmem:[%s1 + $0xbc] sm:$0xf]
      %v1154 = vld [vmem:[%s1 + $0xc0] sm:$0xf]
      %v1155 = vld [vmem:[%s1 + $0xc4] sm:$0xf]
      %v1156 = vld [vmem:[%s1 + $0xc8] sm:$0xf]
      %v1157 = vld [vmem:[%s1 + $0xcc] sm:$0xf]
      %v1158 = vld [vmem:[%s1 + $0xd0] sm:$0xf]
      %v1159 = vld [vmem:[%s1 + $0xd4] sm:$0xf]
      %v1160 = vld [vmem:[%s1 + $0xd8] sm:$0xf]
      %v1161 = vld [vmem:[%s1 + $0xdc] sm:$0xf]
      %v1162 = vld [vmem:[%s1 + $0xe0] sm:$0xf]
      %v1163 = vld [vmem:[%s1 + $0xe4] sm:$0xf]
      %v1164 = vld [vmem:[%s1 + $0xe8] sm:$0xf]
      %v1165 = vld [vmem:[%s1 + $0xec] sm:$0xf]
      %v1166 = vld [vmem:[%s1 + $0xf0] sm:$0xf]
      %v1167 = vld [vmem:[%s1 + $0xf4] sm:$0xf]
      %v1168 = vld [vmem:[%s1 + $0xf8] sm:$0xf]
      %v1169 = vld [vmem:[%s1 + $0xfc] sm:$0xf]
      %v1170 = vld [vmem:[%s1 + $0x100] sm:$0xf]
      %v1171 = vld [vmem:[%s1 + $0x104] sm:$0xf]
      %v1172 = vld [vmem:[%s1 + $0x108] sm:$0xf]
      %v1173 = vld [vmem:[%s1 + $0x10c] sm:$0xf]
      %v1174 = vld [vmem:[%s1 + $0x110] sm:$0xf]
      %v1175 = vld [vmem:[%s1 + $0x114] sm:$0xf]
      %v1176 = vld [vmem:[%s1 + $0x118] sm:$0xf]
      %v1177 = vld [vmem:[%s1 + $0x11c] sm:$0xf]
      %v1178 = vld [vmem:[%s2] sm:$0x1]
      %v1180 = vperm.slane %v1178, 0
      %v1254 = vunpack.c.l.b16 %v1106
      %v1255 = vunpack.c.l.b16 %v1107
      %v1256 = vunpack.c.l.b16 %v1108
      %v1257 = vunpack.c.l.b16 %v1109
      %v1258 = vunpack.c.l.b16 %v1110
      %v1259 = vunpack.c.l.b16 %v1111
      %v1260 = vunpack.c.l.b16 %v1112
      %v1261 = vunpack.c.l.b16 %v1113
      %v1262 = vunpack.c.l.b16 %v1114
      %v1263 = vunpack.c.l.b16 %v1115
      %v1264 = vunpack.c.l.b16 %v1116
      %v1265 = vunpack.c.l.b16 %v1117
      %v1266 = vunpack.c.l.b16 %v1118
      %v1267 = vunpack.c.l.b16 %v1119
      %v1268 = vunpack.c.l.b16 %v1120
      %v1269 = vunpack.c.l.b16 %v1121
      %v1270 = vunpack.c.l.b16 %v1122
      %v1271 = vunpack.c.l.b16 %v1123
      %v1272 = vunpack.c.l.b16 %v1124
      %v1273 = vunpack.c.l.b16 %v1125
      %v1274 = vunpack.c.l.b16 %v1126
      %v1275 = vunpack.c.l.b16 %v1127
      %v1276 = vunpack.c.l.b16 %v1128
      %v1277 = vunpack.c.l.b16 %v1129
      %v1278 = vunpack.c.l.b16 %v1130
      %v1279 = vunpack.c.l.b16 %v1131
      %v1280 = vunpack.c.l.b16 %v1132
      %v1281 = vunpack.c.l.b16 %v1133
      %v1282 = vunpack.c.l.b16 %v1134
      %v1283 = vunpack.c.l.b16 %v1135
      %v1284 = vunpack.c.l.b16 %v1136
      %v1285 = vunpack.c.l.b16 %v1137
      %v1286 = vunpack.c.l.b16 %v1138
      %v1287 = vunpack.c.l.b16 %v1139
      %v1288 = vunpack.c.l.b16 %v1140
      %v1289 = vunpack.c.l.b16 %v1141
      %v1290 = vunpack.c.l.b16 %v1142
      %v1291 = vunpack.c.l.b16 %v1143
      %v1292 = vunpack.c.l.b16 %v1144
      %v1293 = vunpack.c.l.b16 %v1145
      %v1294 = vunpack.c.l.b16 %v1146
      %v1295 = vunpack.c.l.b16 %v1147
      %v1296 = vunpack.c.l.b16 %v1148
      %v1297 = vunpack.c.l.b16 %v1149
      %v1298 = vunpack.c.l.b16 %v1150
      %v1299 = vunpack.c.l.b16 %v1151
      %v1300 = vunpack.c.l.b16 %v1152
      %v1301 = vunpack.c.l.b16 %v1153
      %v1302 = vunpack.c.l.b16 %v1154
      %v1303 = vunpack.c.l.b16 %v1155
      %v1304 = vunpack.c.l.b16 %v1156
      %v1305 = vunpack.c.l.b16 %v1157
      %v1306 = vunpack.c.l.b16 %v1158
      %v1307 = vunpack.c.l.b16 %v1159
      %v1308 = vunpack.c.l.b16 %v1160
      %v1309 = vunpack.c.l.b16 %v1161
      %v1310 = vunpack.c.l.b16 %v1162
      %v1311 = vunpack.c.l.b16 %v1163
      %v1312 = vunpack.c.l.b16 %v1164
      %v1313 = vunpack.c.l.b16 %v1165
      %v1314 = vunpack.c.l.b16 %v1166
      %v1315 = vunpack.c.l.b16 %v1167
      %v1316 = vunpack.c.l.b16 %v1168
      %v1317 = vunpack.c.l.b16 %v1169
      %v1318 = vunpack.c.l.b16 %v1170
      %v1319 = vunpack.c.l.b16 %v1171
      %v1320 = vunpack.c.l.b16 %v1172
      %v1321 = vunpack.c.l.b16 %v1173
      %v1322 = vunpack.c.l.b16 %v1174
      %v1323 = vunpack.c.l.b16 %v1175
      %v1324 = vunpack.c.l.b16 %v1176
      %v1325 = vunpack.c.l.b16 %v1177
      %v1326 = vpack.c.b16 %v1255, %v1254
      %v1327 = vpack.c.b16 %v1257, %v1256
      %v1328 = vpack.c.b16 %v1259, %v1258
      %v1329 = vpack.c.b16 %v1261, %v1260
      %v1330 = vpack.c.b16 %v1263, %v1262
      %v1331 = vpack.c.b16 %v1265, %v1264
      %v1332 = vpack.c.b16 %v1267, %v1266
      %v1333 = vpack.c.b16 %v1269, %v1268
      %v1334 = vpack.c.b16 %v1271, %v1270
      %v1335 = vpack.c.b16 %v1273, %v1272
      %v1336 = vpack.c.b16 %v1275, %v1274
      %v1337 = vpack.c.b16 %v1277, %v1276
      %v1338 = vpack.c.b16 %v1279, %v1278
      %v1339 = vpack.c.b16 %v1281, %v1280
      %v1340 = vpack.c.b16 %v1283, %v1282
      %v1341 = vpack.c.b16 %v1285, %v1284
      %v1342 = vpack.c.b16 %v1287, %v1286
      %v1343 = vpack.c.b16 %v1289, %v1288
      %v1344 = vpack.c.b16 %v1291, %v1290
      %v1345 = vpack.c.b16 %v1293, %v1292
      %v1346 = vpack.c.b16 %v1295, %v1294
      %v1347 = vpack.c.b16 %v1297, %v1296
      %v1348 = vpack.c.b16 %v1299, %v1298
      %v1349 = vpack.c.b16 %v1301, %v1300
      %v1350 = vpack.c.b16 %v1303, %v1302
      %v1351 = vpack.c.b16 %v1305, %v1304
      %v1352 = vpack.c.b16 %v1307, %v1306
      %v1353 = vpack.c.b16 %v1309, %v1308
      %v1354 = vpack.c.b16 %v1311, %v1310
      %v1355 = vpack.c.b16 %v1313, %v1312
      %v1356 = vpack.c.b16 %v1315, %v1314
      %v1357 = vpack.c.b16 %v1317, %v1316
      %v1358 = vpack.c.b16 %v1319, %v1318
      %v1359 = vpack.c.b16 %v1321, %v1320
      %v1360 = vpack.c.b16 %v1323, %v1322
      %v1361 = vpack.c.b16 %v1325, %v1324
      %v1399 = vsel %vm993, %v971, 0
      %v1402 = vsel %vm993, %v974, 0
      %v1405 = vsel %vm993, %v977, 0
      %v1408 = vsel %vm993, %v980, 0
      %v1411 = vsel %vm993, %v983, 0
      %v1414 = vsel %vm993, %v986, 0
      %v1417 = vsel %vm993, %v989, 0
      %v1420 = vsel %vm993, %v992, 0
      %1422 = vmatpush.bf16.msra.mxu0 %v1333
      %1423 = vmatpush.bf16.msra.mxu0 %v1332
      %1424 = vmatpush.bf16.msra.mxu0 %v1331
      %1425 = vmatpush.bf16.msra.mxu0 %v1330
      %1426 = vmatpush.bf16.msra.mxu0 %v1329
      %1427 = vmatpush.bf16.msra.mxu0 %v1328
      %1428 = vmatpush.bf16.msra.mxu0 %v1327
      %1429 = vmatpush.bf16.msra.mxu0 %v1326
      %1430 = vmatmul.bf16.gmra.mxu0 %v995
      %v1431 = vpop.f32.mrf.mxu0
      %v1432 = vadd.f32 %v1180, %v1431
      %v1433 = vpop.f32.mrf.mxu0
      %v1434 = vadd.f32 %v1180, %v1433
      %1435 = vmatmul.bf16.gmra.mxu0 %v998
      %v1436 = vpop.f32.mrf.mxu0
      %v1437 = vadd.f32 %v1180, %v1436
      %v1438 = vpop.f32.mrf.mxu0
      %v1439 = vadd.f32 %v1180, %v1438
      %1440 = vmatmul.bf16.gmra.mxu0 %v1001
      %v1441 = vpop.f32.mrf.mxu0
      %v1442 = vadd.f32 %v1180, %v1441
      %v1443 = vpop.f32.mrf.mxu0
      %v1444 = vadd.f32 %v1180, %v1443
      %1445 = vmatmul.bf16.gmra.mxu0 %v1004
      %v1446 = vpop.f32.mrf.mxu0
      %v1447 = vadd.f32 %v1180, %v1446
      %v1448 = vpop.f32.mrf.mxu0
      %v1449 = vadd.f32 %v1180, %v1448
      %1450 = vmatmul.bf16.gmra.mxu0 %v1007
      %v1451 = vpop.f32.mrf.mxu0
      %v1452 = vadd.f32 %v1180, %v1451
      %v1453 = vpop.f32.mrf.mxu0
      %v1454 = vadd.f32 %v1180, %v1453
      %1455 = vmatmul.bf16.gmra.mxu0 %v1010
      %v1456 = vpop.f32.mrf.mxu0
      %v1457 = vadd.f32 %v1180, %v1456
      %v1458 = vpop.f32.mrf.mxu0
      %v1459 = vadd.f32 %v1180, %v1458
      %1460 = vmatmul.bf16.gmra.mxu0 %v1013
      %v1461 = vpop.f32.mrf.mxu0
      %v1462 = vadd.f32 %v1180, %v1461
      %v1463 = vpop.f32.mrf.mxu0
      %v1464 = vadd.f32 %v1180, %v1463
      %1465 = vmatmul.bf16.gmra.mxu0 %v1016
      %v1466 = vpop.f32.mrf.mxu0
      %v1467 = vadd.f32 %v1180, %v1466
      %v1468 = vpop.f32.mrf.mxu0
      %v1469 = vadd.f32 %v1180, %v1468
      %1470 = vdwg.mxu0
      %1471 = vmatpush.bf16.msra.mxu0 %v1341
      %1472 = vmatpush.bf16.msra.mxu0 %v1340
      %1473 = vmatpush.bf16.msra.mxu0 %v1339
      %1474 = vmatpush.bf16.msra.mxu0 %v1338
      %1475 = vmatpush.bf16.msra.mxu0 %v1337
      %1476 = vmatpush.bf16.msra.mxu0 %v1336
      %1477 = vmatpush.bf16.msra.mxu0 %v1335
      %1478 = vmatpush.bf16.msra.mxu0 %v1334
      %1479 = vmatmul.bf16.gmra.mxu0 %v1020
      %v1480 = vpop.f32.mrf.mxu0
      %v1481 = vadd.f32 %v1432, %v1480
      %v1482 = vpop.f32.mrf.mxu0
      %v1483 = vadd.f32 %v1434, %v1482
      %1484 = vmatmul.bf16.gmra.mxu0 %v1024
      %v1485 = vpop.f32.mrf.mxu0
      %v1486 = vadd.f32 %v1437, %v1485
      %v1487 = vpop.f32.mrf.mxu0
      %v1488 = vadd.f32 %v1439, %v1487
      %1489 = vmatmul.bf16.gmra.mxu0 %v1028
      %v1490 = vpop.f32.mrf.mxu0
      %v1491 = vadd.f32 %v1442, %v1490
      %v1492 = vpop.f32.mrf.mxu0
      %v1493 = vadd.f32 %v1444, %v1492
      %1494 = vmatmul.bf16.gmra.mxu0 %v1032
      %v1495 = vpop.f32.mrf.mxu0
      %v1496 = vadd.f32 %v1447, %v1495
      %v1497 = vpop.f32.mrf.mxu0
      %v1498 = vadd.f32 %v1449, %v1497
      %1499 = vmatmul.bf16.gmra.mxu0 %v1036
      %v1500 = vpop.f32.mrf.mxu0
      %v1501 = vadd.f32 %v1452, %v1500
      %v1502 = vpop.f32.mrf.mxu0
      %v1503 = vadd.f32 %v1454, %v1502
      %1504 = vmatmul.bf16.gmra.mxu0 %v1040
      %v1505 = vpop.f32.mrf.mxu0
      %v1506 = vadd.f32 %v1457, %v1505
      %v1507 = vpop.f32.mrf.mxu0
      %v1508 = vadd.f32 %v1459, %v1507
      %1509 = vmatmul.bf16.gmra.mxu0 %v1044
      %v1510 = vpop.f32.mrf.mxu0
      %v1511 = vadd.f32 %v1462, %v1510
      %v1512 = vpop.f32.mrf.mxu0
      %v1513 = vadd.f32 %v1464, %v1512
      %1514 = vmatmul.bf16.gmra.mxu0 %v1048
      %v1515 = vpop.f32.mrf.mxu0
      %v1516 = vadd.f32 %v1467, %v1515
      %v1517 = vpop.f32.mrf.mxu0
      %v1518 = vadd.f32 %v1469, %v1517
      %1519 = vdwg.mxu0
      %1520 = vmatpush.bf16.msra.mxu0 %v1349
      %1521 = vmatpush.bf16.msra.mxu0 %v1348
      %1522 = vmatpush.bf16.msra.mxu0 %v1347
      %1523 = vmatpush.bf16.msra.mxu0 %v1346
      %1524 = vmatpush.bf16.msra.mxu0 %v1345
      %1525 = vmatpush.bf16.msra.mxu0 %v1344
      %1526 = vmatpush.bf16.msra.mxu0 %v1343
      %1527 = vmatpush.bf16.msra.mxu0 %v1342
      %1528 = vmatmul.bf16.gmra.mxu0 %v1052
      %v1529 = vpop.f32.mrf.mxu0
      %v1530 = vadd.f32 %v1481, %v1529
      %v1531 = vpop.f32.mrf.mxu0
      %v1532 = vadd.f32 %v1483, %v1531
      %1533 = vmatmul.bf16.gmra.mxu0 %v1056
      %v1534 = vpop.f32.mrf.mxu0
      %v1535 = vadd.f32 %v1486, %v1534
      %v1536 = vpop.f32.mrf.mxu0
      %v1537 = vadd.f32 %v1488, %v1536
      %1538 = vmatmul.bf16.gmra.mxu0 %v1060
      %v1539 = vpop.f32.mrf.mxu0
      %v1540 = vadd.f32 %v1491, %v1539
      %v1541 = vpop.f32.mrf.mxu0
      %v1542 = vadd.f32 %v1493, %v1541
      %1543 = vmatmul.bf16.gmra.mxu0 %v1064
      %v1544 = vpop.f32.mrf.mxu0
      %v1545 = vadd.f32 %v1496, %v1544
      %v1546 = vpop.f32.mrf.mxu0
      %v1547 = vadd.f32 %v1498, %v1546
      %1548 = vmatmul.bf16.gmra.mxu0 %v1068
      %v1549 = vpop.f32.mrf.mxu0
      %v1550 = vadd.f32 %v1501, %v1549
      %v1551 = vpop.f32.mrf.mxu0
      %v1552 = vadd.f32 %v1503, %v1551
      %1553 = vmatmul.bf16.gmra.mxu0 %v1072
      %v1554 = vpop.f32.mrf.mxu0
      %v1555 = vadd.f32 %v1506, %v1554
      %v1556 = vpop.f32.mrf.mxu0
      %v1557 = vadd.f32 %v1508, %v1556
      %1558 = vmatmul.bf16.gmra.mxu0 %v1076
      %v1559 = vpop.f32.mrf.mxu0
      %v1560 = vadd.f32 %v1511, %v1559
      %v1561 = vpop.f32.mrf.mxu0
      %v1562 = vadd.f32 %v1513, %v1561
      %1563 = vmatmul.bf16.gmra.mxu0 %v1080
      %v1564 = vpop.f32.mrf.mxu0
      %v1565 = vadd.f32 %v1516, %v1564
      %v1566 = vpop.f32.mrf.mxu0
      %v1567 = vadd.f32 %v1518, %v1566
      %1568 = vdwg.mxu0
      %1569 = vmatpush.bf16.msra.mxu0 %v1357
      %1570 = vmatpush.bf16.msra.mxu0 %v1356
      %1571 = vmatpush.bf16.msra.mxu0 %v1355
      %1572 = vmatpush.bf16.msra.mxu0 %v1354
      %1573 = vmatpush.bf16.msra.mxu0 %v1353
      %1574 = vmatpush.bf16.msra.mxu0 %v1352
      %1575 = vmatpush.bf16.msra.mxu0 %v1351
      %1576 = vmatpush.bf16.msra.mxu0 %v1350
      %1577 = vmatmul.bf16.gmra.mxu0 %v1083
      %v1578 = vpop.f32.mrf.mxu0
      %v1579 = vadd.f32 %v1530, %v1578
      %v1580 = vpop.f32.mrf.mxu0
      %v1581 = vadd.f32 %v1532, %v1580
      %1582 = vmatmul.bf16.gmra.mxu0 %v1086
      %v1583 = vpop.f32.mrf.mxu0
      %v1584 = vadd.f32 %v1535, %v1583
      %v1585 = vpop.f32.mrf.mxu0
      %v1586 = vadd.f32 %v1537, %v1585
      %1587 = vmatmul.bf16.gmra.mxu0 %v1089
      %v1588 = vpop.f32.mrf.mxu0
      %v1589 = vadd.f32 %v1540, %v1588
      %v1590 = vpop.f32.mrf.mxu0
      %v1591 = vadd.f32 %v1542, %v1590
      %1592 = vmatmul.bf16.gmra.mxu0 %v1092
      %v1593 = vpop.f32.mrf.mxu0
      %v1594 = vadd.f32 %v1545, %v1593
      %v1595 = vpop.f32.mrf.mxu0
      %v1596 = vadd.f32 %v1547, %v1595
      %1597 = vmatmul.bf16.gmra.mxu0 %v1095
      %v1598 = vpop.f32.mrf.mxu0
      %v1599 = vadd.f32 %v1550, %v1598
      %v1600 = vpop.f32.mrf.mxu0
      %v1601 = vadd.f32 %v1552, %v1600
      %1602 = vmatmul.bf16.gmra.mxu0 %v1098
      %v1603 = vpop.f32.mrf.mxu0
      %v1604 = vadd.f32 %v1555, %v1603
      %v1605 = vpop.f32.mrf.mxu0
      %v1606 = vadd.f32 %v1557, %v1605
      %1607 = vmatmul.bf16.gmra.mxu0 %v1101
      %v1608 = vpop.f32.mrf.mxu0
      %v1609 = vadd.f32 %v1560, %v1608
      %v1610 = vpop.f32.mrf.mxu0
      %v1611 = vadd.f32 %v1562, %v1610
      %1612 = vmatmul.bf16.gmra.mxu0 %v1104
      %v1613 = vpop.f32.mrf.mxu0
      %v1614 = vadd.f32 %v1565, %v1613
      %v1615 = vpop.f32.mrf.mxu0
      %v1616 = vadd.f32 %v1567, %v1615
      %1617 = vdwg.mxu0
      %1618 = vmatpush.bf16.msra.mxu0 0
      %1619 = vmatpush.bf16.msra.mxu0 0
      %1620 = vmatpush.bf16.msra.mxu0 0
      %1621 = vmatpush.bf16.msra.mxu0 0
      %1622 = vmatpush.bf16.msra.mxu0 %v1361
      %1623 = vmatpush.bf16.msra.mxu0 %v1360
      %1624 = vmatpush.bf16.msra.mxu0 %v1359
      %1625 = vmatpush.bf16.msra.mxu0 %v1358
      %1626 = vmatmul.bf16.gmra.mxu0 %v1399
      %v1627 = vpop.f32.mrf.mxu0
      %v1628 = vadd.f32 %v1579, %v1627
      %v1629 = vpop.f32.mrf.mxu0
      %v1630 = vadd.f32 %v1581, %v1629
      %1631 = vmatmul.bf16.gmra.mxu0 %v1402
      %v1632 = vpop.f32.mrf.mxu0
      %v1633 = vadd.f32 %v1584, %v1632
      %v1634 = vpop.f32.mrf.mxu0
      %v1635 = vadd.f32 %v1586, %v1634
      %1636 = vmatmul.bf16.gmra.mxu0 %v1405
      %v1637 = vpop.f32.mrf.mxu0
      %v1638 = vadd.f32 %v1589, %v1637
      %v1639 = vpop.f32.mrf.mxu0
      %v1640 = vadd.f32 %v1591, %v1639
      %1641 = vmatmul.bf16.gmra.mxu0 %v1408
      %v1642 = vpop.f32.mrf.mxu0
      %v1643 = vadd.f32 %v1594, %v1642
      %v1644 = vpop.f32.mrf.mxu0
      %v1645 = vadd.f32 %v1596, %v1644
      %1646 = vmatmul.bf16.gmra.mxu0 %v1411
      %v1647 = vpop.f32.mrf.mxu0
      %v1648 = vadd.f32 %v1599, %v1647
      %v1649 = vpop.f32.mrf.mxu0
      %v1650 = vadd.f32 %v1601, %v1649
      %1651 = vmatmul.bf16.gmra.mxu0 %v1414
      %v1652 = vpop.f32.mrf.mxu0
      %v1653 = vadd.f32 %v1604, %v1652
      %v1654 = vpop.f32.mrf.mxu0
      %v1655 = vadd.f32 %v1606, %v1654
      %1656 = vmatmul.bf16.gmra.mxu0 %v1417
      %v1657 = vpop.f32.mrf.mxu0
      %v1658 = vadd.f32 %v1609, %v1657
      %v1659 = vpop.f32.mrf.mxu0
      %v1660 = vadd.f32 %v1611, %v1659
      %1661 = vmatmul.bf16.gmra.mxu0 %v1420
      %v1662 = vpop.f32.mrf.mxu0
      %v1663 = vadd.f32 %v1614, %v1662
      %v1664 = vpop.f32.mrf.mxu0
      %v1665 = vadd.f32 %v1616, %v1664
      %1666 = vdwg.mxu0
      %v1667 = vmax.f32 %v1628, 0.0
      %v1668 = vmax.f32 %v1630, 0.0
      %v1669 = vmax.f32 %v1633, 0.0
      %v1670 = vmax.f32 %v1635, 0.0
      %v1671 = vmax.f32 %v1638, 0.0
      %v1672 = vmax.f32 %v1640, 0.0
      %v1673 = vmax.f32 %v1643, 0.0
      %v1674 = vmax.f32 %v1645, 0.0
      %v1675 = vmax.f32 %v1648, 0.0
      %v1676 = vmax.f32 %v1650, 0.0
      %v1677 = vmax.f32 %v1653, 0.0
      %v1678 = vmax.f32 %v1655, 0.0
      %v1679 = vmax.f32 %v1658, 0.0
      %v1680 = vmax.f32 %v1660, 0.0
      %v1681 = vmax.f32 %v1663, 0.0
      %v1682 = vmax.f32 %v1665, 0.0
      %v1683 = vpack.c.bf16 %v1667, %v1667
      %v1684 = vpack.c.bf16 %v1668, %v1668
      %v1685 = vpack.c.bf16 %v1669, %v1669
      %v1686 = vpack.c.bf16 %v1670, %v1670
      %v1687 = vpack.c.bf16 %v1671, %v1671
      %v1688 = vpack.c.bf16 %v1672, %v1672
      %v1689 = vpack.c.bf16 %v1673, %v1673
      %v1690 = vpack.c.bf16 %v1674, %v1674
      %v1691 = vpack.c.bf16 %v1675, %v1675
      %v1692 = vpack.c.bf16 %v1676, %v1676
      %v1693 = vpack.c.bf16 %v1677, %v1677
      %v1694 = vpack.c.bf16 %v1678, %v1678
      %v1695 = vpack.c.bf16 %v1679, %v1679
      %v1696 = vpack.c.bf16 %v1680, %v1680
      %v1697 = vpack.c.bf16 %v1681, %v1681
      %v1698 = vpack.c.bf16 %v1682, %v1682
      %vm1699 = vcmask 781312
      %1700 = vst.msk [vmem:[%s192] sm:$0xf] %vm1699, %v1683
      %1701 = vst.msk [vmem:[%s192 + $0x4] sm:$0xf] %vm1699, %v1684
      %1702 = vst.msk [vmem:[%s192 + $0x8] sm:$0xf] %vm1699, %v1685
      %1703 = vst.msk [vmem:[%s192 + $0xc] sm:$0xf] %vm1699, %v1686
      %1704 = vst.msk [vmem:[%s192 + $0x10] sm:$0xf] %vm1699, %v1687
      %1705 = vst.msk [vmem:[%s192 + $0x14] sm:$0xf] %vm1699, %v1688
      %1706 = vst.msk [vmem:[%s192 + $0x18] sm:$0xf] %vm1699, %v1689
      %1707 = vst.msk [vmem:[%s192 + $0x1c] sm:$0xf] %vm1699, %v1690
      %1708 = vst.msk [vmem:[%s192 + $0x20] sm:$0xf] %vm1699, %v1691
      %1709 = vst.msk [vmem:[%s192 + $0x24] sm:$0xf] %vm1699, %v1692
      %1710 = vst.msk [vmem:[%s192 + $0x28] sm:$0xf] %vm1699, %v1693
      %1711 = vst.msk [vmem:[%s192 + $0x2c] sm:$0xf] %vm1699, %v1694
      %1712 = vst.msk [vmem:[%s192 + $0x30] sm:$0xf] %vm1699, %v1695
      %1713 = vst.msk [vmem:[%s192 + $0x34] sm:$0xf] %vm1699, %v1696
      %1714 = vst.msk [vmem:[%s192 + $0x38] sm:$0xf] %vm1699, %v1697
      %1715 = vst.msk [vmem:[%s192 + $0x3c] sm:$0xf] %vm1699, %v1698
      %s1716 = smul.u32 16, %s19
      %p1717 = scmp.lt.s32.totalorder %s18, 1
      %s1718 = scalar_select %p1717, %s18, 1
      %p1719 = scmp.lt.s32.totalorder %s1716, 31
      %s1720 = scalar_select %p1719, %s1716, 31
      %s1721 = smul.addr %s1718, 32
      %s1722 = sadd.s32 %s1720, %s1721
      %s1723 = smul.addr %s1722, 4
      %s1724 = scalar_lea.vmem %s3, %s1723
      // Predicated region
      $region33: #{inception_a_forward.4} parent=31 // pred_check
        %p1725 = pneg %p114
      $region34: #{inception_a_forward.4} parent=31 // pred_check_branch
        %1727 = sbr.rel (%p1725) target = $region36
      $region35: #{inception_a_forward.4} parent=31 // pred_region
        %s1728 = smul.u32 16, %s19
      $region36: #{inception_a_forward.4} parent=31 // pred_fallthru
        _
    $region32: #{inception_a_forward.4} parent=5 // pred_fallthru
      _
    %p1729 = scmp.le.s32.totalorder 2, %s9
    // Predicated region
    $region37: #{inception_a_forward.4} parent=5 // pred_check
      %p1730 = pneg %p1729
    $region38: #{inception_a_forward.4} parent=5 // pred_check_branch
      %1732 = sbr.rel (%p1730) target = $region40
    $region39: #{inception_a_forward.4} parent=5 // pred_region
      %s1733 = ssub.s32 %s9, 2
      // Predicated region
      $region41: #{inception_a_forward.4} parent=39 // pred_check
        %p1734 = pneg %p120
      $region42: #{inception_a_forward.4} parent=39 // pred_check_branch
        %1736 = sbr.rel (%p1734) target = $region44
      $region43: #{inception_a_forward.4} parent=39 // pred_region
        %s1737 = smul.u32 16, %s21
        %p1738 = scmp.lt.s32.totalorder %s20, 1
        %s1739 = scalar_select %p1738, %s20, 1
        %p1740 = scmp.lt.s32.totalorder %s1737, 31
        %s1741 = scalar_select %p1740, %s1737, 31
        %s1742 = smul.addr %s1739, 32
        %s1743 = sadd.s32 %s1741, %s1742
        %s1744 = smul.addr %s1743, 4
        %s1745 = scalar_lea.vmem %s3, %s1744
      $region44: #{inception_a_forward.4} parent=39 // pred_fallthru
        _
    $region40: #{inception_a_forward.4} parent=5 // pred_fallthru
      _
  $region6: #{inception_a_forward.4} parent=0 // loop_footer
    %s13 = sadd.s32 1, %s9
  $region7: #{inception_a_forward.4} parent=0 // loop_footer_branch
    %8 = sbr.rel target = $region3
  $region8: #{inception_a_forward.4} parent=0 // loop_exit
    _

// kernel: inception_a_forward.5
$region0: #{inception_a_forward.5}
  #allocation0 [shape = 'u32[]', space=smem, size = 0x4, offset = 0x4, fixed_abs, tag = 'smem constant byte address 0x4 - core index']
  #allocation1 [shape = 'u32[72,128]{1,0:T(1,128)}', space=vmem, size = 0x9000, scoped, tag = 'internal scratch']
  %s0 = inlined_call_operand.vmem [shape: bf16[2,18,18,4], index: 0, kind: input, shape index: {}]
  %s1 = inlined_call_operand.vmem [shape: bf16[2,18,18,64], index: 1, kind: input, shape index: {}]
  %s2 = inlined_call_operand.vmem [shape: bf16[2,18,18,96], index: 2, kind: input, shape index: {}]
  %s3 = inlined_call_operand.vmem [shape: bf16[4,96], index: 3, kind: input, shape index: {}]
  %s4 = inlined_call_operand.vmem [shape: f32[1,96], index: 4, kind: input, shape index: {}]
  %s5 = inlined_call_operand.vmem [shape: bf16[4,96], index: 5, kind: input, shape index: {}]
  %s6 = inlined_call_operand.vmem [shape: f32[1,96], index: 6, kind: input, shape index: {}]
  %s7 = inlined_call_operand.vmem [shape: bf16[576,96], index: 7, kind: input, shape index: {}]
  %s8 = inlined_call_operand.vmem [shape: f32[1,96], index: 8, kind: input, shape index: {}]
  %s9 = inlined_call_operand.vmem [shape: bf16[864,96], index: 9, kind: input, shape index: {}]
  %s10 = inlined_call_operand.vmem [shape: f32[1,96], index: 10, kind: input, shape index: {}]
  %s11 = inlined_call_operand.hbm [shape: f32[2,256,384], index: 11, kind: output, shape index: {}]
  %s12 = sld [smem:[#allocation0]]
  $region77: #{inception_a_forward.5} parent=0
    _
  %s14 = ssub.s32 1, %s12
  %s15 = scalar_select 0, %s14, %s12
  $region1: #{inception_a_forward.5} parent=0
    #allocation2 [shape = 'u8[393216]{0}', space=vmem, size = 0x60000, scoped, tag = 'output window, operand 0']
    #allocation3 [shape = 's32[2]{0}', space=sflag, size = 0x8, scoped, tag = 'scoped memory for inception_a_forward.5']
    %16 = vsyncpa [#allocation3], 0
    %s17 = scalar_lea.sflag [#allocation3], 1
    %18 = vsyncpa %s17, 0
    loop: start=0, step=1, limit=6
    $region2: #{inception_a_forward.5} parent=1 // loop_pre_header
      _
    $region3: #{inception_a_forward.5} parent=1 // loop_header
      %s20 = sphi 0, %s24
      %p21 = scmp.ge.s32.totalorder %s20, 6
      %s27 = sphi 0, %s39
      %s28 = sphi 0, %s35
      %s29 = sphi 0, %s27
      %s30 = sphi 0, %s28
      %s31 = sphi 0, %s29
      %s32 = sphi 0, %s30
      %s42 = sphi 0, %s44
      %s45 = sphi 0, %s42
      %s46 = sphi 0, %s45
      %s62 = sphi 0, %s46
      %s68 = sphi 0, %s70
      %s71 = sphi 0, %s68
      %s72 = sphi 0, %s71
      %s88 = sphi 0, %s72
      %s94 = sphi 0, %s96
      %s97 = sphi 0, %s94
      %s98 = sphi 0, %s97
      %s114 = sphi 0, %s98
      %s118 = sphi 0, %s118
      %s120 = sphi 0, %s118
      %s121 = sphi 0, %s120
      %s135 = sphi 0, %s121
      %s139 = sphi 0, %s139
      %s141 = sphi 0, %s139
      %s142 = sphi 0, %s141
      %s156 = sphi 0, %s142
      %s160 = sphi 0, %s160
      %s162 = sphi 0, %s160
      %s163 = sphi 0, %s162
      %s177 = sphi 0, %s163
      %s181 = sphi 0, %s181
      %s183 = sphi 0, %s181
      %s184 = sphi 0, %s183
      %s198 = sphi 0, %s184
      %s202 = sphi 0, %s202
      %s204 = sphi 0, %s202
      %s205 = sphi 0, %s204
      %s219 = sphi 0, %s205
      %s223 = sphi 0, %s223
      %s225 = sphi 0, %s223
      %s226 = sphi 0, %s225
      %s240 = sphi 0, %s226
      %s244 = sphi 0, %s244
      %s246 = sphi 0, %s244
      %s247 = sphi 0, %s246
      %s261 = sphi 0, %s247
      %s265 = sphi 0, %s265
      %s267 = sphi 0, %s265
      %s268 = sphi 0, %s267
      %s282 = sphi 0, %s268
      %s290 = sphi 0, %s292
      %s293 = sphi 0, %s290
      %s294 = sphi 0, %s293
      %s310 = sphi 0, %s294
    $region4: #{inception_a_forward.5} parent=1 // loop_header_branch
      %23 = sbr.rel (%p21) target = $region8
    $region5: #{inception_a_forward.5} parent=1 // loop_body
      %s25 = ssub.s32 %s20, 1
      %s26 = ssub.s32 %s20, 2
      %s33 = sadd.s32 1, %s28
      %p34 = scmp.ge.s32.totalorder %s33, 2
      %s35 = scalar_select %p34, 0, %s33
      %s36 = sadd.s32 1, %s27
      %s37 = scalar_select %p34, %s36, %s27
      %p38 = scmp.ge.s32.totalorder %s37, 2
      %s39 = scalar_select %p38, 0, %s37
      %s40 = ssub.s32 %s27, %s39
      %p41 = scmp.eq.s32.totalorder %s40, 0
      %s43 = sadd.s32 %s42, 1
      %s44 = scalar_select %p41, %s42, %s43
      %p47 = pneg %p41
      %p48 = scmp.eq.s32.totalorder %s20, 3
      %p49 = por %p47, %p48
      %p50 = scmp.ne.s32.totalorder %s42, %s45
      %p51 = scmp.eq.s32.totalorder %s20, 0
      %p52 = por %p50, %p51
      %p53 = scmp.ne.s32.totalorder %s42, %s45
      %p54 = scmp.eq.s32.totalorder %s25, 3
      %p55 = por %p53, %p54
      %p56 = scmp.ne.s32.totalorder %s45, %s46
      %p57 = scmp.eq.s32.totalorder %s25, 0
      %p58 = por %p56, %p57
      %p59 = scmp.ne.s32.totalorder %s45, %s46
      %p60 = scmp.eq.s32.totalorder %s26, 3
      %p61 = por %p59, %p60
      %p63 = scmp.ne.s32.totalorder %s46, %s62
      %p64 = scmp.eq.s32.totalorder %s26, 0
      %p65 = por %p63, %p64
      %s66 = ssub.s32 %s27, %s39
      %p67 = scmp.eq.s32.totalorder %s66, 0
      %s69 = sadd.s32 %s68, 1
      %s70 = scalar_select %p67, %s68, %s69
      %p73 = pneg %p67
      %p74 = scmp.eq.s32.totalorder %s20, 3
      %p75 = por %p73, %p74
      %p76 = scmp.ne.s32.totalorder %s68, %s71
      %p77 = scmp.eq.s32.totalorder %s20, 0
      %p78 = por %p76, %p77
      %p79 = scmp.ne.s32.totalorder %s68, %s71
      %p80 = scmp.eq.s32.totalorder %s25, 3
      %p81 = por %p79, %p80
      %p82 = scmp.ne.s32.totalorder %s71, %s72
      %p83 = scmp.eq.s32.totalorder %s25, 0
      %p84 = por %p82, %p83
      %p85 = scmp.ne.s32.totalorder %s71, %s72
      %p86 = scmp.eq.s32.totalorder %s26, 3
      %p87 = por %p85, %p86
      %p89 = scmp.ne.s32.totalorder %s72, %s88
      %p90 = scmp.eq.s32.totalorder %s26, 0
      %p91 = por %p89, %p90
      %s92 = ssub.s32 %s27, %s39
      %p93 = scmp.eq.s32.totalorder %s92, 0
      %s95 = sadd.s32 %s94, 1
      %s96 = scalar_select %p93, %s94, %s95
      %p99 = pneg %p93
      %p100 = scmp.eq.s32.totalorder %s20, 3
      %p101 = por %p99, %p100
      %p102 = scmp.ne.s32.totalorder %s94, %s97
      %p103 = scmp.eq.s32.totalorder %s20, 0
      %p104 = por %p102, %p103
      %p105 = scmp.ne.s32.totalorder %s94, %s97
      %p106 = scmp.eq.s32.totalorder %s25, 3
      %p107 = por %p105, %p106
      %p108 = scmp.ne.s32.totalorder %s97, %s98
      %p109 = scmp.eq.s32.totalorder %s25, 0
      %p110 = por %p108, %p109
      %p111 = scmp.ne.s32.totalorder %s97, %s98
      %p112 = scmp.eq.s32.totalorder %s26, 3
      %p113 = por %p111, %p112
      %p115 = scmp.ne.s32.totalorder %s98, %s114
      %p116 = scmp.eq.s32.totalorder %s26, 0
      %p117 = por %p115, %p116
      %s119 = sadd.s32 %s118, 1
      %p122 = scmp.eq.s32.totalorder %s20, 3
      %p123 = scmp.ne.s32.totalorder %s118, %s120
      %p124 = scmp.eq.s32.totalorder %s20, 0
      %p125 = por %p123, %p124
      %p126 = scmp.ne.s32.totalorder %s118, %s120
      %p127 = scmp.eq.s32.totalorder %s25, 3
      %p128 = por %p126, %p127
      %p129 = scmp.ne.s32.totalorder %s120, %s121
      %p130 = scmp.eq.s32.totalorder %s25, 0
      %p131 = por %p129, %p130
      %p132 = scmp.ne.s32.totalorder %s120, %s121
      %p133 = scmp.eq.s32.totalorder %s26, 3
      %p134 = por %p132, %p133
      %p136 = scmp.ne.s32.totalorder %s121, %s135
      %p137 = scmp.eq.s32.totalorder %s26, 0
      %p138 = por %p136, %p137
      %s140 = sadd.s32 %s139, 1
      %p143 = scmp.eq.s32.totalorder %s20, 3
      %p144 = scmp.ne.s32.totalorder %s139, %s141
      %p145 = scmp.eq.s32.totalorder %s20, 0
      %p146 = por %p144, %p145
      %p147 = scmp.ne.s32.totalorder %s139, %s141
      %p148 = scmp.eq.s32.totalorder %s25, 3
      %p149 = por %p147, %p148
      %p150 = scmp.ne.s32.totalorder %s141, %s142
      %p151 = scmp.eq.s32.totalorder %s25, 0
      %p152 = por %p150, %p151
      %p153 = scmp.ne.s32.totalorder %s141, %s142
      %p154 = scmp.eq.s32.totalorder %s26, 3
      %p155 = por %p153, %p154
      %p157 = scmp.ne.s32.totalorder %s142, %s156
      %p158 = scmp.eq.s32.totalorder %s26, 0
      %p159 = por %p157, %p158
      %s161 = sadd.s32 %s160, 1
      %p164 = scmp.eq.s32.totalorder %s20, 3
      %p165 = scmp.ne.s32.totalorder %s160, %s162
      %p166 = scmp.eq.s32.totalorder %s20, 0
      %p167 = por %p165, %p166
      %p168 = scmp.ne.s32.totalorder %s160, %s162
      %p169 = scmp.eq.s32.totalorder %s25, 3
      %p170 = por %p168, %p169
      %p171 = scmp.ne.s32.totalorder %s162, %s163
      %p172 = scmp.eq.s32.totalorder %s25, 0
      %p173 = por %p171, %p172
      %p174 = scmp.ne.s32.totalorder %s162, %s163
      %p175 = scmp.eq.s32.totalorder %s26, 3
      %p176 = por %p174, %p175
      %p178 = scmp.ne.s32.totalorder %s163, %s177
      %p179 = scmp.eq.s32.totalorder %s26, 0
      %p180 = por %p178, %p179
      %s182 = sadd.s32 %s181, 1
      %p185 = scmp.eq.s32.totalorder %s20, 3
      %p186 = scmp.ne.s32.totalorder %s181, %s183
      %p187 = scmp.eq.s32.totalorder %s20, 0
      %p188 = por %p186, %p187
      %p189 = scmp.ne.s32.totalorder %s181, %s183
      %p190 = scmp.eq.s32.totalorder %s25, 3
      %p191 = por %p189, %p190
      %p192 = scmp.ne.s32.totalorder %s183, %s184
      %p193 = scmp.eq.s32.totalorder %s25, 0
      %p194 = por %p192, %p193
      %p195 = scmp.ne.s32.totalorder %s183, %s184
      %p196 = scmp.eq.s32.totalorder %s26, 3
      %p197 = por %p195, %p196
      %p199 = scmp.ne.s32.totalorder %s184, %s198
      %p200 = scmp.eq.s32.totalorder %s26, 0
      %p201 = por %p199, %p200
      %s203 = sadd.s32 %s202, 1
      %p206 = scmp.eq.s32.totalorder %s20, 3
      %p207 = scmp.ne.s32.totalorder %s202, %s204
      %p208 = scmp.eq.s32.totalorder %s20, 0
      %p209 = por %p207, %p208
      %p210 = scmp.ne.s32.totalorder %s202, %s204
      %p211 = scmp.eq.s32.totalorder %s25, 3
      %p212 = por %p210, %p211
      %p213 = scmp.ne.s32.totalorder %s204, %s205
      %p214 = scmp.eq.s32.totalorder %s25, 0
      %p215 = por %p213, %p214
      %p216 = scmp.ne.s32.totalorder %s204, %s205
      %p217 = scmp.eq.s32.totalorder %s26, 3
      %p218 = por %p216, %p217
      %p220 = scmp.ne.s32.totalorder %s205, %s219
      %p221 = scmp.eq.s32.totalorder %s26, 0
      %p222 = por %p220, %p221
      %s224 = sadd.s32 %s223, 1
      %p227 = scmp.eq.s32.totalorder %s20, 3
      %p228 = scmp.ne.s32.totalorder %s223, %s225
      %p229 = scmp.eq.s32.totalorder %s20, 0
      %p230 = por %p228, %p229
      %p231 = scmp.ne.s32.totalorder %s223, %s225
      %p232 = scmp.eq.s32.totalorder %s25, 3
      %p233 = por %p231, %p232
      %p234 = scmp.ne.s32.totalorder %s225, %s226
      %p235 = scmp.eq.s32.totalorder %s25, 0
      %p236 = por %p234, %p235
      %p237 = scmp.ne.s32.totalorder %s225, %s226
      %p238 = scmp.eq.s32.totalorder %s26, 3
      %p239 = por %p237, %p238
      %p241 = scmp.ne.s32.totalorder %s226, %s240
      %p242 = scmp.eq.s32.totalorder %s26, 0
      %p243 = por %p241, %p242
      %s245 = sadd.s32 %s244, 1
      %p248 = scmp.eq.s32.totalorder %s20, 3
      %p249 = scmp.ne.s32.totalorder %s244, %s246
      %p250 = scmp.eq.s32.totalorder %s20, 0
      %p251 = por %p249, %p250
      %p252 = scmp.ne.s32.totalorder %s244, %s246
      %p253 = scmp.eq.s32.totalorder %s25, 3
      %p254 = por %p252, %p253
      %p255 = scmp.ne.s32.totalorder %s246, %s247
      %p256 = scmp.eq.s32.totalorder %s25, 0
      %p257 = por %p255, %p256
      %p258 = scmp.ne.s32.totalorder %s246, %s247
      %p259 = scmp.eq.s32.totalorder %s26, 3
      %p260 = por %p258, %p259
      %p262 = scmp.ne.s32.totalorder %s247, %s261
      %p263 = scmp.eq.s32.totalorder %s26, 0
      %p264 = por %p262, %p263
      %s266 = sadd.s32 %s265, 1
      %p269 = scmp.eq.s32.totalorder %s20, 3
      %p270 = scmp.ne.s32.totalorder %s265, %s267
      %p271 = scmp.eq.s32.totalorder %s20, 0
      %p272 = por %p270, %p271
      %p273 = scmp.ne.s32.totalorder %s265, %s267
      %p274 = scmp.eq.s32.totalorder %s25, 3
      %p275 = por %p273, %p274
      %p276 = scmp.ne.s32.totalorder %s267, %s268
      %p277 = scmp.eq.s32.totalorder %s25, 0
      %p278 = por %p276, %p277
      %p279 = scmp.ne.s32.totalorder %s267, %s268
      %p280 = scmp.eq.s32.totalorder %s26, 3
      %p281 = por %p279, %p280
      %p283 = scmp.ne.s32.totalorder %s268, %s282
      %p284 = scmp.eq.s32.totalorder %s26, 0
      %p285 = por %p283, %p284
      %s286 = ssub.s32 %s27, %s39
      %s287 = ssub.s32 %s28, %s35
      %s288 = sor.u32 %s286, %s287
      %p289 = scmp.eq.s32.totalorder %s288, 0
      %s291 = sadd.s32 %s290, 1
      %s292 = scalar_select %p289, %s290, %s291
      %p295 = pneg %p289
      %p296 = scmp.eq.s32.totalorder %s20, 3
      %p297 = por %p295, %p296
      %p298 = scmp.ne.s32.totalorder %s290, %s293
      %p299 = scmp.eq.s32.totalorder %s20, 0
      %p300 = por %p298, %p299
      %p301 = scmp.ne.s32.totalorder %s290, %s293
      %p302 = scmp.eq.s32.totalorder %s25, 3
      %p303 = por %p301, %p302
      %p304 = scmp.ne.s32.totalorder %s293, %s294
      %p305 = scmp.eq.s32.totalorder %s25, 0
      %p306 = por %p304, %p305
      %p307 = scmp.ne.s32.totalorder %s293, %s294
      %p308 = scmp.eq.s32.totalorder %s26, 3
      %p309 = por %p307, %p308
      %p311 = scmp.ne.s32.totalorder %s294, %s310
      %p312 = scmp.eq.s32.totalorder %s26, 0
      %p313 = por %p311, %p312
      %p314 = scmp.le.s32.totalorder 1, %s20
      %p315 = scmp.lt.s32.totalorder %s20, 5
      %p316 = pnand %p314, %p315
      %p317 = pneg %p316
      // Predicated region
      $region9: #{inception_a_forward.5} parent=5 // pred_check
        _
      $region10: #{inception_a_forward.5} parent=5 // pred_check_branch
        %319 = sbr.rel (%p316) target = $region12
      $region11: #{inception_a_forward.5} parent=5 // pred_region
        %s320 = ssub.s32 %s20, 1
        // Predicated region
        $region13: #{inception_a_forward.5} parent=11 // pred_check
          %p321 = pneg %p131
        $region14: #{inception_a_forward.5} parent=11 // pred_check_branch
          %323 = sbr.rel (%p321) target = $region16
        $region15: #{inception_a_forward.5} parent=11 // pred_region
          _
        $region16: #{inception_a_forward.5} parent=11 // pred_fallthru
          _
        // Predicated region
        $region17: #{inception_a_forward.5} parent=11 // pred_check
          %p324 = pneg %p152
        $region18: #{inception_a_forward.5} parent=11 // pred_check_branch
          %326 = sbr.rel (%p324) target = $region20
        $region19: #{inception_a_forward.5} parent=11 // pred_region
          _
        $region20: #{inception_a_forward.5} parent=11 // pred_fallthru
          _
        // Predicated region
        $region21: #{inception_a_forward.5} parent=11 // pred_check
          %p327 = pneg %p173
        $region22: #{inception_a_forward.5} parent=11 // pred_check_branch
          %329 = sbr.rel (%p327) target = $region24
        $region23: #{inception_a_forward.5} parent=11 // pred_region
          _
        $region24: #{inception_a_forward.5} parent=11 // pred_fallthru
          _
        // Predicated region
        $region25: #{inception_a_forward.5} parent=11 // pred_check
          %p330 = pneg %p194
        $region26: #{inception_a_forward.5} parent=11 // pred_check_branch
          %332 = sbr.rel (%p330) target = $region28
        $region27: #{inception_a_forward.5} parent=11 // pred_region
          _
        $region28: #{inception_a_forward.5} parent=11 // pred_fallthru
          _
        // Predicated region
        $region29: #{inception_a_forward.5} parent=11 // pred_check
          %p333 = pneg %p215
        $region30: #{inception_a_forward.5} parent=11 // pred_check_branch
          %335 = sbr.rel (%p333) target = $region32
        $region31: #{inception_a_forward.5} parent=11 // pred_region
          _
        $region32: #{inception_a_forward.5} parent=11 // pred_fallthru
          _
        // Predicated region
        $region33: #{inception_a_forward.5} parent=11 // pred_check
          %p336 = pneg %p236
        $region34: #{inception_a_forward.5} parent=11 // pred_check_branch
          %338 = sbr.rel (%p336) target = $region36
        $region35: #{inception_a_forward.5} parent=11 // pred_region
          _
        $region36: #{inception_a_forward.5} parent=11 // pred_fallthru
          _
        // Predicated region
        $region37: #{inception_a_forward.5} parent=11 // pred_check
          %p339 = pneg %p257
        $region38: #{inception_a_forward.5} parent=11 // pred_check_branch
          %341 = sbr.rel (%p339) target = $region40
        $region39: #{inception_a_forward.5} parent=11 // pred_region
          _
        $region40: #{inception_a_forward.5} parent=11 // pred_fallthru
          _
        // Predicated region
        $region41: #{inception_a_forward.5} parent=11 // pred_check
          %p342 = pneg %p278
        $region42: #{inception_a_forward.5} parent=11 // pred_check_branch
          %344 = sbr.rel (%p342) target = $region44
        $region43: #{inception_a_forward.5} parent=11 // pred_region
          _
        $region44: #{inception_a_forward.5} parent=11 // pred_fallthru
          _
      $region12: #{inception_a_forward.5} parent=5 // pred_fallthru
        _
      %p345 = scmp.lt.s32.totalorder %s20, 4
      // Predicated region
      $region45: #{inception_a_forward.5} parent=5 // pred_check
        %p346 = pneg %p345
      $region46: #{inception_a_forward.5} parent=5 // pred_check_branch
        %348 = sbr.rel (%p346) target = $region48
      $region47: #{inception_a_forward.5} parent=5 // pred_region
        // Predicated region
        $region49: #{inception_a_forward.5} parent=47 // pred_check
          %p349 = pneg %p52
        $region50: #{inception_a_forward.5} parent=47 // pred_check_branch
          %351 = sbr.rel (%p349) target = $region52
        $region51: #{inception_a_forward.5} parent=47 // pred_region
          %p352 = scmp.lt.s32.totalorder %s27, 1
          %s353 = scalar_select %p352, %s27, 1
          %s354 = smul.addr %s353, 54
          %s355 = smul.addr %s354, 4
          %s356 = scalar_lea.vmem %s0, %s355
        $region52: #{inception_a_forward.5} parent=47 // pred_fallthru
          _
        // Predicated region
        $region53: #{inception_a_forward.5} parent=47 // pred_check
          %p357 = pneg %p78
        $region54: #{inception_a_forward.5} parent=47 // pred_check_branch
          %359 = sbr.rel (%p357) target = $region56
        $region55: #{inception_a_forward.5} parent=47 // pred_region
          %p360 = scmp.lt.s32.totalorder %s27, 1
          %s361 = scalar_select %p360, %s27, 1
          %s362 = smul.addr %s361, 54
          %s363 = smul.addr %s362, 4
          %s364 = scalar_lea.vmem %s1, %s363
        $region56: #{inception_a_forward.5} parent=47 // pred_fallthru
          _
        // Predicated region
        $region57: #{inception_a_forward.5} parent=47 // pred_check
          %p365 = pneg %p104
        $region58: #{inception_a_forward.5} parent=47 // pred_check_branch
          %367 = sbr.rel (%p365) target = $region60
        $region59: #{inception_a_forward.5} parent=47 // pred_region
          %p368 = scmp.lt.s32.totalorder %s27, 1
          %s369 = scalar_select %p368, %s27, 1
          %s370 = smul.addr %s369, 54
          %s371 = smul.addr %s370, 4
          %s372 = scalar_lea.vmem %s2, %s371
        $region60: #{inception_a_forward.5} parent=47 // pred_fallthru
          _
      $region48: #{inception_a_forward.5} parent=5 // pred_fallthru
        _
      %p373 = scmp.le.s32.totalorder 1, %s20
      %p374 = scmp.lt.s32.totalorder %s20, 5
      %p375 = pnand %p373, %p374
      %p376 = pneg %p375
      // Predicated region
      $region61: #{inception_a_forward.5} parent=5 // pred_check
        _
      $region62: #{inception_a_forward.5} parent=5 // pred_check_branch
        %378 = sbr.rel (%p375) target = $region64
      $region63: #{inception_a_forward.5} parent=5 // pred_region
        %s379 = ssub.s32 %s20, 1
        %p380 = scmp.lt.s32.totalorder %s29, 1
        %s381 = scalar_select %p380, %s29, 1
        %s382 = smul.addr %s381, 54
        %s383 = smul.addr %s382, 4
        %s384 = scalar_lea.vmem %s0, %s383
        %p385 = pneg %p58
        %p386 = pneg %p55
        %p387 = scmp.lt.s32.totalorder %s29, 1
        %s388 = scalar_select %p387, %s29, 1
        %s389 = smul.addr %s388, 54
        %s390 = smul.addr %s389, 4
        %s391 = scalar_lea.vmem %s1, %s390
        %p392 = pneg %p84
        %p393 = pneg %p81
        %p394 = scmp.lt.s32.totalorder %s29, 1
        %s395 = scalar_select %p394, %s29, 1
        %s396 = smul.addr %s395, 54
        %s397 = smul.addr %s396, 4
        %s398 = scalar_lea.vmem %s2, %s397
        %p399 = pneg %p110
        %p400 = pneg %p107
        %p401 = pneg %p131
        %p402 = pneg %p128
        %p403 = pneg %p152
        %p404 = pneg %p149
        %p405 = pneg %p173
        %p406 = pneg %p170
        %p407 = pneg %p194
        %p408 = pneg %p191
        %p409 = pneg %p215
        %p410 = pneg %p212
        %p411 = pneg %p236
        %p412 = pneg %p233
        %p413 = pneg %p257
        %p414 = pneg %p254
        %p415 = pneg %p278
        %p416 = pneg %p275
        %p417 = pneg %p306
        %p418 = pneg %p303
        %s419 = sand.u32 %s293, 1
        %s420 = scalar_lea.sflag [#allocation3], %s419
        %s421 = sand.u32 %s293, 1
        %s422 = smul.addr %s421, 384
        %s423 = scalar_lea.vmem [#allocation2], %s422
        %p424 = scmp.lt.s32.totalorder %s29, 1
        %s425 = scalar_select %p424, %s29, 1
        %s426 = smul.addr %s425, 54
        %s427 = smul.addr %s426, 4
        %s428 = scalar_lea.vmem %s0, %s427
        %p429 = scmp.lt.s32.totalorder %s29, 1
        %s430 = scalar_select %p429, %s29, 1
        %s431 = smul.addr %s430, 54
        %s432 = smul.addr %s431, 4
        %s433 = scalar_lea.vmem %s1, %s432
        %p434 = scmp.lt.s32.totalorder %s29, 1
        %s435 = scalar_select %p434, %s29, 1
        %s436 = smul.addr %s435, 54
        %s437 = smul.addr %s436, 4
        %s438 = scalar_lea.vmem %s2, %s437
        %s439 = smul.u32 16, %s30
        %s441 = smul.u32 %s30, 8
        %s442 = smul.u32 %s441, 3
        %s443 = smul.addr %s442, 4
        %s444 = scalar_lea.vmem %s428, %s443
        %v445 = vld [vmem:[%s444] sm:$0xf]
        %v446 = vld [vmem:[%s444 + $0x4] sm:$0xf]
        %v447 = vld [vmem:[%s444 + $0xc] sm:$0xf]
        %v448 = vld [vmem:[%s444 + $0x10] sm:$0xf]
        %v449 = vld [vmem:[%s444 + $0x18] sm:$0xf]
        %v450 = vld [vmem:[%s444 + $0x1c] sm:$0xf]
        %v451 = vld [vmem:[%s444 + $0x24] sm:$0xf]
        %v452 = vld [vmem:[%s444 + $0x28] sm:$0xf]
        %v453 = vld [vmem:[%s444 + $0x30] sm:$0xf]
        %v454 = vld [vmem:[%s444 + $0x34] sm:$0xf]
        %v455 = vld [vmem:[%s444 + $0x3c] sm:$0xf]
        %v456 = vld [vmem:[%s444 + $0x40] sm:$0xf]
        %v457 = vld [vmem:[%s444 + $0x48] sm:$0xf]
        %v458 = vld [vmem:[%s444 + $0x4c] sm:$0xf]
        %v459 = vld [vmem:[%s444 + $0x54] sm:$0xf]
        %v460 = vld [vmem:[%s444 + $0x58] sm:$0xf]
        %v461 = vld [vmem:[%s444 + $0x60] sm:$0xf]
        %v462 = vld [vmem:[%s444 + $0x64] sm:$0xf]
        %v463 = vld [vmem:[%s444 + $0x6c] sm:$0xf]
        %v464 = vld [vmem:[%s444 + $0x70] sm:$0xf]
        %v465 = vld [vmem:[%s444 + $0x8] sm:$0x1]
        %v466 = vld [vmem:[%s444 + $0x14] sm:$0x1]
        %v467 = vld [vmem:[%s444 + $0x20] sm:$0x1]
        %v468 = vld [vmem:[%s444 + $0x2c] sm:$0x1]
        %v469 = vld [vmem:[%s444 + $0x38] sm:$0x1]
        %v470 = vld [vmem:[%s444 + $0x44] sm:$0x1]
        %v471 = vld [vmem:[%s444 + $0x50] sm:$0x1]
        %v472 = vld [vmem:[%s444 + $0x5c] sm:$0x1]
        %v473 = vld [vmem:[%s444 + $0x68] sm:$0x1]
        %v474 = vld [vmem:[%s444 + $0x74] sm:$0x1]
        %v475 = vunpack.c.l.bf16 %v445
        %v476 = vunpack.c.l.bf16 %v446
        %v477 = vunpack.c.l.bf16 %v447
        %v478 = vunpack.c.l.bf16 %v448
        %v479 = vunpack.c.l.bf16 %v449
        %v480 = vunpack.c.l.bf16 %v450
        %v481 = vunpack.c.l.bf16 %v451
        %v482 = vunpack.c.l.bf16 %v452
        %v483 = vunpack.c.l.bf16 %v453
        %v484 = vunpack.c.l.bf16 %v454
        %v485 = vunpack.c.l.bf16 %v455
        %v486 = vunpack.c.l.bf16 %v456
        %v487 = vunpack.c.l.bf16 %v457
        %v488 = vunpack.c.l.bf16 %v458
        %v489 = vunpack.c.l.bf16 %v459
        %v490 = vunpack.c.l.bf16 %v460
        %v491 = vunpack.c.l.bf16 %v461
        %v492 = vunpack.c.l.bf16 %v462
        %v493 = vunpack.c.l.bf16 %v463
        %v494 = vunpack.c.l.bf16 %v464
        %v495 = vunpack.c.l.bf16 %v465
        %v496 = vunpack.c.l.bf16 %v466
        %v497 = vunpack.c.l.bf16 %v467
        %v498 = vunpack.c.l.bf16 %v468
        %v499 = vunpack.c.l.bf16 %v469
        %v500 = vunpack.c.l.bf16 %v470
        %v501 = vunpack.c.l.bf16 %v471
        %v502 = vunpack.c.l.bf16 %v472
        %v503 = vunpack.c.l.bf16 %v473
        %v504 = vunpack.c.l.bf16 %v474
        %vm535 = vcmask 1046528
        %v536 = vrot.slane %v475, 1
        %v537 = vrot.slane %v476, 1
        %v538 = vsel %vm535, %v536, %v537
        %v539 = vrot.slane %v495, 1
        %v540 = vsel %vm535, %v537, %v539
        %v541 = vrot.slane %v477, 1
        %v542 = vrot.slane %v478, 1
        %v543 = vsel %vm535, %v541, %v542
        %v544 = vrot.slane %v496, 1
        %v545 = vsel %vm535, %v542, %v544
        %v546 = vrot.slane %v479, 1
        %v547 = vrot.slane %v480, 1
        %v548 = vsel %vm535, %v546, %v547
        %v549 = vrot.slane %v497, 1
        %v550 = vsel %vm535, %v547, %v549
        %v551 = vrot.slane %v481, 1
        %v552 = vrot.slane %v482, 1
        %v553 = vsel %vm535, %v551, %v552
        %v554 = vrot.slane %v498, 1
        %v555 = vsel %vm535, %v552, %v554
        %v556 = vrot.slane %v483, 1
        %v557 = vrot.slane %v484, 1
        %v558 = vsel %vm535, %v556, %v557
        %v559 = vrot.slane %v499, 1
        %v560 = vsel %vm535, %v557, %v559
        %v561 = vrot.slane %v485, 1
        %v562 = vrot.slane %v486, 1
        %v563 = vsel %vm535, %v561, %v562
        %v564 = vrot.slane %v500, 1
        %v565 = vsel %vm535, %v562, %v564
        %v566 = vrot.slane %v487, 1
        %v567 = vrot.slane %v488, 1
        %v568 = vsel %vm535, %v566, %v567
        %v569 = vrot.slane %v501, 1
        %v570 = vsel %vm535, %v567, %v569
        %v571 = vrot.slane %v489, 1
        %v572 = vrot.slane %v490, 1
        %v573 = vsel %vm535, %v571, %v572
        %v574 = vrot.slane %v502, 1
        %v575 = vsel %vm535, %v572, %v574
        %v576 = vrot.slane %v491, 1
        %v577 = vrot.slane %v492, 1
        %v578 = vsel %vm535, %v576, %v577
        %v579 = vrot.slane %v503, 1
        %v580 = vsel %vm535, %v577, %v579
        %v581 = vrot.slane %v493, 1
        %v582 = vrot.slane %v494, 1
        %v583 = vsel %vm535, %v581, %v582
        %v584 = vrot.slane %v504, 1
        %v585 = vsel %vm535, %v582, %v584
        %v606 = vadd.f32 %v475, %v538
        %v607 = vadd.f32 %v476, %v540
        %v608 = vadd.f32 %v477, %v543
        %v609 = vadd.f32 %v478, %v545
        %v610 = vadd.f32 %v479, %v548
        %v611 = vadd.f32 %v480, %v550
        %v612 = vadd.f32 %v481, %v553
        %v613 = vadd.f32 %v482, %v555
        %v614 = vadd.f32 %v483, %v558
        %v615 = vadd.f32 %v484, %v560
        %v616 = vadd.f32 %v485, %v563
        %v617 = vadd.f32 %v486, %v565
        %v618 = vadd.f32 %v487, %v568
        %v619 = vadd.f32 %v488, %v570
        %v620 = vadd.f32 %v489, %v573
        %v621 = vadd.f32 %v490, %v575
        %v622 = vadd.f32 %v491, %v578
        %v623 = vadd.f32 %v492, %v580
        %v624 = vadd.f32 %v493, %v583
        %v625 = vadd.f32 %v494, %v585
        %v626 = vpack.c.bf16 %v606, %v606
        %v627 = vpack.c.bf16 %v607, %v607
        %v628 = vpack.c.bf16 %v608, %v608
        %v629 = vpack.c.bf16 %v609, %v609
        %v630 = vpack.c.bf16 %v610, %v610
        %v631 = vpack.c.bf16 %v611, %v611
        %v632 = vpack.c.bf16 %v612, %v612
        %v633 = vpack.c.bf16 %v613, %v613
        %v634 = vpack.c.bf16 %v614, %v614
        %v635 = vpack.c.bf16 %v615, %v615
        %v636 = vpack.c.bf16 %v616, %v616
        %v637 = vpack.c.bf16 %v617, %v617
        %v638 = vpack.c.bf16 %v618, %v618
        %v639 = vpack.c.bf16 %v619, %v619
        %v640 = vpack.c.bf16 %v620, %v620
        %v641 = vpack.c.bf16 %v621, %v621
        %v642 = vpack.c.bf16 %v622, %v622
        %v643 = vpack.c.bf16 %v623, %v623
        %v644 = vpack.c.bf16 %v624, %v624
        %v645 = vpack.c.bf16 %v625, %v625
        %v646 = vld [vmem:[%s444] sm:$0xe]
        %v647 = vld [vmem:[%s444 + $0xc] sm:$0xe]
        %v648 = vld [vmem:[%s444 + $0x18] sm:$0xe]
        %v649 = vld [vmem:[%s444 + $0x24] sm:$0xe]
        %v650 = vld [vmem:[%s444 + $0x30] sm:$0xe]
        %v651 = vld [vmem:[%s444 + $0x3c] sm:$0xe]
        %v652 = vld [vmem:[%s444 + $0x48] sm:$0xe]
        %v653 = vld [vmem:[%s444 + $0x54] sm:$0xe]
        %v654 = vld [vmem:[%s444 + $0x60] sm:$0xe]
        %v655 = vld [vmem:[%s444 + $0x6c] sm:$0xe]
        %v656 = vunpack.c.l.bf16 %v626
        %v657 = vunpack.c.l.bf16 %v627
        %v658 = vunpack.c.l.bf16 %v628
        %v659 = vunpack.c.l.bf16 %v629
        %v660 = vunpack.c.l.bf16 %v630
        %v661 = vunpack.c.l.bf16 %v631
        %v662 = vunpack.c.l.bf16 %v632
        %v663 = vunpack.c.l.bf16 %v633
        %v664 = vunpack.c.l.bf16 %v634
        %v665 = vunpack.c.l.bf16 %v635
        %v666 = vunpack.c.l.bf16 %v636
        %v667 = vunpack.c.l.bf16 %v637
        %v668 = vunpack.c.l.bf16 %v638
        %v669 = vunpack.c.l.bf16 %v639
        %v670 = vunpack.c.l.bf16 %v640
        %v671 = vunpack.c.l.bf16 %v641
        %v672 = vunpack.c.l.bf16 %v642
        %v673 = vunpack.c.l.bf16 %v643
        %v674 = vunpack.c.l.bf16 %v644
        %v675 = vunpack.c.l.bf16 %v645
        %v676 = vunpack.c.l.bf16 %v646
        %v677 = vunpack.c.l.bf16 %v647
        %v678 = vunpack.c.l.bf16 %v648
        %v679 = vunpack.c.l.bf16 %v649
        %v680 = vunpack.c.l.bf16 %v650
        %v681 = vunpack.c.l.bf16 %v651
        %v682 = vunpack.c.l.bf16 %v652
        %v683 = vunpack.c.l.bf16 %v653
        %v684 = vunpack.c.l.bf16 %v654
        %v685 = vunpack.c.l.bf16 %v655
        %vm696 = vcmask 1045504
        %v697 = vrot.slane %v676, 2
        %v698 = vrot.slane %v476, 2
        %v699 = vsel %vm696, %v697, %v698
        %v700 = vrot.slane %v495, 2
        %v701 = vsel %vm696, %v698, %v700
        %v702 = vrot.slane %v677, 2
        %v703 = vrot.slane %v478, 2
        %v704 = vsel %vm696, %v702, %v703
        %v705 = vrot.slane %v496, 2
        %v706 = vsel %vm696, %v703, %v705
        %v707 = vrot.slane %v678, 2
        %v708 = vrot.slane %v480, 2
        %v709 = vsel %vm696, %v707, %v708
        %v710 = vrot.slane %v497, 2
        %v711 = vsel %vm696, %v708, %v710
        %v712 = vrot.slane %v679, 2
        %v713 = vrot.slane %v482, 2
        %v714 = vsel %vm696, %v712, %v713
        %v715 = vrot.slane %v498, 2
        %v716 = vsel %vm696, %v713, %v715
        %v717 = vrot.slane %v680, 2
        %v718 = vrot.slane %v484, 2
        %v719 = vsel %vm696, %v717, %v718
        %v720 = vrot.slane %v499, 2
        %v721 = vsel %vm696, %v718, %v720
        %v722 = vrot.slane %v681, 2
        %v723 = vrot.slane %v486, 2
        %v724 = vsel %vm696, %v722, %v723
        %v725 = vrot.slane %v500, 2
        %v726 = vsel %vm696, %v723, %v725
        %v727 = vrot.slane %v682, 2
        %v728 = vrot.slane %v488, 2
        %v729 = vsel %vm696, %v727, %v728
        %v730 = vrot.slane %v501, 2
        %v731 = vsel %vm696, %v728, %v730
        %v732 = vrot.slane %v683, 2
        %v733 = vrot.slane %v490, 2
        %v734 = vsel %vm696, %v732, %v733
        %v735 = vrot.slane %v502, 2
        %v736 = vsel %vm696, %v733, %v735
        %v737 = vrot.slane %v684, 2
        %v738 = vrot.slane %v492, 2
        %v739 = vsel %vm696, %v737, %v738
        %v740 = vrot.slane %v503, 2
        %v741 = vsel %vm696, %v738, %v740
        %v742 = vrot.slane %v685, 2
        %v743 = vrot.slane %v494, 2
        %v744 = vsel %vm696, %v742, %v743
        %v745 = vrot.slane %v504, 2
        %v746 = vsel %vm696, %v743, %v745
        %v767 = vadd.f32 %v656, %v699
        %v768 = vadd.f32 %v657, %v701
        %v769 = vadd.f32 %v658, %v704
        %v770 = vadd.f32 %v659, %v706
        %v771 = vadd.f32 %v660, %v709
        %v772 = vadd.f32 %v661, %v711
        %v773 = vadd.f32 %v662, %v714
        %v774 = vadd.f32 %v663, %v716
        %v775 = vadd.f32 %v664, %v719
        %v776 = vadd.f32 %v665, %v721
        %v777 = vadd.f32 %v666, %v724
        %v778 = vadd.f32 %v667, %v726
        %v779 = vadd.f32 %v668, %v729
        %v780 = vadd.f32 %v669, %v731
        %v781 = vadd.f32 %v670, %v734
        %v782 = vadd.f32 %v671, %v736
        %v783 = vadd.f32 %v672, %v739
        %v784 = vadd.f32 %v673, %v741
        %v785 = vadd.f32 %v674, %v744
        %v786 = vadd.f32 %v675, %v746
        %v787 = vpack.c.bf16 %v767, %v767
        %v788 = vpack.c.bf16 %v768, %v768
        %v789 = vpack.c.bf16 %v769, %v769
        %v790 = vpack.c.bf16 %v770, %v770
        %v791 = vpack.c.bf16 %v771, %v771
        %v792 = vpack.c.bf16 %v772, %v772
        %v793 = vpack.c.bf16 %v773, %v773
        %v794 = vpack.c.bf16 %v774, %v774
        %v795 = vpack.c.bf16 %v775, %v775
        %v796 = vpack.c.bf16 %v776, %v776
        %v797 = vpack.c.bf16 %v777, %v777
        %v798 = vpack.c.bf16 %v778, %v778
        %v799 = vpack.c.bf16 %v779, %v779
        %v800 = vpack.c.bf16 %v780, %v780
        %v801 = vpack.c.bf16 %v781, %v781
        %v802 = vpack.c.bf16 %v782, %v782
        %v803 = vpack.c.bf16 %v783, %v783
        %v804 = vpack.c.bf16 %v784, %v784
        %v805 = vpack.c.bf16 %v785, %v785
        %v806 = vpack.c.bf16 %v786, %v786
        %v807 = vunpack.c.l.bf16 %v787
        %v808 = vunpack.c.l.bf16 %v788
        %v809 = vunpack.c.l.bf16 %v789
        %v810 = vunpack.c.l.bf16 %v790
        %v811 = vunpack.c.l.bf16 %v791
        %v812 = vunpack.c.l.bf16 %v792
        %v813 = vunpack.c.l.bf16 %v793
        %v814 = vunpack.c.l.bf16 %v794
        %v815 = vunpack.c.l.bf16 %v795
        %v816 = vunpack.c.l.bf16 %v796
        %v817 = vunpack.c.l.bf16 %v797
        %v818 = vunpack.c.l.bf16 %v798
        %v819 = vunpack.c.l.bf16 %v799
        %v820 = vunpack.c.l.bf16 %v800
        %v821 = vunpack.c.l.bf16 %v801
        %v822 = vunpack.c.l.bf16 %v802
        %v823 = vunpack.c.l.bf16 %v803
        %v824 = vunpack.c.l.bf16 %v804
        %v825 = vadd.f32 %v807, %v809
        %v826 = vadd.f32 %v808, %v810
        %v827 = vadd.f32 %v809, %v811
        %v828 = vadd.f32 %v810, %v812
        %v829 = vadd.f32 %v811, %v813
        %v830 = vadd.f32 %v812, %v814
        %v831 = vadd.f32 %v813, %v815
        %v832 = vadd.f32 %v814, %v816
        %v833 = vadd.f32 %v815, %v817
        %v834 = vadd.f32 %v816, %v818
        %v835 = vadd.f32 %v817, %v819
        %v836 = vadd.f32 %v818, %v820
        %v837 = vadd.f32 %v819, %v821
        %v838 = vadd.f32 %v820, %v822
        %v839 = vadd.f32 %v821, %v823
        %v840 = vadd.f32 %v822, %v824
        %v841 = vpack.c.bf16 %v825, %v825
        %v842 = vpack.c.bf16 %v826, %v826
        %v843 = vpack.c.bf16 %v827, %v827
        %v844 = vpack.c.bf16 %v828, %v828
        %v845 = vpack.c.bf16 %v829, %v829
        %v846 = vpack.c.bf16 %v830, %v830
        %v847 = vpack.c.bf16 %v831, %v831
        %v848 = vpack.c.bf16 %v832, %v832
        %v849 = vpack.c.bf16 %v833, %v833
        %v850 = vpack.c.bf16 %v834, %v834
        %v851 = vpack.c.bf16 %v835, %v835
        %v852 = vpack.c.bf16 %v836, %v836
        %v853 = vpack.c.bf16 %v837, %v837
        %v854 = vpack.c.bf16 %v838, %v838
        %v855 = vpack.c.bf16 %v839, %v839
        %v856 = vpack.c.bf16 %v840, %v840
        %v857 = vunpack.c.l.bf16 %v841
        %v858 = vunpack.c.l.bf16 %v842
        %v859 = vunpack.c.l.bf16 %v843
        %v860 = vunpack.c.l.bf16 %v844
        %v861 = vunpack.c.l.bf16 %v845
        %v862 = vunpack.c.l.bf16 %v846
        %v863 = vunpack.c.l.bf16 %v847
        %v864 = vunpack.c.l.bf16 %v848
        %v865 = vunpack.c.l.bf16 %v849
        %v866 = vunpack.c.l.bf16 %v850
        %v867 = vunpack.c.l.bf16 %v851
        %v868 = vunpack.c.l.bf16 %v852
        %v869 = vunpack.c.l.bf16 %v853
        %v870 = vunpack.c.l.bf16 %v854
        %v871 = vunpack.c.l.bf16 %v855
        %v872 = vunpack.c.l.bf16 %v856
        %v873 = vunpack.c.l.bf16 %v805
        %v874 = vunpack.c.l.bf16 %v806
        %v875 = vadd.f32 %v857, %v811
        %v876 = vadd.f32 %v858, %v812
        %v877 = vadd.f32 %v859, %v813
        %v878 = vadd.f32 %v860, %v814
        %v879 = vadd.f32 %v861, %v815
        %v880 = vadd.f32 %v862, %v816
        %v881 = vadd.f32 %v863, %v817
        %v882 = vadd.f32 %v864, %v818
        %v883 = vadd.f32 %v865, %v819
        %v884 = vadd.f32 %v866, %v820
        %v885 = vadd.f32 %v867, %v821
        %v886 = vadd.f32 %v868, %v822
        %v887 = vadd.f32 %v869, %v823
        %v888 = vadd.f32 %v870, %v824
        %v889 = vadd.f32 %v871, %v873
        %v890 = vadd.f32 %v872, %v874
        %v891 = vpack.c.bf16 %v875, %v875
        %v892 = vpack.c.bf16 %v876, %v876
        %v893 = vpack.c.bf16 %v877, %v877
        %v894 = vpack.c.bf16 %v878, %v878
        %v895 = vpack.c.bf16 %v879, %v879
        %v896 = vpack.c.bf16 %v880, %v880
        %v897 = vpack.c.bf16 %v881, %v881
        %v898 = vpack.c.bf16 %v882, %v882
        %v899 = vpack.c.bf16 %v883, %v883
        %v900 = vpack.c.bf16 %v884, %v884
        %v901 = vpack.c.bf16 %v885, %v885
        %v902 = vpack.c.bf16 %v886, %v886
        %v903 = vpack.c.bf16 %v887, %v887
        %v904 = vpack.c.bf16 %v888, %v888
        %v905 = vpack.c.bf16 %v889, %v889
        %v906 = vpack.c.bf16 %v890, %v890
        %v907 = vld [vmem:[%s3] sm:$0x3]
        %v908 = vld [vmem:[%s4] sm:$0x1]
        %v910 = vperm.slane %v908, 0
        %v928 = vunpack.c.l.b16 %v891
        %v929 = vunpack.c.l.b16 %v892
        %v930 = vunpack.c.l.b16 %v893
        %v931 = vunpack.c.l.b16 %v894
        %v932 = vunpack.c.l.b16 %v895
        %v933 = vunpack.c.l.b16 %v896
        %v934 = vunpack.c.l.b16 %v897
        %v935 = vunpack.c.l.b16 %v898
        %v936 = vunpack.c.l.b16 %v899
        %v937 = vunpack.c.l.b16 %v900
        %v938 = vunpack.c.l.b16 %v901
        %v939 = vunpack.c.l.b16 %v902
        %v940 = vunpack.c.l.b16 %v903
        %v941 = vunpack.c.l.b16 %v904
        %v942 = vunpack.c.l.b16 %v905
        %v943 = vunpack.c.l.b16 %v906
        %v944 = vpack.c.b16 %v929, %v928
        %v945 = vpack.c.b16 %v931, %v930
        %v946 = vpack.c.b16 %v933, %v932
        %v947 = vpack.c.b16 %v935, %v934
        %v948 = vpack.c.b16 %v937, %v936
        %v949 = vpack.c.b16 %v939, %v938
        %v950 = vpack.c.b16 %v941, %v940
        %v951 = vpack.c.b16 %v943, %v942
        %vm952 = vcmask 31744
        %v954 = vsel %vm952, %v944, 0
        %v957 = vsel %vm952, %v945, 0
        %v960 = vsel %vm952, %v946, 0
        %v963 = vsel %vm952, %v947, 0
        %v966 = vsel %vm952, %v948, 0
        %v969 = vsel %vm952, %v949, 0
        %v972 = vsel %vm952, %v950, 0
        %v975 = vsel %vm952, %v951, 0
        %vm977 = vcmask 1041408
        %v979 = vsel %vm977, %v907, 0
        %981 = vmatpush.bf16.msra.mxu0 0
        %982 = vmatpush.bf16.msra.mxu0 0
        %983 = vmatpush.bf16.msra.mxu0 0
        %984 = vmatpush.bf16.msra.mxu0 0
        %985 = vmatpush.bf16.msra.mxu0 0
        %986 = vmatpush.bf16.msra.mxu0 0
        %987 = vmatpush.bf16.msra.mxu0 0
        %988 = vmatpush.bf16.msra.mxu0 %v979
        %989 = vmatmul.bf16.gmra.mxu0 %v954
        %v990 = vpop.f32.mrf.mxu0
        %v991 = vadd.f32 %v910, %v990
        %v992 = vpop.f32.mrf.mxu0
        %v993 = vadd.f32 %v910, %v992
        %994 = vmatmul.bf16.gmra.mxu0 %v957
        %v995 = vpop.f32.mrf.mxu0
        %v996 = vadd.f32 %v910, %v995
        %v997 = vpop.f32.mrf.mxu0
        %v998 = vadd.f32 %v910, %v997
        %999 = vmatmul.bf16.gmra.mxu0 %v960
        %v1000 = vpop.f32.mrf.mxu0
        %v1001 = vadd.f32 %v910, %v1000
        %v1002 = vpop.f32.mrf.mxu0
        %v1003 = vadd.f32 %v910, %v1002
        %1004 = vmatmul.bf16.gmra.mxu0 %v963
        %v1005 = vpop.f32.mrf.mxu0
        %v1006 = vadd.f32 %v910, %v1005
        %v1007 = vpop.f32.mrf.mxu0
        %v1008 = vadd.f32 %v910, %v1007
        %1009 = vmatmul.bf16.gmra.mxu0 %v966
        %v1010 = vpop.f32.mrf.mxu0
        %v1011 = vadd.f32 %v910, %v1010
        %v1012 = vpop.f32.mrf.mxu0
        %v1013 = vadd.f32 %v910, %v1012
        %1014 = vmatmul.bf16.gmra.mxu0 %v969
        %v1015 = vpop.f32.mrf.mxu0
        %v1016 = vadd.f32 %v910, %v1015
        %v1017 = vpop.f32.mrf.mxu0
        %v1018 = vadd.f32 %v910, %v1017
        %1019 = vmatmul.bf16.gmra.mxu0 %v972
        %v1020 = vpop.f32.mrf.mxu0
        %v1021 = vadd.f32 %v910, %v1020
        %v1022 = vpop.f32.mrf.mxu0
        %v1023 = vadd.f32 %v910, %v1022
        %1024 = vmatmul.bf16.gmra.mxu0 %v975
        %v1025 = vpop.f32.mrf.mxu0
        %v1026 = vadd.f32 %v910, %v1025
        %v1027 = vpop.f32.mrf.mxu0
        %v1028 = vadd.f32 %v910, %v1027
        %1029 = vdwg.mxu0
        %v1030 = vmax.f32 %v991, 0.0
        %v1031 = vmax.f32 %v993, 0.0
        %v1032 = vmax.f32 %v996, 0.0
        %v1033 = vmax.f32 %v998, 0.0
        %v1034 = vmax.f32 %v1001, 0.0
        %v1035 = vmax.f32 %v1003, 0.0
        %v1036 = vmax.f32 %v1006, 0.0
        %v1037 = vmax.f32 %v1008, 0.0
        %v1038 = vmax.f32 %v1011, 0.0
        %v1039 = vmax.f32 %v1013, 0.0
        %v1040 = vmax.f32 %v1016, 0.0
        %v1041 = vmax.f32 %v1018, 0.0
        %v1042 = vmax.f32 %v1021, 0.0
        %v1043 = vmax.f32 %v1023, 0.0
        %v1044 = vmax.f32 %v1026, 0.0
        %v1045 = vmax.f32 %v1028, 0.0
        %s1046 = sadd.s32 %s441, 1
        %s1047 = smul.u32 %s1046, 3
        %s1048 = smul.addr %s1047, 4
        %s1049 = scalar_lea.vmem %s428, %s1048
        %v1050 = vld [vmem:[%s1049] sm:$0xf]
        %v1051 = vld [vmem:[%s1049 + $0x4] sm:$0xf]
        %v1052 = vld [vmem:[%s1049 + $0x8] sm:$0x1]
        %v1053 = vld [vmem:[%s1049 + $0xc] sm:$0xf]
        %v1054 = vld [vmem:[%s1049 + $0x10] sm:$0xf]
        %v1055 = vld [vmem:[%s1049 + $0x14] sm:$0x1]
        %v1056 = vld [vmem:[%s1049 + $0x18] sm:$0xf]
        %v1057 = vld [vmem:[%s1049 + $0x1c] sm:$0xf]
        %v1058 = vld [vmem:[%s1049 + $0x20] sm:$0x1]
        %v1059 = vld [vmem:[%s1049 + $0x24] sm:$0xf]
        %v1060 = vld [vmem:[%s1049 + $0x28] sm:$0xf]
        %v1061 = vld [vmem:[%s1049 + $0x2c] sm:$0x1]
        %v1062 = vld [vmem:[%s1049 + $0x30] sm:$0xf]
        %v1063 = vld [vmem:[%s1049 + $0x34] sm:$0xf]
        %v1064 = vld [vmem:[%s1049 + $0x38] sm:$0x1]
        %v1065 = vld [vmem:[%s1049 + $0x3c] sm:$0xf]
        %v1066 = vld [vmem:[%s1049 + $0x40] sm:$0xf]
        %v1067 = vld [vmem:[%s1049 + $0x44] sm:$0x1]
        %v1068 = vld [vmem:[%s1049 + $0x48] sm:$0xf]
        %v1069 = vld [vmem:[%s1049 + $0x4c] sm:$0xf]
        %v1070 = vld [vmem:[%s1049 + $0x50] sm:$0x1]
        %v1071 = vld [vmem:[%s1049 + $0x54] sm:$0xf]
        %v1072 = vld [vmem:[%s1049 + $0x58] sm:$0xf]
        %v1073 = vld [vmem:[%s1049 + $0x5c] sm:$0x1]
        %vm1074 = vsmask.f32 3328
        %vm1075 = vsmask.f32 7440
        %vm1076 = vmor %vm1074, %vm1075
        %v1078 = vshrl.u32 %v1050, 16
        %v1080 = vrot.slane %v1078, 4
        %v1081 = vshll.u32 %v1050, 16
        %v1083 = vrot.slane %v1081, 5
        %v1084 = vor.u32 %v1080, %v1083
        %v1085 = vrot.slane %v1084, 4
        %v1087 = vshll.u32 %v1051, 16
        %v1089 = vrot.slane %v1087, 5
        %v1090 = vsel %vm1076, %v1085, %v1089
        %v1091 = vshrl.u32 %v1051, 16
        %v1093 = vrot.slane %v1091, 4
        %v1094 = vor.u32 %v1093, %v1089
        %v1095 = vrot.slane %v1094, 4
        %v1097 = vshll.u32 %v1052, 16
        %v1099 = vrot.slane %v1097, 5
        %v1100 = vsel %vm1076, %v1095, %v1099
        %v1102 = vshrl.u32 %v1053, 16
        %v1104 = vrot.slane %v1102, 4
        %v1105 = vshll.u32 %v1053, 16
        %v1107 = vrot.slane %v1105, 5
        %v1108 = vor.u32 %v1104, %v1107
        %v1109 = vrot.slane %v1108, 4
        %v1111 = vshll.u32 %v1054, 16
        %v1113 = vrot.slane %v1111, 5
        %v1114 = vsel %vm1076, %v1109, %v1113
        %v1115 = vshrl.u32 %v1054, 16
        %v1117 = vrot.slane %v1115, 4
        %v1118 = vor.u32 %v1117, %v1113
        %v1119 = vrot.slane %v1118, 4
        %v1121 = vshll.u32 %v1055, 16
        %v1123 = vrot.slane %v1121, 5
        %v1124 = vsel %vm1076, %v1119, %v1123
        %v1126 = vshrl.u32 %v1056, 16
        %v1128 = vrot.slane %v1126, 4
        %v1129 = vshll.u32 %v1056, 16
        %v1131 = vrot.slane %v1129, 5
        %v1132 = vor.u32 %v1128, %v1131
        %v1133 = vrot.slane %v1132, 4
        %v1135 = vshll.u32 %v1057, 16
        %v1137 = vrot.slane %v1135, 5
        %v1138 = vsel %vm1076, %v1133, %v1137
        %v1139 = vshrl.u32 %v1057, 16
        %v1141 = vrot.slane %v1139, 4
        %v1142 = vor.u32 %v1141, %v1137
        %v1143 = vrot.slane %v1142, 4
        %v1145 = vshll.u32 %v1058, 16
        %v1147 = vrot.slane %v1145, 5
        %v1148 = vsel %vm1076, %v1143, %v1147
        %v1150 = vshrl.u32 %v1059, 16
        %v1152 = vrot.slane %v1150, 4
        %v1153 = vshll.u32 %v1059, 16
        %v1155 = vrot.slane %v1153, 5
        %v1156 = vor.u32 %v1152, %v1155
        %v1157 = vrot.slane %v1156, 4
        %v1159 = vshll.u32 %v1060, 16
        %v1161 = vrot.slane %v1159, 5
        %v1162 = vsel %vm1076, %v1157, %v1161
        %v1163 = vshrl.u32 %v1060, 16
        %v1165 = vrot.slane %v1163, 4
        %v1166 = vor.u32 %v1165, %v1161
        %v1167 = vrot.slane %v1166, 4
        %v1169 = vshll.u32 %v1061, 16
        %v1171 = vrot.slane %v1169, 5
        %v1172 = vsel %vm1076, %v1167, %v1171
        %v1174 = vshrl.u32 %v1062, 16
        %v1176 = vrot.slane %v1174, 4
        %v1177 = vshll.u32 %v1062, 16
        %v1179 = vrot.slane %v1177, 5
        %v1180 = vor.u32 %v1176, %v1179
        %v1181 = vrot.slane %v1180, 4
        %v1183 = vshll.u32 %v1063, 16
        %v1185 = vrot.slane %v1183, 5
        %v1186 = vsel %vm1076, %v1181, %v1185
        %v1187 = vshrl.u32 %v1063, 16
        %v1189 = vrot.slane %v1187, 4
        %v1190 = vor.u32 %v1189, %v1185
        %v1191 = vrot.slane %v1190, 4
        %v1193 = vshll.u32 %v1064, 16
        %v1195 = vrot.slane %v1193, 5
        %v1196 = vsel %vm1076, %v1191, %v1195
        %v1198 = vshrl.u32 %v1065, 16
        %v1200 = vrot.slane %v1198, 4
        %v1201 = vshll.u32 %v1065, 16
        %v1203 = vrot.slane %v1201, 5
        %v1204 = vor.u32 %v1200, %v1203
        %v1205 = vrot.slane %v1204, 4
        %v1207 = vshll.u32 %v1066, 16
        %v1209 = vrot.slane %v1207, 5
        %v1210 = vsel %vm1076, %v1205, %v1209
        %v1211 = vshrl.u32 %v1066, 16
        %v1213 = vrot.slane %v1211, 4
        %v1214 = vor.u32 %v1213, %v1209
        %v1215 = vrot.slane %v1214, 4
        %v1217 = vshll.u32 %v1067, 16
        %v1219 = vrot.slane %v1217, 5
        %v1220 = vsel %vm1076, %v1215, %v1219
        %v1222 = vshrl.u32 %v1068, 16
        %v1224 = vrot.slane %v1222, 4
        %v1225 = vshll.u32 %v1068, 16
        %v1227 = vrot.slane %v1225, 5
        %v1228 = vor.u32 %v1224, %v1227
        %v1229 = vrot.slane %v1228, 4
        %v1231 = vshll.u32 %v1069, 16
        %v1233 = vrot.slane %v1231, 5
        %v1234 = vsel %vm1076, %v1229, %v1233
        %v1235 = vshrl.u32 %v1069, 16
        %v1237 = vrot.slane %v1235, 4
        %v1238 = vor.u32 %v1237, %v1233
        %v1239 = vrot.slane %v1238, 4
        %v1241 = vshll.u32 %v1070, 16
        %v1243 = vrot.slane %v1241, 5
        %v1244 = vsel %vm1076, %v1239, %v1243
        %v1246 = vshrl.u32 %v1071, 16
        %v1248 = vrot.slane %v1246, 4
        %v1249 = vshll.u32 %v1071, 16
        %v1251 = vrot.slane %v1249, 5
        %v1252 = vor.u32 %v1248, %v1251
        %v1253 = vrot.slane %v1252, 4
        %v1255 = vshll.u32 %v1072, 16
        %v1257 = vrot.slane %v1255, 5
        %v1258 = vsel %vm1076, %v1253, %v1257
        %v1259 = vshrl.u32 %v1072, 16
        %v1261 = vrot.slane %v1259, 4
        %v1262 = vor.u32 %v1261, %v1257
        %v1263 = vrot.slane %v1262, 4
        %v1265 = vshll.u32 %v1073, 16
        %v1267 = vrot.slane %v1265, 5
        %v1268 = vsel %vm1076, %v1263, %v1267
        %v1269 = vld [vmem:[%s5] sm:$0x3]
        %v1270 = vld [vmem:[%s6] sm:$0x1]
        %v1272 = vperm.slane %v1270, 0
        %v1274 = vunpack.c.l.b16 %v1090
        %v1275 = vunpack.c.l.b16 %v1100
        %v1276 = vunpack.c.l.b16 %v1114
        %v1277 = vunpack.c.l.b16 %v1124
        %v1278 = vunpack.c.l.b16 %v1138
        %v1279 = vunpack.c.l.b16 %v1148
        %v1280 = vunpack.c.l.b16 %v1162
        %v1281 = vunpack.c.l.b16 %v1172
        %v1282 = vunpack.c.l.b16 %v1186
        %v1283 = vunpack.c.l.b16 %v1196
        %v1284 = vunpack.c.l.b16 %v1210
        %v1285 = vunpack.c.l.b16 %v1220
        %v1286 = vunpack.c.l.b16 %v1234
        %v1287 = vunpack.c.l.b16 %v1244
        %v1288 = vunpack.c.l.b16 %v1258
        %v1289 = vunpack.c.l.b16 %v1268
        %v1290 = vpack.c.b16 %v1275, %v1274
        %v1291 = vpack.c.b16 %v1277, %v1276
        %v1292 = vpack.c.b16 %v1279, %v1278
        %v1293 = vpack.c.b16 %v1281, %v1280
        %v1294 = vpack.c.b16 %v1283, %v1282
        %v1295 = vpack.c.b16 %v1285, %v1284
        %v1296 = vpack.c.b16 %v1287, %v1286
        %v1297 = vpack.c.b16 %v1289, %v1288
        %v1299 = vsel %vm952, %v1290, 0
        %v1302 = vsel %vm952, %v1291, 0
        %v1305 = vsel %vm952, %v1292, 0
        %v1308 = vsel %vm952, %v1293, 0
        %v1311 = vsel %vm952, %v1294, 0
        %v1314 = vsel %vm952, %v1295, 0
        %v1317 = vsel %vm952, %v1296, 0
        %v1320 = vsel %vm952, %v1297, 0
        %v1323 = vsel %vm977, %v1269, 0
        %1325 = vmatpush.bf16.msra.mxu0 0
        %1326 = vmatpush.bf16.msra.mxu0 0
        %1327 = vmatpush.bf16.msra.mxu0 0
        %1328 = vmatpush.bf16.msra.mxu0 0
        %1329 = vmatpush.bf16.msra.mxu0 0
        %1330 = vmatpush.bf16.msra.mxu0 0
        %1331 = vmatpush.bf16.msra.mxu0 0
        %1332 = vmatpush.bf16.msra.mxu0 %v1323
        %1333 = vmatmul.bf16.gmra.mxu0 %v1299
        %v1334 = vpop.f32.mrf.mxu0
        %v1335 = vadd.f32 %v1272, %v1334
        %v1336 = vpop.f32.mrf.mxu0
        %v1337 = vadd.f32 %v1272, %v1336
        %1338 = vmatmul.bf16.gmra.mxu0 %v1302
        %v1339 = vpop.f32.mrf.mxu0
        %v1340 = vadd.f32 %v1272, %v1339
        %v1341 = vpop.f32.mrf.mxu0
        %v1342 = vadd.f32 %v1272, %v1341
        %1343 = vmatmul.bf16.gmra.mxu0 %v1305
        %v1344 = vpop.f32.mrf.mxu0
        %v1345 = vadd.f32 %v1272, %v1344
        %v1346 = vpop.f32.mrf.mxu0
        %v1347 = vadd.f32 %v1272, %v1346
        %1348 = vmatmul.bf16.gmra.mxu0 %v1308
        %v1349 = vpop.f32.mrf.mxu0
        %v1350 = vadd.f32 %v1272, %v1349
        %v1351 = vpop.f32.mrf.mxu0
        %v1352 = vadd.f32 %v1272, %v1351
        %1353 = vmatmul.bf16.gmra.mxu0 %v1311
        %v1354 = vpop.f32.mrf.mxu0
        %v1355 = vadd.f32 %v1272, %v1354
        %v1356 = vpop.f32.mrf.mxu0
        %v1357 = vadd.f32 %v1272, %v1356
        %1358 = vmatmul.bf16.gmra.mxu0 %v1314
        %v1359 = vpop.f32.mrf.mxu0
        %v1360 = vadd.f32 %v1272, %v1359
        %v1361 = vpop.f32.mrf.mxu0
        %v1362 = vadd.f32 %v1272, %v1361
        %1363 = vmatmul.bf16.gmra.mxu0 %v1317
        %v1364 = vpop.f32.mrf.mxu0
        %v1365 = vadd.f32 %v1272, %v1364
        %v1366 = vpop.f32.mrf.mxu0
        %v1367 = vadd.f32 %v1272, %v1366
        %1368 = vmatmul.bf16.gmra.mxu0 %v1320
        %v1369 = vpop.f32.mrf.mxu0
        %v1370 = vadd.f32 %v1272, %v1369
        %v1371 = vpop.f32.mrf.mxu0
        %v1372 = vadd.f32 %v1272, %v1371
        %1373 = vdwg.mxu0
        %v1374 = vmax.f32 %v1335, 0.0
        %v1375 = vmax.f32 %v1337, 0.0
        %v1376 = vmax.f32 %v1340, 0.0
        %v1377 = vmax.f32 %v1342, 0.0
        %v1378 = vmax.f32 %v1345, 0.0
        %v1379 = vmax.f32 %v1347, 0.0
        %v1380 = vmax.f32 %v1350, 0.0
        %v1381 = vmax.f32 %v1352, 0.0
        %v1382 = vmax.f32 %v1355, 0.0
        %v1383 = vmax.f32 %v1357, 0.0
        %v1384 = vmax.f32 %v1360, 0.0
        %v1385 = vmax.f32 %v1362, 0.0
        %v1386 = vmax.f32 %v1365, 0.0
        %v1387 = vmax.f32 %v1367, 0.0
        %v1388 = vmax.f32 %v1370, 0.0
        %v1389 = vmax.f32 %v1372, 0.0
        %s1390 = smul.addr %s442, 4
        %s1391 = scalar_lea.vmem %s433, %s1390
        %v1392 = vld [vmem:[%s1391] sm:$0xf]
        %v1393 = vld [vmem:[%s1391 + $0x4] sm:$0xf]
        %v1394 = vld [vmem:[%s1391 + $0xc] sm:$0xf]
        %v1395 = vld [vmem:[%s1391 + $0x10] sm:$0xf]
        %v1396 = vld [vmem:[%s1391 + $0x18] sm:$0xf]
        %v1397 = vld [vmem:[%s1391 + $0x1c] sm:$0xf]
        %v1398 = vld [vmem:[%s1391 + $0x24] sm:$0xf]
        %v1399 = vld [vmem:[%s1391 + $0x28] sm:$0xf]
        %v1400 = vld [vmem:[%s1391 + $0x30] sm:$0xf]
        %v1401 = vld [vmem:[%s1391 + $0x34] sm:$0xf]
        %v1402 = vld [vmem:[%s1391 + $0x3c] sm:$0xf]
        %v1403 = vld [vmem:[%s1391 + $0x40] sm:$0xf]
        %v1404 = vld [vmem:[%s1391 + $0x48] sm:$0xf]
        %v1405 = vld [vmem:[%s1391 + $0x4c] sm:$0xf]
        %v1406 = vld [vmem:[%s1391 + $0x54] sm:$0xf]
        %v1407 = vld [vmem:[%s1391 + $0x58] sm:$0xf]
        %v1408 = vld [vmem:[%s1391 + $0x8] sm:$0x1]
        %v1409 = vld [vmem:[%s1391 + $0x14] sm:$0x1]
        %v1410 = vld [vmem:[%s1391 + $0x20] sm:$0x1]
        %v1411 = vld [vmem:[%s1391 + $0x2c] sm:$0x1]
        %v1412 = vld [vmem:[%s1391 + $0x38] sm:$0x1]
        %v1413 = vld [vmem:[%s1391 + $0x44] sm:$0x1]
        %v1414 = vld [vmem:[%s1391 + $0x50] sm:$0x1]
        %v1415 = vld [vmem:[%s1391 + $0x5c] sm:$0x1]
        %v1416 = vld [vmem:[%s1391] sm:$0xe]
        %v1417 = vld [vmem:[%s1391 + $0xc] sm:$0xe]
        %v1418 = vld [vmem:[%s1391 + $0x18] sm:$0xe]
        %v1419 = vld [vmem:[%s1391 + $0x24] sm:$0xe]
        %v1420 = vld [vmem:[%s1391 + $0x30] sm:$0xe]
        %v1421 = vld [vmem:[%s1391 + $0x3c] sm:$0xe]
        %v1422 = vld [vmem:[%s1391 + $0x48] sm:$0xe]
        %v1423 = vld [vmem:[%s1391 + $0x54] sm:$0xe]
        %s1424 = smul.addr %s1047, 4
        %s1425 = scalar_lea.vmem %s433, %s1424
        %v1426 = vld [vmem:[%s1425] sm:$0xf]
        %v1427 = vld [vmem:[%s1425 + $0x4] sm:$0xf]
        %v1428 = vld [vmem:[%s1425 + $0xc] sm:$0xf]
        %v1429 = vld [vmem:[%s1425 + $0x10] sm:$0xf]
        %v1430 = vld [vmem:[%s1425 + $0x18] sm:$0xf]
        %v1431 = vld [vmem:[%s1425 + $0x1c] sm:$0xf]
        %v1432 = vld [vmem:[%s1425 + $0x24] sm:$0xf]
        %v1433 = vld [vmem:[%s1425 + $0x28] sm:$0xf]
        %v1434 = vld [vmem:[%s1425 + $0x30] sm:$0xf]
        %v1435 = vld [vmem:[%s1425 + $0x34] sm:$0xf]
        %v1436 = vld [vmem:[%s1425 + $0x3c] sm:$0xf]
        %v1437 = vld [vmem:[%s1425 + $0x40] sm:$0xf]
        %v1438 = vld [vmem:[%s1425 + $0x48] sm:$0xf]
        %v1439 = vld [vmem:[%s1425 + $0x4c] sm:$0xf]
        %v1440 = vld [vmem:[%s1425 + $0x54] sm:$0xf]
        %v1441 = vld [vmem:[%s1425 + $0x58] sm:$0xf]
        %v1442 = vld [vmem:[%s1425 + $0x8] sm:$0x1]
        %v1443 = vld [vmem:[%s1425 + $0x14] sm:$0x1]
        %v1444 = vld [vmem:[%s1425 + $0x20] sm:$0x1]
        %v1445 = vld [vmem:[%s1425 + $0x2c] sm:$0x1]
        %v1446 = vld [vmem:[%s1425 + $0x38] sm:$0x1]
        %v1447 = vld [vmem:[%s1425 + $0x44] sm:$0x1]
        %v1448 = vld [vmem:[%s1425 + $0x50] sm:$0x1]
        %v1449 = vld [vmem:[%s1425 + $0x5c] sm:$0x1]
        %v1450 = vld [vmem:[%s1425] sm:$0xe]
        %v1451 = vld [vmem:[%s1425 + $0xc] sm:$0xe]
        %v1452 = vld [vmem:[%s1425 + $0x18] sm:$0xe]
        %v1453 = vld [vmem:[%s1425 + $0x24] sm:$0xe]
        %v1454 = vld [vmem:[%s1425 + $0x30] sm:$0xe]
        %v1455 = vld [vmem:[%s1425 + $0x3c] sm:$0xe]
        %v1456 = vld [vmem:[%s1425 + $0x48] sm:$0xe]
        %v1457 = vld [vmem:[%s1425 + $0x54] sm:$0xe]
        %s1458 = sadd.s32 %s441, 2
        %s1459 = smul.u32 %s1458, 3
        %s1460 = smul.addr %s1459, 4
        %s1461 = scalar_lea.vmem %s433, %s1460
        %v1462 = vld [vmem:[%s1461] sm:$0xf]
        %v1463 = vld [vmem:[%s1461 + $0x4] sm:$0xf]
        %v1464 = vld [vmem:[%s1461 + $0xc] sm:$0xf]
        %v1465 = vld [vmem:[%s1461 + $0x10] sm:$0xf]
        %v1466 = vld [vmem:[%s1461 + $0x18] sm:$0xf]
        %v1467 = vld [vmem:[%s1461 + $0x1c] sm:$0xf]
        %v1468 = vld [vmem:[%s1461 + $0x24] sm:$0xf]
        %v1469 = vld [vmem:[%s1461 + $0x28] sm:$0xf]
        %v1470 = vld [vmem:[%s1461 + $0x30] sm:$0xf]
        %v1471 = vld [vmem:[%s1461 + $0x34] sm:$0xf]
        %v1472 = vld [vmem:[%s1461 + $0x3c] sm:$0xf]
        %v1473 = vld [vmem:[%s1461 + $0x40] sm:$0xf]
        %v1474 = vld [vmem:[%s1461 + $0x48] sm:$0xf]
        %v1475 = vld [vmem:[%s1461 + $0x4c] sm:$0xf]
        %v1476 = vld [vmem:[%s1461 + $0x54] sm:$0xf]
        %v1477 = vld [vmem:[%s1461 + $0x58] sm:$0xf]
        %v1478 = vld [vmem:[%s1461 + $0x8] sm:$0x1]
        %v1479 = vld [vmem:[%s1461 + $0x14] sm:$0x1]
        %v1480 = vld [vmem:[%s1461 + $0x20] sm:$0x1]
        %v1481 = vld [vmem:[%s1461 + $0x2c] sm:$0x1]
        %v1482 = vld [vmem:[%s1461 + $0x38] sm:$0x1]
        %v1483 = vld [vmem:[%s1461 + $0x44] sm:$0x1]
        %v1484 = vld [vmem:[%s1461 + $0x50] sm:$0x1]
        %v1485 = vld [vmem:[%s1461 + $0x5c] sm:$0x1]
        %v1486 = vld [vmem:[%s1461] sm:$0xe]
        %v1487 = vld [vmem:[%s1461 + $0xc] sm:$0xe]
        %v1488 = vld [vmem:[%s1461 + $0x18] sm:$0xe]
        %v1489 = vld [vmem:[%s1461 + $0x24] sm:$0xe]
        %v1490 = vld [vmem:[%s1461 + $0x30] sm:$0xe]
        %v1491 = vld [vmem:[%s1461 + $0x3c] sm:$0xe]
        %v1492 = vld [vmem:[%s1461 + $0x48] sm:$0xe]
        %v1493 = vld [vmem:[%s1461 + $0x54] sm:$0xe]
        %v1510 = vunpack.c.l.b16 %v1392
        %v1511 = vunpack.c.l.b16 %v1393
        %v1512 = vunpack.c.l.b16 %v1394
        %v1513 = vunpack.c.l.b16 %v1395
        %v1514 = vunpack.c.l.b16 %v1396
        %v1515 = vunpack.c.l.b16 %v1397
        %v1516 = vunpack.c.l.b16 %v1398
        %v1517 = vunpack.c.l.b16 %v1399
        %v1518 = vunpack.c.l.b16 %v1400
        %v1519 = vunpack.c.l.b16 %v1401
        %v1520 = vunpack.c.l.b16 %v1402
        %v1521 = vunpack.c.l.b16 %v1403
        %v1522 = vunpack.c.l.b16 %v1404
        %v1523 = vunpack.c.l.b16 %v1405
        %v1524 = vunpack.c.l.b16 %v1406
        %v1525 = vunpack.c.l.b16 %v1407
        %v1526 = vpack.c.b16 %v1511, %v1510
        %v1527 = vpack.c.b16 %v1513, %v1512
        %v1528 = vpack.c.b16 %v1515, %v1514
        %v1529 = vpack.c.b16 %v1517, %v1516
        %v1530 = vpack.c.b16 %v1519, %v1518
        %v1531 = vpack.c.b16 %v1521, %v1520
        %v1532 = vpack.c.b16 %v1523, %v1522
        %v1533 = vpack.c.b16 %v1525, %v1524
        %v1542 = vunpack.c.l.b16 %v1408
        %v1543 = vunpack.c.l.b16 %v1409
        %v1544 = vunpack.c.l.b16 %v1410
        %v1545 = vunpack.c.l.b16 %v1411
        %v1546 = vunpack.c.l.b16 %v1412
        %v1547 = vunpack.c.l.b16 %v1413
        %v1548 = vunpack.c.l.b16 %v1414
        %v1549 = vunpack.c.l.b16 %v1415
        %v1550 = vpack.c.b16 %v1542, %v1542
        %v1551 = vpack.c.b16 %v1543, %v1543
        %v1552 = vpack.c.b16 %v1544, %v1544
        %v1553 = vpack.c.b16 %v1545, %v1545
        %v1554 = vpack.c.b16 %v1546, %v1546
        %v1555 = vpack.c.b16 %v1547, %v1547
        %v1556 = vpack.c.b16 %v1548, %v1548
        %v1557 = vpack.c.b16 %v1549, %v1549
        %vm1558 = vsmask.f32 7424
        %v1560 = vshrl.u32 %v1526, 16
        %v1562 = vshll.u32 %v1526, 16
        %v1564 = vrot.slane %v1562, 1
        %v1565 = vor.u32 %v1560, %v1564
        %v1567 = vshll.u32 %v1550, 16
        %v1569 = vrot.slane %v1567, 1
        %v1570 = vsel %vm1558, %v1565, %v1569
        %v1572 = vshrl.u32 %v1527, 16
        %v1574 = vshll.u32 %v1527, 16
        %v1576 = vrot.slane %v1574, 1
        %v1577 = vor.u32 %v1572, %v1576
        %v1579 = vshll.u32 %v1551, 16
        %v1581 = vrot.slane %v1579, 1
        %v1582 = vsel %vm1558, %v1577, %v1581
        %v1584 = vshrl.u32 %v1528, 16
        %v1586 = vshll.u32 %v1528, 16
        %v1588 = vrot.slane %v1586, 1
        %v1589 = vor.u32 %v1584, %v1588
        %v1591 = vshll.u32 %v1552, 16
        %v1593 = vrot.slane %v1591, 1
        %v1594 = vsel %vm1558, %v1589, %v1593
        %v1596 = vshrl.u32 %v1529, 16
        %v1598 = vshll.u32 %v1529, 16
        %v1600 = vrot.slane %v1598, 1
        %v1601 = vor.u32 %v1596, %v1600
        %v1603 = vshll.u32 %v1553, 16
        %v1605 = vrot.slane %v1603, 1
        %v1606 = vsel %vm1558, %v1601, %v1605
        %v1608 = vshrl.u32 %v1530, 16
        %v1610 = vshll.u32 %v1530, 16
        %v1612 = vrot.slane %v1610, 1
        %v1613 = vor.u32 %v1608, %v1612
        %v1615 = vshll.u32 %v1554, 16
        %v1617 = vrot.slane %v1615, 1
        %v1618 = vsel %vm1558, %v1613, %v1617
        %v1620 = vshrl.u32 %v1531, 16
        %v1622 = vshll.u32 %v1531, 16
        %v1624 = vrot.slane %v1622, 1
        %v1625 = vor.u32 %v1620, %v1624
        %v1627 = vshll.u32 %v1555, 16
        %v1629 = vrot.slane %v1627, 1
        %v1630 = vsel %vm1558, %v1625, %v1629
        %v1632 = vshrl.u32 %v1532, 16
        %v1634 = vshll.u32 %v1532, 16
        %v1636 = vrot.slane %v1634, 1
        %v1637 = vor.u32 %v1632, %v1636
        %v1639 = vshll.u32 %v1556, 16
        %v1641 = vrot.slane %v1639, 1
        %v1642 = vsel %vm1558, %v1637, %v1641
        %v1644 = vshrl.u32 %v1533, 16
        %v1646 = vshll.u32 %v1533, 16
        %v1648 = vrot.slane %v1646, 1
        %v1649 = vor.u32 %v1644, %v1648
        %v1651 = vshll.u32 %v1557, 16
        %v1653 = vrot.slane %v1651, 1
        %v1654 = vsel %vm1558, %v1649, %v1653
        %1655 = vrot.lane.b32.xlu0 %v1570, 64
        %v1656 = vpop.permute.xlu0 %1655
        %1657 = vrot.lane.b32.xlu0 %v1582, 64
        %v1658 = vpop.permute.xlu0 %1657
        %1659 = vrot.lane.b32.xlu0 %v1594, 64
        %v1660 = vpop.permute.xlu0 %1659
        %1661 = vrot.lane.b32.xlu0 %v1606, 64
        %v1662 = vpop.permute.xlu0 %1661
        %1663 = vrot.lane.b32.xlu0 %v1618, 64
        %v1664 = vpop.permute.xlu0 %1663
        %1665 = vrot.lane.b32.xlu0 %v1630, 64
        %v1666 = vpop.permute.xlu0 %1665
        %1667 = vrot.lane.b32.xlu0 %v1642, 64
        %v1668 = vpop.permute.xlu0 %1667
        %1669 = vrot.lane.b32.xlu0 %v1654, 64
        %v1670 = vpop.permute.xlu0 %1669
        %v1679 = vunpack.c.l.b16 %v1416
        %v1680 = vunpack.c.l.b16 %v1417
        %v1681 = vunpack.c.l.b16 %v1418
        %v1682 = vunpack.c.l.b16 %v1419
        %v1683 = vunpack.c.l.b16 %v1420
        %v1684 = vunpack.c.l.b16 %v1421
        %v1685 = vunpack.c.l.b16 %v1422
        %v1686 = vunpack.c.l.b16 %v1423
        %v1687 = vpack.c.b16 %v1511, %v1679
        %v1688 = vpack.c.b16 %v1513, %v1680
        %v1689 = vpack.c.b16 %v1515, %v1681
        %v1690 = vpack.c.b16 %v1517, %v1682
        %v1691 = vpack.c.b16 %v1519, %v1683
        %v1692 = vpack.c.b16 %v1521, %v1684
        %v1693 = vpack.c.b16 %v1523, %v1685
        %v1694 = vpack.c.b16 %v1525, %v1686
        %vm1695 = vcmask 1046528
        %v1696 = vrot.slane %v1687, 1
        %v1697 = vrot.slane %v1550, 1
        %v1698 = vsel %vm1695, %v1696, %v1697
        %v1699 = vrot.slane %v1688, 1
        %v1700 = vrot.slane %v1551, 1
        %v1701 = vsel %vm1695, %v1699, %v1700
        %v1702 = vrot.slane %v1689, 1
        %v1703 = vrot.slane %v1552, 1
        %v1704 = vsel %vm1695, %v1702, %v1703
        %v1705 = vrot.slane %v1690, 1
        %v1706 = vrot.slane %v1553, 1
        %v1707 = vsel %vm1695, %v1705, %v1706
        %v1708 = vrot.slane %v1691, 1
        %v1709 = vrot.slane %v1554, 1
        %v1710 = vsel %vm1695, %v1708, %v1709
        %v1711 = vrot.slane %v1692, 1
        %v1712 = vrot.slane %v1555, 1
        %v1713 = vsel %vm1695, %v1711, %v1712
        %v1714 = vrot.slane %v1693, 1
        %v1715 = vrot.slane %v1556, 1
        %v1716 = vsel %vm1695, %v1714, %v1715
        %v1717 = vrot.slane %v1694, 1
        %v1718 = vrot.slane %v1557, 1
        %v1719 = vsel %vm1695, %v1717, %v1718
        %v1736 = vunpack.c.l.b16 %v1426
        %v1737 = vunpack.c.l.b16 %v1427
        %v1738 = vunpack.c.l.b16 %v1428
        %v1739 = vunpack.c.l.b16 %v1429
        %v1740 = vunpack.c.l.b16 %v1430
        %v1741 = vunpack.c.l.b16 %v1431
        %v1742 = vunpack.c.l.b16 %v1432
        %v1743 = vunpack.c.l.b16 %v1433
        %v1744 = vunpack.c.l.b16 %v1434
        %v1745 = vunpack.c.l.b16 %v1435
        %v1746 = vunpack.c.l.b16 %v1436
        %v1747 = vunpack.c.l.b16 %v1437
        %v1748 = vunpack.c.l.b16 %v1438
        %v1749 = vunpack.c.l.b16 %v1439
        %v1750 = vunpack.c.l.b16 %v1440
        %v1751 = vunpack.c.l.b16 %v1441
        %v1752 = vpack.c.b16 %v1737, %v1736
        %v1753 = vpack.c.b16 %v1739, %v1738
        %v1754 = vpack.c.b16 %v1741, %v1740
        %v1755 = vpack.c.b16 %v1743, %v1742
        %v1756 = vpack.c.b16 %v1745, %v1744
        %v1757 = vpack.c.b16 %v1747, %v1746
        %v1758 = vpack.c.b16 %v1749, %v1748
        %v1759 = vpack.c.b16 %v1751, %v1750
        %1760 = vrot.lane.b32.xlu0 %v1752, 64
        %v1761 = vpop.permute.xlu0 %1760
        %1762 = vrot.lane.b32.xlu0 %v1753, 64
        %v1763 = vpop.permute.xlu0 %1762
        %1764 = vrot.lane.b32.xlu0 %v1754, 64
        %v1765 = vpop.permute.xlu0 %1764
        %1766 = vrot.lane.b32.xlu0 %v1755, 64
        %v1767 = vpop.permute.xlu0 %1766
        %1768 = vrot.lane.b32.xlu0 %v1756, 64
        %v1769 = vpop.permute.xlu0 %1768
        %1770 = vrot.lane.b32.xlu0 %v1757, 64
        %v1771 = vpop.permute.xlu0 %1770
        %1772 = vrot.lane.b32.xlu0 %v1758, 64
        %v1773 = vpop.permute.xlu0 %1772
        %1774 = vrot.lane.b32.xlu0 %v1759, 64
        %v1775 = vpop.permute.xlu0 %1774
        %v1784 = vunpack.c.l.b16 %v1442
        %v1785 = vunpack.c.l.b16 %v1443
        %v1786 = vunpack.c.l.b16 %v1444
        %v1787 = vunpack.c.l.b16 %v1445
        %v1788 = vunpack.c.l.b16 %v1446
        %v1789 = vunpack.c.l.b16 %v1447
        %v1790 = vunpack.c.l.b16 %v1448
        %v1791 = vunpack.c.l.b16 %v1449
        %v1792 = vpack.c.b16 %v1784, %v1784
        %v1793 = vpack.c.b16 %v1785, %v1785
        %v1794 = vpack.c.b16 %v1786, %v1786
        %v1795 = vpack.c.b16 %v1787, %v1787
        %v1796 = vpack.c.b16 %v1788, %v1788
        %v1797 = vpack.c.b16 %v1789, %v1789
        %v1798 = vpack.c.b16 %v1790, %v1790
        %v1799 = vpack.c.b16 %v1791, %v1791
        %v1801 = vshrl.u32 %v1752, 16
        %v1803 = vshll.u32 %v1752, 16
        %v1805 = vrot.slane %v1803, 1
        %v1806 = vor.u32 %v1801, %v1805
        %v1808 = vshll.u32 %v1792, 16
        %v1810 = vrot.slane %v1808, 1
        %v1811 = vsel %vm1558, %v1806, %v1810
        %v1813 = vshrl.u32 %v1753, 16
        %v1815 = vshll.u32 %v1753, 16
        %v1817 = vrot.slane %v1815, 1
        %v1818 = vor.u32 %v1813, %v1817
        %v1820 = vshll.u32 %v1793, 16
        %v1822 = vrot.slane %v1820, 1
        %v1823 = vsel %vm1558, %v1818, %v1822
        %v1825 = vshrl.u32 %v1754, 16
        %v1827 = vshll.u32 %v1754, 16
        %v1829 = vrot.slane %v1827, 1
        %v1830 = vor.u32 %v1825, %v1829
        %v1832 = vshll.u32 %v1794, 16
        %v1834 = vrot.slane %v1832, 1
        %v1835 = vsel %vm1558, %v1830, %v1834
        %v1837 = vshrl.u32 %v1755, 16
        %v1839 = vshll.u32 %v1755, 16
        %v1841 = vrot.slane %v1839, 1
        %v1842 = vor.u32 %v1837, %v1841
        %v1844 = vshll.u32 %v1795, 16
        %v1846 = vrot.slane %v1844, 1
        %v1847 = vsel %vm1558, %v1842, %v1846
        %v1849 = vshrl.u32 %v1756, 16
        %v1851 = vshll.u32 %v1756, 16
        %v1853 = vrot.slane %v1851, 1
        %v1854 = vor.u32 %v1849, %v1853
        %v1856 = vshll.u32 %v1796, 16
        %v1858 = vrot.slane %v1856, 1
        %v1859 = vsel %vm1558, %v1854, %v1858
        %v1861 = vshrl.u32 %v1757, 16
        %v1863 = vshll.u32 %v1757, 16
        %v1865 = vrot.slane %v1863, 1
        %v1866 = vor.u32 %v1861, %v1865
        %v1868 = vshll.u32 %v1797, 16
        %v1870 = vrot.slane %v1868, 1
        %v1871 = vsel %vm1558, %v1866, %v1870
        %v1873 = vshrl.u32 %v1758, 16
        %v1875 = vshll.u32 %v1758, 16
        %v1877 = vrot.slane %v1875, 1
        %v1878 = vor.u32 %v1873, %v1877
        %v1880 = vshll.u32 %v1798, 16
        %v1882 = vrot.slane %v1880, 1
        %v1883 = vsel %vm1558, %v1878, %v1882
        %v1885 = vshrl.u32 %v1759, 16
        %v1887 = vshll.u32 %v1759, 16
        %v1889 = vrot.slane %v1887, 1
        %v1890 = vor.u32 %v1885, %v1889
        %v1892 = vshll.u32 %v1799, 16
        %v1894 = vrot.slane %v1892, 1
        %v1895 = vsel %vm1558, %v1890, %v1894
        %v1904 = vunpack.c.l.b16 %v1450
        %v1905 = vunpack.c.l.b16 %v1451
        %v1906 = vunpack.c.l.b16 %v1452
        %v1907 = vunpack.c.l.b16 %v1453
        %v1908 = vunpack.c.l.b16 %v1454
        %v1909 = vunpack.c.l.b16 %v1455
        %v1910 = vunpack.c.l.b16 %v1456
        %v1911 = vunpack.c.l.b16 %v1457
        %v1912 = vpack.c.b16 %v1737, %v1904
        %v1913 = vpack.c.b16 %v1739, %v1905
        %v1914 = vpack.c.b16 %v1741, %v1906
        %v1915 = vpack.c.b16 %v1743, %v1907
        %v1916 = vpack.c.b16 %v1745, %v1908
        %v1917 = vpack.c.b16 %v1747, %v1909
        %v1918 = vpack.c.b16 %v1749, %v1910
        %v1919 = vpack.c.b16 %v1751, %v1911
        %v1920 = vrot.slane %v1912, 1
        %v1921 = vrot.slane %v1792, 1
        %v1922 = vsel %vm1695, %v1920, %v1921
        %v1923 = vrot.slane %v1913, 1
        %v1924 = vrot.slane %v1793, 1
        %v1925 = vsel %vm1695, %v1923, %v1924
        %v1926 = vrot.slane %v1914, 1
        %v1927 = vrot.slane %v1794, 1
        %v1928 = vsel %vm1695, %v1926, %v1927
        %v1929 = vrot.slane %v1915, 1
        %v1930 = vrot.slane %v1795, 1
        %v1931 = vsel %vm1695, %v1929, %v1930
        %v1932 = vrot.slane %v1916, 1
        %v1933 = vrot.slane %v1796, 1
        %v1934 = vsel %vm1695, %v1932, %v1933
        %v1935 = vrot.slane %v1917, 1
        %v1936 = vrot.slane %v1797, 1
        %v1937 = vsel %vm1695, %v1935, %v1936
        %v1938 = vrot.slane %v1918, 1
        %v1939 = vrot.slane %v1798, 1
        %v1940 = vsel %vm1695, %v1938, %v1939
        %v1941 = vrot.slane %v1919, 1
        %v1942 = vrot.slane %v1799, 1
        %v1943 = vsel %vm1695, %v1941, %v1942
        %1944 = vrot.lane.b32.xlu0 %v1922, 64
        %v1945 = vpop.permute.xlu0 %1944
        %1946 = vrot.lane.b32.xlu0 %v1925, 64
        %v1947 = vpop.permute.xlu0 %1946
        %1948 = vrot.lane.b32.xlu0 %v1928, 64
        %v1949 = vpop.permute.xlu0 %1948
        %1950 = vrot.lane.b32.xlu0 %v1931, 64
        %v1951 = vpop.permute.xlu0 %1950
        %1952 = vrot.lane.b32.xlu0 %v1934, 64
        %v1953 = vpop.permute.xlu0 %1952
        %1954 = vrot.lane.b32.xlu0 %v1937, 64
        %v1955 = vpop.permute.xlu0 %1954
        %1956 = vrot.lane.b32.xlu0 %v1940, 64
        %v1957 = vpop.permute.xlu0 %1956
        %1958 = vrot.lane.b32.xlu0 %v1943, 64
        %v1959 = vpop.permute.xlu0 %1958
        %v1976 = vunpack.c.l.b16 %v1462
        %v1977 = vunpack.c.l.b16 %v1463
        %v1978 = vunpack.c.l.b16 %v1464
        %v1979 = vunpack.c.l.b16 %v1465
        %v1980 = vunpack.c.l.b16 %v1466
        %v1981 = vunpack.c.l.b16 %v1467
        %v1982 = vunpack.c.l.b16 %v1468
        %v1983 = vunpack.c.l.b16 %v1469
        %v1984 = vunpack.c.l.b16 %v1470
        %v1985 = vunpack.c.l.b16 %v1471
        %v1986 = vunpack.c.l.b16 %v1472
        %v1987 = vunpack.c.l.b16 %v1473
        %v1988 = vunpack.c.l.b16 %v1474
        %v1989 = vunpack.c.l.b16 %v1475
        %v1990 = vunpack.c.l.b16 %v1476
        %v1991 = vunpack.c.l.b16 %v1477
        %v1992 = vpack.c.b16 %v1977, %v1976
        %v1993 = vpack.c.b16 %v1979, %v1978
        %v1994 = vpack.c.b16 %v1981, %v1980
        %v1995 = vpack.c.b16 %v1983, %v1982
        %v1996 = vpack.c.b16 %v1985, %v1984
        %v1997 = vpack.c.b16 %v1987, %v1986
        %v1998 = vpack.c.b16 %v1989, %v1988
        %v1999 = vpack.c.b16 %v1991, %v1990
        %v2008 = vunpack.c.l.b16 %v1478
        %v2009 = vunpack.c.l.b16 %v1479
        %v2010 = vunpack.c.l.b16 %v1480
        %v2011 = vunpack.c.l.b16 %v1481
        %v2012 = vunpack.c.l.b16 %v1482
        %v2013 = vunpack.c.l.b16 %v1483
        %v2014 = vunpack.c.l.b16 %v1484
        %v2015 = vunpack.c.l.b16 %v1485
        %v2016 = vpack.c.b16 %v2008, %v2008
        %v2017 = vpack.c.b16 %v2009, %v2009
        %v2018 = vpack.c.b16 %v2010, %v2010
        %v2019 = vpack.c.b16 %v2011, %v2011
        %v2020 = vpack.c.b16 %v2012, %v2012
        %v2021 = vpack.c.b16 %v2013, %v2013
        %v2022 = vpack.c.b16 %v2014, %v2014
        %v2023 = vpack.c.b16 %v2015, %v2015
        %v2025 = vshrl.u32 %v1992, 16
        %v2027 = vshll.u32 %v1992, 16
        %v2029 = vrot.slane %v2027, 1
        %v2030 = vor.u32 %v2025, %v2029
        %v2032 = vshll.u32 %v2016, 16
        %v2034 = vrot.slane %v2032, 1
        %v2035 = vsel %vm1558, %v2030, %v2034
        %v2037 = vshrl.u32 %v1993, 16
        %v2039 = vshll.u32 %v1993, 16
        %v2041 = vrot.slane %v2039, 1
        %v2042 = vor.u32 %v2037, %v2041
        %v2044 = vshll.u32 %v2017, 16
        %v2046 = vrot.slane %v2044, 1
        %v2047 = vsel %vm1558, %v2042, %v2046
        %v2049 = vshrl.u32 %v1994, 16
        %v2051 = vshll.u32 %v1994, 16
        %v2053 = vrot.slane %v2051, 1
        %v2054 = vor.u32 %v2049, %v2053
        %v2056 = vshll.u32 %v2018, 16
        %v2058 = vrot.slane %v2056, 1
        %v2059 = vsel %vm1558, %v2054, %v2058
        %v2061 = vshrl.u32 %v1995, 16
        %v2063 = vshll.u32 %v1995, 16
        %v2065 = vrot.slane %v2063, 1
        %v2066 = vor.u32 %v2061, %v2065
        %v2068 = vshll.u32 %v2019, 16
        %v2070 = vrot.slane %v2068, 1
        %v2071 = vsel %vm1558, %v2066, %v2070
        %v2073 = vshrl.u32 %v1996, 16
        %v2075 = vshll.u32 %v1996, 16
        %v2077 = vrot.slane %v2075, 1
        %v2078 = vor.u32 %v2073, %v2077
        %v2080 = vshll.u32 %v2020, 16
        %v2082 = vrot.slane %v2080, 1
        %v2083 = vsel %vm1558, %v2078, %v2082
        %v2085 = vshrl.u32 %v1997, 16
        %v2087 = vshll.u32 %v1997, 16
        %v2089 = vrot.slane %v2087, 1
        %v2090 = vor.u32 %v2085, %v2089
        %v2092 = vshll.u32 %v2021, 16
        %v2094 = vrot.slane %v2092, 1
        %v2095 = vsel %vm1558, %v2090, %v2094
        %v2097 = vshrl.u32 %v1998, 16
        %v2099 = vshll.u32 %v1998, 16
        %v2101 = vrot.slane %v2099, 1
        %v2102 = vor.u32 %v2097, %v2101
        %v2104 = vshll.u32 %v2022, 16
        %v2106 = vrot.slane %v2104, 1
        %v2107 = vsel %vm1558, %v2102, %v2106
        %v2109 = vshrl.u32 %v1999, 16
        %v2111 = vshll.u32 %v1999, 16
        %v2113 = vrot.slane %v2111, 1
        %v2114 = vor.u32 %v2109, %v2113
        %v2116 = vshll.u32 %v2023, 16
        %v2118 = vrot.slane %v2116, 1
        %v2119 = vsel %vm1558, %v2114, %v2118
        %2120 = vrot.lane.b32.xlu0 %v2035, 64
        %v2121 = vpop.permute.xlu0 %2120
        %2122 = vrot.lane.b32.xlu0 %v2047, 64
        %v2123 = vpop.permute.xlu0 %2122
        %2124 = vrot.lane.b32.xlu0 %v2059, 64
        %v2125 = vpop.permute.xlu0 %2124
        %2126 = vrot.lane.b32.xlu0 %v2071, 64
        %v2127 = vpop.permute.xlu0 %2126
        %2128 = vrot.lane.b32.xlu0 %v2083, 64
        %v2129 = vpop.permute.xlu0 %2128
        %2130 = vrot.lane.b32.xlu0 %v2095, 64
        %v2131 = vpop.permute.xlu0 %2130
        %2132 = vrot.lane.b32.xlu0 %v2107, 64
        %v2133 = vpop.permute.xlu0 %2132
        %2134 = vrot.lane.b32.xlu0 %v2119, 64
        %v2135 = vpop.permute.xlu0 %2134
        %v2144 = vunpack.c.l.b16 %v1486
        %v2145 = vunpack.c.l.b16 %v1487
        %v2146 = vunpack.c.l.b16 %v1488
        %v2147 = vunpack.c.l.b16 %v1489
        %v2148 = vunpack.c.l.b16 %v1490
        %v2149 = vunpack.c.l.b16 %v1491
        %v2150 = vunpack.c.l.b16 %v1492
        %v2151 = vunpack.c.l.b16 %v1493
        %v2152 = vpack.c.b16 %v1977, %v2144
        %v2153 = vpack.c.b16 %v1979, %v2145
        %v2154 = vpack.c.b16 %v1981, %v2146
        %v2155 = vpack.c.b16 %v1983, %v2147
        %v2156 = vpack.c.b16 %v1985, %v2148
        %v2157 = vpack.c.b16 %v1987, %v2149
        %v2158 = vpack.c.b16 %v1989, %v2150
        %v2159 = vpack.c.b16 %v1991, %v2151
        %v2160 = vrot.slane %v2152, 1
        %v2161 = vrot.slane %v2016, 1
        %v2162 = vsel %vm1695, %v2160, %v2161
        %v2163 = vrot.slane %v2153, 1
        %v2164 = vrot.slane %v2017, 1
        %v2165 = vsel %vm1695, %v2163, %v2164
        %v2166 = vrot.slane %v2154, 1
        %v2167 = vrot.slane %v2018, 1
        %v2168 = vsel %vm1695, %v2166, %v2167
        %v2169 = vrot.slane %v2155, 1
        %v2170 = vrot.slane %v2019, 1
        %v2171 = vsel %vm1695, %v2169, %v2170
        %v2172 = vrot.slane %v2156, 1
        %v2173 = vrot.slane %v2020, 1
        %v2174 = vsel %vm1695, %v2172, %v2173
        %v2175 = vrot.slane %v2157, 1
        %v2176 = vrot.slane %v2021, 1
        %v2177 = vsel %vm1695, %v2175, %v2176
        %v2178 = vrot.slane %v2158, 1
        %v2179 = vrot.slane %v2022, 1
        %v2180 = vsel %vm1695, %v2178, %v2179
        %v2181 = vrot.slane %v2159, 1
        %v2182 = vrot.slane %v2023, 1
        %v2183 = vsel %vm1695, %v2181, %v2182
        %vm2184 = vcmask 523264
        %v2186 = vsel %vm2184, %v1526, %v1656
        %v2189 = vsel %vm2184, %v1527, %v1658
        %v2192 = vsel %vm2184, %v1528, %v1660
        %v2195 = vsel %vm2184, %v1529, %v1662
        %v2198 = vsel %vm2184, %v1530, %v1664
        %v2201 = vsel %vm2184, %v1531, %v1666
        %v2204 = vsel %vm2184, %v1532, %v1668
        %v2207 = vsel %vm2184, %v1533, %v1670
        %v2211 = vsel %vm2184, %v1698, %v1761
        %v2215 = vsel %vm2184, %v1701, %v1763
        %v2219 = vsel %vm2184, %v1704, %v1765
        %v2223 = vsel %vm2184, %v1707, %v1767
        %v2227 = vsel %vm2184, %v1710, %v1769
        %v2231 = vsel %vm2184, %v1713, %v1771
        %v2235 = vsel %vm2184, %v1716, %v1773
        %v2239 = vsel %vm2184, %v1719, %v1775
        %v2243 = vsel %vm2184, %v1811, %v1945
        %v2247 = vsel %vm2184, %v1823, %v1947
        %v2251 = vsel %vm2184, %v1835, %v1949
        %v2255 = vsel %vm2184, %v1847, %v1951
        %v2259 = vsel %vm2184, %v1859, %v1953
        %v2263 = vsel %vm2184, %v1871, %v1955
        %v2267 = vsel %vm2184, %v1883, %v1957
        %v2271 = vsel %vm2184, %v1895, %v1959
        %v2274 = vsel %vm2184, %v1992, %v2121
        %v2277 = vsel %vm2184, %v1993, %v2123
        %v2280 = vsel %vm2184, %v1994, %v2125
        %v2283 = vsel %vm2184, %v1995, %v2127
        %v2286 = vsel %vm2184, %v1996, %v2129
        %v2289 = vsel %vm2184, %v1997, %v2131
        %v2292 = vsel %vm2184, %v1998, %v2133
        %v2295 = vsel %vm2184, %v1999, %v2135
        %v2297 = vld [vmem:[%s7] sm:$0xf]
        %v2298 = vld [vmem:[%s7 + $0x4] sm:$0xf]
        %v2299 = vld [vmem:[%s7 + $0x8] sm:$0xf]
        %v2300 = vld [vmem:[%s7 + $0xc] sm:$0xf]
        %v2301 = vld [vmem:[%s7 + $0x10] sm:$0xf]
        %v2302 = vld [vmem:[%s7 + $0x14] sm:$0xf]
        %v2303 = vld [vmem:[%s7 + $0x18] sm:$0xf]
        %v2304 = vld [vmem:[%s7 + $0x1c] sm:$0xf]
        %v2305 = vld [vmem:[%s7 + $0x20] sm:$0xf]
        %v2306 = vld [vmem:[%s7 + $0x24] sm:$0xf]
        %v2307 = vld [vmem:[%s7 + $0x28] sm:$0xf]
        %v2308 = vld [vmem:[%s7 + $0x2c] sm:$0xf]
        %v2309 = vld [vmem:[%s7 + $0x30] sm:$0xf]
        %v2310 = vld [vmem:[%s7 + $0x34] sm:$0xf]
        %v2311 = vld [vmem:[%s7 + $0x38] sm:$0xf]
        %v2312 = vld [vmem:[%s7 + $0x3c] sm:$0xf]
        %v2313 = vld [vmem:[%s7 + $0x40] sm:$0xf]
        %v2314 = vld [vmem:[%s7 + $0x44] sm:$0xf]
        %v2315 = vld [vmem:[%s7 + $0x48] sm:$0xf]
        %v2316 = vld [vmem:[%s7 + $0x4c] sm:$0xf]
        %v2317 = vld [vmem:[%s7 + $0x50] sm:$0xf]
        %v2318 = vld [vmem:[%s7 + $0x54] sm:$0xf]
        %v2319 = vld [vmem:[%s7 + $0x58] sm:$0xf]
        %v2320 = vld [vmem:[%s7 + $0x5c] sm:$0xf]
        %v2321 = vld [vmem:[%s7 + $0x60] sm:$0xf]
        %v2322 = vld [vmem:[%s7 + $0x64] sm:$0xf]
        %v2323 = vld [vmem:[%s7 + $0x68] sm:$0xf]
        %v2324 = vld [vmem:[%s7 + $0x6c] sm:$0xf]
        %v2325 = vld [vmem:[%s7 + $0x70] sm:$0xf]
        %v2326 = vld [vmem:[%s7 + $0x74] sm:$0xf]
        %v2327 = vld [vmem:[%s7 + $0x78] sm:$0xf]
        %v2328 = vld [vmem:[%s7 + $0x7c] sm:$0xf]
        %v2329 = vld [vmem:[%s7 + $0x80] sm:$0xf]
        %v2330 = vld [vmem:[%s7 + $0x84] sm:$0xf]
        %v2331 = vld [vmem:[%s7 + $0x88] sm:$0xf]
        %v2332 = vld [vmem:[%s7 + $0x8c] sm:$0xf]
        %v2333 = vld [vmem:[%s7 + $0x90] sm:$0xf]
        %v2334 = vld [vmem:[%s7 + $0x94] sm:$0xf]
        %v2335 = vld [vmem:[%s7 + $0x98] sm:$0xf]
        %v2336 = vld [vmem:[%s7 + $0x9c] sm:$0xf]
        %v2337 = vld [vmem:[%s7 + $0xa0] sm:$0xf]
        %v2338 = vld [vmem:[%s7 + $0xa4] sm:$0xf]
        %v2339 = vld [vmem:[%s7 + $0xa8] sm:$0xf]
        %v2340 = vld [vmem:[%s7 + $0xac] sm:$0xf]
        %v2341 = vld [vmem:[%s7 + $0xb0] sm:$0xf]
        %v2342 = vld [vmem:[%s7 + $0xb4] sm:$0xf]
        %v2343 = vld [vmem:[%s7 + $0xb8] sm:$0xf]
        %v2344 = vld [vmem:[%s7 + $0xbc] sm:$0xf]
        %v2345 = vld [vmem:[%s7 + $0xc0] sm:$0xf]
        %v2346 = vld [vmem:[%s7 + $0xc4] sm:$0xf]
        %v2347 = vld [vmem:[%s7 + $0xc8] sm:$0xf]
        %v2348 = vld [vmem:[%s7 + $0xcc] sm:$0xf]
        %v2349 = vld [vmem:[%s7 + $0xd0] sm:$0xf]
        %v2350 = vld [vmem:[%s7 + $0xd4] sm:$0xf]
        %v2351 = vld [vmem:[%s7 + $0xd8] sm:$0xf]
        %v2352 = vld [vmem:[%s7 + $0xdc] sm:$0xf]
        %v2353 = vld [vmem:[%s7 + $0xe0] sm:$0xf]
        %v2354 = vld [vmem:[%s7 + $0xe4] sm:$0xf]
        %v2355 = vld [vmem:[%s7 + $0xe8] sm:$0xf]
        %v2356 = vld [vmem:[%s7 + $0xec] sm:$0xf]
        %v2357 = vld [vmem:[%s7 + $0xf0] sm:$0xf]
        %v2358 = vld [vmem:[%s7 + $0xf4] sm:$0xf]
        %v2359 = vld [vmem:[%s7 + $0xf8] sm:$0xf]
        %v2360 = vld [vmem:[%s7 + $0xfc] sm:$0xf]
        %v2361 = vld [vmem:[%s7 + $0x100] sm:$0xf]
        %v2362 = vld [vmem:[%s7 + $0x104] sm:$0xf]
        %v2363 = vld [vmem:[%s7 + $0x108] sm:$0xf]
        %v2364 = vld [vmem:[%s7 + $0x10c] sm:$0xf]
        %v2365 = vld [vmem:[%s7 + $0x110] sm:$0xf]
        %v2366 = vld [vmem:[%s7 + $0x114] sm:$0xf]
        %v2367 = vld [vmem:[%s7 + $0x118] sm:$0xf]
        %v2368 = vld [vmem:[%s7 + $0x11c] sm:$0xf]
        %v2369 = vld [vmem:[%s8] sm:$0x1]
        %v2371 = vperm.slane %v2369, 0
        %v2445 = vunpack.c.l.b16 %v2297
        %v2446 = vunpack.c.l.b16 %v2298
        %v2447 = vunpack.c.l.b16 %v2299
        %v2448 = vunpack.c.l.b16 %v2300
        %v2449 = vunpack.c.l.b16 %v2301
        %v2450 = vunpack.c.l.b16 %v2302
        %v2451 = vunpack.c.l.b16 %v2303
        %v2452 = vunpack.c.l.b16 %v2304
        %v2453 = vunpack.c.l.b16 %v2305
        %v2454 = vunpack.c.l.b16 %v2306
        %v2455 = vunpack.c.l.b16 %v2307
        %v2456 = vunpack.c.l.b16 %v2308
        %v2457 = vunpack.c.l.b16 %v2309
        %v2458 = vunpack.c.l.b16 %v2310
        %v2459 = vunpack.c.l.b16 %v2311
        %v2460 = vunpack.c.l.b16 %v2312
        %v2461 = vunpack.c.l.b16 %v2313
        %v2462 = vunpack.c.l.b16 %v2314
        %v2463 = vunpack.c.l.b16 %v2315
        %v2464 = vunpack.c.l.b16 %v2316
        %v2465 = vunpack.c.l.b16 %v2317
        %v2466 = vunpack.c.l.b16 %v2318
        %v2467 = vunpack.c.l.b16 %v2319
        %v2468 = vunpack.c.l.b16 %v2320
        %v2469 = vunpack.c.l.b16 %v2321
        %v2470 = vunpack.c.l.b16 %v2322
        %v2471 = vunpack.c.l.b16 %v2323
        %v2472 = vunpack.c.l.b16 %v2324
        %v2473 = vunpack.c.l.b16 %v2325
        %v2474 = vunpack.c.l.b16 %v2326
        %v2475 = vunpack.c.l.b16 %v2327
        %v2476 = vunpack.c.l.b16 %v2328
        %v2477 = vunpack.c.l.b16 %v2329
        %v2478 = vunpack.c.l.b16 %v2330
        %v2479 = vunpack.c.l.b16 %v2331
        %v2480 = vunpack.c.l.b16 %v2332
        %v2481 = vunpack.c.l.b16 %v2333
        %v2482 = vunpack.c.l.b16 %v2334
        %v2483 = vunpack.c.l.b16 %v2335
        %v2484 = vunpack.c.l.b16 %v2336
        %v2485 = vunpack.c.l.b16 %v2337
        %v2486 = vunpack.c.l.b16 %v2338
        %v2487 = vunpack.c.l.b16 %v2339
        %v2488 = vunpack.c.l.b16 %v2340
        %v2489 = vunpack.c.l.b16 %v2341
        %v2490 = vunpack.c.l.b16 %v2342
        %v2491 = vunpack.c.l.b16 %v2343
        %v2492 = vunpack.c.l.b16 %v2344
        %v2493 = vunpack.c.l.b16 %v2345
        %v2494 = vunpack.c.l.b16 %v2346
        %v2495 = vunpack.c.l.b16 %v2347
        %v2496 = vunpack.c.l.b16 %v2348
        %v2497 = vunpack.c.l.b16 %v2349
        %v2498 = vunpack.c.l.b16 %v2350
        %v2499 = vunpack.c.l.b16 %v2351
        %v2500 = vunpack.c.l.b16 %v2352
        %v2501 = vunpack.c.l.b16 %v2353
        %v2502 = vunpack.c.l.b16 %v2354
        %v2503 = vunpack.c.l.b16 %v2355
        %v2504 = vunpack.c.l.b16 %v2356
        %v2505 = vunpack.c.l.b16 %v2357
        %v2506 = vunpack.c.l.b16 %v2358
        %v2507 = vunpack.c.l.b16 %v2359
        %v2508 = vunpack.c.l.b16 %v2360
        %v2509 = vunpack.c.l.b16 %v2361
        %v2510 = vunpack.c.l.b16 %v2362
        %v2511 = vunpack.c.l.b16 %v2363
        %v2512 = vunpack.c.l.b16 %v2364
        %v2513 = vunpack.c.l.b16 %v2365
        %v2514 = vunpack.c.l.b16 %v2366
        %v2515 = vunpack.c.l.b16 %v2367
        %v2516 = vunpack.c.l.b16 %v2368
        %v2517 = vpack.c.b16 %v2446, %v2445
        %v2518 = vpack.c.b16 %v2448, %v2447
        %v2519 = vpack.c.b16 %v2450, %v2449
        %v2520 = vpack.c.b16 %v2452, %v2451
        %v2521 = vpack.c.b16 %v2454, %v2453
        %v2522 = vpack.c.b16 %v2456, %v2455
        %v2523 = vpack.c.b16 %v2458, %v2457
        %v2524 = vpack.c.b16 %v2460, %v2459
        %v2525 = vpack.c.b16 %v2462, %v2461
        %v2526 = vpack.c.b16 %v2464, %v2463
        %v2527 = vpack.c.b16 %v2466, %v2465
        %v2528 = vpack.c.b16 %v2468, %v2467
        %v2529 = vpack.c.b16 %v2470, %v2469
        %v2530 = vpack.c.b16 %v2472, %v2471
        %v2531 = vpack.c.b16 %v2474, %v2473
        %v2532 = vpack.c.b16 %v2476, %v2475
        %v2533 = vpack.c.b16 %v2478, %v2477
        %v2534 = vpack.c.b16 %v2480, %v2479
        %v2535 = vpack.c.b16 %v2482, %v2481
        %v2536 = vpack.c.b16 %v2484, %v2483
        %v2537 = vpack.c.b16 %v2486, %v2485
        %v2538 = vpack.c.b16 %v2488, %v2487
        %v2539 = vpack.c.b16 %v2490, %v2489
        %v2540 = vpack.c.b16 %v2492, %v2491
        %v2541 = vpack.c.b16 %v2494, %v2493
        %v2542 = vpack.c.b16 %v2496, %v2495
        %v2543 = vpack.c.b16 %v2498, %v2497
        %v2544 = vpack.c.b16 %v2500, %v2499
        %v2545 = vpack.c.b16 %v2502, %v2501
        %v2546 = vpack.c.b16 %v2504, %v2503
        %v2547 = vpack.c.b16 %v2506, %v2505
        %v2548 = vpack.c.b16 %v2508, %v2507
        %v2549 = vpack.c.b16 %v2510, %v2509
        %v2550 = vpack.c.b16 %v2512, %v2511
        %v2551 = vpack.c.b16 %v2514, %v2513
        %v2552 = vpack.c.b16 %v2516, %v2515
        %v2590 = vsel %vm2184, %v2162, 0
        %v2593 = vsel %vm2184, %v2165, 0
        %v2596 = vsel %vm2184, %v2168, 0
        %v2599 = vsel %vm2184, %v2171, 0
        %v2602 = vsel %vm2184, %v2174, 0
        %v2605 = vsel %vm2184, %v2177, 0
        %v2608 = vsel %vm2184, %v2180, 0
        %v2611 = vsel %vm2184, %v2183, 0
        %2613 = vmatpush.bf16.msra.mxu0 %v2524
        %2614 = vmatpush.bf16.msra.mxu0 %v2523
        %2615 = vmatpush.bf16.msra.mxu0 %v2522
        %2616 = vmatpush.bf16.msra.mxu0 %v2521
        %2617 = vmatpush.bf16.msra.mxu0 %v2520
        %2618 = vmatpush.bf16.msra.mxu0 %v2519
        %2619 = vmatpush.bf16.msra.mxu0 %v2518
        %2620 = vmatpush.bf16.msra.mxu0 %v2517
        %2621 = vmatmul.bf16.gmra.mxu0 %v2186
        %v2622 = vpop.f32.mrf.mxu0
        %v2623 = vadd.f32 %v2371, %v2622
        %v2624 = vpop.f32.mrf.mxu0
        %v2625 = vadd.f32 %v2371, %v2624
        %2626 = vmatmul.bf16.gmra.mxu0 %v2189
        %v2627 = vpop.f32.mrf.mxu0
        %v2628 = vadd.f32 %v2371, %v2627
        %v2629 = vpop.f32.mrf.mxu0
        %v2630 = vadd.f32 %v2371, %v2629
        %2631 = vmatmul.bf16.gmra.mxu0 %v2192
        %v2632 = vpop.f32.mrf.mxu0
        %v2633 = vadd.f32 %v2371, %v2632
        %v2634 = vpop.f32.mrf.mxu0
        %v2635 = vadd.f32 %v2371, %v2634
        %2636 = vmatmul.bf16.gmra.mxu0 %v2195
        %v2637 = vpop.f32.mrf.mxu0
        %v2638 = vadd.f32 %v2371, %v2637
        %v2639 = vpop.f32.mrf.mxu0
        %v2640 = vadd.f32 %v2371, %v2639
        %2641 = vmatmul.bf16.gmra.mxu0 %v2198
        %v2642 = vpop.f32.mrf.mxu0
        %v2643 = vadd.f32 %v2371, %v2642
        %v2644 = vpop.f32.mrf.mxu0
        %v2645 = vadd.f32 %v2371, %v2644
        %2646 = vmatmul.bf16.gmra.mxu0 %v2201
        %v2647 = vpop.f32.mrf.mxu0
        %v2648 = vadd.f32 %v2371, %v2647
        %v2649 = vpop.f32.mrf.mxu0
        %v2650 = vadd.f32 %v2371, %v2649
        %2651 = vmatmul.bf16.gmra.mxu0 %v2204
        %v2652 = vpop.f32.mrf.mxu0
        %v2653 = vadd.f32 %v2371, %v2652
        %v2654 = vpop.f32.mrf.mxu0
        %v2655 = vadd.f32 %v2371, %v2654
        %2656 = vmatmul.bf16.gmra.mxu0 %v2207
        %v2657 = vpop.f32.mrf.mxu0
        %v2658 = vadd.f32 %v2371, %v2657
        %v2659 = vpop.f32.mrf.mxu0
        %v2660 = vadd.f32 %v2371, %v2659
        %2661 = vdwg.mxu0
        %2662 = vmatpush.bf16.msra.mxu0 %v2532
        %2663 = vmatpush.bf16.msra.mxu0 %v2531
        %2664 = vmatpush.bf16.msra.mxu0 %v2530
        %2665 = vmatpush.bf16.msra.mxu0 %v2529
        %2666 = vmatpush.bf16.msra.mxu0 %v2528
        %2667 = vmatpush.bf16.msra.mxu0 %v2527
        %2668 = vmatpush.bf16.msra.mxu0 %v2526
        %2669 = vmatpush.bf16.msra.mxu0 %v2525
        %2670 = vmatmul.bf16.gmra.mxu0 %v2211
        %v2671 = vpop.f32.mrf.mxu0
        %v2672 = vadd.f32 %v2623, %v2671
        %v2673 = vpop.f32.mrf.mxu0
        %v2674 = vadd.f32 %v2625, %v2673
        %2675 = vmatmul.bf16.gmra.mxu0 %v2215
        %v2676 = vpop.f32.mrf.mxu0
        %v2677 = vadd.f32 %v2628, %v2676
        %v2678 = vpop.f32.mrf.mxu0
        %v2679 = vadd.f32 %v2630, %v2678
        %2680 = vmatmul.bf16.gmra.mxu0 %v2219
        %v2681 = vpop.f32.mrf.mxu0
        %v2682 = vadd.f32 %v2633, %v2681
        %v2683 = vpop.f32.mrf.mxu0
        %v2684 = vadd.f32 %v2635, %v2683
        %2685 = vmatmul.bf16.gmra.mxu0 %v2223
        %v2686 = vpop.f32.mrf.mxu0
        %v2687 = vadd.f32 %v2638, %v2686
        %v2688 = vpop.f32.mrf.mxu0
        %v2689 = vadd.f32 %v2640, %v2688
        %2690 = vmatmul.bf16.gmra.mxu0 %v2227
        %v2691 = vpop.f32.mrf.mxu0
        %v2692 = vadd.f32 %v2643, %v2691
        %v2693 = vpop.f32.mrf.mxu0
        %v2694 = vadd.f32 %v2645, %v2693
        %2695 = vmatmul.bf16.gmra.mxu0 %v2231
        %v2696 = vpop.f32.mrf.mxu0
        %v2697 = vadd.f32 %v2648, %v2696
        %v2698 = vpop.f32.mrf.mxu0
        %v2699 = vadd.f32 %v2650, %v2698
        %2700 = vmatmul.bf16.gmra.mxu0 %v2235
        %v2701 = vpop.f32.mrf.mxu0
        %v2702 = vadd.f32 %v2653, %v2701
        %v2703 = vpop.f32.mrf.mxu0
        %v2704 = vadd.f32 %v2655, %v2703
        %2705 = vmatmul.bf16.gmra.mxu0 %v2239
        %v2706 = vpop.f32.mrf.mxu0
        %v2707 = vadd.f32 %v2658, %v2706
        %v2708 = vpop.f32.mrf.mxu0
        %v2709 = vadd.f32 %v2660, %v2708
        %2710 = vdwg.mxu0
        %2711 = vmatpush.bf16.msra.mxu0 %v2540
        %2712 = vmatpush.bf16.msra.mxu0 %v2539
        %2713 = vmatpush.bf16.msra.mxu0 %v2538
        %2714 = vmatpush.bf16.msra.mxu0 %v2537
        %2715 = vmatpush.bf16.msra.mxu0 %v2536
        %2716 = vmatpush.bf16.msra.mxu0 %v2535
        %2717 = vmatpush.bf16.msra.mxu0 %v2534
        %2718 = vmatpush.bf16.msra.mxu0 %v2533
        %2719 = vmatmul.bf16.gmra.mxu0 %v2243
        %v2720 = vpop.f32.mrf.mxu0
        %v2721 = vadd.f32 %v2672, %v2720
        %v2722 = vpop.f32.mrf.mxu0
        %v2723 = vadd.f32 %v2674, %v2722
        %2724 = vmatmul.bf16.gmra.mxu0 %v2247
        %v2725 = vpop.f32.mrf.mxu0
        %v2726 = vadd.f32 %v2677, %v2725
        %v2727 = vpop.f32.mrf.mxu0
        %v2728 = vadd.f32 %v2679, %v2727
        %2729 = vmatmul.bf16.gmra.mxu0 %v2251
        %v2730 = vpop.f32.mrf.mxu0
        %v2731 = vadd.f32 %v2682, %v2730
        %v2732 = vpop.f32.mrf.mxu0
        %v2733 = vadd.f32 %v2684, %v2732
        %2734 = vmatmul.bf16.gmra.mxu0 %v2255
        %v2735 = vpop.f32.mrf.mxu0
        %v2736 = vadd.f32 %v2687, %v2735
        %v2737 = vpop.f32.mrf.mxu0
        %v2738 = vadd.f32 %v2689, %v2737
        %2739 = vmatmul.bf16.gmra.mxu0 %v2259
        %v2740 = vpop.f32.mrf.mxu0
        %v2741 = vadd.f32 %v2692, %v2740
        %v2742 = vpop.f32.mrf.mxu0
        %v2743 = vadd.f32 %v2694, %v2742
        %2744 = vmatmul.bf16.gmra.mxu0 %v2263
        %v2745 = vpop.f32.mrf.mxu0
        %v2746 = vadd.f32 %v2697, %v2745
        %v2747 = vpop.f32.mrf.mxu0
        %v2748 = vadd.f32 %v2699, %v2747
        %2749 = vmatmul.bf16.gmra.mxu0 %v2267
        %v2750 = vpop.f32.mrf.mxu0
        %v2751 = vadd.f32 %v2702, %v2750
        %v2752 = vpop.f32.mrf.mxu0
        %v2753 = vadd.f32 %v2704, %v2752
        %2754 = vmatmul.bf16.gmra.mxu0 %v2271
        %v2755 = vpop.f32.mrf.mxu0
        %v2756 = vadd.f32 %v2707, %v2755
        %v2757 = vpop.f32.mrf.mxu0
        %v2758 = vadd.f32 %v2709, %v2757
        %2759 = vdwg.mxu0
        %2760 = vmatpush.bf16.msra.mxu0 %v2548
        %2761 = vmatpush.bf16.msra.mxu0 %v2547
        %2762 = vmatpush.bf16.msra.mxu0 %v2546
        %2763 = vmatpush.bf16.msra.mxu0 %v2545
        %2764 = vmatpush.bf16.msra.mxu0 %v2544
        %2765 = vmatpush.bf16.msra.mxu0 %v2543
        %2766 = vmatpush.bf16.msra.mxu0 %v2542
        %2767 = vmatpush.bf16.msra.mxu0 %v2541
        %2768 = vmatmul.bf16.gmra.mxu0 %v2274
        %v2769 = vpop.f32.mrf.mxu0
        %v2770 = vadd.f32 %v2721, %v2769
        %v2771 = vpop.f32.mrf.mxu0
        %v2772 = vadd.f32 %v2723, %v2771
        %2773 = vmatmul.bf16.gmra.mxu0 %v2277
        %v2774 = vpop.f32.mrf.mxu0
        %v2775 = vadd.f32 %v2726, %v2774
        %v2776 = vpop.f32.mrf.mxu0
        %v2777 = vadd.f32 %v2728, %v2776
        %2778 = vmatmul.bf16.gmra.mxu0 %v2280
        %v2779 = vpop.f32.mrf.mxu0
        %v2780 = vadd.f32 %v2731, %v2779
        %v2781 = vpop.f32.mrf.mxu0
        %v2782 = vadd.f32 %v2733, %v2781
        %2783 = vmatmul.bf16.gmra.mxu0 %v2283
        %v2784 = vpop.f32.mrf.mxu0
        %v2785 = vadd.f32 %v2736, %v2784
        %v2786 = vpop.f32.mrf.mxu0
        %v2787 = vadd.f32 %v2738, %v2786
        %2788 = vmatmul.bf16.gmra.mxu0 %v2286
        %v2789 = vpop.f32.mrf.mxu0
        %v2790 = vadd.f32 %v2741, %v2789
        %v2791 = vpop.f32.mrf.mxu0
        %v2792 = vadd.f32 %v2743, %v2791
        %2793 = vmatmul.bf16.gmra.mxu0 %v2289
        %v2794 = vpop.f32.mrf.mxu0
        %v2795 = vadd.f32 %v2746, %v2794
        %v2796 = vpop.f32.mrf.mxu0
        %v2797 = vadd.f32 %v2748, %v2796
        %2798 = vmatmul.bf16.gmra.mxu0 %v2292
        %v2799 = vpop.f32.mrf.mxu0
        %v2800 = vadd.f32 %v2751, %v2799
        %v2801 = vpop.f32.mrf.mxu0
        %v2802 = vadd.f32 %v2753, %v2801
        %2803 = vmatmul.bf16.gmra.mxu0 %v2295
        %v2804 = vpop.f32.mrf.mxu0
        %v2805 = vadd.f32 %v2756, %v2804
        %v2806 = vpop.f32.mrf.mxu0
        %v2807 = vadd.f32 %v2758, %v2806
        %2808 = vdwg.mxu0
        %2809 = vmatpush.bf16.msra.mxu0 0
        %2810 = vmatpush.bf16.msra.mxu0 0
        %2811 = vmatpush.bf16.msra.mxu0 0
        %2812 = vmatpush.bf16.msra.mxu0 0
        %2813 = vmatpush.bf16.msra.mxu0 %v2552
        %2814 = vmatpush.bf16.msra.mxu0 %v2551
        %2815 = vmatpush.bf16.msra.mxu0 %v2550
        %2816 = vmatpush.bf16.msra.mxu0 %v2549
        %2817 = vmatmul.bf16.gmra.mxu0 %v2590
        %v2818 = vpop.f32.mrf.mxu0
        %v2819 = vadd.f32 %v2770, %v2818
        %v2820 = vpop.f32.mrf.mxu0
        %v2821 = vadd.f32 %v2772, %v2820
        %2822 = vmatmul.bf16.gmra.mxu0 %v2593
        %v2823 = vpop.f32.mrf.mxu0
        %v2824 = vadd.f32 %v2775, %v2823
        %v2825 = vpop.f32.mrf.mxu0
        %v2826 = vadd.f32 %v2777, %v2825
        %2827 = vmatmul.bf16.gmra.mxu0 %v2596
        %v2828 = vpop.f32.mrf.mxu0
        %v2829 = vadd.f32 %v2780, %v2828
        %v2830 = vpop.f32.mrf.mxu0
        %v2831 = vadd.f32 %v2782, %v2830
        %2832 = vmatmul.bf16.gmra.mxu0 %v2599
        %v2833 = vpop.f32.mrf.mxu0
        %v2834 = vadd.f32 %v2785, %v2833
        %v2835 = vpop.f32.mrf.mxu0
        %v2836 = vadd.f32 %v2787, %v2835
        %2837 = vmatmul.bf16.gmra.mxu0 %v2602
        %v2838 = vpop.f32.mrf.mxu0
        %v2839 = vadd.f32 %v2790, %v2838
        %v2840 = vpop.f32.mrf.mxu0
        %v2841 = vadd.f32 %v2792, %v2840
        %2842 = vmatmul.bf16.gmra.mxu0 %v2605
        %v2843 = vpop.f32.mrf.mxu0
        %v2844 = vadd.f32 %v2795, %v2843
        %v2845 = vpop.f32.mrf.mxu0
        %v2846 = vadd.f32 %v2797, %v2845
        %2847 = vmatmul.bf16.gmra.mxu0 %v2608
        %v2848 = vpop.f32.mrf.mxu0
        %v2849 = vadd.f32 %v2800, %v2848
        %v2850 = vpop.f32.mrf.mxu0
        %v2851 = vadd.f32 %v2802, %v2850
        %2852 = vmatmul.bf16.gmra.mxu0 %v2611
        %v2853 = vpop.f32.mrf.mxu0
        %v2854 = vadd.f32 %v2805, %v2853
        %v2855 = vpop.f32.mrf.mxu0
        %v2856 = vadd.f32 %v2807, %v2855
        %2857 = vdwg.mxu0
        %v2858 = vmax.f32 %v2819, 0.0
        %v2859 = vmax.f32 %v2821, 0.0
        %v2860 = vmax.f32 %v2824, 0.0
        %v2861 = vmax.f32 %v2826, 0.0
        %v2862 = vmax.f32 %v2829, 0.0
        %v2863 = vmax.f32 %v2831, 0.0
        %v2864 = vmax.f32 %v2834, 0.0
        %v2865 = vmax.f32 %v2836, 0.0
        %v2866 = vmax.f32 %v2839, 0.0
        %v2867 = vmax.f32 %v2841, 0.0
        %v2868 = vmax.f32 %v2844, 0.0
        %v2869 = vmax.f32 %v2846, 0.0
        %v2870 = vmax.f32 %v2849, 0.0
        %v2871 = vmax.f32 %v2851, 0.0
        %v2872 = vmax.f32 %v2854, 0.0
        %v2873 = vmax.f32 %v2856, 0.0
        %s2874 = smul.addr %s442, 4
        %s2875 = scalar_lea.vmem %s438, %s2874
        %v2876 = vld [vmem:[%s2875] sm:$0xf]
        %v2877 = vld [vmem:[%s2875 + $0x4] sm:$0xf]
        %v2878 = vld [vmem:[%s2875 + $0xc] sm:$0xf]
        %v2879 = vld [vmem:[%s2875 + $0x10] sm:$0xf]
        %v2880 = vld [vmem:[%s2875 + $0x18] sm:$0xf]
        %v2881 = vld [vmem:[%s2875 + $0x1c] sm:$0xf]
        %v2882 = vld [vmem:[%s2875 + $0x24] sm:$0xf]
        %v2883 = vld [vmem:[%s2875 + $0x28] sm:$0xf]
        %v2884 = vld [vmem:[%s2875 + $0x30] sm:$0xf]
        %v2885 = vld [vmem:[%s2875 + $0x34] sm:$0xf]
        %v2886 = vld [vmem:[%s2875 + $0x3c] sm:$0xf]
        %v2887 = vld [vmem:[%s2875 + $0x40] sm:$0xf]
        %v2888 = vld [vmem:[%s2875 + $0x48] sm:$0xf]
        %v2889 = vld [vmem:[%s2875 + $0x4c] sm:$0xf]
        %v2890 = vld [vmem:[%s2875 + $0x54] sm:$0xf]
        %v2891 = vld [vmem:[%s2875 + $0x58] sm:$0xf]
        %v2892 = vld [vmem:[%s2875 + $0x8] sm:$0x1]
        %v2893 = vld [vmem:[%s2875 + $0x14] sm:$0x1]
        %v2894 = vld [vmem:[%s2875 + $0x20] sm:$0x1]
        %v2895 = vld [vmem:[%s2875 + $0x2c] sm:$0x1]
        %v2896 = vld [vmem:[%s2875 + $0x38] sm:$0x1]
        %v2897 = vld [vmem:[%s2875 + $0x44] sm:$0x1]
        %v2898 = vld [vmem:[%s2875 + $0x50] sm:$0x1]
        %v2899 = vld [vmem:[%s2875 + $0x5c] sm:$0x1]
        %v2900 = vld [vmem:[%s2875] sm:$0xe]
        %v2901 = vld [vmem:[%s2875 + $0xc] sm:$0xe]
        %v2902 = vld [vmem:[%s2875 + $0x18] sm:$0xe]
        %v2903 = vld [vmem:[%s2875 + $0x24] sm:$0xe]
        %v2904 = vld [vmem:[%s2875 + $0x30] sm:$0xe]
        %v2905 = vld [vmem:[%s2875 + $0x3c] sm:$0xe]
        %v2906 = vld [vmem:[%s2875 + $0x48] sm:$0xe]
        %v2907 = vld [vmem:[%s2875 + $0x54] sm:$0xe]
        %s2908 = smul.addr %s1047, 4
        %s2909 = scalar_lea.vmem %s438, %s2908
        %v2910 = vld [vmem:[%s2909] sm:$0xf]
        %v2911 = vld [vmem:[%s2909 + $0x4] sm:$0xf]
        %v2912 = vld [vmem:[%s2909 + $0xc] sm:$0xf]
        %v2913 = vld [vmem:[%s2909 + $0x10] sm:$0xf]
        %v2914 = vld [vmem:[%s2909 + $0x18] sm:$0xf]
        %v2915 = vld [vmem:[%s2909 + $0x1c] sm:$0xf]
        %v2916 = vld [vmem:[%s2909 + $0x24] sm:$0xf]
        %v2917 = vld [vmem:[%s2909 + $0x28] sm:$0xf]
        %v2918 = vld [vmem:[%s2909 + $0x30] sm:$0xf]
        %v2919 = vld [vmem:[%s2909 + $0x34] sm:$0xf]
        %v2920 = vld [vmem:[%s2909 + $0x3c] sm:$0xf]
        %v2921 = vld [vmem:[%s2909 + $0x40] sm:$0xf]
        %v2922 = vld [vmem:[%s2909 + $0x48] sm:$0xf]
        %v2923 = vld [vmem:[%s2909 + $0x4c] sm:$0xf]
        %v2924 = vld [vmem:[%s2909 + $0x54] sm:$0xf]
        %v2925 = vld [vmem:[%s2909 + $0x58] sm:$0xf]
        %v2926 = vld [vmem:[%s2909 + $0x8] sm:$0x1]
        %v2927 = vld [vmem:[%s2909 + $0x14] sm:$0x1]
        %v2928 = vld [vmem:[%s2909 + $0x20] sm:$0x1]
        %v2929 = vld [vmem:[%s2909 + $0x2c] sm:$0x1]
        %v2930 = vld [vmem:[%s2909 + $0x38] sm:$0x1]
        %v2931 = vld [vmem:[%s2909 + $0x44] sm:$0x1]
        %v2932 = vld [vmem:[%s2909 + $0x50] sm:$0x1]
        %v2933 = vld [vmem:[%s2909 + $0x5c] sm:$0x1]
        %v2934 = vld [vmem:[%s2909] sm:$0xe]
        %v2935 = vld [vmem:[%s2909 + $0xc] sm:$0xe]
        %v2936 = vld [vmem:[%s2909 + $0x18] sm:$0xe]
        %v2937 = vld [vmem:[%s2909 + $0x24] sm:$0xe]
        %v2938 = vld [vmem:[%s2909 + $0x30] sm:$0xe]
        %v2939 = vld [vmem:[%s2909 + $0x3c] sm:$0xe]
        %v2940 = vld [vmem:[%s2909 + $0x48] sm:$0xe]
        %v2941 = vld [vmem:[%s2909 + $0x54] sm:$0xe]
        %s2942 = smul.addr %s1459, 4
        %s2943 = scalar_lea.vmem %s438, %s2942
        %v2944 = vld [vmem:[%s2943] sm:$0xf]
        %v2945 = vld [vmem:[%s2943 + $0x4] sm:$0xf]
        %v2946 = vld [vmem:[%s2943 + $0xc] sm:$0xf]
        %v2947 = vld [vmem:[%s2943 + $0x10] sm:$0xf]
        %v2948 = vld [vmem:[%s2943 + $0x18] sm:$0xf]
        %v2949 = vld [vmem:[%s2943 + $0x1c] sm:$0xf]
        %v2950 = vld [vmem:[%s2943 + $0x24] sm:$0xf]
        %v2951 = vld [vmem:[%s2943 + $0x28] sm:$0xf]
        %v2952 = vld [vmem:[%s2943 + $0x30] sm:$0xf]
        %v2953 = vld [vmem:[%s2943 + $0x34] sm:$0xf]
        %v2954 = vld [vmem:[%s2943 + $0x3c] sm:$0xf]
        %v2955 = vld [vmem:[%s2943 + $0x40] sm:$0xf]
        %v2956 = vld [vmem:[%s2943 + $0x48] sm:$0xf]
        %v2957 = vld [vmem:[%s2943 + $0x4c] sm:$0xf]
        %v2958 = vld [vmem:[%s2943 + $0x54] sm:$0xf]
        %v2959 = vld [vmem:[%s2943 + $0x58] sm:$0xf]
        %v2960 = vld [vmem:[%s2943 + $0x8] sm:$0x1]
        %v2961 = vld [vmem:[%s2943 + $0x14] sm:$0x1]
        %v2962 = vld [vmem:[%s2943 + $0x20] sm:$0x1]
        %v2963 = vld [vmem:[%s2943 + $0x2c] sm:$0x1]
        %v2964 = vld [vmem:[%s2943 + $0x38] sm:$0x1]
        %v2965 = vld [vmem:[%s2943 + $0x44] sm:$0x1]
        %v2966 = vld [vmem:[%s2943 + $0x50] sm:$0x1]
        %v2967 = vld [vmem:[%s2943 + $0x5c] sm:$0x1]
        %v2968 = vld [vmem:[%s2943] sm:$0xe]
        %v2969 = vld [vmem:[%s2943 + $0xc] sm:$0xe]
        %v2970 = vld [vmem:[%s2943 + $0x18] sm:$0xe]
        %v2971 = vld [vmem:[%s2943 + $0x24] sm:$0xe]
        %v2972 = vld [vmem:[%s2943 + $0x30] sm:$0xe]
        %v2973 = vld [vmem:[%s2943 + $0x3c] sm:$0xe]
        %v2974 = vld [vmem:[%s2943 + $0x48] sm:$0xe]
        %v2975 = vld [vmem:[%s2943 + $0x54] sm:$0xe]
        %v2992 = vunpack.c.l.b16 %v2876
        %v2993 = vunpack.c.l.b16 %v2877
        %v2994 = vunpack.c.l.b16 %v2878
        %v2995 = vunpack.c.l.b16 %v2879
        %v2996 = vunpack.c.l.b16 %v2880
        %v2997 = vunpack.c.l.b16 %v2881
        %v2998 = vunpack.c.l.b16 %v2882
        %v2999 = vunpack.c.l.b16 %v2883
        %v3000 = vunpack.c.l.b16 %v2884
        %v3001 = vunpack.c.l.b16 %v2885
        %v3002 = vunpack.c.l.b16 %v2886
        %v3003 = vunpack.c.l.b16 %v2887
        %v3004 = vunpack.c.l.b16 %v2888
        %v3005 = vunpack.c.l.b16 %v2889
        %v3006 = vunpack.c.l.b16 %v2890
        %v3007 = vunpack.c.l.b16 %v2891
        %v3008 = vpack.c.b16 %v2993, %v2992
        %v3009 = vpack.c.b16 %v2995, %v2994
        %v3010 = vpack.c.b16 %v2997, %v2996
        %v3011 = vpack.c.b16 %v2999, %v2998
        %v3012 = vpack.c.b16 %v3001, %v3000
        %v3013 = vpack.c.b16 %v3003, %v3002
        %v3014 = vpack.c.b16 %v3005, %v3004
        %v3015 = vpack.c.b16 %v3007, %v3006
        %v3024 = vunpack.c.l.b16 %v2892
        %v3025 = vunpack.c.l.b16 %v2893
        %v3026 = vunpack.c.l.b16 %v2894
        %v3027 = vunpack.c.l.b16 %v2895
        %v3028 = vunpack.c.l.b16 %v2896
        %v3029 = vunpack.c.l.b16 %v2897
        %v3030 = vunpack.c.l.b16 %v2898
        %v3031 = vunpack.c.l.b16 %v2899
        %v3032 = vpack.c.b16 %v3024, %v3024
        %v3033 = vpack.c.b16 %v3025, %v3025
        %v3034 = vpack.c.b16 %v3026, %v3026
        %v3035 = vpack.c.b16 %v3027, %v3027
        %v3036 = vpack.c.b16 %v3028, %v3028
        %v3037 = vpack.c.b16 %v3029, %v3029
        %v3038 = vpack.c.b16 %v3030, %v3030
        %v3039 = vpack.c.b16 %v3031, %v3031
        %v3041 = vshrl.u32 %v3008, 16
        %v3043 = vshll.u32 %v3008, 16
        %v3045 = vrot.slane %v3043, 1
        %v3046 = vor.u32 %v3041, %v3045
        %v3048 = vshll.u32 %v3032, 16
        %v3050 = vrot.slane %v3048, 1
        %v3051 = vsel %vm1558, %v3046, %v3050
        %v3053 = vshrl.u32 %v3009, 16
        %v3055 = vshll.u32 %v3009, 16
        %v3057 = vrot.slane %v3055, 1
        %v3058 = vor.u32 %v3053, %v3057
        %v3060 = vshll.u32 %v3033, 16
        %v3062 = vrot.slane %v3060, 1
        %v3063 = vsel %vm1558, %v3058, %v3062
        %v3065 = vshrl.u32 %v3010, 16
        %v3067 = vshll.u32 %v3010, 16
        %v3069 = vrot.slane %v3067, 1
        %v3070 = vor.u32 %v3065, %v3069
        %v3072 = vshll.u32 %v3034, 16
        %v3074 = vrot.slane %v3072, 1
        %v3075 = vsel %vm1558, %v3070, %v3074
        %v3077 = vshrl.u32 %v3011, 16
        %v3079 = vshll.u32 %v3011, 16
        %v3081 = vrot.slane %v3079, 1
        %v3082 = vor.u32 %v3077, %v3081
        %v3084 = vshll.u32 %v3035, 16
        %v3086 = vrot.slane %v3084, 1
        %v3087 = vsel %vm1558, %v3082, %v3086
        %v3089 = vshrl.u32 %v3012, 16
        %v3091 = vshll.u32 %v3012, 16
        %v3093 = vrot.slane %v3091, 1
        %v3094 = vor.u32 %v3089, %v3093
        %v3096 = vshll.u32 %v3036, 16
        %v3098 = vrot.slane %v3096, 1
        %v3099 = vsel %vm1558, %v3094, %v3098
        %v3101 = vshrl.u32 %v3013, 16
        %v3103 = vshll.u32 %v3013, 16
        %v3105 = vrot.slane %v3103, 1
        %v3106 = vor.u32 %v3101, %v3105
        %v3108 = vshll.u32 %v3037, 16
        %v3110 = vrot.slane %v3108, 1
        %v3111 = vsel %vm1558, %v3106, %v3110
        %v3113 = vshrl.u32 %v3014, 16
        %v3115 = vshll.u32 %v3014, 16
        %v3117 = vrot.slane %v3115, 1
        %v3118 = vor.u32 %v3113, %v3117
        %v3120 = vshll.u32 %v3038, 16
        %v3122 = vrot.slane %v3120, 1
        %v3123 = vsel %vm1558, %v3118, %v3122
        %v3125 = vshrl.u32 %v3015, 16
        %v3127 = vshll.u32 %v3015, 16
        %v3129 = vrot.slane %v3127, 1
        %v3130 = vor.u32 %v3125, %v3129
        %v3132 = vshll.u32 %v3039, 16
        %v3134 = vrot.slane %v3132, 1
        %v3135 = vsel %vm1558, %v3130, %v3134
        %3136 = vrot.lane.b32.xlu0 %v3051, 96
        %v3137 = vpop.permute.xlu0 %3136
        %3138 = vrot.lane.b32.xlu0 %v3063, 96
        %v3139 = vpop.permute.xlu0 %3138
        %3140 = vrot.lane.b32.xlu0 %v3075, 96
        %v3141 = vpop.permute.xlu0 %3140
        %3142 = vrot.lane.b32.xlu0 %v3087, 96
        %v3143 = vpop.permute.xlu0 %3142
        %3144 = vrot.lane.b32.xlu0 %v3099, 96
        %v3145 = vpop.permute.xlu0 %3144
        %3146 = vrot.lane.b32.xlu0 %v3111, 96
        %v3147 = vpop.permute.xlu0 %3146
        %3148 = vrot.lane.b32.xlu0 %v3123, 96
        %v3149 = vpop.permute.xlu0 %3148
        %3150 = vrot.lane.b32.xlu0 %v3135, 96
        %v3151 = vpop.permute.xlu0 %3150
        %v3160 = vunpack.c.l.b16 %v2900
        %v3161 = vunpack.c.l.b16 %v2901
        %v3162 = vunpack.c.l.b16 %v2902
        %v3163 = vunpack.c.l.b16 %v2903
        %v3164 = vunpack.c.l.b16 %v2904
        %v3165 = vunpack.c.l.b16 %v2905
        %v3166 = vunpack.c.l.b16 %v2906
        %v3167 = vunpack.c.l.b16 %v2907
        %v3168 = vpack.c.b16 %v2993, %v3160
        %v3169 = vpack.c.b16 %v2995, %v3161
        %v3170 = vpack.c.b16 %v2997, %v3162
        %v3171 = vpack.c.b16 %v2999, %v3163
        %v3172 = vpack.c.b16 %v3001, %v3164
        %v3173 = vpack.c.b16 %v3003, %v3165
        %v3174 = vpack.c.b16 %v3005, %v3166
        %v3175 = vpack.c.b16 %v3007, %v3167
        %v3176 = vrot.slane %v3168, 1
        %v3177 = vrot.slane %v3032, 1
        %v3178 = vsel %vm1695, %v3176, %v3177
        %v3179 = vrot.slane %v3169, 1
        %v3180 = vrot.slane %v3033, 1
        %v3181 = vsel %vm1695, %v3179, %v3180
        %v3182 = vrot.slane %v3170, 1
        %v3183 = vrot.slane %v3034, 1
        %v3184 = vsel %vm1695, %v3182, %v3183
        %v3185 = vrot.slane %v3171, 1
        %v3186 = vrot.slane %v3035, 1
        %v3187 = vsel %vm1695, %v3185, %v3186
        %v3188 = vrot.slane %v3172, 1
        %v3189 = vrot.slane %v3036, 1
        %v3190 = vsel %vm1695, %v3188, %v3189
        %v3191 = vrot.slane %v3173, 1
        %v3192 = vrot.slane %v3037, 1
        %v3193 = vsel %vm1695, %v3191, %v3192
        %v3194 = vrot.slane %v3174, 1
        %v3195 = vrot.slane %v3038, 1
        %v3196 = vsel %vm1695, %v3194, %v3195
        %v3197 = vrot.slane %v3175, 1
        %v3198 = vrot.slane %v3039, 1
        %v3199 = vsel %vm1695, %v3197, %v3198
        %3200 = vrot.lane.b32.xlu0 %v3178, 64
        %v3201 = vpop.permute.xlu0 %3200
        %3202 = vrot.lane.b32.xlu0 %v3181, 64
        %v3203 = vpop.permute.xlu0 %3202
        %3204 = vrot.lane.b32.xlu0 %v3184, 64
        %v3205 = vpop.permute.xlu0 %3204
        %3206 = vrot.lane.b32.xlu0 %v3187, 64
        %v3207 = vpop.permute.xlu0 %3206
        %3208 = vrot.lane.b32.xlu0 %v3190, 64
        %v3209 = vpop.permute.xlu0 %3208
        %3210 = vrot.lane.b32.xlu0 %v3193, 64
        %v3211 = vpop.permute.xlu0 %3210
        %3212 = vrot.lane.b32.xlu0 %v3196, 64
        %v3213 = vpop.permute.xlu0 %3212
        %3214 = vrot.lane.b32.xlu0 %v3199, 64
        %v3215 = vpop.permute.xlu0 %3214
        %v3232 = vunpack.c.l.b16 %v2910
        %v3233 = vunpack.c.l.b16 %v2911
        %v3234 = vunpack.c.l.b16 %v2912
        %v3235 = vunpack.c.l.b16 %v2913
        %v3236 = vunpack.c.l.b16 %v2914
        %v3237 = vunpack.c.l.b16 %v2915
        %v3238 = vunpack.c.l.b16 %v2916
        %v3239 = vunpack.c.l.b16 %v2917
        %v3240 = vunpack.c.l.b16 %v2918
        %v3241 = vunpack.c.l.b16 %v2919
        %v3242 = vunpack.c.l.b16 %v2920
        %v3243 = vunpack.c.l.b16 %v2921
        %v3244 = vunpack.c.l.b16 %v2922
        %v3245 = vunpack.c.l.b16 %v2923
        %v3246 = vunpack.c.l.b16 %v2924
        %v3247 = vunpack.c.l.b16 %v2925
        %v3248 = vpack.c.b16 %v3233, %v3232
        %v3249 = vpack.c.b16 %v3235, %v3234
        %v3250 = vpack.c.b16 %v3237, %v3236
        %v3251 = vpack.c.b16 %v3239, %v3238
        %v3252 = vpack.c.b16 %v3241, %v3240
        %v3253 = vpack.c.b16 %v3243, %v3242
        %v3254 = vpack.c.b16 %v3245, %v3244
        %v3255 = vpack.c.b16 %v3247, %v3246
        %3256 = vrot.lane.b32.xlu0 %v3248, 32
        %v3257 = vpop.permute.xlu0 %3256
        %3258 = vrot.lane.b32.xlu0 %v3249, 32
        %v3259 = vpop.permute.xlu0 %3258
        %3260 = vrot.lane.b32.xlu0 %v3250, 32
        %v3261 = vpop.permute.xlu0 %3260
        %3262 = vrot.lane.b32.xlu0 %v3251, 32
        %v3263 = vpop.permute.xlu0 %3262
        %3264 = vrot.lane.b32.xlu0 %v3252, 32
        %v3265 = vpop.permute.xlu0 %3264
        %3266 = vrot.lane.b32.xlu0 %v3253, 32
        %v3267 = vpop.permute.xlu0 %3266
        %3268 = vrot.lane.b32.xlu0 %v3254, 32
        %v3269 = vpop.permute.xlu0 %3268
        %3270 = vrot.lane.b32.xlu0 %v3255, 32
        %v3271 = vpop.permute.xlu0 %3270
        %v3280 = vunpack.c.l.b16 %v2926
        %v3281 = vunpack.c.l.b16 %v2927
        %v3282 = vunpack.c.l.b16 %v2928
        %v3283 = vunpack.c.l.b16 %v2929
        %v3284 = vunpack.c.l.b16 %v2930
        %v3285 = vunpack.c.l.b16 %v2931
        %v3286 = vunpack.c.l.b16 %v2932
        %v3287 = vunpack.c.l.b16 %v2933
        %v3288 = vpack.c.b16 %v3280, %v3280
        %v3289 = vpack.c.b16 %v3281, %v3281
        %v3290 = vpack.c.b16 %v3282, %v3282
        %v3291 = vpack.c.b16 %v3283, %v3283
        %v3292 = vpack.c.b16 %v3284, %v3284
        %v3293 = vpack.c.b16 %v3285, %v3285
        %v3294 = vpack.c.b16 %v3286, %v3286
        %v3295 = vpack.c.b16 %v3287, %v3287
        %v3297 = vshrl.u32 %v3248, 16
        %v3299 = vshll.u32 %v3248, 16
        %v3301 = vrot.slane %v3299, 1
        %v3302 = vor.u32 %v3297, %v3301
        %v3304 = vshll.u32 %v3288, 16
        %v3306 = vrot.slane %v3304, 1
        %v3307 = vsel %vm1558, %v3302, %v3306
        %v3309 = vshrl.u32 %v3249, 16
        %v3311 = vshll.u32 %v3249, 16
        %v3313 = vrot.slane %v3311, 1
        %v3314 = vor.u32 %v3309, %v3313
        %v3316 = vshll.u32 %v3289, 16
        %v3318 = vrot.slane %v3316, 1
        %v3319 = vsel %vm1558, %v3314, %v3318
        %v3321 = vshrl.u32 %v3250, 16
        %v3323 = vshll.u32 %v3250, 16
        %v3325 = vrot.slane %v3323, 1
        %v3326 = vor.u32 %v3321, %v3325
        %v3328 = vshll.u32 %v3290, 16
        %v3330 = vrot.slane %v3328, 1
        %v3331 = vsel %vm1558, %v3326, %v3330
        %v3333 = vshrl.u32 %v3251, 16
        %v3335 = vshll.u32 %v3251, 16
        %v3337 = vrot.slane %v3335, 1
        %v3338 = vor.u32 %v3333, %v3337
        %v3340 = vshll.u32 %v3291, 16
        %v3342 = vrot.slane %v3340, 1
        %v3343 = vsel %vm1558, %v3338, %v3342
        %v3345 = vshrl.u32 %v3252, 16
        %v3347 = vshll.u32 %v3252, 16
        %v3349 = vrot.slane %v3347, 1
        %v3350 = vor.u32 %v3345, %v3349
        %v3352 = vshll.u32 %v3292, 16
        %v3354 = vrot.slane %v3352, 1
        %v3355 = vsel %vm1558, %v3350, %v3354
        %v3357 = vshrl.u32 %v3253, 16
        %v3359 = vshll.u32 %v3253, 16
        %v3361 = vrot.slane %v3359, 1
        %v3362 = vor.u32 %v3357, %v3361
        %v3364 = vshll.u32 %v3293, 16
        %v3366 = vrot.slane %v3364, 1
        %v3367 = vsel %vm1558, %v3362, %v3366
        %v3369 = vshrl.u32 %v3254, 16
        %v3371 = vshll.u32 %v3254, 16
        %v3373 = vrot.slane %v3371, 1
        %v3374 = vor.u32 %v3369, %v3373
        %v3376 = vshll.u32 %v3294, 16
        %v3378 = vrot.slane %v3376, 1
        %v3379 = vsel %vm1558, %v3374, %v3378
        %v3381 = vshrl.u32 %v3255, 16
        %v3383 = vshll.u32 %v3255, 16
        %v3385 = vrot.slane %v3383, 1
        %v3386 = vor.u32 %v3381, %v3385
        %v3388 = vshll.u32 %v3295, 16
        %v3390 = vrot.slane %v3388, 1
        %v3391 = vsel %vm1558, %v3386, %v3390
        %v3400 = vunpack.c.l.b16 %v2934
        %v3401 = vunpack.c.l.b16 %v2935
        %v3402 = vunpack.c.l.b16 %v2936
        %v3403 = vunpack.c.l.b16 %v2937
        %v3404 = vunpack.c.l.b16 %v2938
        %v3405 = vunpack.c.l.b16 %v2939
        %v3406 = vunpack.c.l.b16 %v2940
        %v3407 = vunpack.c.l.b16 %v2941
        %v3408 = vpack.c.b16 %v3233, %v3400
        %v3409 = vpack.c.b16 %v3235, %v3401
        %v3410 = vpack.c.b16 %v3237, %v3402
        %v3411 = vpack.c.b16 %v3239, %v3403
        %v3412 = vpack.c.b16 %v3241, %v3404
        %v3413 = vpack.c.b16 %v3243, %v3405
        %v3414 = vpack.c.b16 %v3245, %v3406
        %v3415 = vpack.c.b16 %v3247, %v3407
        %v3416 = vrot.slane %v3408, 1
        %v3417 = vrot.slane %v3288, 1
        %v3418 = vsel %vm1695, %v3416, %v3417
        %v3419 = vrot.slane %v3409, 1
        %v3420 = vrot.slane %v3289, 1
        %v3421 = vsel %vm1695, %v3419, %v3420
        %v3422 = vrot.slane %v3410, 1
        %v3423 = vrot.slane %v3290, 1
        %v3424 = vsel %vm1695, %v3422, %v3423
        %v3425 = vrot.slane %v3411, 1
        %v3426 = vrot.slane %v3291, 1
        %v3427 = vsel %vm1695, %v3425, %v3426
        %v3428 = vrot.slane %v3412, 1
        %v3429 = vrot.slane %v3292, 1
        %v3430 = vsel %vm1695, %v3428, %v3429
        %v3431 = vrot.slane %v3413, 1
        %v3432 = vrot.slane %v3293, 1
        %v3433 = vsel %vm1695, %v3431, %v3432
        %v3434 = vrot.slane %v3414, 1
        %v3435 = vrot.slane %v3294, 1
        %v3436 = vsel %vm1695, %v3434, %v3435
        %v3437 = vrot.slane %v3415, 1
        %v3438 = vrot.slane %v3295, 1
        %v3439 = vsel %vm1695, %v3437, %v3438
        %3440 = vrot.lane.b32.xlu0 %v3418, 96
        %v3441 = vpop.permute.xlu0 %3440
        %3442 = vrot.lane.b32.xlu0 %v3421, 96
        %v3443 = vpop.permute.xlu0 %3442
        %3444 = vrot.lane.b32.xlu0 %v3424, 96
        %v3445 = vpop.permute.xlu0 %3444
        %3446 = vrot.lane.b32.xlu0 %v3427, 96
        %v3447 = vpop.permute.xlu0 %3446
        %3448 = vrot.lane.b32.xlu0 %v3430, 96
        %v3449 = vpop.permute.xlu0 %3448
        %3450 = vrot.lane.b32.xlu0 %v3433, 96
        %v3451 = vpop.permute.xlu0 %3450
        %3452 = vrot.lane.b32.xlu0 %v3436, 96
        %v3453 = vpop.permute.xlu0 %3452
        %3454 = vrot.lane.b32.xlu0 %v3439, 96
        %v3455 = vpop.permute.xlu0 %3454
        %v3472 = vunpack.c.l.b16 %v2944
        %v3473 = vunpack.c.l.b16 %v2945
        %v3474 = vunpack.c.l.b16 %v2946
        %v3475 = vunpack.c.l.b16 %v2947
        %v3476 = vunpack.c.l.b16 %v2948
        %v3477 = vunpack.c.l.b16 %v2949
        %v3478 = vunpack.c.l.b16 %v2950
        %v3479 = vunpack.c.l.b16 %v2951
        %v3480 = vunpack.c.l.b16 %v2952
        %v3481 = vunpack.c.l.b16 %v2953
        %v3482 = vunpack.c.l.b16 %v2954
        %v3483 = vunpack.c.l.b16 %v2955
        %v3484 = vunpack.c.l.b16 %v2956
        %v3485 = vunpack.c.l.b16 %v2957
        %v3486 = vunpack.c.l.b16 %v2958
        %v3487 = vunpack.c.l.b16 %v2959
        %v3488 = vpack.c.b16 %v3473, %v3472
        %v3489 = vpack.c.b16 %v3475, %v3474
        %v3490 = vpack.c.b16 %v3477, %v3476
        %v3491 = vpack.c.b16 %v3479, %v3478
        %v3492 = vpack.c.b16 %v3481, %v3480
        %v3493 = vpack.c.b16 %v3483, %v3482
        %v3494 = vpack.c.b16 %v3485, %v3484
        %v3495 = vpack.c.b16 %v3487, %v3486
        %3496 = vrot.lane.b32.xlu0 %v3488, 64
        %v3497 = vpop.permute.xlu0 %3496
        %3498 = vrot.lane.b32.xlu0 %v3489, 64
        %v3499 = vpop.permute.xlu0 %3498
        %3500 = vrot.lane.b32.xlu0 %v3490, 64
        %v3501 = vpop.permute.xlu0 %3500
        %3502 = vrot.lane.b32.xlu0 %v3491, 64
        %v3503 = vpop.permute.xlu0 %3502
        %3504 = vrot.lane.b32.xlu0 %v3492, 64
        %v3505 = vpop.permute.xlu0 %3504
        %3506 = vrot.lane.b32.xlu0 %v3493, 64
        %v3507 = vpop.permute.xlu0 %3506
        %3508 = vrot.lane.b32.xlu0 %v3494, 64
        %v3509 = vpop.permute.xlu0 %3508
        %3510 = vrot.lane.b32.xlu0 %v3495, 64
        %v3511 = vpop.permute.xlu0 %3510
        %v3520 = vunpack.c.l.b16 %v2960
        %v3521 = vunpack.c.l.b16 %v2961
        %v3522 = vunpack.c.l.b16 %v2962
        %v3523 = vunpack.c.l.b16 %v2963
        %v3524 = vunpack.c.l.b16 %v2964
        %v3525 = vunpack.c.l.b16 %v2965
        %v3526 = vunpack.c.l.b16 %v2966
        %v3527 = vunpack.c.l.b16 %v2967
        %v3528 = vpack.c.b16 %v3520, %v3520
        %v3529 = vpack.c.b16 %v3521, %v3521
        %v3530 = vpack.c.b16 %v3522, %v3522
        %v3531 = vpack.c.b16 %v3523, %v3523
        %v3532 = vpack.c.b16 %v3524, %v3524
        %v3533 = vpack.c.b16 %v3525, %v3525
        %v3534 = vpack.c.b16 %v3526, %v3526
        %v3535 = vpack.c.b16 %v3527, %v3527
        %v3537 = vshrl.u32 %v3488, 16
        %v3539 = vshll.u32 %v3488, 16
        %v3541 = vrot.slane %v3539, 1
        %v3542 = vor.u32 %v3537, %v3541
        %v3544 = vshll.u32 %v3528, 16
        %v3546 = vrot.slane %v3544, 1
        %v3547 = vsel %vm1558, %v3542, %v3546
        %v3549 = vshrl.u32 %v3489, 16
        %v3551 = vshll.u32 %v3489, 16
        %v3553 = vrot.slane %v3551, 1
        %v3554 = vor.u32 %v3549, %v3553
        %v3556 = vshll.u32 %v3529, 16
        %v3558 = vrot.slane %v3556, 1
        %v3559 = vsel %vm1558, %v3554, %v3558
        %v3561 = vshrl.u32 %v3490, 16
        %v3563 = vshll.u32 %v3490, 16
        %v3565 = vrot.slane %v3563, 1
        %v3566 = vor.u32 %v3561, %v3565
        %v3568 = vshll.u32 %v3530, 16
        %v3570 = vrot.slane %v3568, 1
        %v3571 = vsel %vm1558, %v3566, %v3570
        %v3573 = vshrl.u32 %v3491, 16
        %v3575 = vshll.u32 %v3491, 16
        %v3577 = vrot.slane %v3575, 1
        %v3578 = vor.u32 %v3573, %v3577
        %v3580 = vshll.u32 %v3531, 16
        %v3582 = vrot.slane %v3580, 1
        %v3583 = vsel %vm1558, %v3578, %v3582
        %v3585 = vshrl.u32 %v3492, 16
        %v3587 = vshll.u32 %v3492, 16
        %v3589 = vrot.slane %v3587, 1
        %v3590 = vor.u32 %v3585, %v3589
        %v3592 = vshll.u32 %v3532, 16
        %v3594 = vrot.slane %v3592, 1
        %v3595 = vsel %vm1558, %v3590, %v3594
        %v3597 = vshrl.u32 %v3493, 16
        %v3599 = vshll.u32 %v3493, 16
        %v3601 = vrot.slane %v3599, 1
        %v3602 = vor.u32 %v3597, %v3601
        %v3604 = vshll.u32 %v3533, 16
        %v3606 = vrot.slane %v3604, 1
        %v3607 = vsel %vm1558, %v3602, %v3606
        %v3609 = vshrl.u32 %v3494, 16
        %v3611 = vshll.u32 %v3494, 16
        %v3613 = vrot.slane %v3611, 1
        %v3614 = vor.u32 %v3609, %v3613
        %v3616 = vshll.u32 %v3534, 16
        %v3618 = vrot.slane %v3616, 1
        %v3619 = vsel %vm1558, %v3614, %v3618
        %v3621 = vshrl.u32 %v3495, 16
        %v3623 = vshll.u32 %v3495, 16
        %v3625 = vrot.slane %v3623, 1
        %v3626 = vor.u32 %v3621, %v3625
        %v3628 = vshll.u32 %v3535, 16
        %v3630 = vrot.slane %v3628, 1
        %v3631 = vsel %vm1558, %v3626, %v3630
        %3632 = vrot.lane.b32.xlu0 %v3547, 32
        %v3633 = vpop.permute.xlu0 %3632
        %3634 = vrot.lane.b32.xlu0 %v3559, 32
        %v3635 = vpop.permute.xlu0 %3634
        %3636 = vrot.lane.b32.xlu0 %v3571, 32
        %v3637 = vpop.permute.xlu0 %3636
        %3638 = vrot.lane.b32.xlu0 %v3583, 32
        %v3639 = vpop.permute.xlu0 %3638
        %3640 = vrot.lane.b32.xlu0 %v3595, 32
        %v3641 = vpop.permute.xlu0 %3640
        %3642 = vrot.lane.b32.xlu0 %v3607, 32
        %v3643 = vpop.permute.xlu0 %3642
        %3644 = vrot.lane.b32.xlu0 %v3619, 32
        %v3645 = vpop.permute.xlu0 %3644
        %3646 = vrot.lane.b32.xlu0 %v3631, 32
        %v3647 = vpop.permute.xlu0 %3646
        %v3656 = vunpack.c.l.b16 %v2968
        %v3657 = vunpack.c.l.b16 %v2969
        %v3658 = vunpack.c.l.b16 %v2970
        %v3659 = vunpack.c.l.b16 %v2971
        %v3660 = vunpack.c.l.b16 %v2972
        %v3661 = vunpack.c.l.b16 %v2973
        %v3662 = vunpack.c.l.b16 %v2974
        %v3663 = vunpack.c.l.b16 %v2975
        %v3664 = vpack.c.b16 %v3473, %v3656
        %v3665 = vpack.c.b16 %v3475, %v3657
        %v3666 = vpack.c.b16 %v3477, %v3658
        %v3667 = vpack.c.b16 %v3479, %v3659
        %v3668 = vpack.c.b16 %v3481, %v3660
        %v3669 = vpack.c.b16 %v3483, %v3661
        %v3670 = vpack.c.b16 %v3485, %v3662
        %v3671 = vpack.c.b16 %v3487, %v3663
        %v3672 = vrot.slane %v3664, 1
        %v3673 = vrot.slane %v3528, 1
        %v3674 = vsel %vm1695, %v3672, %v3673
        %v3675 = vrot.slane %v3665, 1
        %v3676 = vrot.slane %v3529, 1
        %v3677 = vsel %vm1695, %v3675, %v3676
        %v3678 = vrot.slane %v3666, 1
        %v3679 = vrot.slane %v3530, 1
        %v3680 = vsel %vm1695, %v3678, %v3679
        %v3681 = vrot.slane %v3667, 1
        %v3682 = vrot.slane %v3531, 1
        %v3683 = vsel %vm1695, %v3681, %v3682
        %v3684 = vrot.slane %v3668, 1
        %v3685 = vrot.slane %v3532, 1
        %v3686 = vsel %vm1695, %v3684, %v3685
        %v3687 = vrot.slane %v3669, 1
        %v3688 = vrot.slane %v3533, 1
        %v3689 = vsel %vm1695, %v3687, %v3688
        %v3690 = vrot.slane %v3670, 1
        %v3691 = vrot.slane %v3534, 1
        %v3692 = vsel %vm1695, %v3690, %v3691
        %v3693 = vrot.slane %v3671, 1
        %v3694 = vrot.slane %v3535, 1
        %v3695 = vsel %vm1695, %v3693, %v3694
        %vm3696 = vcmask 785408
        %v3698 = vsel %vm3696, %v3008, %v3137
        %v3701 = vsel %vm3696, %v3009, %v3139
        %v3704 = vsel %vm3696, %v3010, %v3141
        %v3707 = vsel %vm3696, %v3011, %v3143
        %v3710 = vsel %vm3696, %v3012, %v3145
        %v3713 = vsel %vm3696, %v3013, %v3147
        %v3716 = vsel %vm3696, %v3014, %v3149
        %v3719 = vsel %vm3696, %v3015, %v3151
        %v3722 = vsel %vm2184, %v3137, %v3201
        %v3725 = vsel %vm2184, %v3139, %v3203
        %v3728 = vsel %vm2184, %v3141, %v3205
        %v3731 = vsel %vm2184, %v3143, %v3207
        %v3734 = vsel %vm2184, %v3145, %v3209
        %v3737 = vsel %vm2184, %v3147, %v3211
        %v3740 = vsel %vm2184, %v3149, %v3213
        %v3743 = vsel %vm2184, %v3151, %v3215
        %vm3745 = vcmask 261120
        %v3747 = vsel %vm3745, %v3201, %v3257
        %v3750 = vsel %vm3745, %v3203, %v3259
        %v3753 = vsel %vm3745, %v3205, %v3261
        %v3756 = vsel %vm3745, %v3207, %v3263
        %v3759 = vsel %vm3745, %v3209, %v3265
        %v3762 = vsel %vm3745, %v3211, %v3267
        %v3765 = vsel %vm3745, %v3213, %v3269
        %v3768 = vsel %vm3745, %v3215, %v3271
        %v3772 = vsel %vm3696, %v3307, %v3441
        %v3776 = vsel %vm3696, %v3319, %v3443
        %v3780 = vsel %vm3696, %v3331, %v3445
        %v3784 = vsel %vm3696, %v3343, %v3447
        %v3788 = vsel %vm3696, %v3355, %v3449
        %v3792 = vsel %vm3696, %v3367, %v3451
        %v3796 = vsel %vm3696, %v3379, %v3453
        %v3800 = vsel %vm3696, %v3391, %v3455
        %v3803 = vsel %vm2184, %v3441, %v3497
        %v3806 = vsel %vm2184, %v3443, %v3499
        %v3809 = vsel %vm2184, %v3445, %v3501
        %v3812 = vsel %vm2184, %v3447, %v3503
        %v3815 = vsel %vm2184, %v3449, %v3505
        %v3818 = vsel %vm2184, %v3451, %v3507
        %v3821 = vsel %vm2184, %v3453, %v3509
        %v3824 = vsel %vm2184, %v3455, %v3511
        %v3827 = vsel %vm3745, %v3497, %v3633
        %v3830 = vsel %vm3745, %v3499, %v3635
        %v3833 = vsel %vm3745, %v3501, %v3637
        %v3836 = vsel %vm3745, %v3503, %v3639
        %v3839 = vsel %vm3745, %v3505, %v3641
        %v3842 = vsel %vm3745, %v3507, %v3643
        %v3845 = vsel %vm3745, %v3509, %v3645
        %v3848 = vsel %vm3745, %v3511, %v3647
        %v3850 = vld [vmem:[%s9] sm:$0xf]
        %v3851 = vld [vmem:[%s9 + $0x4] sm:$0xf]
        %v3852 = vld [vmem:[%s9 + $0x8] sm:$0xf]
        %v3853 = vld [vmem:[%s9 + $0xc] sm:$0xf]
        %v3854 = vld [vmem:[%s9 + $0x10] sm:$0xf]
        %v3855 = vld [vmem:[%s9 + $0x14] sm:$0xf]
        %v3856 = vld [vmem:[%s9 + $0x18] sm:$0xf]
        %v3857 = vld [vmem:[%s9 + $0x1c] sm:$0xf]
        %v3858 = vld [vmem:[%s9 + $0x20] sm:$0xf]
        %v3859 = vld [vmem:[%s9 + $0x24] sm:$0xf]
        %v3860 = vld [vmem:[%s9 + $0x28] sm:$0xf]
        %v3861 = vld [vmem:[%s9 + $0x2c] sm:$0xf]
        %v3862 = vld [vmem:[%s9 + $0x30] sm:$0xf]
        %v3863 = vld [vmem:[%s9 + $0x34] sm:$0xf]
        %v3864 = vld [vmem:[%s9 + $0x38] sm:$0xf]
        %v3865 = vld [vmem:[%s9 + $0x3c] sm:$0xf]
        %v3866 = vld [vmem:[%s9 + $0x40] sm:$0xf]
        %v3867 = vld [vmem:[%s9 + $0x44] sm:$0xf]
        %v3868 = vld [vmem:[%s9 + $0x48] sm:$0xf]
        %v3869 = vld [vmem:[%s9 + $0x4c] sm:$0xf]
        %v3870 = vld [vmem:[%s9 + $0x50] sm:$0xf]
        %v3871 = vld [vmem:[%s9 + $0x54] sm:$0xf]
        %v3872 = vld [vmem:[%s9 + $0x58] sm:$0xf]
        %v3873 = vld [vmem:[%s9 + $0x5c] sm:$0xf]
        %v3874 = vld [vmem:[%s9 + $0x60] sm:$0xf]
        %v3875 = vld [vmem:[%s9 + $0x64] sm:$0xf]
        %v3876 = vld [vmem:[%s9 + $0x68] sm:$0xf]
        %v3877 = vld [vmem:[%s9 + $0x6c] sm:$0xf]
        %v3878 = vld [vmem:[%s9 + $0x70] sm:$0xf]
        %v3879 = vld [vmem:[%s9 + $0x74] sm:$0xf]
        %v3880 = vld [vmem:[%s9 + $0x78] sm:$0xf]
        %v3881 = vld [vmem:[%s9 + $0x7c] sm:$0xf]
        %v3882 = vld [vmem:[%s9 + $0x80] sm:$0xf]
        %v3883 = vld [vmem:[%s9 + $0x84] sm:$0xf]
        %v3884 = vld [vmem:[%s9 + $0x88] sm:$0xf]
        %v3885 = vld [vmem:[%s9 + $0x8c] sm:$0xf]
        %v3886 = vld [vmem:[%s9 + $0x90] sm:$0xf]
        %v3887 = vld [vmem:[%s9 + $0x94] sm:$0xf]
        %v3888 = vld [vmem:[%s9 + $0x98] sm:$0xf]
        %v3889 = vld [vmem:[%s9 + $0x9c] sm:$0xf]
        %v3890 = vld [vmem:[%s9 + $0xa0] sm:$0xf]
        %v3891 = vld [vmem:[%s9 + $0xa4] sm:$0xf]
        %v3892 = vld [vmem:[%s9 + $0xa8] sm:$0xf]
        %v3893 = vld [vmem:[%s9 + $0xac] sm:$0xf]
        %v3894 = vld [vmem:[%s9 + $0xb0] sm:$0xf]
        %v3895 = vld [vmem:[%s9 + $0xb4] sm:$0xf]
        %v3896 = vld [vmem:[%s9 + $0xb8] sm:$0xf]
        %v3897 = vld [vmem:[%s9 + $0xbc] sm:$0xf]
        %v3898 = vld [vmem:[%s9 + $0xc0] sm:$0xf]
        %v3899 = vld [vmem:[%s9 + $0xc4] sm:$0xf]
        %v3900 = vld [vmem:[%s9 + $0xc8] sm:$0xf]
        %v3901 = vld [vmem:[%s9 + $0xcc] sm:$0xf]
        %v3902 = vld [vmem:[%s9 + $0xd0] sm:$0xf]
        %v3903 = vld [vmem:[%s9 + $0xd4] sm:$0xf]
        %v3904 = vld [vmem:[%s9 + $0xd8] sm:$0xf]
        %v3905 = vld [vmem:[%s9 + $0xdc] sm:$0xf]
        %v3906 = vld [vmem:[%s9 + $0xe0] sm:$0xf]
        %v3907 = vld [vmem:[%s9 + $0xe4] sm:$0xf]
        %v3908 = vld [vmem:[%s9 + $0xe8] sm:$0xf]
        %v3909 = vld [vmem:[%s9 + $0xec] sm:$0xf]
        %v3910 = vld [vmem:[%s9 + $0xf0] sm:$0xf]
        %v3911 = vld [vmem:[%s9 + $0xf4] sm:$0xf]
        %v3912 = vld [vmem:[%s9 + $0xf8] sm:$0xf]
        %v3913 = vld [vmem:[%s9 + $0xfc] sm:$0xf]
        %v3914 = vld [vmem:[%s9 + $0x100] sm:$0xf]
        %v3915 = vld [vmem:[%s9 + $0x104] sm:$0xf]
        %v3916 = vld [vmem:[%s9 + $0x108] sm:$0xf]
        %v3917 = vld [vmem:[%s9 + $0x10c] sm:$0xf]
        %v3918 = vld [vmem:[%s9 + $0x110] sm:$0xf]
        %v3919 = vld [vmem:[%s9 + $0x114] sm:$0xf]
        %v3920 = vld [vmem:[%s9 + $0x118] sm:$0xf]
        %v3921 = vld [vmem:[%s9 + $0x11c] sm:$0xf]
        %v3922 = vld [vmem:[%s9 + $0x120] sm:$0xf]
        %v3923 = vld [vmem:[%s9 + $0x124] sm:$0xf]
        %v3924 = vld [vmem:[%s9 + $0x128] sm:$0xf]
        %v3925 = vld [vmem:[%s9 + $0x12c] sm:$0xf]
        %v3926 = vld [vmem:[%s9 + $0x130] sm:$0xf]
        %v3927 = vld [vmem:[%s9 + $0x134] sm:$0xf]
        %v3928 = vld [vmem:[%s9 + $0x138] sm:$0xf]
        %v3929 = vld [vmem:[%s9 + $0x13c] sm:$0xf]
        %v3930 = vld [vmem:[%s9 + $0x140] sm:$0xf]
        %v3931 = vld [vmem:[%s9 + $0x144] sm:$0xf]
        %v3932 = vld [vmem:[%s9 + $0x148] sm:$0xf]
        %v3933 = vld [vmem:[%s9 + $0x14c] sm:$0xf]
        %v3934 = vld [vmem:[%s9 + $0x150] sm:$0xf]
        %v3935 = vld [vmem:[%s9 + $0x154] sm:$0xf]
        %v3936 = vld [vmem:[%s9 + $0x158] sm:$0xf]
        %v3937 = vld [vmem:[%s9 + $0x15c] sm:$0xf]
        %v3938 = vld [vmem:[%s9 + $0x160] sm:$0xf]
        %v3939 = vld [vmem:[%s9 + $0x164] sm:$0xf]
        %v3940 = vld [vmem:[%s9 + $0x168] sm:$0xf]
        %v3941 = vld [vmem:[%s9 + $0x16c] sm:$0xf]
        %v3942 = vld [vmem:[%s9 + $0x170] sm:$0xf]
        %v3943 = vld [vmem:[%s9 + $0x174] sm:$0xf]
        %v3944 = vld [vmem:[%s9 + $0x178] sm:$0xf]
        %v3945 = vld [vmem:[%s9 + $0x17c] sm:$0xf]
        %v3946 = vld [vmem:[%s9 + $0x180] sm:$0xf]
        %v3947 = vld [vmem:[%s9 + $0x184] sm:$0xf]
        %v3948 = vld [vmem:[%s9 + $0x188] sm:$0xf]
        %v3949 = vld [vmem:[%s9 + $0x18c] sm:$0xf]
        %v3950 = vld [vmem:[%s9 + $0x190] sm:$0xf]
        %v3951 = vld [vmem:[%s9 + $0x194] sm:$0xf]
        %v3952 = vld [vmem:[%s9 + $0x198] sm:$0xf]
        %v3953 = vld [vmem:[%s9 + $0x19c] sm:$0xf]
        %v3954 = vld [vmem:[%s9 + $0x1a0] sm:$0xf]
        %v3955 = vld [vmem:[%s9 + $0x1a4] sm:$0xf]
        %v3956 = vld [vmem:[%s9 + $0x1a8] sm:$0xf]
        %v3957 = vld [vmem:[%s9 + $0x1ac] sm:$0xf]
        %v3958 = vld [vmem:[%s10] sm:$0x1]
        %v3960 = vperm.slane %v3958, 0
        %v4070 = vunpack.c.l.b16 %v3850
        %v4071 = vunpack.c.l.b16 %v3851
        %v4072 = vunpack.c.l.b16 %v3852
        %v4073 = vunpack.c.l.b16 %v3853
        %v4074 = vunpack.c.l.b16 %v3854
        %v4075 = vunpack.c.l.b16 %v3855
        %v4076 = vunpack.c.l.b16 %v3856
        %v4077 = vunpack.c.l.b16 %v3857
        %v4078 = vunpack.c.l.b16 %v3858
        %v4079 = vunpack.c.l.b16 %v3859
        %v4080 = vunpack.c.l.b16 %v3860
        %v4081 = vunpack.c.l.b16 %v3861
        %v4082 = vunpack.c.l.b16 %v3862
        %v4083 = vunpack.c.l.b16 %v3863
        %v4084 = vunpack.c.l.b16 %v3864
        %v4085 = vunpack.c.l.b16 %v3865
        %v4086 = vunpack.c.l.b16 %v3866
        %v4087 = vunpack.c.l.b16 %v3867
        %v4088 = vunpack.c.l.b16 %v3868
        %v4089 = vunpack.c.l.b16 %v3869
        %v4090 = vunpack.c.l.b16 %v3870
        %v4091 = vunpack.c.l.b16 %v3871
        %v4092 = vunpack.c.l.b16 %v3872
        %v4093 = vunpack.c.l.b16 %v3873
        %v4094 = vunpack.c.l.b16 %v3874
        %v4095 = vunpack.c.l.b16 %v3875
        %v4096 = vunpack.c.l.b16 %v3876
        %v4097 = vunpack.c.l.b16 %v3877
        %v4098 = vunpack.c.l.b16 %v3878
        %v4099 = vunpack.c.l.b16 %v3879
        %v4100 = vunpack.c.l.b16 %v3880
        %v4101 = vunpack.c.l.b16 %v3881
        %v4102 = vunpack.c.l.b16 %v3882
        %v4103 = vunpack.c.l.b16 %v3883
        %v4104 = vunpack.c.l.b16 %v3884
        %v4105 = vunpack.c.l.b16 %v3885
        %v4106 = vunpack.c.l.b16 %v3886
        %v4107 = vunpack.c.l.b16 %v3887
        %v4108 = vunpack.c.l.b16 %v3888
        %v4109 = vunpack.c.l.b16 %v3889
        %v4110 = vunpack.c.l.b16 %v3890
        %v4111 = vunpack.c.l.b16 %v3891
        %v4112 = vunpack.c.l.b16 %v3892
        %v4113 = vunpack.c.l.b16 %v3893
        %v4114 = vunpack.c.l.b16 %v3894
        %v4115 = vunpack.c.l.b16 %v3895
        %v4116 = vunpack.c.l.b16 %v3896
        %v4117 = vunpack.c.l.b16 %v3897
        %v4118 = vunpack.c.l.b16 %v3898
        %v4119 = vunpack.c.l.b16 %v3899
        %v4120 = vunpack.c.l.b16 %v3900
        %v4121 = vunpack.c.l.b16 %v3901
        %v4122 = vunpack.c.l.b16 %v3902
        %v4123 = vunpack.c.l.b16 %v3903
        %v4124 = vunpack.c.l.b16 %v3904
        %v4125 = vunpack.c.l.b16 %v3905
        %v4126 = vunpack.c.l.b16 %v3906
        %v4127 = vunpack.c.l.b16 %v3907
        %v4128 = vunpack.c.l.b16 %v3908
        %v4129 = vunpack.c.l.b16 %v3909
        %v4130 = vunpack.c.l.b16 %v3910
        %v4131 = vunpack.c.l.b16 %v3911
        %v4132 = vunpack.c.l.b16 %v3912
        %v4133 = vunpack.c.l.b16 %v3913
        %v4134 = vunpack.c.l.b16 %v3914
        %v4135 = vunpack.c.l.b16 %v3915
        %v4136 = vunpack.c.l.b16 %v3916
        %v4137 = vunpack.c.l.b16 %v3917
        %v4138 = vunpack.c.l.b16 %v3918
        %v4139 = vunpack.c.l.b16 %v3919
        %v4140 = vunpack.c.l.b16 %v3920
        %v4141 = vunpack.c.l.b16 %v3921
        %v4142 = vunpack.c.l.b16 %v3922
        %v4143 = vunpack.c.l.b16 %v3923
        %v4144 = vunpack.c.l.b16 %v3924
        %v4145 = vunpack.c.l.b16 %v3925
        %v4146 = vunpack.c.l.b16 %v3926
        %v4147 = vunpack.c.l.b16 %v3927
        %v4148 = vunpack.c.l.b16 %v3928
        %v4149 = vunpack.c.l.b16 %v3929
        %v4150 = vunpack.c.l.b16 %v3930
        %v4151 = vunpack.c.l.b16 %v3931
        %v4152 = vunpack.c.l.b16 %v3932
        %v4153 = vunpack.c.l.b16 %v3933
        %v4154 = vunpack.c.l.b16 %v3934
        %v4155 = vunpack.c.l.b16 %v3935
        %v4156 = vunpack.c.l.b16 %v3936
        %v4157 = vunpack.c.l.b16 %v3937
        %v4158 = vunpack.c.l.b16 %v3938
        %v4159 = vunpack.c.l.b16 %v3939
        %v4160 = vunpack.c.l.b16 %v3940
        %v4161 = vunpack.c.l.b16 %v3941
        %v4162 = vunpack.c.l.b16 %v3942
        %v4163 = vunpack.c.l.b16 %v3943
        %v4164 = vunpack.c.l.b16 %v3944
        %v4165 = vunpack.c.l.b16 %v3945
        %v4166 = vunpack.c.l.b16 %v3946
        %v4167 = vunpack.c.l.b16 %v3947
        %v4168 = vunpack.c.l.b16 %v3948
        %v4169 = vunpack.c.l.b16 %v3949
        %v4170 = vunpack.c.l.b16 %v3950
        %v4171 = vunpack.c.l.b16 %v3951
        %v4172 = vunpack.c.l.b16 %v3952
        %v4173 = vunpack.c.l.b16 %v3953
        %v4174 = vunpack.c.l.b16 %v3954
        %v4175 = vunpack.c.l.b16 %v3955
        %v4176 = vunpack.c.l.b16 %v3956
        %v4177 = vunpack.c.l.b16 %v3957
        %v4178 = vpack.c.b16 %v4071, %v4070
        %v4179 = vpack.c.b16 %v4073, %v4072
        %v4180 = vpack.c.b16 %v4075, %v4074
        %v4181 = vpack.c.b16 %v4077, %v4076
        %v4182 = vpack.c.b16 %v4079, %v4078
        %v4183 = vpack.c.b16 %v4081, %v4080
        %v4184 = vpack.c.b16 %v4083, %v4082
        %v4185 = vpack.c.b16 %v4085, %v4084
        %v4186 = vpack.c.b16 %v4087, %v4086
        %v4187 = vpack.c.b16 %v4089, %v4088
        %v4188 = vpack.c.b16 %v4091, %v4090
        %v4189 = vpack.c.b16 %v4093, %v4092
        %v4190 = vpack.c.b16 %v4095, %v4094
        %v4191 = vpack.c.b16 %v4097, %v4096
        %v4192 = vpack.c.b16 %v4099, %v4098
        %v4193 = vpack.c.b16 %v4101, %v4100
        %v4194 = vpack.c.b16 %v4103, %v4102
        %v4195 = vpack.c.b16 %v4105, %v4104
        %v4196 = vpack.c.b16 %v4107, %v4106
        %v4197 = vpack.c.b16 %v4109, %v4108
        %v4198 = vpack.c.b16 %v4111, %v4110
        %v4199 = vpack.c.b16 %v4113, %v4112
        %v4200 = vpack.c.b16 %v4115, %v4114
        %v4201 = vpack.c.b16 %v4117, %v4116
        %v4202 = vpack.c.b16 %v4119, %v4118
        %v4203 = vpack.c.b16 %v4121, %v4120
        %v4204 = vpack.c.b16 %v4123, %v4122
        %v4205 = vpack.c.b16 %v4125, %v4124
        %v4206 = vpack.c.b16 %v4127, %v4126
        %v4207 = vpack.c.b16 %v4129, %v4128
        %v4208 = vpack.c.b16 %v4131, %v4130
        %v4209 = vpack.c.b16 %v4133, %v4132
        %v4210 = vpack.c.b16 %v4135, %v4134
        %v4211 = vpack.c.b16 %v4137, %v4136
        %v4212 = vpack.c.b16 %v4139, %v4138
        %v4213 = vpack.c.b16 %v4141, %v4140
        %v4214 = vpack.c.b16 %v4143, %v4142
        %v4215 = vpack.c.b16 %v4145, %v4144
        %v4216 = vpack.c.b16 %v4147, %v4146
        %v4217 = vpack.c.b16 %v4149, %v4148
        %v4218 = vpack.c.b16 %v4151, %v4150
        %v4219 = vpack.c.b16 %v4153, %v4152
        %v4220 = vpack.c.b16 %v4155, %v4154
        %v4221 = vpack.c.b16 %v4157, %v4156
        %v4222 = vpack.c.b16 %v4159, %v4158
        %v4223 = vpack.c.b16 %v4161, %v4160
        %v4224 = vpack.c.b16 %v4163, %v4162
        %v4225 = vpack.c.b16 %v4165, %v4164
        %v4226 = vpack.c.b16 %v4167, %v4166
        %v4227 = vpack.c.b16 %v4169, %v4168
        %v4228 = vpack.c.b16 %v4171, %v4170
        %v4229 = vpack.c.b16 %v4173, %v4172
        %v4230 = vpack.c.b16 %v4175, %v4174
        %v4231 = vpack.c.b16 %v4177, %v4176
        %v4287 = vsel %vm3696, %v3674, 0
        %v4290 = vsel %vm3696, %v3677, 0
        %v4293 = vsel %vm3696, %v3680, 0
        %v4296 = vsel %vm3696, %v3683, 0
        %v4299 = vsel %vm3696, %v3686, 0
        %v4302 = vsel %vm3696, %v3689, 0
        %v4305 = vsel %vm3696, %v3692, 0
        %v4308 = vsel %vm3696, %v3695, 0
        %4310 = vmatpush.bf16.msra.mxu0 %v4185
        %4311 = vmatpush.bf16.msra.mxu0 %v4184
        %4312 = vmatpush.bf16.msra.mxu0 %v4183
        %4313 = vmatpush.bf16.msra.mxu0 %v4182
        %4314 = vmatpush.bf16.msra.mxu0 %v4181
        %4315 = vmatpush.bf16.msra.mxu0 %v4180
        %4316 = vmatpush.bf16.msra.mxu0 %v4179
        %4317 = vmatpush.bf16.msra.mxu0 %v4178
        %4318 = vmatmul.bf16.gmra.mxu0 %v3698
        %v4319 = vpop.f32.mrf.mxu0
        %v4320 = vadd.f32 %v3960, %v4319
        %v4321 = vpop.f32.mrf.mxu0
        %v4322 = vadd.f32 %v3960, %v4321
        %4323 = vmatmul.bf16.gmra.mxu0 %v3701
        %v4324 = vpop.f32.mrf.mxu0
        %v4325 = vadd.f32 %v3960, %v4324
        %v4326 = vpop.f32.mrf.mxu0
        %v4327 = vadd.f32 %v3960, %v4326
        %4328 = vmatmul.bf16.gmra.mxu0 %v3704
        %v4329 = vpop.f32.mrf.mxu0
        %v4330 = vadd.f32 %v3960, %v4329
        %v4331 = vpop.f32.mrf.mxu0
        %v4332 = vadd.f32 %v3960, %v4331
        %4333 = vmatmul.bf16.gmra.mxu0 %v3707
        %v4334 = vpop.f32.mrf.mxu0
        %v4335 = vadd.f32 %v3960, %v4334
        %v4336 = vpop.f32.mrf.mxu0
        %v4337 = vadd.f32 %v3960, %v4336
        %4338 = vmatmul.bf16.gmra.mxu0 %v3710
        %v4339 = vpop.f32.mrf.mxu0
        %v4340 = vadd.f32 %v3960, %v4339
        %v4341 = vpop.f32.mrf.mxu0
        %v4342 = vadd.f32 %v3960, %v4341
        %4343 = vmatmul.bf16.gmra.mxu0 %v3713
        %v4344 = vpop.f32.mrf.mxu0
        %v4345 = vadd.f32 %v3960, %v4344
        %v4346 = vpop.f32.mrf.mxu0
        %v4347 = vadd.f32 %v3960, %v4346
        %4348 = vmatmul.bf16.gmra.mxu0 %v3716
        %v4349 = vpop.f32.mrf.mxu0
        %v4350 = vadd.f32 %v3960, %v4349
        %v4351 = vpop.f32.mrf.mxu0
        %v4352 = vadd.f32 %v3960, %v4351
        %4353 = vmatmul.bf16.gmra.mxu0 %v3719
        %v4354 = vpop.f32.mrf.mxu0
        %v4355 = vadd.f32 %v3960, %v4354
        %v4356 = vpop.f32.mrf.mxu0
        %v4357 = vadd.f32 %v3960, %v4356
        %4358 = vdwg.mxu0
        %4359 = vmatpush.bf16.msra.mxu0 %v4193
        %4360 = vmatpush.bf16.msra.mxu0 %v4192
        %4361 = vmatpush.bf16.msra.mxu0 %v4191
        %4362 = vmatpush.bf16.msra.mxu0 %v4190
        %4363 = vmatpush.bf16.msra.mxu0 %v4189
        %4364 = vmatpush.bf16.msra.mxu0 %v4188
        %4365 = vmatpush.bf16.msra.mxu0 %v4187
        %4366 = vmatpush.bf16.msra.mxu0 %v4186
        %4367 = vmatmul.bf16.gmra.mxu0 %v3722
        %v4368 = vpop.f32.mrf.mxu0
        %v4369 = vadd.f32 %v4320, %v4368
        %v4370 = vpop.f32.mrf.mxu0
        %v4371 = vadd.f32 %v4322, %v4370
        %4372 = vmatmul.bf16.gmra.mxu0 %v3725
        %v4373 = vpop.f32.mrf.mxu0
        %v4374 = vadd.f32 %v4325, %v4373
        %v4375 = vpop.f32.mrf.mxu0
        %v4376 = vadd.f32 %v4327, %v4375
        %4377 = vmatmul.bf16.gmra.mxu0 %v3728
        %v4378 = vpop.f32.mrf.mxu0
        %v4379 = vadd.f32 %v4330, %v4378
        %v4380 = vpop.f32.mrf.mxu0
        %v4381 = vadd.f32 %v4332, %v4380
        %4382 = vmatmul.bf16.gmra.mxu0 %v3731
        %v4383 = vpop.f32.mrf.mxu0
        %v4384 = vadd.f32 %v4335, %v4383
        %v4385 = vpop.f32.mrf.mxu0
        %v4386 = vadd.f32 %v4337, %v4385
        %4387 = vmatmul.bf16.gmra.mxu0 %v3734
        %v4388 = vpop.f32.mrf.mxu0
        %v4389 = vadd.f32 %v4340, %v4388
        %v4390 = vpop.f32.mrf.mxu0
        %v4391 = vadd.f32 %v4342, %v4390
        %4392 = vmatmul.bf16.gmra.mxu0 %v3737
        %v4393 = vpop.f32.mrf.mxu0
        %v4394 = vadd.f32 %v4345, %v4393
        %v4395 = vpop.f32.mrf.mxu0
        %v4396 = vadd.f32 %v4347, %v4395
        %4397 = vmatmul.bf16.gmra.mxu0 %v3740
        %v4398 = vpop.f32.mrf.mxu0
        %v4399 = vadd.f32 %v4350, %v4398
        %v4400 = vpop.f32.mrf.mxu0
        %v4401 = vadd.f32 %v4352, %v4400
        %4402 = vmatmul.bf16.gmra.mxu0 %v3743
        %v4403 = vpop.f32.mrf.mxu0
        %v4404 = vadd.f32 %v4355, %v4403
        %v4405 = vpop.f32.mrf.mxu0
        %v4406 = vadd.f32 %v4357, %v4405
        %4407 = vdwg.mxu0
        %4408 = vmatpush.bf16.msra.mxu0 %v4201
        %4409 = vmatpush.bf16.msra.mxu0 %v4200
        %4410 = vmatpush.bf16.msra.mxu0 %v4199
        %4411 = vmatpush.bf16.msra.mxu0 %v4198
        %4412 = vmatpush.bf16.msra.mxu0 %v4197
        %4413 = vmatpush.bf16.msra.mxu0 %v4196
        %4414 = vmatpush.bf16.msra.mxu0 %v4195
        %4415 = vmatpush.bf16.msra.mxu0 %v4194
        %4416 = vmatmul.bf16.gmra.mxu0 %v3747
        %v4417 = vpop.f32.mrf.mxu0
        %v4418 = vadd.f32 %v4369, %v4417
        %v4419 = vpop.f32.mrf.mxu0
        %v4420 = vadd.f32 %v4371, %v4419
        %4421 = vmatmul.bf16.gmra.mxu0 %v3750
        %v4422 = vpop.f32.mrf.mxu0
        %v4423 = vadd.f32 %v4374, %v4422
        %v4424 = vpop.f32.mrf.mxu0
        %v4425 = vadd.f32 %v4376, %v4424
        %4426 = vmatmul.bf16.gmra.mxu0 %v3753
        %v4427 = vpop.f32.mrf.mxu0
        %v4428 = vadd.f32 %v4379, %v4427
        %v4429 = vpop.f32.mrf.mxu0
        %v4430 = vadd.f32 %v4381, %v4429
        %4431 = vmatmul.bf16.gmra.mxu0 %v3756
        %v4432 = vpop.f32.mrf.mxu0
        %v4433 = vadd.f32 %v4384, %v4432
        %v4434 = vpop.f32.mrf.mxu0
        %v4435 = vadd.f32 %v4386, %v4434
        %4436 = vmatmul.bf16.gmra.mxu0 %v3759
        %v4437 = vpop.f32.mrf.mxu0
        %v4438 = vadd.f32 %v4389, %v4437
        %v4439 = vpop.f32.mrf.mxu0
        %v4440 = vadd.f32 %v4391, %v4439
        %4441 = vmatmul.bf16.gmra.mxu0 %v3762
        %v4442 = vpop.f32.mrf.mxu0
        %v4443 = vadd.f32 %v4394, %v4442
        %v4444 = vpop.f32.mrf.mxu0
        %v4445 = vadd.f32 %v4396, %v4444
        %4446 = vmatmul.bf16.gmra.mxu0 %v3765
        %v4447 = vpop.f32.mrf.mxu0
        %v4448 = vadd.f32 %v4399, %v4447
        %v4449 = vpop.f32.mrf.mxu0
        %v4450 = vadd.f32 %v4401, %v4449
        %4451 = vmatmul.bf16.gmra.mxu0 %v3768
        %v4452 = vpop.f32.mrf.mxu0
        %v4453 = vadd.f32 %v4404, %v4452
        %v4454 = vpop.f32.mrf.mxu0
        %v4455 = vadd.f32 %v4406, %v4454
        %4456 = vdwg.mxu0
        %4457 = vmatpush.bf16.msra.mxu0 %v4209
        %4458 = vmatpush.bf16.msra.mxu0 %v4208
        %4459 = vmatpush.bf16.msra.mxu0 %v4207
        %4460 = vmatpush.bf16.msra.mxu0 %v4206
        %4461 = vmatpush.bf16.msra.mxu0 %v4205
        %4462 = vmatpush.bf16.msra.mxu0 %v4204
        %4463 = vmatpush.bf16.msra.mxu0 %v4203
        %4464 = vmatpush.bf16.msra.mxu0 %v4202
        %4465 = vmatmul.bf16.gmra.mxu0 %v3772
        %v4466 = vpop.f32.mrf.mxu0
        %v4467 = vadd.f32 %v4418, %v4466
        %v4468 = vpop.f32.mrf.mxu0
        %v4469 = vadd.f32 %v4420, %v4468
        %4470 = vmatmul.bf16.gmra.mxu0 %v3776
        %v4471 = vpop.f32.mrf.mxu0
        %v4472 = vadd.f32 %v4423, %v4471
        %v4473 = vpop.f32.mrf.mxu0
        %v4474 = vadd.f32 %v4425, %v4473
        %4475 = vmatmul.bf16.gmra.mxu0 %v3780
        %v4476 = vpop.f32.mrf.mxu0
        %v4477 = vadd.f32 %v4428, %v4476
        %v4478 = vpop.f32.mrf.mxu0
        %v4479 = vadd.f32 %v4430, %v4478
        %4480 = vmatmul.bf16.gmra.mxu0 %v3784
        %v4481 = vpop.f32.mrf.mxu0
        %v4482 = vadd.f32 %v4433, %v4481
        %v4483 = vpop.f32.mrf.mxu0
        %v4484 = vadd.f32 %v4435, %v4483
        %4485 = vmatmul.bf16.gmra.mxu0 %v3788
        %v4486 = vpop.f32.mrf.mxu0
        %v4487 = vadd.f32 %v4438, %v4486
        %v4488 = vpop.f32.mrf.mxu0
        %v4489 = vadd.f32 %v4440, %v4488
        %4490 = vmatmul.bf16.gmra.mxu0 %v3792
        %v4491 = vpop.f32.mrf.mxu0
        %v4492 = vadd.f32 %v4443, %v4491
        %v4493 = vpop.f32.mrf.mxu0
        %v4494 = vadd.f32 %v4445, %v4493
        %4495 = vmatmul.bf16.gmra.mxu0 %v3796
        %v4496 = vpop.f32.mrf.mxu0
        %v4497 = vadd.f32 %v4448, %v4496
        %v4498 = vpop.f32.mrf.mxu0
        %v4499 = vadd.f32 %v4450, %v4498
        %4500 = vmatmul.bf16.gmra.mxu0 %v3800
        %v4501 = vpop.f32.mrf.mxu0
        %v4502 = vadd.f32 %v4453, %v4501
        %v4503 = vpop.f32.mrf.mxu0
        %v4504 = vadd.f32 %v4455, %v4503
        %4505 = vdwg.mxu0
        %4506 = vmatpush.bf16.msra.mxu0 %v4217
        %4507 = vmatpush.bf16.msra.mxu0 %v4216
        %4508 = vmatpush.bf16.msra.mxu0 %v4215
        %4509 = vmatpush.bf16.msra.mxu0 %v4214
        %4510 = vmatpush.bf16.msra.mxu0 %v4213
        %4511 = vmatpush.bf16.msra.mxu0 %v4212
        %4512 = vmatpush.bf16.msra.mxu0 %v4211
        %4513 = vmatpush.bf16.msra.mxu0 %v4210
        %4514 = vmatmul.bf16.gmra.mxu0 %v3803
        %v4515 = vpop.f32.mrf.mxu0
        %v4516 = vadd.f32 %v4467, %v4515
        %v4517 = vpop.f32.mrf.mxu0
        %v4518 = vadd.f32 %v4469, %v4517
        %4519 = vmatmul.bf16.gmra.mxu0 %v3806
        %v4520 = vpop.f32.mrf.mxu0
        %v4521 = vadd.f32 %v4472, %v4520
        %v4522 = vpop.f32.mrf.mxu0
        %v4523 = vadd.f32 %v4474, %v4522
        %4524 = vmatmul.bf16.gmra.mxu0 %v3809
        %v4525 = vpop.f32.mrf.mxu0
        %v4526 = vadd.f32 %v4477, %v4525
        %v4527 = vpop.f32.mrf.mxu0
        %v4528 = vadd.f32 %v4479, %v4527
        %4529 = vmatmul.bf16.gmra.mxu0 %v3812
        %v4530 = vpop.f32.mrf.mxu0
        %v4531 = vadd.f32 %v4482, %v4530
        %v4532 = vpop.f32.mrf.mxu0
        %v4533 = vadd.f32 %v4484, %v4532
        %4534 = vmatmul.bf16.gmra.mxu0 %v3815
        %v4535 = vpop.f32.mrf.mxu0
        %v4536 = vadd.f32 %v4487, %v4535
        %v4537 = vpop.f32.mrf.mxu0
        %v4538 = vadd.f32 %v4489, %v4537
        %4539 = vmatmul.bf16.gmra.mxu0 %v3818
        %v4540 = vpop.f32.mrf.mxu0
        %v4541 = vadd.f32 %v4492, %v4540
        %v4542 = vpop.f32.mrf.mxu0
        %v4543 = vadd.f32 %v4494, %v4542
        %4544 = vmatmul.bf16.gmra.mxu0 %v3821
        %v4545 = vpop.f32.mrf.mxu0
        %v4546 = vadd.f32 %v4497, %v4545
        %v4547 = vpop.f32.mrf.mxu0
        %v4548 = vadd.f32 %v4499, %v4547
        %4549 = vmatmul.bf16.gmra.mxu0 %v3824
        %v4550 = vpop.f32.mrf.mxu0
        %v4551 = vadd.f32 %v4502, %v4550
        %v4552 = vpop.f32.mrf.mxu0
        %v4553 = vadd.f32 %v4504, %v4552
        %4554 = vdwg.mxu0
        %4555 = vmatpush.bf16.msra.mxu0 %v4225
        %4556 = vmatpush.bf16.msra.mxu0 %v4224
        %4557 = vmatpush.bf16.msra.mxu0 %v4223
        %4558 = vmatpush.bf16.msra.mxu0 %v4222
        %4559 = vmatpush.bf16.msra.mxu0 %v4221
        %4560 = vmatpush.bf16.msra.mxu0 %v4220
        %4561 = vmatpush.bf16.msra.mxu0 %v4219
        %4562 = vmatpush.bf16.msra.mxu0 %v4218
        %4563 = vmatmul.bf16.gmra.mxu0 %v3827
        %v4564 = vpop.f32.mrf.mxu0
        %v4565 = vadd.f32 %v4516, %v4564
        %v4566 = vpop.f32.mrf.mxu0
        %v4567 = vadd.f32 %v4518, %v4566
        %4568 = vmatmul.bf16.gmra.mxu0 %v3830
        %v4569 = vpop.f32.mrf.mxu0
        %v4570 = vadd.f32 %v4521, %v4569
        %v4571 = vpop.f32.mrf.mxu0
        %v4572 = vadd.f32 %v4523, %v4571
        %4573 = vmatmul.bf16.gmra.mxu0 %v3833
        %v4574 = vpop.f32.mrf.mxu0
        %v4575 = vadd.f32 %v4526, %v4574
        %v4576 = vpop.f32.mrf.mxu0
        %v4577 = vadd.f32 %v4528, %v4576
        %4578 = vmatmul.bf16.gmra.mxu0 %v3836
        %v4579 = vpop.f32.mrf.mxu0
        %v4580 = vadd.f32 %v4531, %v4579
        %v4581 = vpop.f32.mrf.mxu0
        %v4582 = vadd.f32 %v4533, %v4581
        %4583 = vmatmul.bf16.gmra.mxu0 %v3839
        %v4584 = vpop.f32.mrf.mxu0
        %v4585 = vadd.f32 %v4536, %v4584
        %v4586 = vpop.f32.mrf.mxu0
        %v4587 = vadd.f32 %v4538, %v4586
        %4588 = vmatmul.bf16.gmra.mxu0 %v3842
        %v4589 = vpop.f32.mrf.mxu0
        %v4590 = vadd.f32 %v4541, %v4589
        %v4591 = vpop.f32.mrf.mxu0
        %v4592 = vadd.f32 %v4543, %v4591
        %4593 = vmatmul.bf16.gmra.mxu0 %v3845
        %v4594 = vpop.f32.mrf.mxu0
        %v4595 = vadd.f32 %v4546, %v4594
        %v4596 = vpop.f32.mrf.mxu0
        %v4597 = vadd.f32 %v4548, %v4596
        %4598 = vmatmul.bf16.gmra.mxu0 %v3848
        %v4599 = vpop.f32.mrf.mxu0
        %v4600 = vadd.f32 %v4551, %v4599
        %v4601 = vpop.f32.mrf.mxu0
        %v4602 = vadd.f32 %v4553, %v4601
        %4603 = vdwg.mxu0
        %4604 = vmatpush.bf16.msra.mxu0 0
        %4605 = vmatpush.bf16.msra.mxu0 0
        %4606 = vmatpush.bf16.msra.mxu0 %v4231
        %4607 = vmatpush.bf16.msra.mxu0 %v4230
        %4608 = vmatpush.bf16.msra.mxu0 %v4229
        %4609 = vmatpush.bf16.msra.mxu0 %v4228
        %4610 = vmatpush.bf16.msra.mxu0 %v4227
        %4611 = vmatpush.bf16.msra.mxu0 %v4226
        %4612 = vmatmul.bf16.gmra.mxu0 %v4287
        %v4613 = vpop.f32.mrf.mxu0
        %v4614 = vadd.f32 %v4565, %v4613
        %v4615 = vpop.f32.mrf.mxu0
        %v4616 = vadd.f32 %v4567, %v4615
        %4617 = vmatmul.bf16.gmra.mxu0 %v4290
        %v4618 = vpop.f32.mrf.mxu0
        %v4619 = vadd.f32 %v4570, %v4618
        %v4620 = vpop.f32.mrf.mxu0
        %v4621 = vadd.f32 %v4572, %v4620
        %4622 = vmatmul.bf16.gmra.mxu0 %v4293
        %v4623 = vpop.f32.mrf.mxu0
        %v4624 = vadd.f32 %v4575, %v4623
        %v4625 = vpop.f32.mrf.mxu0
        %v4626 = vadd.f32 %v4577, %v4625
        %4627 = vmatmul.bf16.gmra.mxu0 %v4296
        %v4628 = vpop.f32.mrf.mxu0
        %v4629 = vadd.f32 %v4580, %v4628
        %v4630 = vpop.f32.mrf.mxu0
        %v4631 = vadd.f32 %v4582, %v4630
        %4632 = vmatmul.bf16.gmra.mxu0 %v4299
        %v4633 = vpop.f32.mrf.mxu0
        %v4634 = vadd.f32 %v4585, %v4633
        %v4635 = vpop.f32.mrf.mxu0
        %v4636 = vadd.f32 %v4587, %v4635
        %4637 = vmatmul.bf16.gmra.mxu0 %v4302
        %v4638 = vpop.f32.mrf.mxu0
        %v4639 = vadd.f32 %v4590, %v4638
        %v4640 = vpop.f32.mrf.mxu0
        %v4641 = vadd.f32 %v4592, %v4640
        %4642 = vmatmul.bf16.gmra.mxu0 %v4305
        %v4643 = vpop.f32.mrf.mxu0
        %v4644 = vadd.f32 %v4595, %v4643
        %v4645 = vpop.f32.mrf.mxu0
        %v4646 = vadd.f32 %v4597, %v4645
        %4647 = vmatmul.bf16.gmra.mxu0 %v4308
        %v4648 = vpop.f32.mrf.mxu0
        %v4649 = vadd.f32 %v4600, %v4648
        %v4650 = vpop.f32.mrf.mxu0
        %v4651 = vadd.f32 %v4602, %v4650
        %4652 = vdwg.mxu0
        %v4653 = vmax.f32 %v4614, 0.0
        %v4654 = vmax.f32 %v4616, 0.0
        %v4655 = vmax.f32 %v4619, 0.0
        %v4656 = vmax.f32 %v4621, 0.0
        %v4657 = vmax.f32 %v4624, 0.0
        %v4658 = vmax.f32 %v4626, 0.0
        %v4659 = vmax.f32 %v4629, 0.0
        %v4660 = vmax.f32 %v4631, 0.0
        %v4661 = vmax.f32 %v4634, 0.0
        %v4662 = vmax.f32 %v4636, 0.0
        %v4663 = vmax.f32 %v4639, 0.0
        %v4664 = vmax.f32 %v4641, 0.0
        %v4665 = vmax.f32 %v4644, 0.0
        %v4666 = vmax.f32 %v4646, 0.0
        %v4667 = vmax.f32 %v4649, 0.0
        %v4668 = vmax.f32 %v4651, 0.0
        %4685 = vrot.lane.b32.xlu0 %v1374, 96
        %v4686 = vpop.permute.xlu0 %4685
        %4687 = vrot.lane.b32.xlu0 %v1375, 96
        %v4688 = vpop.permute.xlu0 %4687
        %4689 = vrot.lane.b32.xlu0 %v1376, 96
        %v4690 = vpop.permute.xlu0 %4689
        %4691 = vrot.lane.b32.xlu0 %v1377, 96
        %v4692 = vpop.permute.xlu0 %4691
        %4693 = vrot.lane.b32.xlu0 %v1378, 96
        %v4694 = vpop.permute.xlu0 %4693
        %4695 = vrot.lane.b32.xlu0 %v1379, 96
        %v4696 = vpop.permute.xlu0 %4695
        %4697 = vrot.lane.b32.xlu0 %v1380, 96
        %v4698 = vpop.permute.xlu0 %4697
        %4699 = vrot.lane.b32.xlu0 %v1381, 96
        %v4700 = vpop.permute.xlu0 %4699
        %4701 = vrot.lane.b32.xlu0 %v1382, 96
        %v4702 = vpop.permute.xlu0 %4701
        %4703 = vrot.lane.b32.xlu0 %v1383, 96
        %v4704 = vpop.permute.xlu0 %4703
        %4705 = vrot.lane.b32.xlu0 %v1384, 96
        %v4706 = vpop.permute.xlu0 %4705
        %4707 = vrot.lane.b32.xlu0 %v1385, 96
        %v4708 = vpop.permute.xlu0 %4707
        %4709 = vrot.lane.b32.xlu0 %v1386, 96
        %v4710 = vpop.permute.xlu0 %4709
        %4711 = vrot.lane.b32.xlu0 %v1387, 96
        %v4712 = vpop.permute.xlu0 %4711
        %4713 = vrot.lane.b32.xlu0 %v1388, 96
        %v4714 = vpop.permute.xlu0 %4713
        %4715 = vrot.lane.b32.xlu0 %v1389, 96
        %v4716 = vpop.permute.xlu0 %4715
        %4749 = vrot.lane.b32.xlu0 %v2858, 64
        %v4750 = vpop.permute.xlu0 %4749
        %4751 = vrot.lane.b32.xlu0 %v2859, 64
        %v4752 = vpop.permute.xlu0 %4751
        %4753 = vrot.lane.b32.xlu0 %v2860, 64
        %v4754 = vpop.permute.xlu0 %4753
        %4755 = vrot.lane.b32.xlu0 %v2861, 64
        %v4756 = vpop.permute.xlu0 %4755
        %4757 = vrot.lane.b32.xlu0 %v2862, 64
        %v4758 = vpop.permute.xlu0 %4757
        %4759 = vrot.lane.b32.xlu0 %v2863, 64
        %v4760 = vpop.permute.xlu0 %4759
        %4761 = vrot.lane.b32.xlu0 %v2864, 64
        %v4762 = vpop.permute.xlu0 %4761
        %4763 = vrot.lane.b32.xlu0 %v2865, 64
        %v4764 = vpop.permute.xlu0 %4763
        %4765 = vrot.lane.b32.xlu0 %v2866, 64
        %v4766 = vpop.permute.xlu0 %4765
        %4767 = vrot.lane.b32.xlu0 %v2867, 64
        %v4768 = vpop.permute.xlu0 %4767
        %4769 = vrot.lane.b32.xlu0 %v2868, 64
        %v4770 = vpop.permute.xlu0 %4769
        %4771 = vrot.lane.b32.xlu0 %v2869, 64
        %v4772 = vpop.permute.xlu0 %4771
        %4773 = vrot.lane.b32.xlu0 %v2870, 64
        %v4774 = vpop.permute.xlu0 %4773
        %4775 = vrot.lane.b32.xlu0 %v2871, 64
        %v4776 = vpop.permute.xlu0 %4775
        %4777 = vrot.lane.b32.xlu0 %v2872, 64
        %v4778 = vpop.permute.xlu0 %4777
        %4779 = vrot.lane.b32.xlu0 %v2873, 64
        %v4780 = vpop.permute.xlu0 %4779
        %4813 = vrot.lane.b32.xlu0 %v4653, 32
        %v4814 = vpop.permute.xlu0 %4813
        %4815 = vrot.lane.b32.xlu0 %v4654, 32
        %v4816 = vpop.permute.xlu0 %4815
        %4817 = vrot.lane.b32.xlu0 %v4655, 32
        %v4818 = vpop.permute.xlu0 %4817
        %4819 = vrot.lane.b32.xlu0 %v4656, 32
        %v4820 = vpop.permute.xlu0 %4819
        %4821 = vrot.lane.b32.xlu0 %v4657, 32
        %v4822 = vpop.permute.xlu0 %4821
        %4823 = vrot.lane.b32.xlu0 %v4658, 32
        %v4824 = vpop.permute.xlu0 %4823
        %4825 = vrot.lane.b32.xlu0 %v4659, 32
        %v4826 = vpop.permute.xlu0 %4825
        %4827 = vrot.lane.b32.xlu0 %v4660, 32
        %v4828 = vpop.permute.xlu0 %4827
        %4829 = vrot.lane.b32.xlu0 %v4661, 32
        %v4830 = vpop.permute.xlu0 %4829
        %4831 = vrot.lane.b32.xlu0 %v4662, 32
        %v4832 = vpop.permute.xlu0 %4831
        %4833 = vrot.lane.b32.xlu0 %v4663, 32
        %v4834 = vpop.permute.xlu0 %4833
        %4835 = vrot.lane.b32.xlu0 %v4664, 32
        %v4836 = vpop.permute.xlu0 %4835
        %4837 = vrot.lane.b32.xlu0 %v4665, 32
        %v4838 = vpop.permute.xlu0 %4837
        %4839 = vrot.lane.b32.xlu0 %v4666, 32
        %v4840 = vpop.permute.xlu0 %4839
        %4841 = vrot.lane.b32.xlu0 %v4667, 32
        %v4842 = vpop.permute.xlu0 %4841
        %4843 = vrot.lane.b32.xlu0 %v4668, 32
        %v4844 = vpop.permute.xlu0 %4843
        %v4861 = vsel %vm3696, %v1030, %v4686
        %v4862 = vsel %vm3696, %v1031, %v4688
        %v4863 = vsel %vm3696, %v1032, %v4690
        %v4864 = vsel %vm3696, %v1033, %v4692
        %v4865 = vsel %vm3696, %v1034, %v4694
        %v4866 = vsel %vm3696, %v1035, %v4696
        %v4867 = vsel %vm3696, %v1036, %v4698
        %v4868 = vsel %vm3696, %v1037, %v4700
        %v4869 = vsel %vm3696, %v1038, %v4702
        %v4870 = vsel %vm3696, %v1039, %v4704
        %v4871 = vsel %vm3696, %v1040, %v4706
        %v4872 = vsel %vm3696, %v1041, %v4708
        %v4873 = vsel %vm3696, %v1042, %v4710
        %v4874 = vsel %vm3696, %v1043, %v4712
        %v4875 = vsel %vm3696, %v1044, %v4714
        %v4876 = vsel %vm3696, %v1045, %v4716
        %v4877 = vsel %vm2184, %v4686, %v4750
        %v4878 = vsel %vm2184, %v4688, %v4752
        %v4879 = vsel %vm2184, %v4690, %v4754
        %v4880 = vsel %vm2184, %v4692, %v4756
        %v4881 = vsel %vm2184, %v4694, %v4758
        %v4882 = vsel %vm2184, %v4696, %v4760
        %v4883 = vsel %vm2184, %v4698, %v4762
        %v4884 = vsel %vm2184, %v4700, %v4764
        %v4885 = vsel %vm2184, %v4702, %v4766
        %v4886 = vsel %vm2184, %v4704, %v4768
        %v4887 = vsel %vm2184, %v4706, %v4770
        %v4888 = vsel %vm2184, %v4708, %v4772
        %v4889 = vsel %vm2184, %v4710, %v4774
        %v4890 = vsel %vm2184, %v4712, %v4776
        %v4891 = vsel %vm2184, %v4714, %v4778
        %v4892 = vsel %vm2184, %v4716, %v4780
        %v4893 = vsel %vm3745, %v4750, %v4814
        %v4894 = vsel %vm3745, %v4752, %v4816
        %v4895 = vsel %vm3745, %v4754, %v4818
        %v4896 = vsel %vm3745, %v4756, %v4820
        %v4897 = vsel %vm3745, %v4758, %v4822
        %v4898 = vsel %vm3745, %v4760, %v4824
        %v4899 = vsel %vm3745, %v4762, %v4826
        %v4900 = vsel %vm3745, %v4764, %v4828
        %v4901 = vsel %vm3745, %v4766, %v4830
        %v4902 = vsel %vm3745, %v4768, %v4832
        %v4903 = vsel %vm3745, %v4770, %v4834
        %v4904 = vsel %vm3745, %v4772, %v4836
        %v4905 = vsel %vm3745, %v4774, %v4838
        %v4906 = vsel %vm3745, %v4776, %v4840
        %v4907 = vsel %vm3745, %v4778, %v4842
        %v4908 = vsel %vm3745, %v4780, %v4844
        %4909 = vst [vmem:[%s423] sm:$0xff] %v4861
        %4910 = vst [vmem:[%s423 + $0x8] sm:$0xff] %v4877
        %4911 = vst [vmem:[%s423 + $0x10] sm:$0xff] %v4893
        %4912 = vst [vmem:[%s423 + $0x18] sm:$0xff] %v4862
        %4913 = vst [vmem:[%s423 + $0x20] sm:$0xff] %v4878
        %4914 = vst [vmem:[%s423 + $0x28] sm:$0xff] %v4894
        %4915 = vst [vmem:[%s423 + $0x30] sm:$0xff] %v4863
        %4916 = vst [vmem:[%s423 + $0x38] sm:$0xff] %v4879
        %4917 = vst [vmem:[%s423 + $0x40] sm:$0xff] %v4895
        %4918 = vst [vmem:[%s423 + $0x48] sm:$0xff] %v4864
        %4919 = vst [vmem:[%s423 + $0x50] sm:$0xff] %v4880
        %4920 = vst [vmem:[%s423 + $0x58] sm:$0xff] %v4896
        %4921 = vst [vmem:[%s423 + $0x60] sm:$0xff] %v4865
        %4922 = vst [vmem:[%s423 + $0x68] sm:$0xff] %v4881
        %4923 = vst [vmem:[%s423 + $0x70] sm:$0xff] %v4897
        %4924 = vst [vmem:[%s423 + $0x78] sm:$0xff] %v4866
        %4925 = vst [vmem:[%s423 + $0x80] sm:$0xff] %v4882
        %4926 = vst [vmem:[%s423 + $0x88] sm:$0xff] %v4898
        %4927 = vst [vmem:[%s423 + $0x90] sm:$0xff] %v4867
        %4928 = vst [vmem:[%s423 + $0x98] sm:$0xff] %v4883
        %4929 = vst [vmem:[%s423 + $0xa0] sm:$0xff] %v4899
        %4930 = vst [vmem:[%s423 + $0xa8] sm:$0xff] %v4868
        %4931 = vst [vmem:[%s423 + $0xb0] sm:$0xff] %v4884
        %4932 = vst [vmem:[%s423 + $0xb8] sm:$0xff] %v4900
        %4933 = vst [vmem:[%s423 + $0xc0] sm:$0xff] %v4869
        %4934 = vst [vmem:[%s423 + $0xc8] sm:$0xff] %v4885
        %4935 = vst [vmem:[%s423 + $0xd0] sm:$0xff] %v4901
        %4936 = vst [vmem:[%s423 + $0xd8] sm:$0xff] %v4870
        %4937 = vst [vmem:[%s423 + $0xe0] sm:$0xff] %v4886
        %4938 = vst [vmem:[%s423 + $0xe8] sm:$0xff] %v4902
        %4939 = vst [vmem:[%s423 + $0xf0] sm:$0xff] %v4871
        %4940 = vst [vmem:[%s423 + $0xf8] sm:$0xff] %v4887
        %4941 = vst [vmem:[%s423 + $0x100] sm:$0xff] %v4903
        %4942 = vst [vmem:[%s423 + $0x108] sm:$0xff] %v4872
        %4943 = vst [vmem:[%s423 + $0x110] sm:$0xff] %v4888
        %4944 = vst [vmem:[%s423 + $0x118] sm:$0xff] %v4904
        %4945 = vst [vmem:[%s423 + $0x120] sm:$0xff] %v4873
        %4946 = vst [vmem:[%s423 + $0x128] sm:$0xff] %v4889
        %4947 = vst [vmem:[%s423 + $0x130] sm:$0xff] %v4905
        %4948 = vst [vmem:[%s423 + $0x138] sm:$0xff] %v4874
        %4949 = vst [vmem:[%s423 + $0x140] sm:$0xff] %v4890
        %4950 = vst [vmem:[%s423 + $0x148] sm:$0xff] %v4906
        %4951 = vst [vmem:[%s423 + $0x150] sm:$0xff] %v4875
        %4952 = vst [vmem:[%s423 + $0x158] sm:$0xff] %v4891
        %4953 = vst [vmem:[%s423 + $0x160] sm:$0xff] %v4907
        %4954 = vst [vmem:[%s423 + $0x168] sm:$0xff] %v4876
        %4955 = vst [vmem:[%s423 + $0x170] sm:$0xff] %v4892
        %4956 = vst [vmem:[%s423 + $0x178] sm:$0xff] %v4908
        %s4957 = sand.u32 %s293, 1
        %s4958 = scalar_lea.sflag [#allocation3], %s4957
        %s4959 = sand.u32 %s293, 1
        %s4960 = smul.addr %s4959, 384
        %s4961 = scalar_lea.vmem [#allocation2], %s4960
        // Predicated region
        $region65: #{inception_a_forward.5} parent=63 // pred_check
          %p4962 = pneg %p303
        $region66: #{inception_a_forward.5} parent=63 // pred_check_branch
          %4964 = sbr.rel (%p4962) target = $region68
        $region67: #{inception_a_forward.5} parent=63 // pred_region
          %s4965 = smul.u32 16, %s30
          %4967 = vsyncadd %s4958, 0
          %s4968 = smul.addr %s4965, 3
          %s4969 = smul.addr %s29, 96
          %s4970 = sadd.s32 %s4968, %s4969
          %s4971 = smul.addr %s4970, 8
          %s4972 = scalar_lea.hbm %s11, %s4971
          %s4973 = sshll.u32 %s4961, 4
          %s4974 = int_to_ptr.vmem [resolvable:$true] %s4973
          %s4975 = sshll.u32 %s4972, 4
          %s4976 = int_to_ptr.hbm [resolvable:$true] %s4975
          %4981 = dma.vmem_to_hbm [thread:$0]  %s4974, 6144, %s4976, %s4958, 384, 384, 24
        $region68: #{inception_a_forward.5} parent=63 // pred_fallthru
          _
      $region64: #{inception_a_forward.5} parent=5 // pred_fallthru
        _
      %p4982 = scmp.le.s32.totalorder 2, %s20
      // Predicated region
      $region69: #{inception_a_forward.5} parent=5 // pred_check
        %p4983 = pneg %p4982
      $region70: #{inception_a_forward.5} parent=5 // pred_check_branch
        %4985 = sbr.rel (%p4983) target = $region72
      $region71: #{inception_a_forward.5} parent=5 // pred_region
        %s4986 = ssub.s32 %s20, 2
        // Predicated region
        $region73: #{inception_a_forward.5} parent=71 // pred_check
          %p4987 = pneg %p309
        $region74: #{inception_a_forward.5} parent=71 // pred_check_branch
          %4989 = sbr.rel (%p4987) target = $region76
        $region75: #{inception_a_forward.5} parent=71 // pred_region
          %s4990 = sand.u32 %s294, 1
          %s4991 = scalar_lea.sflag [#allocation3], %s4990
          %s4992 = sand.u32 %s294, 1
          %s4993 = smul.addr %s4992, 384
          %s4994 = scalar_lea.vmem [#allocation2], %s4993
          %4996 = dma.done %s4991, 6144
        $region76: #{inception_a_forward.5} parent=71 // pred_fallthru
          _
      $region72: #{inception_a_forward.5} parent=5 // pred_fallthru
        _
    $region6: #{inception_a_forward.5} parent=1 // loop_footer
      %s24 = sadd.s32 1, %s20
    $region7: #{inception_a_forward.5} parent=1 // loop_footer_branch
      %19 = sbr.rel target = $region3
    $region8: #{inception_a_forward.5} parent=1 // loop_exit
      _
    %4997 = vsyncpa [#allocation3], 1
    %s4998 = scalar_lea.sflag [#allocation3], 1
    %4999 = vsyncpa %s4998, 1

</llo_original>
